<compile_context>
chip_gen: v7x
topology: tpu7x:2x2x1
jax: 0.10.0
libtpu: 0.0.40
codegen_flags: <defaults>
</compile_context>

<pallas_src>
import functools

import numpy as np
import jax
import jax.numpy as jnp
from jax.experimental import pallas as pl
from jax.experimental.pallas import tpu as pltpu


# ---------------------------------------------------------------------------
# Fused Pallas kernel: 3x3 conv (shifted-roll accumulation) + Linear + MLP
# ---------------------------------------------------------------------------

def _critic_fused_kernel(sT_ref, masks_ref, wtap_ref, bc_ref, w1_ref, b1_ref,
                         w2_ref, b2_ref, w3_ref, b3_ref, o_ref, *, width):
    cout, hw, f1 = w1_ref.shape
    bhw = sT_ref.shape[1]            # (padded batch) * H * W, lane-dense
    bpad, opad = o_ref.shape         # bpad = bhw // hw

    # --- 3x3 'same' conv as 9 shifted MXU accumulations (in-kernel im2col) --
    x = sT_ref[...]                                     # [Cin, B*H*W] f32
    acc = jnp.zeros((cout, bhw), jnp.float32)
    k = 0
    for dh in (-1, 0, 1):
        for dw in (-1, 0, 1):
            shift = (-(dh * width + dw)) % bhw          # roll so pos -> pos+delta
            shifted = x if shift == 0 else pltpu.roll(x, shift, axis=1)
            masked = shifted * masks_ref[k]             # zero out-of-image taps
            acc = acc + jnp.dot(wtap_ref[k], masked,
                                preferred_element_type=jnp.float32)
            k += 1
    convT = jnp.maximum(acc + bc_ref[...], 0.0)         # [Cout, B*HW] f32
    convT = convT.astype(jnp.bfloat16)                  # single hoisted cast

    # --- preprocess Linear + ReLU: one Cout-batched contraction -------------
    # feat(NCHW flatten) @ w1  ==  sum_c conv[:, c, :] @ w1_3d[c]
    conv3 = convT.reshape(cout, bpad, hw)               # 128-aligned lane split
    h3 = jnp.einsum("cbk,ckf->cbf", conv3, w1_ref[...],
                    preferred_element_type=jnp.float32)  # [Cout, B, F1]
    h = jnp.sum(h3, axis=0) + b1_ref[...]                # [B, F1]
    h = jnp.maximum(h, 0.0).astype(jnp.bfloat16)

    # --- MLP hidden Linear + ReLU -------------------------------------------
    h = jnp.dot(h, w2_ref[...], preferred_element_type=jnp.float32) + b2_ref[...]
    h = jnp.maximum(h, 0.0).astype(jnp.bfloat16)

    # --- final Linear (lane-dense 128-padded; column 0 holds Q) --------------
    # Full unmasked (8, 128) store thanks to the padded batch rows.
    o_ref[...] = jnp.dot(h, w3_ref[...], preferred_element_type=jnp.float32) + b3_ref[...]


def _full_spec(shape):
    """Single full-array block (block shape == array shape is always legal)."""
    ndim = len(shape)
    return pl.BlockSpec(shape, lambda i, _n=ndim: (0,) * _n)


def critic_fused_pallas(sT, masks, wtap, bc, w1_3d, b1, w2, b2, w3p, b3p, *, width):
    cin, bhw = sT.shape
    cout, hw, f1 = w1_3d.shape
    f2 = w2.shape[1]
    opad = w3p.shape[1]
    bpad = bhw // hw

    flops = 2 * (9 * cout * cin * bhw            # conv taps
                 + cout * hw * bpad * f1         # preprocess linear
                 + bpad * f1 * f2                # hidden linear
                 + bpad * f2 * 1)                # final linear (real width)
    bytes_accessed = sum(int(a.size) * a.dtype.itemsize
                         for a in (sT, masks, wtap, bc, w1_3d, b1, w2, b2, w3p, b3p))
    bytes_accessed += bpad * opad * 4
    cost = pl.CostEstimate(flops=flops, transcendentals=0,
                           bytes_accessed=bytes_accessed)

    kernel = functools.partial(_critic_fused_kernel, width=width)
    args = (sT, masks, wtap, bc, w1_3d, b1, w2, b2, w3p, b3p)

    return pl.pallas_call(
        kernel,
        out_shape=jax.ShapeDtypeStruct((bpad, opad), jnp.float32),
        grid=(1,),
        in_specs=[_full_spec(a.shape) for a in args],
        out_specs=_full_spec((bpad, opad)),
        cost_estimate=cost,
        compiler_params=pltpu.CompilerParams(dimension_semantics=("arbitrary",)),
    )(*args)


# ---------------------------------------------------------------------------
# Glue: tap masks, parameter init / kernel-layout prep, forward
# ---------------------------------------------------------------------------

def _tap_masks(batch, H, W):
    """[9, 1, batch*H*W] f32 validity masks per 3x3 tap (trace-time constant)."""
    pos = np.arange(batch * H * W)
    hh = (pos // W) % H
    ww = pos % W
    ms = []
    for dh in (-1, 0, 1):
        for dw in (-1, 0, 1):
            ms.append((hh + dh >= 0) & (hh + dh < H)
                      & (ww + dw >= 0) & (ww + dw < W))
    m = np.stack(ms).astype(np.float32).reshape(9, 1, batch * H * W)
    return jnp.asarray(m)


def init_params(key, in_ch, H, W, conv_out=8, feat_hidden=32, mlp_hidden=32):
    ks = jax.random.split(key, 8)

    def lin(k, fan_in, fan_out):
        return (jax.random.normal(k, (fan_in, fan_out), jnp.float32)
                / jnp.sqrt(jnp.float32(fan_in)))

    conv_w = jax.random.normal(ks[0], (conv_out, in_ch, 3, 3), jnp.float32) * 0.1
    conv_b = jax.random.normal(ks[1], (conv_out,), jnp.float32) * 0.01
    flat_dim = conv_out * H * W
    w1 = lin(ks[2], flat_dim, feat_hidden)        # rows in (c, h, w) flatten order
    b1 = jax.random.normal(ks[3], (feat_hidden,), jnp.float32) * 0.01
    w2 = lin(ks[4], feat_hidden, mlp_hidden)
    b2 = jax.random.normal(ks[5], (mlp_hidden,), jnp.float32) * 0.01
    w3 = lin(ks[6], mlp_hidden, 1)
    b3 = jax.random.normal(ks[7], (1,), jnp.float32) * 0.01
    return dict(conv_w=conv_w, conv_b=conv_b,
                w1=w1, b1=b1, w2=w2, b2=b2, w3=w3, b3=b3)


def prepare_kernel_params(params, H, W, opad=128):
    """One-time layout/dtype prep: per-tap conv weights, 3D w1, padded w3."""
    conv_w = params["conv_w"]                           # [Cout, Cin, 3, 3]
    cout, cin, kh, kw = conv_w.shape
    f1 = params["w1"].shape[1]
    # tap k = kh_idx*3 + kw_idx  ->  wtap[k] = conv_w[:, :, kh_idx, kw_idx]
    wtap = jnp.transpose(conv_w, (2, 3, 0, 1)).reshape(kh * kw, cout, cin)
    wtap = wtap.astype(jnp.float32)
    bc = params["conv_b"].reshape(cout, 1).astype(jnp.float32)
    # w1 rows are (c, h, w) == original NCHW flatten order; reshape [Cout, HW, F1]
    w1_3d = params["w1"].reshape(cout, H * W, f1).astype(jnp.bfloat16)
    b1 = params["b1"].reshape(1, f1).astype(jnp.float32)
    w2 = params["w2"].astype(jnp.bfloat16)
    b2 = params["b2"].reshape(1, -1).astype(jnp.float32)
    w3 = params["w3"]                                   # [F2, 1]
    w3p = jnp.pad(w3, ((0, 0), (0, opad - w3.shape[1]))).astype(jnp.bfloat16)
    b3p = jnp.pad(params["b3"].reshape(1, -1),
                  ((0, 0), (0, opad - params["b3"].shape[0]))).astype(jnp.float32)
    return dict(wtap=wtap, bc=bc, w1=w1_3d, b1=b1, w2=w2, b2=b2, w3=w3p, b3=b3p)


@jax.jit
def critic_stack_forward(kparams, s, a=None):
    """Mapping: (s, a) -> logits -> Q(s, a). Returns [B, 1] float32."""
    s = s.astype(jnp.float32)
    B, C, H, W = s.shape
    bpad = max(8, ((B + 7) // 8) * 8)                   # sublane-full batch
    sT = jnp.transpose(s, (1, 0, 2, 3)).reshape(C, B * H * W)
    sT = jnp.pad(sT, ((0, 0), (0, (bpad - B) * H * W)))  # zero rows -> full tiles
    masks = _tap_masks(bpad, H, W)                      # baked constant
    out = critic_fused_pallas(
        sT, masks, kparams["wtap"], kparams["bc"], kparams["w1"], kparams["b1"],
        kparams["w2"], kparams["b2"], kparams["w3"], kparams["b3"], width=W)
    return out[:B, :1]                                  # Q value [B, 1]


def reference_forward(params, s):
    """Pure-JAX f32 reference with original NCHW-flatten semantics."""
    B, C, H, W = s.shape
    cout = params["conv_w"].shape[0]
    xp = jnp.pad(s, ((0, 0), (0, 0), (1, 1), (1, 1)))
    cols = []
    for kh in range(3):
        for kw in range(3):
            cols.append(xp[:, :, kh:kh + H, kw:kw + W])
    p = jnp.stack(cols, axis=2).reshape(B, C * 9, H, W)        # (c, k) order
    wmat = params["conv_w"].reshape(cout, C * 9)
    y = jnp.einsum("bkhw,ok->bohw", p, wmat) + params["conv_b"][None, :, None, None]
    y = jnp.maximum(y, 0.0)
    feat = y.reshape(B, cout * H * W)                          # NCHW flatten
    h = jnp.maximum(feat @ params["w1"] + params["b1"], 0.0)
    h = jnp.maximum(h @ params["w2"] + params["b2"], 0.0)
    return h @ params["w3"] + params["b3"]


if __name__ == "__main__":
    B, C, H, W = 2, 4, 16, 16
    key = jax.random.PRNGKey(0)
    k_param, k_s = jax.random.split(key)

    params = init_params(k_param, C, H, W)
    kparams = prepare_kernel_params(params, H, W)
    s = jax.random.normal(k_s, (B, C, H, W), jnp.float32)      # NCHW input

    q = critic_stack_forward(kparams, s)
    q = jax.block_until_ready(q)
    assert q.shape == (B, 1) and q.dtype == jnp.float32

    # Loose check vs f32 reference (kernel uses bf16 weights / f32 accumulation).
    q_ref = reference_forward(params, s)
    max_err = float(jnp.max(jnp.abs(q - q_ref)))
    assert max_err < 5e-2, f"max abs error {max_err} too large"

    print("KERNEL_OK")
</pallas_src>

<mosaic_0001>
module attributes {stable_mosaic.version = 11 : i64} {
  func.func @_critic_fused_kernel(%arg0: i32, %arg1: memref<4x2048xf32, #tpu.memory_space<vmem>>, %arg2: memref<9x1x2048xf32, #tpu.memory_space<vmem>>, %arg3: memref<9x8x4xf32, #tpu.memory_space<vmem>>, %arg4: memref<8x1xf32, #tpu.memory_space<vmem>>, %arg5: memref<8x256x32xbf16, #tpu.memory_space<vmem>>, %arg6: memref<1x32xf32, #tpu.memory_space<vmem>>, %arg7: memref<32x32xbf16, #tpu.memory_space<vmem>>, %arg8: memref<1x32xf32, #tpu.memory_space<vmem>>, %arg9: memref<32x128xbf16, #tpu.memory_space<vmem>>, %arg10: memref<1x128xf32, #tpu.memory_space<vmem>>, %arg11: memref<8x128xf32, #tpu.memory_space<vmem>>) attributes {dimension_semantics = [#tpu.dimension_semantics<arbitrary>], iteration_bounds = array<i64: 1>, scalar_prefetch = 0 : i64, scratch_operands = 0 : i64, tpu.core_type = #tpu.core_type<tc>, window_params = [{pipeline_mode = #tpu.pipeline_mode<synchronous>, transform_indices = @transform_0, window_bounds = array<i64: 4, 2048>}, {pipeline_mode = #tpu.pipeline_mode<synchronous>, transform_indices = @transform_1, window_bounds = array<i64: 9, 1, 2048>}, {pipeline_mode = #tpu.pipeline_mode<synchronous>, transform_indices = @transform_2, window_bounds = array<i64: 9, 8, 4>}, {pipeline_mode = #tpu.pipeline_mode<synchronous>, transform_indices = @transform_3, window_bounds = array<i64: 8, 1>}, {pipeline_mode = #tpu.pipeline_mode<synchronous>, transform_indices = @transform_4, window_bounds = array<i64: 8, 256, 32>}, {pipeline_mode = #tpu.pipeline_mode<synchronous>, transform_indices = @transform_5, window_bounds = array<i64: 1, 32>}, {pipeline_mode = #tpu.pipeline_mode<synchronous>, transform_indices = @transform_6, window_bounds = array<i64: 32, 32>}, {pipeline_mode = #tpu.pipeline_mode<synchronous>, transform_indices = @transform_7, window_bounds = array<i64: 1, 32>}, {pipeline_mode = #tpu.pipeline_mode<synchronous>, transform_indices = @transform_8, window_bounds = array<i64: 32, 128>}, {pipeline_mode = #tpu.pipeline_mode<synchronous>, transform_indices = @transform_9, window_bounds = array<i64: 1, 128>}, {pipeline_mode = #tpu.pipeline_mode<synchronous>, transform_indices = @transform_10, window_bounds = array<i64: 8, 128>}]} {
    %c0 = arith.constant 0 : index
    %c0_0 = arith.constant 0 : index
    %0 = vector.load %arg1[%c0, %c0_0] : memref<4x2048xf32, #tpu.memory_space<vmem>>, vector<4x2048xf32>
    %cst = arith.constant 0.000000e+00 : f32
    %1 = vector.broadcast %cst : f32 to vector<8x2048xf32>
    %c17_i32 = arith.constant 17 : i32
    %2 = tpu.dynamic_rotate %0 by %c17_i32 dim 1 : vector<4x2048xf32>, i32 -> vector<4x2048xf32>
    %c0_1 = arith.constant 0 : index
    %c0_2 = arith.constant 0 : index
    %c0_3 = arith.constant 0 : index
    %3 = vector.load %arg2[%c0_1, %c0_2, %c0_3] : memref<9x1x2048xf32, #tpu.memory_space<vmem>>, vector<1x1x2048xf32>
    %4 = vector.shape_cast %3 : vector<1x1x2048xf32> to vector<1x2048xf32>
    %5 = vector.broadcast %4 : vector<1x2048xf32> to vector<4x2048xf32>
    %6 = arith.mulf %2, %5 : vector<4x2048xf32>
    %c0_4 = arith.constant 0 : index
    %c0_5 = arith.constant 0 : index
    %c0_6 = arith.constant 0 : index
    %7 = vector.load %arg3[%c0_4, %c0_5, %c0_6] : memref<9x8x4xf32, #tpu.memory_space<vmem>>, vector<1x8x4xf32>
    %8 = vector.shape_cast %7 : vector<1x8x4xf32> to vector<8x4xf32>
    %cst_7 = arith.constant dense<0.000000e+00> : vector<8x2048xf32>
    %9 = tpu.matmul %8, %6, %cst_7 {dimension_numbers = #tpu.dot_dimension_numbers<[1], [0], [0], [1], [0, 0, 1, 1], [], []>} : vector<8x4xf32>, vector<4x2048xf32>, vector<8x2048xf32> -> vector<8x2048xf32>
    %10 = arith.addf %1, %9 : vector<8x2048xf32>
    %c16_i32 = arith.constant 16 : i32
    %11 = tpu.dynamic_rotate %0 by %c16_i32 dim 1 : vector<4x2048xf32>, i32 -> vector<4x2048xf32>
    %c1 = arith.constant 1 : index
    %c0_8 = arith.constant 0 : index
    %c0_9 = arith.constant 0 : index
    %12 = vector.load %arg2[%c1, %c0_8, %c0_9] : memref<9x1x2048xf32, #tpu.memory_space<vmem>>, vector<1x1x2048xf32>
    %13 = vector.shape_cast %12 : vector<1x1x2048xf32> to vector<1x2048xf32>
    %14 = vector.broadcast %13 : vector<1x2048xf32> to vector<4x2048xf32>
    %15 = arith.mulf %11, %14 : vector<4x2048xf32>
    %c1_10 = arith.constant 1 : index
    %c0_11 = arith.constant 0 : index
    %c0_12 = arith.constant 0 : index
    %16 = vector.load %arg3[%c1_10, %c0_11, %c0_12] : memref<9x8x4xf32, #tpu.memory_space<vmem>>, vector<1x8x4xf32>
    %17 = vector.shape_cast %16 : vector<1x8x4xf32> to vector<8x4xf32>
    %cst_13 = arith.constant dense<0.000000e+00> : vector<8x2048xf32>
    %18 = tpu.matmul %17, %15, %cst_13 {dimension_numbers = #tpu.dot_dimension_numbers<[1], [0], [0], [1], [0, 0, 1, 1], [], []>} : vector<8x4xf32>, vector<4x2048xf32>, vector<8x2048xf32> -> vector<8x2048xf32>
    %19 = arith.addf %10, %18 : vector<8x2048xf32>
    %c15_i32 = arith.constant 15 : i32
    %20 = tpu.dynamic_rotate %0 by %c15_i32 dim 1 : vector<4x2048xf32>, i32 -> vector<4x2048xf32>
    %c2 = arith.constant 2 : index
    %c0_14 = arith.constant 0 : index
    %c0_15 = arith.constant 0 : index
    %21 = vector.load %arg2[%c2, %c0_14, %c0_15] : memref<9x1x2048xf32, #tpu.memory_space<vmem>>, vector<1x1x2048xf32>
    %22 = vector.shape_cast %21 : vector<1x1x2048xf32> to vector<1x2048xf32>
    %23 = vector.broadcast %22 : vector<1x2048xf32> to vector<4x2048xf32>
    %24 = arith.mulf %20, %23 : vector<4x2048xf32>
    %c2_16 = arith.constant 2 : index
    %c0_17 = arith.constant 0 : index
    %c0_18 = arith.constant 0 : index
    %25 = vector.load %arg3[%c2_16, %c0_17, %c0_18] : memref<9x8x4xf32, #tpu.memory_space<vmem>>, vector<1x8x4xf32>
    %26 = vector.shape_cast %25 : vector<1x8x4xf32> to vector<8x4xf32>
    %cst_19 = arith.constant dense<0.000000e+00> : vector<8x2048xf32>
    %27 = tpu.matmul %26, %24, %cst_19 {dimension_numbers = #tpu.dot_dimension_numbers<[1], [0], [0], [1], [0, 0, 1, 1], [], []>} : vector<8x4xf32>, vector<4x2048xf32>, vector<8x2048xf32> -> vector<8x2048xf32>
    %28 = arith.addf %19, %27 : vector<8x2048xf32>
    %c1_i32 = arith.constant 1 : i32
    %29 = tpu.dynamic_rotate %0 by %c1_i32 dim 1 : vector<4x2048xf32>, i32 -> vector<4x2048xf32>
    %c3 = arith.constant 3 : index
    %c0_20 = arith.constant 0 : index
    %c0_21 = arith.constant 0 : index
    %30 = vector.load %arg2[%c3, %c0_20, %c0_21] : memref<9x1x2048xf32, #tpu.memory_space<vmem>>, vector<1x1x2048xf32>
    %31 = vector.shape_cast %30 : vector<1x1x2048xf32> to vector<1x2048xf32>
    %32 = vector.broadcast %31 : vector<1x2048xf32> to vector<4x2048xf32>
    %33 = arith.mulf %29, %32 : vector<4x2048xf32>
    %c3_22 = arith.constant 3 : index
    %c0_23 = arith.constant 0 : index
    %c0_24 = arith.constant 0 : index
    %34 = vector.load %arg3[%c3_22, %c0_23, %c0_24] : memref<9x8x4xf32, #tpu.memory_space<vmem>>, vector<1x8x4xf32>
    %35 = vector.shape_cast %34 : vector<1x8x4xf32> to vector<8x4xf32>
    %cst_25 = arith.constant dense<0.000000e+00> : vector<8x2048xf32>
    %36 = tpu.matmul %35, %33, %cst_25 {dimension_numbers = #tpu.dot_dimension_numbers<[1], [0], [0], [1], [0, 0, 1, 1], [], []>} : vector<8x4xf32>, vector<4x2048xf32>, vector<8x2048xf32> -> vector<8x2048xf32>
    %37 = arith.addf %28, %36 : vector<8x2048xf32>
    %c4 = arith.constant 4 : index
    %c0_26 = arith.constant 0 : index
    %c0_27 = arith.constant 0 : index
    %38 = vector.load %arg2[%c4, %c0_26, %c0_27] : memref<9x1x2048xf32, #tpu.memory_space<vmem>>, vector<1x1x2048xf32>
    %39 = vector.shape_cast %38 : vector<1x1x2048xf32> to vector<1x2048xf32>
    %40 = vector.broadcast %39 : vector<1x2048xf32> to vector<4x2048xf32>
    %41 = arith.mulf %0, %40 : vector<4x2048xf32>
    %c4_28 = arith.constant 4 : index
    %c0_29 = arith.constant 0 : index
    %c0_30 = arith.constant 0 : index
    %42 = vector.load %arg3[%c4_28, %c0_29, %c0_30] : memref<9x8x4xf32, #tpu.memory_space<vmem>>, vector<1x8x4xf32>
    %43 = vector.shape_cast %42 : vector<1x8x4xf32> to vector<8x4xf32>
    %cst_31 = arith.constant dense<0.000000e+00> : vector<8x2048xf32>
    %44 = tpu.matmul %43, %41, %cst_31 {dimension_numbers = #tpu.dot_dimension_numbers<[1], [0], [0], [1], [0, 0, 1, 1], [], []>} : vector<8x4xf32>, vector<4x2048xf32>, vector<8x2048xf32> -> vector<8x2048xf32>
    %45 = arith.addf %37, %44 : vector<8x2048xf32>
    %c2047_i32 = arith.constant 2047 : i32
    %46 = tpu.dynamic_rotate %0 by %c2047_i32 dim 1 : vector<4x2048xf32>, i32 -> vector<4x2048xf32>
    %c5 = arith.constant 5 : index
    %c0_32 = arith.constant 0 : index
    %c0_33 = arith.constant 0 : index
    %47 = vector.load %arg2[%c5, %c0_32, %c0_33] : memref<9x1x2048xf32, #tpu.memory_space<vmem>>, vector<1x1x2048xf32>
    %48 = vector.shape_cast %47 : vector<1x1x2048xf32> to vector<1x2048xf32>
    %49 = vector.broadcast %48 : vector<1x2048xf32> to vector<4x2048xf32>
    %50 = arith.mulf %46, %49 : vector<4x2048xf32>
    %c5_34 = arith.constant 5 : index
    %c0_35 = arith.constant 0 : index
    %c0_36 = arith.constant 0 : index
    %51 = vector.load %arg3[%c5_34, %c0_35, %c0_36] : memref<9x8x4xf32, #tpu.memory_space<vmem>>, vector<1x8x4xf32>
    %52 = vector.shape_cast %51 : vector<1x8x4xf32> to vector<8x4xf32>
    %cst_37 = arith.constant dense<0.000000e+00> : vector<8x2048xf32>
    %53 = tpu.matmul %52, %50, %cst_37 {dimension_numbers = #tpu.dot_dimension_numbers<[1], [0], [0], [1], [0, 0, 1, 1], [], []>} : vector<8x4xf32>, vector<4x2048xf32>, vector<8x2048xf32> -> vector<8x2048xf32>
    %54 = arith.addf %45, %53 : vector<8x2048xf32>
    %c2033_i32 = arith.constant 2033 : i32
    %55 = tpu.dynamic_rotate %0 by %c2033_i32 dim 1 : vector<4x2048xf32>, i32 -> vector<4x2048xf32>
    %c6 = arith.constant 6 : index
    %c0_38 = arith.constant 0 : index
    %c0_39 = arith.constant 0 : index
    %56 = vector.load %arg2[%c6, %c0_38, %c0_39] : memref<9x1x2048xf32, #tpu.memory_space<vmem>>, vector<1x1x2048xf32>
    %57 = vector.shape_cast %56 : vector<1x1x2048xf32> to vector<1x2048xf32>
    %58 = vector.broadcast %57 : vector<1x2048xf32> to vector<4x2048xf32>
    %59 = arith.mulf %55, %58 : vector<4x2048xf32>
    %c6_40 = arith.constant 6 : index
    %c0_41 = arith.constant 0 : index
    %c0_42 = arith.constant 0 : index
    %60 = vector.load %arg3[%c6_40, %c0_41, %c0_42] : memref<9x8x4xf32, #tpu.memory_space<vmem>>, vector<1x8x4xf32>
    %61 = vector.shape_cast %60 : vector<1x8x4xf32> to vector<8x4xf32>
    %cst_43 = arith.constant dense<0.000000e+00> : vector<8x2048xf32>
    %62 = tpu.matmul %61, %59, %cst_43 {dimension_numbers = #tpu.dot_dimension_numbers<[1], [0], [0], [1], [0, 0, 1, 1], [], []>} : vector<8x4xf32>, vector<4x2048xf32>, vector<8x2048xf32> -> vector<8x2048xf32>
    %63 = arith.addf %54, %62 : vector<8x2048xf32>
    %c2032_i32 = arith.constant 2032 : i32
    %64 = tpu.dynamic_rotate %0 by %c2032_i32 dim 1 : vector<4x2048xf32>, i32 -> vector<4x2048xf32>
    %c7 = arith.constant 7 : index
    %c0_44 = arith.constant 0 : index
    %c0_45 = arith.constant 0 : index
    %65 = vector.load %arg2[%c7, %c0_44, %c0_45] : memref<9x1x2048xf32, #tpu.memory_space<vmem>>, vector<1x1x2048xf32>
    %66 = vector.shape_cast %65 : vector<1x1x2048xf32> to vector<1x2048xf32>
    %67 = vector.broadcast %66 : vector<1x2048xf32> to vector<4x2048xf32>
    %68 = arith.mulf %64, %67 : vector<4x2048xf32>
    %c7_46 = arith.constant 7 : index
    %c0_47 = arith.constant 0 : index
    %c0_48 = arith.constant 0 : index
    %69 = vector.load %arg3[%c7_46, %c0_47, %c0_48] : memref<9x8x4xf32, #tpu.memory_space<vmem>>, vector<1x8x4xf32>
    %70 = vector.shape_cast %69 : vector<1x8x4xf32> to vector<8x4xf32>
    %cst_49 = arith.constant dense<0.000000e+00> : vector<8x2048xf32>
    %71 = tpu.matmul %70, %68, %cst_49 {dimension_numbers = #tpu.dot_dimension_numbers<[1], [0], [0], [1], [0, 0, 1, 1], [], []>} : vector<8x4xf32>, vector<4x2048xf32>, vector<8x2048xf32> -> vector<8x2048xf32>
    %72 = arith.addf %63, %71 : vector<8x2048xf32>
    %c2031_i32 = arith.constant 2031 : i32
    %73 = tpu.dynamic_rotate %0 by %c2031_i32 dim 1 : vector<4x2048xf32>, i32 -> vector<4x2048xf32>
    %c8 = arith.constant 8 : index
    %c0_50 = arith.constant 0 : index
    %c0_51 = arith.constant 0 : index
    %74 = vector.load %arg2[%c8, %c0_50, %c0_51] : memref<9x1x2048xf32, #tpu.memory_space<vmem>>, vector<1x1x2048xf32>
    %75 = vector.shape_cast %74 : vector<1x1x2048xf32> to vector<1x2048xf32>
    %76 = vector.broadcast %75 : vector<1x2048xf32> to vector<4x2048xf32>
    %77 = arith.mulf %73, %76 : vector<4x2048xf32>
    %c8_52 = arith.constant 8 : index
    %c0_53 = arith.constant 0 : index
    %c0_54 = arith.constant 0 : index
    %78 = vector.load %arg3[%c8_52, %c0_53, %c0_54] : memref<9x8x4xf32, #tpu.memory_space<vmem>>, vector<1x8x4xf32>
    %79 = vector.shape_cast %78 : vector<1x8x4xf32> to vector<8x4xf32>
    %cst_55 = arith.constant dense<0.000000e+00> : vector<8x2048xf32>
    %80 = tpu.matmul %79, %77, %cst_55 {dimension_numbers = #tpu.dot_dimension_numbers<[1], [0], [0], [1], [0, 0, 1, 1], [], []>} : vector<8x4xf32>, vector<4x2048xf32>, vector<8x2048xf32> -> vector<8x2048xf32>
    %81 = arith.addf %72, %80 : vector<8x2048xf32>
    %c0_56 = arith.constant 0 : index
    %c0_57 = arith.constant 0 : index
    %82 = vector.load %arg4[%c0_56, %c0_57] : memref<8x1xf32, #tpu.memory_space<vmem>>, vector<8x1xf32>
    %83 = vector.broadcast %82 : vector<8x1xf32> to vector<8x2048xf32>
    %84 = arith.addf %81, %83 : vector<8x2048xf32>
    %cst_58 = arith.constant 0.000000e+00 : f32
    %85 = vector.broadcast %cst_58 : f32 to vector<8x2048xf32>
    %86 = arith.maximumf %84, %85 : vector<8x2048xf32>
    %87 = arith.truncf %86 : vector<8x2048xf32> to vector<8x2048xbf16>
    %88 = vector.shape_cast %87 : vector<8x2048xbf16> to vector<8x8x256xbf16>
    %c0_59 = arith.constant 0 : index
    %c0_60 = arith.constant 0 : index
    %c0_61 = arith.constant 0 : index
    %89 = vector.load %arg5[%c0_59, %c0_60, %c0_61] : memref<8x256x32xbf16, #tpu.memory_space<vmem>>, vector<8x256x32xbf16>
    "tpu.trace_start"() <{level = 10 : i32, message = "cbk,ckf->cbf"}> : () -> ()
    %cst_62 = arith.constant dense<0.000000e+00> : vector<8x8x32xf32>
    %90 = tpu.matmul %88, %89, %cst_62 {dimension_numbers = #tpu.dot_dimension_numbers<[2], [1], [1], [2], [0, 0, 0, 1, 1, 2], [0], [0]>} : vector<8x8x256xbf16>, vector<8x256x32xbf16>, vector<8x8x32xf32> -> vector<8x8x32xf32>
    "tpu.trace_stop"() : () -> ()
    %cst_63 = arith.constant dense<0.000000e+00> : vector<8x32xf32>
    %91 = vector.multi_reduction <add>, %90, %cst_63 [0] : vector<8x8x32xf32> to vector<8x32xf32>
    %c0_64 = arith.constant 0 : index
    %c0_65 = arith.constant 0 : index
    %92 = vector.load %arg6[%c0_64, %c0_65] : memref<1x32xf32, #tpu.memory_space<vmem>>, vector<1x32xf32>
    %93 = vector.broadcast %92 : vector<1x32xf32> to vector<8x32xf32>
    %94 = arith.addf %91, %93 : vector<8x32xf32>
    %cst_66 = arith.constant 0.000000e+00 : f32
    %95 = vector.broadcast %cst_66 : f32 to vector<8x32xf32>
    %96 = arith.maximumf %94, %95 : vector<8x32xf32>
    %97 = arith.truncf %96 : vector<8x32xf32> to vector<8x32xbf16>
    %c0_67 = arith.constant 0 : index
    %c0_68 = arith.constant 0 : index
    %98 = vector.load %arg7[%c0_67, %c0_68] : memref<32x32xbf16, #tpu.memory_space<vmem>>, vector<32x32xbf16>
    %cst_69 = arith.constant dense<0.000000e+00> : vector<8x32xf32>
    %99 = tpu.matmul %97, %98, %cst_69 {dimension_numbers = #tpu.dot_dimension_numbers<[1], [0], [0], [1], [0, 0, 1, 1], [], []>} : vector<8x32xbf16>, vector<32x32xbf16>, vector<8x32xf32> -> vector<8x32xf32>
    %c0_70 = arith.constant 0 : index
    %c0_71 = arith.constant 0 : index
    %100 = vector.load %arg8[%c0_70, %c0_71] : memref<1x32xf32, #tpu.memory_space<vmem>>, vector<1x32xf32>
    %101 = vector.broadcast %100 : vector<1x32xf32> to vector<8x32xf32>
    %102 = arith.addf %99, %101 : vector<8x32xf32>
    %cst_72 = arith.constant 0.000000e+00 : f32
    %103 = vector.broadcast %cst_72 : f32 to vector<8x32xf32>
    %104 = arith.maximumf %102, %103 : vector<8x32xf32>
    %105 = arith.truncf %104 : vector<8x32xf32> to vector<8x32xbf16>
    %c0_73 = arith.constant 0 : index
    %c0_74 = arith.constant 0 : index
    %106 = vector.load %arg9[%c0_73, %c0_74] : memref<32x128xbf16, #tpu.memory_space<vmem>>, vector<32x128xbf16>
    %cst_75 = arith.constant dense<0.000000e+00> : vector<8x128xf32>
    %107 = tpu.matmul %105, %106, %cst_75 {dimension_numbers = #tpu.dot_dimension_numbers<[1], [0], [0], [1], [0, 0, 1, 1], [], []>} : vector<8x32xbf16>, vector<32x128xbf16>, vector<8x128xf32> -> vector<8x128xf32>
    %c0_76 = arith.constant 0 : index
    %c0_77 = arith.constant 0 : index
    %108 = vector.load %arg10[%c0_76, %c0_77] : memref<1x128xf32, #tpu.memory_space<vmem>>, vector<1x128xf32>
    %109 = vector.broadcast %108 : vector<1x128xf32> to vector<8x128xf32>
    %110 = arith.addf %107, %109 : vector<8x128xf32>
    %c0_78 = arith.constant 0 : index
    %c0_79 = arith.constant 0 : index
    %111 = vector.load %arg11[%c0_78, %c0_79] : memref<8x128xf32, #tpu.memory_space<vmem>>, vector<8x128xf32>
    tpu.vector_store %arg11[%c0_78, %c0_79], %110 {strides = array<i32>} : memref<8x128xf32, #tpu.memory_space<vmem>>, vector<8x128xf32>,
    return
  }
  func.func @transform_0(%arg0: i32) -> (i32, i32) {
    %c0_i32 = arith.constant 0 : i32
    %c0_i32_0 = arith.constant 0 : i32
    %c0_i32_1 = arith.constant 0 : i32
    return %c0_i32, %c0_i32_0 : i32, i32
  }
  func.func @transform_1(%arg0: i32) -> (i32, i32, i32) {
    %c0_i32 = arith.constant 0 : i32
    %c0_i32_0 = arith.constant 0 : i32
    %c0_i32_1 = arith.constant 0 : i32
    %c0_i32_2 = arith.constant 0 : i32
    return %c0_i32, %c0_i32_0, %c0_i32_1 : i32, i32, i32
  }
  func.func @transform_2(%arg0: i32) -> (i32, i32, i32) {
    %c0_i32 = arith.constant 0 : i32
    %c0_i32_0 = arith.constant 0 : i32
    %c0_i32_1 = arith.constant 0 : i32
    %c0_i32_2 = arith.constant 0 : i32
    return %c0_i32, %c0_i32_0, %c0_i32_1 : i32, i32, i32
  }
  func.func @transform_3(%arg0: i32) -> (i32, i32) {
    %c0_i32 = arith.constant 0 : i32
    %c0_i32_0 = arith.constant 0 : i32
    %c0_i32_1 = arith.constant 0 : i32
    return %c0_i32, %c0_i32_0 : i32, i32
  }
  func.func @transform_4(%arg0: i32) -> (i32, i32, i32) {
    %c0_i32 = arith.constant 0 : i32
    %c0_i32_0 = arith.constant 0 : i32
    %c0_i32_1 = arith.constant 0 : i32
    %c0_i32_2 = arith.constant 0 : i32
    return %c0_i32, %c0_i32_0, %c0_i32_1 : i32, i32, i32
  }
  func.func @transform_5(%arg0: i32) -> (i32, i32) {
    %c0_i32 = arith.constant 0 : i32
    %c0_i32_0 = arith.constant 0 : i32
    %c0_i32_1 = arith.constant 0 : i32
    return %c0_i32, %c0_i32_0 : i32, i32
  }
  func.func @transform_6(%arg0: i32) -> (i32, i32) {
    %c0_i32 = arith.constant 0 : i32
    %c0_i32_0 = arith.constant 0 : i32
    %c0_i32_1 = arith.constant 0 : i32
    return %c0_i32, %c0_i32_0 : i32, i32
  }
  func.func @transform_7(%arg0: i32) -> (i32, i32) {
    %c0_i32 = arith.constant 0 : i32
    %c0_i32_0 = arith.constant 0 : i32
    %c0_i32_1 = arith.constant 0 : i32
    return %c0_i32, %c0_i32_0 : i32, i32
  }
  func.func @transform_8(%arg0: i32) -> (i32, i32) {
    %c0_i32 = arith.constant 0 : i32
    %c0_i32_0 = arith.constant 0 : i32
    %c0_i32_1 = arith.constant 0 : i32
    return %c0_i32, %c0_i32_0 : i32, i32
  }
  func.func @transform_9(%arg0: i32) -> (i32, i32) {
    %c0_i32 = arith.constant 0 : i32
    %c0_i32_0 = arith.constant 0 : i32
    %c0_i32_1 = arith.constant 0 : i32
    return %c0_i32, %c0_i32_0 : i32, i32
  }
  func.func @transform_10(%arg0: i32) -> (i32, i32) {
    %c0_i32 = arith.constant 0 : i32
    %c0_i32_0 = arith.constant 0 : i32
    %c0_i32_1 = arith.constant 0 : i32
    return %c0_i32, %c0_i32_0 : i32, i32
  }
}

</mosaic_0001>

<llo_original>
// kernel: critic_stack_forward.1
$region0: #{critic_stack_forward.1}
  #allocation0 [shape = 'u32[]', space=smem, size = 0x4, offset = 0x4, fixed_abs, tag = 'smem constant byte address 0x4 - core index']
  #allocation1 [shape = 'u32[144,128]{1,0:T(1,128)}', space=vmem, size = 0x12000, scoped, tag = 'internal scratch']
  %s0 = inlined_call_operand.vmem [shape: f32[4,2048], index: 0, kind: input, shape index: {}]
  %s1 = inlined_call_operand.vmem [shape: f32[9,1,2048], index: 1, kind: input, shape index: {}]
  %s2 = inlined_call_operand.vmem [shape: f32[9,8,4], index: 2, kind: input, shape index: {}]
  %s3 = inlined_call_operand.vmem [shape: f32[8,1], index: 3, kind: input, shape index: {}]
  %s4 = inlined_call_operand.vmem [shape: bf16[8,256,32], index: 4, kind: input, shape index: {}]
  %s5 = inlined_call_operand.vmem [shape: f32[1,32], index: 5, kind: input, shape index: {}]
  %s6 = inlined_call_operand.vmem [shape: bf16[32,32], index: 6, kind: input, shape index: {}]
  %s7 = inlined_call_operand.vmem [shape: f32[1,32], index: 7, kind: input, shape index: {}]
  %s8 = inlined_call_operand.vmem [shape: bf16[32,128], index: 8, kind: input, shape index: {}]
  %s9 = inlined_call_operand.vmem [shape: f32[1,128], index: 9, kind: input, shape index: {}]
  %s10 = inlined_call_operand.vmem [shape: f32[8,128], index: 10, kind: output, shape index: {}]
  %s11 = sld [smem:[#allocation0]]
  $region50: #{critic_stack_forward.1} parent=0
    _
  %s13 = ssub.s32 1, %s11
  %s14 = scalar_select 0, %s13, %s11
  // Predicated region
  $region2: #{critic_stack_forward.1} parent=0 // pred_check
    _
  $region3: #{critic_stack_forward.1} parent=0 // pred_check_branch
    %16 = sbr.rel (0) target = $region5
  $region4: #{critic_stack_forward.1} parent=0 // pred_region
    _
  $region5: #{critic_stack_forward.1} parent=0 // pred_fallthru
    _
  // Predicated region
  $region6: #{critic_stack_forward.1} parent=0 // pred_check
    _
  $region7: #{critic_stack_forward.1} parent=0 // pred_check_branch
    %18 = sbr.rel (0) target = $region9
  $region8: #{critic_stack_forward.1} parent=0 // pred_region
    _
  $region9: #{critic_stack_forward.1} parent=0 // pred_fallthru
    _
  // Predicated region
  $region10: #{critic_stack_forward.1} parent=0 // pred_check
    _
  $region11: #{critic_stack_forward.1} parent=0 // pred_check_branch
    %20 = sbr.rel (0) target = $region13
  $region12: #{critic_stack_forward.1} parent=0 // pred_region
    _
  $region13: #{critic_stack_forward.1} parent=0 // pred_fallthru
    _
  // Predicated region
  $region14: #{critic_stack_forward.1} parent=0 // pred_check
    _
  $region15: #{critic_stack_forward.1} parent=0 // pred_check_branch
    %22 = sbr.rel (0) target = $region17
  $region16: #{critic_stack_forward.1} parent=0 // pred_region
    _
  $region17: #{critic_stack_forward.1} parent=0 // pred_fallthru
    _
  // Predicated region
  $region18: #{critic_stack_forward.1} parent=0 // pred_check
    _
  $region19: #{critic_stack_forward.1} parent=0 // pred_check_branch
    %24 = sbr.rel (0) target = $region21
  $region20: #{critic_stack_forward.1} parent=0 // pred_region
    _
  $region21: #{critic_stack_forward.1} parent=0 // pred_fallthru
    _
  // Predicated region
  $region22: #{critic_stack_forward.1} parent=0 // pred_check
    _
  $region23: #{critic_stack_forward.1} parent=0 // pred_check_branch
    %26 = sbr.rel (0) target = $region25
  $region24: #{critic_stack_forward.1} parent=0 // pred_region
    _
  $region25: #{critic_stack_forward.1} parent=0 // pred_fallthru
    _
  // Predicated region
  $region26: #{critic_stack_forward.1} parent=0 // pred_check
    _
  $region27: #{critic_stack_forward.1} parent=0 // pred_check_branch
    %28 = sbr.rel (0) target = $region29
  $region28: #{critic_stack_forward.1} parent=0 // pred_region
    _
  $region29: #{critic_stack_forward.1} parent=0 // pred_fallthru
    _
  // Predicated region
  $region30: #{critic_stack_forward.1} parent=0 // pred_check
    _
  $region31: #{critic_stack_forward.1} parent=0 // pred_check_branch
    %30 = sbr.rel (0) target = $region33
  $region32: #{critic_stack_forward.1} parent=0 // pred_region
    _
  $region33: #{critic_stack_forward.1} parent=0 // pred_fallthru
    _
  // Predicated region
  $region34: #{critic_stack_forward.1} parent=0 // pred_check
    _
  $region35: #{critic_stack_forward.1} parent=0 // pred_check_branch
    %32 = sbr.rel (0) target = $region37
  $region36: #{critic_stack_forward.1} parent=0 // pred_region
    _
  $region37: #{critic_stack_forward.1} parent=0 // pred_fallthru
    _
  // Predicated region
  $region38: #{critic_stack_forward.1} parent=0 // pred_check
    _
  $region39: #{critic_stack_forward.1} parent=0 // pred_check_branch
    %34 = sbr.rel (0) target = $region41
  $region40: #{critic_stack_forward.1} parent=0 // pred_region
    _
  $region41: #{critic_stack_forward.1} parent=0 // pred_fallthru
    _
  %v36 = vld [vmem:[%s0] sm:$0xff]
  %v37 = vld [vmem:[%s0 + $0x8] sm:$0xff]
  %v38 = vld [vmem:[%s0 + $0x10] sm:$0xff]
  %v39 = vld [vmem:[%s0 + $0x18] sm:$0xff]
  %v40 = vld [vmem:[%s0 + $0x20] sm:$0xff]
  %v41 = vld [vmem:[%s0 + $0x28] sm:$0xff]
  %v42 = vld [vmem:[%s0 + $0x30] sm:$0xff]
  %v43 = vld [vmem:[%s0 + $0x38] sm:$0xff]
  %v52 = vcombine.high %v36, %v36
  %v53 = vcombine.high %v37, %v37
  %v54 = vcombine.high %v38, %v38
  %v55 = vcombine.high %v39, %v39
  %v56 = vcombine.high %v40, %v40
  %v57 = vcombine.high %v41, %v41
  %v58 = vcombine.high %v42, %v42
  %v59 = vcombine.high %v43, %v43
  %68 = vrot.lane.b32.xlu0 %v36, 17
  %v69 = vpop.permute.xlu0 %68
  %70 = vrot.lane.b32.xlu0 %v52, 17
  %v71 = vpop.permute.xlu0 %70
  %72 = vrot.lane.b32.xlu0 %v37, 17
  %v73 = vpop.permute.xlu0 %72
  %74 = vrot.lane.b32.xlu0 %v53, 17
  %v75 = vpop.permute.xlu0 %74
  %76 = vrot.lane.b32.xlu0 %v38, 17
  %v77 = vpop.permute.xlu0 %76
  %78 = vrot.lane.b32.xlu0 %v54, 17
  %v79 = vpop.permute.xlu0 %78
  %80 = vrot.lane.b32.xlu0 %v39, 17
  %v81 = vpop.permute.xlu0 %80
  %82 = vrot.lane.b32.xlu0 %v55, 17
  %v83 = vpop.permute.xlu0 %82
  %84 = vrot.lane.b32.xlu0 %v40, 17
  %v85 = vpop.permute.xlu0 %84
  %86 = vrot.lane.b32.xlu0 %v56, 17
  %v87 = vpop.permute.xlu0 %86
  %88 = vrot.lane.b32.xlu0 %v41, 17
  %v89 = vpop.permute.xlu0 %88
  %90 = vrot.lane.b32.xlu0 %v57, 17
  %v91 = vpop.permute.xlu0 %90
  %92 = vrot.lane.b32.xlu0 %v42, 17
  %v93 = vpop.permute.xlu0 %92
  %94 = vrot.lane.b32.xlu0 %v58, 17
  %v95 = vpop.permute.xlu0 %94
  %96 = vrot.lane.b32.xlu0 %v43, 17
  %v97 = vpop.permute.xlu0 %96
  %98 = vrot.lane.b32.xlu0 %v59, 17
  %v99 = vpop.permute.xlu0 %98
  %v100 = vlaneseq
  %v101 = vand.u32 %v100, 127
  %vm102 = vcmp.lt.s32.totalorder %v101, 17
  %v103 = vsel %vm102, %v97, %v99
  %v104 = vsel %vm102, %v95, %v97
  %v105 = vsel %vm102, %v93, %v95
  %v106 = vsel %vm102, %v91, %v93
  %v107 = vsel %vm102, %v89, %v91
  %v108 = vsel %vm102, %v87, %v89
  %v109 = vsel %vm102, %v85, %v87
  %v110 = vsel %vm102, %v83, %v85
  %v111 = vsel %vm102, %v81, %v83
  %v112 = vsel %vm102, %v79, %v81
  %v113 = vsel %vm102, %v77, %v79
  %v114 = vsel %vm102, %v75, %v77
  %v115 = vsel %vm102, %v73, %v75
  %v116 = vsel %vm102, %v71, %v73
  %v117 = vsel %vm102, %v69, %v71
  %v118 = vsel %vm102, %v99, %v69
  %v119 = vld [vmem:[%s1] sm:$0xff]
  %v120 = vld [vmem:[%s1 + $0x8] sm:$0xff]
  %v123 = vlaneseq
  %v124 = vshrl.u32 %v123, 7
  %v125 = vsub.s32 0, %v124
  %v126 = vrot.slane %v119, %v125
  %v127 = vlaneseq
  %v128 = vshrl.u32 %v127, 7
  %v129 = vsub.s32 1, %v128
  %v130 = vrot.slane %v119, %v129
  %v131 = vlaneseq
  %v132 = vshrl.u32 %v131, 7
  %v133 = vsub.s32 2, %v132
  %v134 = vrot.slane %v119, %v133
  %v135 = vlaneseq
  %v136 = vshrl.u32 %v135, 7
  %v137 = vsub.s32 3, %v136
  %v138 = vrot.slane %v119, %v137
  %v139 = vlaneseq
  %v140 = vshrl.u32 %v139, 7
  %v141 = vsub.s32 4, %v140
  %v142 = vrot.slane %v119, %v141
  %v143 = vlaneseq
  %v144 = vshrl.u32 %v143, 7
  %v145 = vsub.s32 5, %v144
  %v146 = vrot.slane %v119, %v145
  %v147 = vlaneseq
  %v148 = vshrl.u32 %v147, 7
  %v149 = vsub.s32 6, %v148
  %v150 = vrot.slane %v119, %v149
  %v151 = vlaneseq
  %v152 = vshrl.u32 %v151, 7
  %v153 = vsub.s32 7, %v152
  %v154 = vrot.slane %v119, %v153
  %v155 = vlaneseq
  %v156 = vshrl.u32 %v155, 7
  %v157 = vsub.s32 0, %v156
  %v158 = vrot.slane %v120, %v157
  %v159 = vlaneseq
  %v160 = vshrl.u32 %v159, 7
  %v161 = vsub.s32 1, %v160
  %v162 = vrot.slane %v120, %v161
  %v163 = vlaneseq
  %v164 = vshrl.u32 %v163, 7
  %v165 = vsub.s32 2, %v164
  %v166 = vrot.slane %v120, %v165
  %v167 = vlaneseq
  %v168 = vshrl.u32 %v167, 7
  %v169 = vsub.s32 3, %v168
  %v170 = vrot.slane %v120, %v169
  %v171 = vlaneseq
  %v172 = vshrl.u32 %v171, 7
  %v173 = vsub.s32 4, %v172
  %v174 = vrot.slane %v120, %v173
  %v175 = vlaneseq
  %v176 = vshrl.u32 %v175, 7
  %v177 = vsub.s32 5, %v176
  %v178 = vrot.slane %v120, %v177
  %v179 = vlaneseq
  %v180 = vshrl.u32 %v179, 7
  %v181 = vsub.s32 6, %v180
  %v182 = vrot.slane %v120, %v181
  %v183 = vlaneseq
  %v184 = vshrl.u32 %v183, 7
  %v185 = vsub.s32 7, %v184
  %v186 = vrot.slane %v120, %v185
  %v203 = vmul.f32 %v118, %v126
  %v204 = vmul.f32 %v117, %v130
  %v205 = vmul.f32 %v116, %v134
  %v206 = vmul.f32 %v115, %v138
  %v207 = vmul.f32 %v114, %v142
  %v208 = vmul.f32 %v113, %v146
  %v209 = vmul.f32 %v112, %v150
  %v210 = vmul.f32 %v111, %v154
  %v211 = vmul.f32 %v110, %v158
  %v212 = vmul.f32 %v109, %v162
  %v213 = vmul.f32 %v108, %v166
  %v214 = vmul.f32 %v107, %v170
  %v215 = vmul.f32 %v106, %v174
  %v216 = vmul.f32 %v105, %v178
  %v217 = vmul.f32 %v104, %v182
  %v218 = vmul.f32 %v103, %v186
  %v219 = vld [vmem:[%s2] sm:$0xff]
  %220 = vrot.lane.b32.xlu0 %v36, 16
  %v221 = vpop.permute.xlu0 %220
  %222 = vrot.lane.b32.xlu0 %v52, 16
  %v223 = vpop.permute.xlu0 %222
  %224 = vrot.lane.b32.xlu0 %v37, 16
  %v225 = vpop.permute.xlu0 %224
  %226 = vrot.lane.b32.xlu0 %v53, 16
  %v227 = vpop.permute.xlu0 %226
  %228 = vrot.lane.b32.xlu0 %v38, 16
  %v229 = vpop.permute.xlu0 %228
  %230 = vrot.lane.b32.xlu0 %v54, 16
  %v231 = vpop.permute.xlu0 %230
  %232 = vrot.lane.b32.xlu0 %v39, 16
  %v233 = vpop.permute.xlu0 %232
  %234 = vrot.lane.b32.xlu0 %v55, 16
  %v235 = vpop.permute.xlu0 %234
  %236 = vrot.lane.b32.xlu0 %v40, 16
  %v237 = vpop.permute.xlu0 %236
  %238 = vrot.lane.b32.xlu0 %v56, 16
  %v239 = vpop.permute.xlu0 %238
  %240 = vrot.lane.b32.xlu0 %v41, 16
  %v241 = vpop.permute.xlu0 %240
  %242 = vrot.lane.b32.xlu0 %v57, 16
  %v243 = vpop.permute.xlu0 %242
  %244 = vrot.lane.b32.xlu0 %v42, 16
  %v245 = vpop.permute.xlu0 %244
  %246 = vrot.lane.b32.xlu0 %v58, 16
  %v247 = vpop.permute.xlu0 %246
  %248 = vrot.lane.b32.xlu0 %v43, 16
  %v249 = vpop.permute.xlu0 %248
  %250 = vrot.lane.b32.xlu0 %v59, 16
  %v251 = vpop.permute.xlu0 %250
  %vm252 = vcmp.lt.s32.totalorder %v101, 16
  %v253 = vsel %vm252, %v249, %v251
  %v254 = vsel %vm252, %v247, %v249
  %v255 = vsel %vm252, %v245, %v247
  %v256 = vsel %vm252, %v243, %v245
  %v257 = vsel %vm252, %v241, %v243
  %v258 = vsel %vm252, %v239, %v241
  %v259 = vsel %vm252, %v237, %v239
  %v260 = vsel %vm252, %v235, %v237
  %v261 = vsel %vm252, %v233, %v235
  %v262 = vsel %vm252, %v231, %v233
  %v263 = vsel %vm252, %v229, %v231
  %v264 = vsel %vm252, %v227, %v229
  %v265 = vsel %vm252, %v225, %v227
  %v266 = vsel %vm252, %v223, %v225
  %v267 = vsel %vm252, %v221, %v223
  %v268 = vsel %vm252, %v251, %v221
  %s269 = scalar_lea.vmem %s1, 16
  %v270 = vld [vmem:[%s269] sm:$0xff]
  %v271 = vld [vmem:[%s269 + $0x8] sm:$0xff]
  %v274 = vlaneseq
  %v275 = vshrl.u32 %v274, 7
  %v276 = vsub.s32 0, %v275
  %v277 = vrot.slane %v270, %v276
  %v278 = vlaneseq
  %v279 = vshrl.u32 %v278, 7
  %v280 = vsub.s32 1, %v279
  %v281 = vrot.slane %v270, %v280
  %v282 = vlaneseq
  %v283 = vshrl.u32 %v282, 7
  %v284 = vsub.s32 2, %v283
  %v285 = vrot.slane %v270, %v284
  %v286 = vlaneseq
  %v287 = vshrl.u32 %v286, 7
  %v288 = vsub.s32 3, %v287
  %v289 = vrot.slane %v270, %v288
  %v290 = vlaneseq
  %v291 = vshrl.u32 %v290, 7
  %v292 = vsub.s32 4, %v291
  %v293 = vrot.slane %v270, %v292
  %v294 = vlaneseq
  %v295 = vshrl.u32 %v294, 7
  %v296 = vsub.s32 5, %v295
  %v297 = vrot.slane %v270, %v296
  %v298 = vlaneseq
  %v299 = vshrl.u32 %v298, 7
  %v300 = vsub.s32 6, %v299
  %v301 = vrot.slane %v270, %v300
  %v302 = vlaneseq
  %v303 = vshrl.u32 %v302, 7
  %v304 = vsub.s32 7, %v303
  %v305 = vrot.slane %v270, %v304
  %v306 = vlaneseq
  %v307 = vshrl.u32 %v306, 7
  %v308 = vsub.s32 0, %v307
  %v309 = vrot.slane %v271, %v308
  %v310 = vlaneseq
  %v311 = vshrl.u32 %v310, 7
  %v312 = vsub.s32 1, %v311
  %v313 = vrot.slane %v271, %v312
  %v314 = vlaneseq
  %v315 = vshrl.u32 %v314, 7
  %v316 = vsub.s32 2, %v315
  %v317 = vrot.slane %v271, %v316
  %v318 = vlaneseq
  %v319 = vshrl.u32 %v318, 7
  %v320 = vsub.s32 3, %v319
  %v321 = vrot.slane %v271, %v320
  %v322 = vlaneseq
  %v323 = vshrl.u32 %v322, 7
  %v324 = vsub.s32 4, %v323
  %v325 = vrot.slane %v271, %v324
  %v326 = vlaneseq
  %v327 = vshrl.u32 %v326, 7
  %v328 = vsub.s32 5, %v327
  %v329 = vrot.slane %v271, %v328
  %v330 = vlaneseq
  %v331 = vshrl.u32 %v330, 7
  %v332 = vsub.s32 6, %v331
  %v333 = vrot.slane %v271, %v332
  %v334 = vlaneseq
  %v335 = vshrl.u32 %v334, 7
  %v336 = vsub.s32 7, %v335
  %v337 = vrot.slane %v271, %v336
  %v354 = vmul.f32 %v268, %v277
  %v355 = vmul.f32 %v267, %v281
  %v356 = vmul.f32 %v266, %v285
  %v357 = vmul.f32 %v265, %v289
  %v358 = vmul.f32 %v264, %v293
  %v359 = vmul.f32 %v263, %v297
  %v360 = vmul.f32 %v262, %v301
  %v361 = vmul.f32 %v261, %v305
  %v362 = vmul.f32 %v260, %v309
  %v363 = vmul.f32 %v259, %v313
  %v364 = vmul.f32 %v258, %v317
  %v365 = vmul.f32 %v257, %v321
  %v366 = vmul.f32 %v256, %v325
  %v367 = vmul.f32 %v255, %v329
  %v368 = vmul.f32 %v254, %v333
  %v369 = vmul.f32 %v253, %v337
  %s370 = scalar_lea.vmem %s2, 8
  %v371 = vld [vmem:[%s370] sm:$0xff]
  %vm372 = vcmask 31744
  %v374 = vsel %vm372, %v371, 0
  %vm376 = vcmask 1043456
  %v378 = vsel %vm376, %v354, 0
  %v381 = vsel %vm376, %v355, 0
  %v384 = vsel %vm376, %v356, 0
  %v387 = vsel %vm376, %v357, 0
  %v390 = vsel %vm376, %v358, 0
  %v393 = vsel %vm376, %v359, 0
  %v396 = vsel %vm376, %v360, 0
  %v399 = vsel %vm376, %v361, 0
  %v402 = vsel %vm376, %v362, 0
  %v405 = vsel %vm376, %v363, 0
  %v408 = vsel %vm376, %v364, 0
  %v411 = vsel %vm376, %v365, 0
  %v414 = vsel %vm376, %v366, 0
  %v417 = vsel %vm376, %v367, 0
  %v420 = vsel %vm376, %v368, 0
  %v423 = vsel %vm376, %v369, 0
  %425 = vmatprep.subr.mxu0 %v381
  %426 = vmatpush1.msra.mxu0 %v378
  %427 = vmatprep.subr.mxu0 0.0
  %428 = vmatpush1.msra.mxu0 0.0
  %429 = vmatprep.subr.mxu0 0.0
  %430 = vmatpush1.msra.mxu0 0.0
  %431 = vmatprep.subr.mxu0 0.0
  %432 = vmatpush1.msra.mxu0 0.0
  %433 = vmatprep.subr.mxu0 0.0
  %434 = vmatpush1.msra.mxu0 0.0
  %435 = vmatprep.subr.mxu0 0.0
  %436 = vmatpush1.msra.mxu0 0.0
  %437 = vmatprep.subr.mxu0 0.0
  %438 = vmatpush1.msra.mxu0 0.0
  %439 = vmatprep.subr.mxu0 0.0
  %440 = vmatpush1.msra.mxu0 0.0
  %441 = vmatprep.subr.mxu0 0.0
  %442 = vmatpush1.msra.mxu0 0.0
  %443 = vmatprep.subr.mxu0 0.0
  %444 = vmatpush1.msra.mxu0 0.0
  %445 = vmatprep.subr.mxu0 0.0
  %446 = vmatpush1.msra.mxu0 0.0
  %447 = vmatprep.subr.mxu0 0.0
  %448 = vmatpush1.msra.mxu0 0.0
  %449 = vmatprep.subr.mxu0 0.0
  %450 = vmatpush1.msra.mxu0 0.0
  %451 = vmatprep.subr.mxu0 0.0
  %452 = vmatpush1.msra.mxu0 0.0
  %453 = vmatprep.subr.mxu0 0.0
  %454 = vmatpush1.msra.mxu0 0.0
  %455 = vmatprep.subr.mxu0 0.0
  %456 = vmatpush1.msra.mxu0 0.0
  %457 = vmatprep.subr.mxu0 0.0
  %458 = vmatpush1.msra.mxu0 0.0
  %459 = vmatprep.subr.mxu0 0.0
  %460 = vmatpush1.msra.mxu0 0.0
  %461 = vmatprep.subr.mxu0 0.0
  %462 = vmatpush1.msra.mxu0 0.0
  %463 = vmatprep.subr.mxu0 0.0
  %464 = vmatpush1.msra.mxu0 0.0
  %465 = vmatprep.subr.mxu0 0.0
  %466 = vmatpush1.msra.mxu0 0.0
  %467 = vmatprep.subr.mxu0 0.0
  %468 = vmatpush1.msra.mxu0 0.0
  %469 = vmatprep.subr.mxu0 0.0
  %470 = vmatpush1.msra.mxu0 0.0
  %471 = vmatprep.subr.mxu0 0.0
  %472 = vmatpush1.msra.mxu0 0.0
  %473 = vmatprep.subr.mxu0 0.0
  %474 = vmatpush1.msra.mxu0 0.0
  %475 = vmatprep.subr.mxu0 0.0
  %476 = vmatpush1.msra.mxu0 0.0
  %477 = vmatprep.subr.mxu0 0.0
  %478 = vmatpush1.msra.mxu0 0.0
  %479 = vmatprep.subr.mxu0 0.0
  %480 = vmatpush1.msra.mxu0 0.0
  %481 = vmatprep.subr.mxu0 0.0
  %482 = vmatpush1.msra.mxu0 0.0
  %483 = vmatprep.subr.mxu0 0.0
  %484 = vmatpush1.msra.mxu0 0.0
  %485 = vmatprep.subr.mxu0 0.0
  %486 = vmatpush1.msra.mxu0 0.0
  %487 = vmatprep.subr.mxu0 0.0
  %488 = vmatpush1.msra.mxu0 0.0
  %489 = vmatprep.mubr.f32.mxu0 0.0
  %490 = vmatmul.mubr.f32.gmra.mrb[0].mxu0 %v374
  %v491 = vpop.f32.mrb[0].mxu0
  %v492 = vadd.f32 0.0, %v491
  %v493 = vpop.f32.mrb[0].mxu0
  %v494 = vadd.f32 0.0, %v493
  %495 = vdwg.mxu0
  %496 = vmatprep.subr.mxu0 %v387
  %497 = vmatpush1.msra.mxu0 %v384
  %498 = vmatprep.subr.mxu0 0.0
  %499 = vmatpush1.msra.mxu0 0.0
  %500 = vmatprep.subr.mxu0 0.0
  %501 = vmatpush1.msra.mxu0 0.0
  %502 = vmatprep.subr.mxu0 0.0
  %503 = vmatpush1.msra.mxu0 0.0
  %504 = vmatprep.subr.mxu0 0.0
  %505 = vmatpush1.msra.mxu0 0.0
  %506 = vmatprep.subr.mxu0 0.0
  %507 = vmatpush1.msra.mxu0 0.0
  %508 = vmatprep.subr.mxu0 0.0
  %509 = vmatpush1.msra.mxu0 0.0
  %510 = vmatprep.subr.mxu0 0.0
  %511 = vmatpush1.msra.mxu0 0.0
  %512 = vmatprep.subr.mxu0 0.0
  %513 = vmatpush1.msra.mxu0 0.0
  %514 = vmatprep.subr.mxu0 0.0
  %515 = vmatpush1.msra.mxu0 0.0
  %516 = vmatprep.subr.mxu0 0.0
  %517 = vmatpush1.msra.mxu0 0.0
  %518 = vmatprep.subr.mxu0 0.0
  %519 = vmatpush1.msra.mxu0 0.0
  %520 = vmatprep.subr.mxu0 0.0
  %521 = vmatpush1.msra.mxu0 0.0
  %522 = vmatprep.subr.mxu0 0.0
  %523 = vmatpush1.msra.mxu0 0.0
  %524 = vmatprep.subr.mxu0 0.0
  %525 = vmatpush1.msra.mxu0 0.0
  %526 = vmatprep.subr.mxu0 0.0
  %527 = vmatpush1.msra.mxu0 0.0
  %528 = vmatprep.subr.mxu0 0.0
  %529 = vmatpush1.msra.mxu0 0.0
  %530 = vmatprep.subr.mxu0 0.0
  %531 = vmatpush1.msra.mxu0 0.0
  %532 = vmatprep.subr.mxu0 0.0
  %533 = vmatpush1.msra.mxu0 0.0
  %534 = vmatprep.subr.mxu0 0.0
  %535 = vmatpush1.msra.mxu0 0.0
  %536 = vmatprep.subr.mxu0 0.0
  %537 = vmatpush1.msra.mxu0 0.0
  %538 = vmatprep.subr.mxu0 0.0
  %539 = vmatpush1.msra.mxu0 0.0
  %540 = vmatprep.subr.mxu0 0.0
  %541 = vmatpush1.msra.mxu0 0.0
  %542 = vmatprep.subr.mxu0 0.0
  %543 = vmatpush1.msra.mxu0 0.0
  %544 = vmatprep.subr.mxu0 0.0
  %545 = vmatpush1.msra.mxu0 0.0
  %546 = vmatprep.subr.mxu0 0.0
  %547 = vmatpush1.msra.mxu0 0.0
  %548 = vmatprep.subr.mxu0 0.0
  %549 = vmatpush1.msra.mxu0 0.0
  %550 = vmatprep.subr.mxu0 0.0
  %551 = vmatpush1.msra.mxu0 0.0
  %552 = vmatprep.subr.mxu0 0.0
  %553 = vmatpush1.msra.mxu0 0.0
  %554 = vmatprep.subr.mxu0 0.0
  %555 = vmatpush1.msra.mxu0 0.0
  %556 = vmatprep.subr.mxu0 0.0
  %557 = vmatpush1.msra.mxu0 0.0
  %558 = vmatprep.subr.mxu0 0.0
  %559 = vmatpush1.msra.mxu0 0.0
  %560 = vmatprep.mubr.f32.mxu0 0.0
  %561 = vmatmul.mubr.f32.gmra.mrb[0].mxu0 %v374
  %v562 = vpop.f32.mrb[0].mxu0
  %v563 = vadd.f32 0.0, %v562
  %v564 = vpop.f32.mrb[0].mxu0
  %v565 = vadd.f32 0.0, %v564
  %566 = vdwg.mxu0
  %567 = vmatprep.subr.mxu0 %v393
  %568 = vmatpush1.msra.mxu0 %v390
  %569 = vmatprep.subr.mxu0 0.0
  %570 = vmatpush1.msra.mxu0 0.0
  %571 = vmatprep.subr.mxu0 0.0
  %572 = vmatpush1.msra.mxu0 0.0
  %573 = vmatprep.subr.mxu0 0.0
  %574 = vmatpush1.msra.mxu0 0.0
  %575 = vmatprep.subr.mxu0 0.0
  %576 = vmatpush1.msra.mxu0 0.0
  %577 = vmatprep.subr.mxu0 0.0
  %578 = vmatpush1.msra.mxu0 0.0
  %579 = vmatprep.subr.mxu0 0.0
  %580 = vmatpush1.msra.mxu0 0.0
  %581 = vmatprep.subr.mxu0 0.0
  %582 = vmatpush1.msra.mxu0 0.0
  %583 = vmatprep.subr.mxu0 0.0
  %584 = vmatpush1.msra.mxu0 0.0
  %585 = vmatprep.subr.mxu0 0.0
  %586 = vmatpush1.msra.mxu0 0.0
  %587 = vmatprep.subr.mxu0 0.0
  %588 = vmatpush1.msra.mxu0 0.0
  %589 = vmatprep.subr.mxu0 0.0
  %590 = vmatpush1.msra.mxu0 0.0
  %591 = vmatprep.subr.mxu0 0.0
  %592 = vmatpush1.msra.mxu0 0.0
  %593 = vmatprep.subr.mxu0 0.0
  %594 = vmatpush1.msra.mxu0 0.0
  %595 = vmatprep.subr.mxu0 0.0
  %596 = vmatpush1.msra.mxu0 0.0
  %597 = vmatprep.subr.mxu0 0.0
  %598 = vmatpush1.msra.mxu0 0.0
  %599 = vmatprep.subr.mxu0 0.0
  %600 = vmatpush1.msra.mxu0 0.0
  %601 = vmatprep.subr.mxu0 0.0
  %602 = vmatpush1.msra.mxu0 0.0
  %603 = vmatprep.subr.mxu0 0.0
  %604 = vmatpush1.msra.mxu0 0.0
  %605 = vmatprep.subr.mxu0 0.0
  %606 = vmatpush1.msra.mxu0 0.0
  %607 = vmatprep.subr.mxu0 0.0
  %608 = vmatpush1.msra.mxu0 0.0
  %609 = vmatprep.subr.mxu0 0.0
  %610 = vmatpush1.msra.mxu0 0.0
  %611 = vmatprep.subr.mxu0 0.0
  %612 = vmatpush1.msra.mxu0 0.0
  %613 = vmatprep.subr.mxu0 0.0
  %614 = vmatpush1.msra.mxu0 0.0
  %615 = vmatprep.subr.mxu0 0.0
  %616 = vmatpush1.msra.mxu0 0.0
  %617 = vmatprep.subr.mxu0 0.0
  %618 = vmatpush1.msra.mxu0 0.0
  %619 = vmatprep.subr.mxu0 0.0
  %620 = vmatpush1.msra.mxu0 0.0
  %621 = vmatprep.subr.mxu0 0.0
  %622 = vmatpush1.msra.mxu0 0.0
  %623 = vmatprep.subr.mxu0 0.0
  %624 = vmatpush1.msra.mxu0 0.0
  %625 = vmatprep.subr.mxu0 0.0
  %626 = vmatpush1.msra.mxu0 0.0
  %627 = vmatprep.subr.mxu0 0.0
  %628 = vmatpush1.msra.mxu0 0.0
  %629 = vmatprep.subr.mxu0 0.0
  %630 = vmatpush1.msra.mxu0 0.0
  %631 = vmatprep.mubr.f32.mxu0 0.0
  %632 = vmatmul.mubr.f32.gmra.mrb[0].mxu0 %v374
  %v633 = vpop.f32.mrb[0].mxu0
  %v634 = vadd.f32 0.0, %v633
  %v635 = vpop.f32.mrb[0].mxu0
  %v636 = vadd.f32 0.0, %v635
  %637 = vdwg.mxu0
  %638 = vmatprep.subr.mxu0 %v399
  %639 = vmatpush1.msra.mxu0 %v396
  %640 = vmatprep.subr.mxu0 0.0
  %641 = vmatpush1.msra.mxu0 0.0
  %642 = vmatprep.subr.mxu0 0.0
  %643 = vmatpush1.msra.mxu0 0.0
  %644 = vmatprep.subr.mxu0 0.0
  %645 = vmatpush1.msra.mxu0 0.0
  %646 = vmatprep.subr.mxu0 0.0
  %647 = vmatpush1.msra.mxu0 0.0
  %648 = vmatprep.subr.mxu0 0.0
  %649 = vmatpush1.msra.mxu0 0.0
  %650 = vmatprep.subr.mxu0 0.0
  %651 = vmatpush1.msra.mxu0 0.0
  %652 = vmatprep.subr.mxu0 0.0
  %653 = vmatpush1.msra.mxu0 0.0
  %654 = vmatprep.subr.mxu0 0.0
  %655 = vmatpush1.msra.mxu0 0.0
  %656 = vmatprep.subr.mxu0 0.0
  %657 = vmatpush1.msra.mxu0 0.0
  %658 = vmatprep.subr.mxu0 0.0
  %659 = vmatpush1.msra.mxu0 0.0
  %660 = vmatprep.subr.mxu0 0.0
  %661 = vmatpush1.msra.mxu0 0.0
  %662 = vmatprep.subr.mxu0 0.0
  %663 = vmatpush1.msra.mxu0 0.0
  %664 = vmatprep.subr.mxu0 0.0
  %665 = vmatpush1.msra.mxu0 0.0
  %666 = vmatprep.subr.mxu0 0.0
  %667 = vmatpush1.msra.mxu0 0.0
  %668 = vmatprep.subr.mxu0 0.0
  %669 = vmatpush1.msra.mxu0 0.0
  %670 = vmatprep.subr.mxu0 0.0
  %671 = vmatpush1.msra.mxu0 0.0
  %672 = vmatprep.subr.mxu0 0.0
  %673 = vmatpush1.msra.mxu0 0.0
  %674 = vmatprep.subr.mxu0 0.0
  %675 = vmatpush1.msra.mxu0 0.0
  %676 = vmatprep.subr.mxu0 0.0
  %677 = vmatpush1.msra.mxu0 0.0
  %678 = vmatprep.subr.mxu0 0.0
  %679 = vmatpush1.msra.mxu0 0.0
  %680 = vmatprep.subr.mxu0 0.0
  %681 = vmatpush1.msra.mxu0 0.0
  %682 = vmatprep.subr.mxu0 0.0
  %683 = vmatpush1.msra.mxu0 0.0
  %684 = vmatprep.subr.mxu0 0.0
  %685 = vmatpush1.msra.mxu0 0.0
  %686 = vmatprep.subr.mxu0 0.0
  %687 = vmatpush1.msra.mxu0 0.0
  %688 = vmatprep.subr.mxu0 0.0
  %689 = vmatpush1.msra.mxu0 0.0
  %690 = vmatprep.subr.mxu0 0.0
  %691 = vmatpush1.msra.mxu0 0.0
  %692 = vmatprep.subr.mxu0 0.0
  %693 = vmatpush1.msra.mxu0 0.0
  %694 = vmatprep.subr.mxu0 0.0
  %695 = vmatpush1.msra.mxu0 0.0
  %696 = vmatprep.subr.mxu0 0.0
  %697 = vmatpush1.msra.mxu0 0.0
  %698 = vmatprep.subr.mxu0 0.0
  %699 = vmatpush1.msra.mxu0 0.0
  %700 = vmatprep.subr.mxu0 0.0
  %701 = vmatpush1.msra.mxu0 0.0
  %702 = vmatprep.mubr.f32.mxu0 0.0
  %703 = vmatmul.mubr.f32.gmra.mrb[0].mxu0 %v374
  %v704 = vpop.f32.mrb[0].mxu0
  %v705 = vadd.f32 0.0, %v704
  %v706 = vpop.f32.mrb[0].mxu0
  %v707 = vadd.f32 0.0, %v706
  %708 = vdwg.mxu0
  %709 = vmatprep.subr.mxu0 %v405
  %710 = vmatpush1.msra.mxu0 %v402
  %711 = vmatprep.subr.mxu0 0.0
  %712 = vmatpush1.msra.mxu0 0.0
  %713 = vmatprep.subr.mxu0 0.0
  %714 = vmatpush1.msra.mxu0 0.0
  %715 = vmatprep.subr.mxu0 0.0
  %716 = vmatpush1.msra.mxu0 0.0
  %717 = vmatprep.subr.mxu0 0.0
  %718 = vmatpush1.msra.mxu0 0.0
  %719 = vmatprep.subr.mxu0 0.0
  %720 = vmatpush1.msra.mxu0 0.0
  %721 = vmatprep.subr.mxu0 0.0
  %722 = vmatpush1.msra.mxu0 0.0
  %723 = vmatprep.subr.mxu0 0.0
  %724 = vmatpush1.msra.mxu0 0.0
  %725 = vmatprep.subr.mxu0 0.0
  %726 = vmatpush1.msra.mxu0 0.0
  %727 = vmatprep.subr.mxu0 0.0
  %728 = vmatpush1.msra.mxu0 0.0
  %729 = vmatprep.subr.mxu0 0.0
  %730 = vmatpush1.msra.mxu0 0.0
  %731 = vmatprep.subr.mxu0 0.0
  %732 = vmatpush1.msra.mxu0 0.0
  %733 = vmatprep.subr.mxu0 0.0
  %734 = vmatpush1.msra.mxu0 0.0
  %735 = vmatprep.subr.mxu0 0.0
  %736 = vmatpush1.msra.mxu0 0.0
  %737 = vmatprep.subr.mxu0 0.0
  %738 = vmatpush1.msra.mxu0 0.0
  %739 = vmatprep.subr.mxu0 0.0
  %740 = vmatpush1.msra.mxu0 0.0
  %741 = vmatprep.subr.mxu0 0.0
  %742 = vmatpush1.msra.mxu0 0.0
  %743 = vmatprep.subr.mxu0 0.0
  %744 = vmatpush1.msra.mxu0 0.0
  %745 = vmatprep.subr.mxu0 0.0
  %746 = vmatpush1.msra.mxu0 0.0
  %747 = vmatprep.subr.mxu0 0.0
  %748 = vmatpush1.msra.mxu0 0.0
  %749 = vmatprep.subr.mxu0 0.0
  %750 = vmatpush1.msra.mxu0 0.0
  %751 = vmatprep.subr.mxu0 0.0
  %752 = vmatpush1.msra.mxu0 0.0
  %753 = vmatprep.subr.mxu0 0.0
  %754 = vmatpush1.msra.mxu0 0.0
  %755 = vmatprep.subr.mxu0 0.0
  %756 = vmatpush1.msra.mxu0 0.0
  %757 = vmatprep.subr.mxu0 0.0
  %758 = vmatpush1.msra.mxu0 0.0
  %759 = vmatprep.subr.mxu0 0.0
  %760 = vmatpush1.msra.mxu0 0.0
  %761 = vmatprep.subr.mxu0 0.0
  %762 = vmatpush1.msra.mxu0 0.0
  %763 = vmatprep.subr.mxu0 0.0
  %764 = vmatpush1.msra.mxu0 0.0
  %765 = vmatprep.subr.mxu0 0.0
  %766 = vmatpush1.msra.mxu0 0.0
  %767 = vmatprep.subr.mxu0 0.0
  %768 = vmatpush1.msra.mxu0 0.0
  %769 = vmatprep.subr.mxu0 0.0
  %770 = vmatpush1.msra.mxu0 0.0
  %771 = vmatprep.subr.mxu0 0.0
  %772 = vmatpush1.msra.mxu0 0.0
  %773 = vmatprep.mubr.f32.mxu0 0.0
  %774 = vmatmul.mubr.f32.gmra.mrb[0].mxu0 %v374
  %v775 = vpop.f32.mrb[0].mxu0
  %v776 = vadd.f32 0.0, %v775
  %v777 = vpop.f32.mrb[0].mxu0
  %v778 = vadd.f32 0.0, %v777
  %779 = vdwg.mxu0
  %780 = vmatprep.subr.mxu0 %v411
  %781 = vmatpush1.msra.mxu0 %v408
  %782 = vmatprep.subr.mxu0 0.0
  %783 = vmatpush1.msra.mxu0 0.0
  %784 = vmatprep.subr.mxu0 0.0
  %785 = vmatpush1.msra.mxu0 0.0
  %786 = vmatprep.subr.mxu0 0.0
  %787 = vmatpush1.msra.mxu0 0.0
  %788 = vmatprep.subr.mxu0 0.0
  %789 = vmatpush1.msra.mxu0 0.0
  %790 = vmatprep.subr.mxu0 0.0
  %791 = vmatpush1.msra.mxu0 0.0
  %792 = vmatprep.subr.mxu0 0.0
  %793 = vmatpush1.msra.mxu0 0.0
  %794 = vmatprep.subr.mxu0 0.0
  %795 = vmatpush1.msra.mxu0 0.0
  %796 = vmatprep.subr.mxu0 0.0
  %797 = vmatpush1.msra.mxu0 0.0
  %798 = vmatprep.subr.mxu0 0.0
  %799 = vmatpush1.msra.mxu0 0.0
  %800 = vmatprep.subr.mxu0 0.0
  %801 = vmatpush1.msra.mxu0 0.0
  %802 = vmatprep.subr.mxu0 0.0
  %803 = vmatpush1.msra.mxu0 0.0
  %804 = vmatprep.subr.mxu0 0.0
  %805 = vmatpush1.msra.mxu0 0.0
  %806 = vmatprep.subr.mxu0 0.0
  %807 = vmatpush1.msra.mxu0 0.0
  %808 = vmatprep.subr.mxu0 0.0
  %809 = vmatpush1.msra.mxu0 0.0
  %810 = vmatprep.subr.mxu0 0.0
  %811 = vmatpush1.msra.mxu0 0.0
  %812 = vmatprep.subr.mxu0 0.0
  %813 = vmatpush1.msra.mxu0 0.0
  %814 = vmatprep.subr.mxu0 0.0
  %815 = vmatpush1.msra.mxu0 0.0
  %816 = vmatprep.subr.mxu0 0.0
  %817 = vmatpush1.msra.mxu0 0.0
  %818 = vmatprep.subr.mxu0 0.0
  %819 = vmatpush1.msra.mxu0 0.0
  %820 = vmatprep.subr.mxu0 0.0
  %821 = vmatpush1.msra.mxu0 0.0
  %822 = vmatprep.subr.mxu0 0.0
  %823 = vmatpush1.msra.mxu0 0.0
  %824 = vmatprep.subr.mxu0 0.0
  %825 = vmatpush1.msra.mxu0 0.0
  %826 = vmatprep.subr.mxu0 0.0
  %827 = vmatpush1.msra.mxu0 0.0
  %828 = vmatprep.subr.mxu0 0.0
  %829 = vmatpush1.msra.mxu0 0.0
  %830 = vmatprep.subr.mxu0 0.0
  %831 = vmatpush1.msra.mxu0 0.0
  %832 = vmatprep.subr.mxu0 0.0
  %833 = vmatpush1.msra.mxu0 0.0
  %834 = vmatprep.subr.mxu0 0.0
  %835 = vmatpush1.msra.mxu0 0.0
  %836 = vmatprep.subr.mxu0 0.0
  %837 = vmatpush1.msra.mxu0 0.0
  %838 = vmatprep.subr.mxu0 0.0
  %839 = vmatpush1.msra.mxu0 0.0
  %840 = vmatprep.subr.mxu0 0.0
  %841 = vmatpush1.msra.mxu0 0.0
  %842 = vmatprep.subr.mxu0 0.0
  %843 = vmatpush1.msra.mxu0 0.0
  %844 = vmatprep.mubr.f32.mxu0 0.0
  %845 = vmatmul.mubr.f32.gmra.mrb[0].mxu0 %v374
  %v846 = vpop.f32.mrb[0].mxu0
  %v847 = vadd.f32 0.0, %v846
  %v848 = vpop.f32.mrb[0].mxu0
  %v849 = vadd.f32 0.0, %v848
  %850 = vdwg.mxu0
  %851 = vmatprep.subr.mxu0 %v417
  %852 = vmatpush1.msra.mxu0 %v414
  %853 = vmatprep.subr.mxu0 0.0
  %854 = vmatpush1.msra.mxu0 0.0
  %855 = vmatprep.subr.mxu0 0.0
  %856 = vmatpush1.msra.mxu0 0.0
  %857 = vmatprep.subr.mxu0 0.0
  %858 = vmatpush1.msra.mxu0 0.0
  %859 = vmatprep.subr.mxu0 0.0
  %860 = vmatpush1.msra.mxu0 0.0
  %861 = vmatprep.subr.mxu0 0.0
  %862 = vmatpush1.msra.mxu0 0.0
  %863 = vmatprep.subr.mxu0 0.0
  %864 = vmatpush1.msra.mxu0 0.0
  %865 = vmatprep.subr.mxu0 0.0
  %866 = vmatpush1.msra.mxu0 0.0
  %867 = vmatprep.subr.mxu0 0.0
  %868 = vmatpush1.msra.mxu0 0.0
  %869 = vmatprep.subr.mxu0 0.0
  %870 = vmatpush1.msra.mxu0 0.0
  %871 = vmatprep.subr.mxu0 0.0
  %872 = vmatpush1.msra.mxu0 0.0
  %873 = vmatprep.subr.mxu0 0.0
  %874 = vmatpush1.msra.mxu0 0.0
  %875 = vmatprep.subr.mxu0 0.0
  %876 = vmatpush1.msra.mxu0 0.0
  %877 = vmatprep.subr.mxu0 0.0
  %878 = vmatpush1.msra.mxu0 0.0
  %879 = vmatprep.subr.mxu0 0.0
  %880 = vmatpush1.msra.mxu0 0.0
  %881 = vmatprep.subr.mxu0 0.0
  %882 = vmatpush1.msra.mxu0 0.0
  %883 = vmatprep.subr.mxu0 0.0
  %884 = vmatpush1.msra.mxu0 0.0
  %885 = vmatprep.subr.mxu0 0.0
  %886 = vmatpush1.msra.mxu0 0.0
  %887 = vmatprep.subr.mxu0 0.0
  %888 = vmatpush1.msra.mxu0 0.0
  %889 = vmatprep.subr.mxu0 0.0
  %890 = vmatpush1.msra.mxu0 0.0
  %891 = vmatprep.subr.mxu0 0.0
  %892 = vmatpush1.msra.mxu0 0.0
  %893 = vmatprep.subr.mxu0 0.0
  %894 = vmatpush1.msra.mxu0 0.0
  %895 = vmatprep.subr.mxu0 0.0
  %896 = vmatpush1.msra.mxu0 0.0
  %897 = vmatprep.subr.mxu0 0.0
  %898 = vmatpush1.msra.mxu0 0.0
  %899 = vmatprep.subr.mxu0 0.0
  %900 = vmatpush1.msra.mxu0 0.0
  %901 = vmatprep.subr.mxu0 0.0
  %902 = vmatpush1.msra.mxu0 0.0
  %903 = vmatprep.subr.mxu0 0.0
  %904 = vmatpush1.msra.mxu0 0.0
  %905 = vmatprep.subr.mxu0 0.0
  %906 = vmatpush1.msra.mxu0 0.0
  %907 = vmatprep.subr.mxu0 0.0
  %908 = vmatpush1.msra.mxu0 0.0
  %909 = vmatprep.subr.mxu0 0.0
  %910 = vmatpush1.msra.mxu0 0.0
  %911 = vmatprep.subr.mxu0 0.0
  %912 = vmatpush1.msra.mxu0 0.0
  %913 = vmatprep.subr.mxu0 0.0
  %914 = vmatpush1.msra.mxu0 0.0
  %915 = vmatprep.mubr.f32.mxu0 0.0
  %916 = vmatmul.mubr.f32.gmra.mrb[0].mxu0 %v374
  %v917 = vpop.f32.mrb[0].mxu0
  %v918 = vadd.f32 0.0, %v917
  %v919 = vpop.f32.mrb[0].mxu0
  %v920 = vadd.f32 0.0, %v919
  %921 = vdwg.mxu0
  %922 = vmatprep.subr.mxu0 %v423
  %923 = vmatpush1.msra.mxu0 %v420
  %924 = vmatprep.subr.mxu0 0.0
  %925 = vmatpush1.msra.mxu0 0.0
  %926 = vmatprep.subr.mxu0 0.0
  %927 = vmatpush1.msra.mxu0 0.0
  %928 = vmatprep.subr.mxu0 0.0
  %929 = vmatpush1.msra.mxu0 0.0
  %930 = vmatprep.subr.mxu0 0.0
  %931 = vmatpush1.msra.mxu0 0.0
  %932 = vmatprep.subr.mxu0 0.0
  %933 = vmatpush1.msra.mxu0 0.0
  %934 = vmatprep.subr.mxu0 0.0
  %935 = vmatpush1.msra.mxu0 0.0
  %936 = vmatprep.subr.mxu0 0.0
  %937 = vmatpush1.msra.mxu0 0.0
  %938 = vmatprep.subr.mxu0 0.0
  %939 = vmatpush1.msra.mxu0 0.0
  %940 = vmatprep.subr.mxu0 0.0
  %941 = vmatpush1.msra.mxu0 0.0
  %942 = vmatprep.subr.mxu0 0.0
  %943 = vmatpush1.msra.mxu0 0.0
  %944 = vmatprep.subr.mxu0 0.0
  %945 = vmatpush1.msra.mxu0 0.0
  %946 = vmatprep.subr.mxu0 0.0
  %947 = vmatpush1.msra.mxu0 0.0
  %948 = vmatprep.subr.mxu0 0.0
  %949 = vmatpush1.msra.mxu0 0.0
  %950 = vmatprep.subr.mxu0 0.0
  %951 = vmatpush1.msra.mxu0 0.0
  %952 = vmatprep.subr.mxu0 0.0
  %953 = vmatpush1.msra.mxu0 0.0
  %954 = vmatprep.subr.mxu0 0.0
  %955 = vmatpush1.msra.mxu0 0.0
  %956 = vmatprep.subr.mxu0 0.0
  %957 = vmatpush1.msra.mxu0 0.0
  %958 = vmatprep.subr.mxu0 0.0
  %959 = vmatpush1.msra.mxu0 0.0
  %960 = vmatprep.subr.mxu0 0.0
  %961 = vmatpush1.msra.mxu0 0.0
  %962 = vmatprep.subr.mxu0 0.0
  %963 = vmatpush1.msra.mxu0 0.0
  %964 = vmatprep.subr.mxu0 0.0
  %965 = vmatpush1.msra.mxu0 0.0
  %966 = vmatprep.subr.mxu0 0.0
  %967 = vmatpush1.msra.mxu0 0.0
  %968 = vmatprep.subr.mxu0 0.0
  %969 = vmatpush1.msra.mxu0 0.0
  %970 = vmatprep.subr.mxu0 0.0
  %971 = vmatpush1.msra.mxu0 0.0
  %972 = vmatprep.subr.mxu0 0.0
  %973 = vmatpush1.msra.mxu0 0.0
  %974 = vmatprep.subr.mxu0 0.0
  %975 = vmatpush1.msra.mxu0 0.0
  %976 = vmatprep.subr.mxu0 0.0
  %977 = vmatpush1.msra.mxu0 0.0
  %978 = vmatprep.subr.mxu0 0.0
  %979 = vmatpush1.msra.mxu0 0.0
  %980 = vmatprep.subr.mxu0 0.0
  %981 = vmatpush1.msra.mxu0 0.0
  %982 = vmatprep.subr.mxu0 0.0
  %983 = vmatpush1.msra.mxu0 0.0
  %984 = vmatprep.subr.mxu0 0.0
  %985 = vmatpush1.msra.mxu0 0.0
  %986 = vmatprep.mubr.f32.mxu0 0.0
  %987 = vmatmul.mubr.f32.gmra.mrb[0].mxu0 %v374
  %v988 = vpop.f32.mrb[0].mxu0
  %v989 = vadd.f32 0.0, %v988
  %v990 = vpop.f32.mrb[0].mxu0
  %v991 = vadd.f32 0.0, %v990
  %992 = vdwg.mxu0
  %v994 = vsel %vm372, %v219, 0
  %v997 = vsel %vm376, %v203, 0
  %v1000 = vsel %vm376, %v204, 0
  %v1003 = vsel %vm376, %v205, 0
  %v1006 = vsel %vm376, %v206, 0
  %v1009 = vsel %vm376, %v207, 0
  %v1012 = vsel %vm376, %v208, 0
  %v1015 = vsel %vm376, %v209, 0
  %v1018 = vsel %vm376, %v210, 0
  %v1021 = vsel %vm376, %v211, 0
  %v1024 = vsel %vm376, %v212, 0
  %v1027 = vsel %vm376, %v213, 0
  %v1030 = vsel %vm376, %v214, 0
  %v1033 = vsel %vm376, %v215, 0
  %v1036 = vsel %vm376, %v216, 0
  %v1039 = vsel %vm376, %v217, 0
  %v1042 = vsel %vm376, %v218, 0
  %1044 = vmatprep.subr.mxu0 %v1000
  %1045 = vmatpush1.msra.mxu0 %v997
  %1046 = vmatprep.subr.mxu0 0.0
  %1047 = vmatpush1.msra.mxu0 0.0
  %1048 = vmatprep.subr.mxu0 0.0
  %1049 = vmatpush1.msra.mxu0 0.0
  %1050 = vmatprep.subr.mxu0 0.0
  %1051 = vmatpush1.msra.mxu0 0.0
  %1052 = vmatprep.subr.mxu0 0.0
  %1053 = vmatpush1.msra.mxu0 0.0
  %1054 = vmatprep.subr.mxu0 0.0
  %1055 = vmatpush1.msra.mxu0 0.0
  %1056 = vmatprep.subr.mxu0 0.0
  %1057 = vmatpush1.msra.mxu0 0.0
  %1058 = vmatprep.subr.mxu0 0.0
  %1059 = vmatpush1.msra.mxu0 0.0
  %1060 = vmatprep.subr.mxu0 0.0
  %1061 = vmatpush1.msra.mxu0 0.0
  %1062 = vmatprep.subr.mxu0 0.0
  %1063 = vmatpush1.msra.mxu0 0.0
  %1064 = vmatprep.subr.mxu0 0.0
  %1065 = vmatpush1.msra.mxu0 0.0
  %1066 = vmatprep.subr.mxu0 0.0
  %1067 = vmatpush1.msra.mxu0 0.0
  %1068 = vmatprep.subr.mxu0 0.0
  %1069 = vmatpush1.msra.mxu0 0.0
  %1070 = vmatprep.subr.mxu0 0.0
  %1071 = vmatpush1.msra.mxu0 0.0
  %1072 = vmatprep.subr.mxu0 0.0
  %1073 = vmatpush1.msra.mxu0 0.0
  %1074 = vmatprep.subr.mxu0 0.0
  %1075 = vmatpush1.msra.mxu0 0.0
  %1076 = vmatprep.subr.mxu0 0.0
  %1077 = vmatpush1.msra.mxu0 0.0
  %1078 = vmatprep.subr.mxu0 0.0
  %1079 = vmatpush1.msra.mxu0 0.0
  %1080 = vmatprep.subr.mxu0 0.0
  %1081 = vmatpush1.msra.mxu0 0.0
  %1082 = vmatprep.subr.mxu0 0.0
  %1083 = vmatpush1.msra.mxu0 0.0
  %1084 = vmatprep.subr.mxu0 0.0
  %1085 = vmatpush1.msra.mxu0 0.0
  %1086 = vmatprep.subr.mxu0 0.0
  %1087 = vmatpush1.msra.mxu0 0.0
  %1088 = vmatprep.subr.mxu0 0.0
  %1089 = vmatpush1.msra.mxu0 0.0
  %1090 = vmatprep.subr.mxu0 0.0
  %1091 = vmatpush1.msra.mxu0 0.0
  %1092 = vmatprep.subr.mxu0 0.0
  %1093 = vmatpush1.msra.mxu0 0.0
  %1094 = vmatprep.subr.mxu0 0.0
  %1095 = vmatpush1.msra.mxu0 0.0
  %1096 = vmatprep.subr.mxu0 0.0
  %1097 = vmatpush1.msra.mxu0 0.0
  %1098 = vmatprep.subr.mxu0 0.0
  %1099 = vmatpush1.msra.mxu0 0.0
  %1100 = vmatprep.subr.mxu0 0.0
  %1101 = vmatpush1.msra.mxu0 0.0
  %1102 = vmatprep.subr.mxu0 0.0
  %1103 = vmatpush1.msra.mxu0 0.0
  %1104 = vmatprep.subr.mxu0 0.0
  %1105 = vmatpush1.msra.mxu0 0.0
  %1106 = vmatprep.subr.mxu0 0.0
  %1107 = vmatpush1.msra.mxu0 0.0
  %1108 = vmatprep.mubr.f32.mxu0 0.0
  %1109 = vmatmul.mubr.f32.gmra.mrb[0].mxu0 %v994
  %v1110 = vpop.f32.mrb[0].mxu0
  %v1111 = vadd.f32 %v492, %v1110
  %v1112 = vpop.f32.mrb[0].mxu0
  %v1113 = vadd.f32 %v494, %v1112
  %1114 = vdwg.mxu0
  %1115 = vmatprep.subr.mxu0 %v1006
  %1116 = vmatpush1.msra.mxu0 %v1003
  %1117 = vmatprep.subr.mxu0 0.0
  %1118 = vmatpush1.msra.mxu0 0.0
  %1119 = vmatprep.subr.mxu0 0.0
  %1120 = vmatpush1.msra.mxu0 0.0
  %1121 = vmatprep.subr.mxu0 0.0
  %1122 = vmatpush1.msra.mxu0 0.0
  %1123 = vmatprep.subr.mxu0 0.0
  %1124 = vmatpush1.msra.mxu0 0.0
  %1125 = vmatprep.subr.mxu0 0.0
  %1126 = vmatpush1.msra.mxu0 0.0
  %1127 = vmatprep.subr.mxu0 0.0
  %1128 = vmatpush1.msra.mxu0 0.0
  %1129 = vmatprep.subr.mxu0 0.0
  %1130 = vmatpush1.msra.mxu0 0.0
  %1131 = vmatprep.subr.mxu0 0.0
  %1132 = vmatpush1.msra.mxu0 0.0
  %1133 = vmatprep.subr.mxu0 0.0
  %1134 = vmatpush1.msra.mxu0 0.0
  %1135 = vmatprep.subr.mxu0 0.0
  %1136 = vmatpush1.msra.mxu0 0.0
  %1137 = vmatprep.subr.mxu0 0.0
  %1138 = vmatpush1.msra.mxu0 0.0
  %1139 = vmatprep.subr.mxu0 0.0
  %1140 = vmatpush1.msra.mxu0 0.0
  %1141 = vmatprep.subr.mxu0 0.0
  %1142 = vmatpush1.msra.mxu0 0.0
  %1143 = vmatprep.subr.mxu0 0.0
  %1144 = vmatpush1.msra.mxu0 0.0
  %1145 = vmatprep.subr.mxu0 0.0
  %1146 = vmatpush1.msra.mxu0 0.0
  %1147 = vmatprep.subr.mxu0 0.0
  %1148 = vmatpush1.msra.mxu0 0.0
  %1149 = vmatprep.subr.mxu0 0.0
  %1150 = vmatpush1.msra.mxu0 0.0
  %1151 = vmatprep.subr.mxu0 0.0
  %1152 = vmatpush1.msra.mxu0 0.0
  %1153 = vmatprep.subr.mxu0 0.0
  %1154 = vmatpush1.msra.mxu0 0.0
  %1155 = vmatprep.subr.mxu0 0.0
  %1156 = vmatpush1.msra.mxu0 0.0
  %1157 = vmatprep.subr.mxu0 0.0
  %1158 = vmatpush1.msra.mxu0 0.0
  %1159 = vmatprep.subr.mxu0 0.0
  %1160 = vmatpush1.msra.mxu0 0.0
  %1161 = vmatprep.subr.mxu0 0.0
  %1162 = vmatpush1.msra.mxu0 0.0
  %1163 = vmatprep.subr.mxu0 0.0
  %1164 = vmatpush1.msra.mxu0 0.0
  %1165 = vmatprep.subr.mxu0 0.0
  %1166 = vmatpush1.msra.mxu0 0.0
  %1167 = vmatprep.subr.mxu0 0.0
  %1168 = vmatpush1.msra.mxu0 0.0
  %1169 = vmatprep.subr.mxu0 0.0
  %1170 = vmatpush1.msra.mxu0 0.0
  %1171 = vmatprep.subr.mxu0 0.0
  %1172 = vmatpush1.msra.mxu0 0.0
  %1173 = vmatprep.subr.mxu0 0.0
  %1174 = vmatpush1.msra.mxu0 0.0
  %1175 = vmatprep.subr.mxu0 0.0
  %1176 = vmatpush1.msra.mxu0 0.0
  %1177 = vmatprep.subr.mxu0 0.0
  %1178 = vmatpush1.msra.mxu0 0.0
  %1179 = vmatprep.mubr.f32.mxu0 0.0
  %1180 = vmatmul.mubr.f32.gmra.mrb[0].mxu0 %v994
  %v1181 = vpop.f32.mrb[0].mxu0
  %v1182 = vadd.f32 %v563, %v1181
  %v1183 = vpop.f32.mrb[0].mxu0
  %v1184 = vadd.f32 %v565, %v1183
  %1185 = vdwg.mxu0
  %1186 = vmatprep.subr.mxu0 %v1012
  %1187 = vmatpush1.msra.mxu0 %v1009
  %1188 = vmatprep.subr.mxu0 0.0
  %1189 = vmatpush1.msra.mxu0 0.0
  %1190 = vmatprep.subr.mxu0 0.0
  %1191 = vmatpush1.msra.mxu0 0.0
  %1192 = vmatprep.subr.mxu0 0.0
  %1193 = vmatpush1.msra.mxu0 0.0
  %1194 = vmatprep.subr.mxu0 0.0
  %1195 = vmatpush1.msra.mxu0 0.0
  %1196 = vmatprep.subr.mxu0 0.0
  %1197 = vmatpush1.msra.mxu0 0.0
  %1198 = vmatprep.subr.mxu0 0.0
  %1199 = vmatpush1.msra.mxu0 0.0
  %1200 = vmatprep.subr.mxu0 0.0
  %1201 = vmatpush1.msra.mxu0 0.0
  %1202 = vmatprep.subr.mxu0 0.0
  %1203 = vmatpush1.msra.mxu0 0.0
  %1204 = vmatprep.subr.mxu0 0.0
  %1205 = vmatpush1.msra.mxu0 0.0
  %1206 = vmatprep.subr.mxu0 0.0
  %1207 = vmatpush1.msra.mxu0 0.0
  %1208 = vmatprep.subr.mxu0 0.0
  %1209 = vmatpush1.msra.mxu0 0.0
  %1210 = vmatprep.subr.mxu0 0.0
  %1211 = vmatpush1.msra.mxu0 0.0
  %1212 = vmatprep.subr.mxu0 0.0
  %1213 = vmatpush1.msra.mxu0 0.0
  %1214 = vmatprep.subr.mxu0 0.0
  %1215 = vmatpush1.msra.mxu0 0.0
  %1216 = vmatprep.subr.mxu0 0.0
  %1217 = vmatpush1.msra.mxu0 0.0
  %1218 = vmatprep.subr.mxu0 0.0
  %1219 = vmatpush1.msra.mxu0 0.0
  %1220 = vmatprep.subr.mxu0 0.0
  %1221 = vmatpush1.msra.mxu0 0.0
  %1222 = vmatprep.subr.mxu0 0.0
  %1223 = vmatpush1.msra.mxu0 0.0
  %1224 = vmatprep.subr.mxu0 0.0
  %1225 = vmatpush1.msra.mxu0 0.0
  %1226 = vmatprep.subr.mxu0 0.0
  %1227 = vmatpush1.msra.mxu0 0.0
  %1228 = vmatprep.subr.mxu0 0.0
  %1229 = vmatpush1.msra.mxu0 0.0
  %1230 = vmatprep.subr.mxu0 0.0
  %1231 = vmatpush1.msra.mxu0 0.0
  %1232 = vmatprep.subr.mxu0 0.0
  %1233 = vmatpush1.msra.mxu0 0.0
  %1234 = vmatprep.subr.mxu0 0.0
  %1235 = vmatpush1.msra.mxu0 0.0
  %1236 = vmatprep.subr.mxu0 0.0
  %1237 = vmatpush1.msra.mxu0 0.0
  %1238 = vmatprep.subr.mxu0 0.0
  %1239 = vmatpush1.msra.mxu0 0.0
  %1240 = vmatprep.subr.mxu0 0.0
  %1241 = vmatpush1.msra.mxu0 0.0
  %1242 = vmatprep.subr.mxu0 0.0
  %1243 = vmatpush1.msra.mxu0 0.0
  %1244 = vmatprep.subr.mxu0 0.0
  %1245 = vmatpush1.msra.mxu0 0.0
  %1246 = vmatprep.subr.mxu0 0.0
  %1247 = vmatpush1.msra.mxu0 0.0
  %1248 = vmatprep.subr.mxu0 0.0
  %1249 = vmatpush1.msra.mxu0 0.0
  %1250 = vmatprep.mubr.f32.mxu0 0.0
  %1251 = vmatmul.mubr.f32.gmra.mrb[0].mxu0 %v994
  %v1252 = vpop.f32.mrb[0].mxu0
  %v1253 = vadd.f32 %v634, %v1252
  %v1254 = vpop.f32.mrb[0].mxu0
  %v1255 = vadd.f32 %v636, %v1254
  %1256 = vdwg.mxu0
  %1257 = vmatprep.subr.mxu0 %v1018
  %1258 = vmatpush1.msra.mxu0 %v1015
  %1259 = vmatprep.subr.mxu0 0.0
  %1260 = vmatpush1.msra.mxu0 0.0
  %1261 = vmatprep.subr.mxu0 0.0
  %1262 = vmatpush1.msra.mxu0 0.0
  %1263 = vmatprep.subr.mxu0 0.0
  %1264 = vmatpush1.msra.mxu0 0.0
  %1265 = vmatprep.subr.mxu0 0.0
  %1266 = vmatpush1.msra.mxu0 0.0
  %1267 = vmatprep.subr.mxu0 0.0
  %1268 = vmatpush1.msra.mxu0 0.0
  %1269 = vmatprep.subr.mxu0 0.0
  %1270 = vmatpush1.msra.mxu0 0.0
  %1271 = vmatprep.subr.mxu0 0.0
  %1272 = vmatpush1.msra.mxu0 0.0
  %1273 = vmatprep.subr.mxu0 0.0
  %1274 = vmatpush1.msra.mxu0 0.0
  %1275 = vmatprep.subr.mxu0 0.0
  %1276 = vmatpush1.msra.mxu0 0.0
  %1277 = vmatprep.subr.mxu0 0.0
  %1278 = vmatpush1.msra.mxu0 0.0
  %1279 = vmatprep.subr.mxu0 0.0
  %1280 = vmatpush1.msra.mxu0 0.0
  %1281 = vmatprep.subr.mxu0 0.0
  %1282 = vmatpush1.msra.mxu0 0.0
  %1283 = vmatprep.subr.mxu0 0.0
  %1284 = vmatpush1.msra.mxu0 0.0
  %1285 = vmatprep.subr.mxu0 0.0
  %1286 = vmatpush1.msra.mxu0 0.0
  %1287 = vmatprep.subr.mxu0 0.0
  %1288 = vmatpush1.msra.mxu0 0.0
  %1289 = vmatprep.subr.mxu0 0.0
  %1290 = vmatpush1.msra.mxu0 0.0
  %1291 = vmatprep.subr.mxu0 0.0
  %1292 = vmatpush1.msra.mxu0 0.0
  %1293 = vmatprep.subr.mxu0 0.0
  %1294 = vmatpush1.msra.mxu0 0.0
  %1295 = vmatprep.subr.mxu0 0.0
  %1296 = vmatpush1.msra.mxu0 0.0
  %1297 = vmatprep.subr.mxu0 0.0
  %1298 = vmatpush1.msra.mxu0 0.0
  %1299 = vmatprep.subr.mxu0 0.0
  %1300 = vmatpush1.msra.mxu0 0.0
  %1301 = vmatprep.subr.mxu0 0.0
  %1302 = vmatpush1.msra.mxu0 0.0
  %1303 = vmatprep.subr.mxu0 0.0
  %1304 = vmatpush1.msra.mxu0 0.0
  %1305 = vmatprep.subr.mxu0 0.0
  %1306 = vmatpush1.msra.mxu0 0.0
  %1307 = vmatprep.subr.mxu0 0.0
  %1308 = vmatpush1.msra.mxu0 0.0
  %1309 = vmatprep.subr.mxu0 0.0
  %1310 = vmatpush1.msra.mxu0 0.0
  %1311 = vmatprep.subr.mxu0 0.0
  %1312 = vmatpush1.msra.mxu0 0.0
  %1313 = vmatprep.subr.mxu0 0.0
  %1314 = vmatpush1.msra.mxu0 0.0
  %1315 = vmatprep.subr.mxu0 0.0
  %1316 = vmatpush1.msra.mxu0 0.0
  %1317 = vmatprep.subr.mxu0 0.0
  %1318 = vmatpush1.msra.mxu0 0.0
  %1319 = vmatprep.subr.mxu0 0.0
  %1320 = vmatpush1.msra.mxu0 0.0
  %1321 = vmatprep.mubr.f32.mxu0 0.0
  %1322 = vmatmul.mubr.f32.gmra.mrb[0].mxu0 %v994
  %v1323 = vpop.f32.mrb[0].mxu0
  %v1324 = vadd.f32 %v705, %v1323
  %v1325 = vpop.f32.mrb[0].mxu0
  %v1326 = vadd.f32 %v707, %v1325
  %1327 = vdwg.mxu0
  %1328 = vmatprep.subr.mxu0 %v1024
  %1329 = vmatpush1.msra.mxu0 %v1021
  %1330 = vmatprep.subr.mxu0 0.0
  %1331 = vmatpush1.msra.mxu0 0.0
  %1332 = vmatprep.subr.mxu0 0.0
  %1333 = vmatpush1.msra.mxu0 0.0
  %1334 = vmatprep.subr.mxu0 0.0
  %1335 = vmatpush1.msra.mxu0 0.0
  %1336 = vmatprep.subr.mxu0 0.0
  %1337 = vmatpush1.msra.mxu0 0.0
  %1338 = vmatprep.subr.mxu0 0.0
  %1339 = vmatpush1.msra.mxu0 0.0
  %1340 = vmatprep.subr.mxu0 0.0
  %1341 = vmatpush1.msra.mxu0 0.0
  %1342 = vmatprep.subr.mxu0 0.0
  %1343 = vmatpush1.msra.mxu0 0.0
  %1344 = vmatprep.subr.mxu0 0.0
  %1345 = vmatpush1.msra.mxu0 0.0
  %1346 = vmatprep.subr.mxu0 0.0
  %1347 = vmatpush1.msra.mxu0 0.0
  %1348 = vmatprep.subr.mxu0 0.0
  %1349 = vmatpush1.msra.mxu0 0.0
  %1350 = vmatprep.subr.mxu0 0.0
  %1351 = vmatpush1.msra.mxu0 0.0
  %1352 = vmatprep.subr.mxu0 0.0
  %1353 = vmatpush1.msra.mxu0 0.0
  %1354 = vmatprep.subr.mxu0 0.0
  %1355 = vmatpush1.msra.mxu0 0.0
  %1356 = vmatprep.subr.mxu0 0.0
  %1357 = vmatpush1.msra.mxu0 0.0
  %1358 = vmatprep.subr.mxu0 0.0
  %1359 = vmatpush1.msra.mxu0 0.0
  %1360 = vmatprep.subr.mxu0 0.0
  %1361 = vmatpush1.msra.mxu0 0.0
  %1362 = vmatprep.subr.mxu0 0.0
  %1363 = vmatpush1.msra.mxu0 0.0
  %1364 = vmatprep.subr.mxu0 0.0
  %1365 = vmatpush1.msra.mxu0 0.0
  %1366 = vmatprep.subr.mxu0 0.0
  %1367 = vmatpush1.msra.mxu0 0.0
  %1368 = vmatprep.subr.mxu0 0.0
  %1369 = vmatpush1.msra.mxu0 0.0
  %1370 = vmatprep.subr.mxu0 0.0
  %1371 = vmatpush1.msra.mxu0 0.0
  %1372 = vmatprep.subr.mxu0 0.0
  %1373 = vmatpush1.msra.mxu0 0.0
  %1374 = vmatprep.subr.mxu0 0.0
  %1375 = vmatpush1.msra.mxu0 0.0
  %1376 = vmatprep.subr.mxu0 0.0
  %1377 = vmatpush1.msra.mxu0 0.0
  %1378 = vmatprep.subr.mxu0 0.0
  %1379 = vmatpush1.msra.mxu0 0.0
  %1380 = vmatprep.subr.mxu0 0.0
  %1381 = vmatpush1.msra.mxu0 0.0
  %1382 = vmatprep.subr.mxu0 0.0
  %1383 = vmatpush1.msra.mxu0 0.0
  %1384 = vmatprep.subr.mxu0 0.0
  %1385 = vmatpush1.msra.mxu0 0.0
  %1386 = vmatprep.subr.mxu0 0.0
  %1387 = vmatpush1.msra.mxu0 0.0
  %1388 = vmatprep.subr.mxu0 0.0
  %1389 = vmatpush1.msra.mxu0 0.0
  %1390 = vmatprep.subr.mxu0 0.0
  %1391 = vmatpush1.msra.mxu0 0.0
  %1392 = vmatprep.mubr.f32.mxu0 0.0
  %1393 = vmatmul.mubr.f32.gmra.mrb[0].mxu0 %v994
  %v1394 = vpop.f32.mrb[0].mxu0
  %v1395 = vadd.f32 %v776, %v1394
  %v1396 = vpop.f32.mrb[0].mxu0
  %v1397 = vadd.f32 %v778, %v1396
  %1398 = vdwg.mxu0
  %1399 = vmatprep.subr.mxu0 %v1030
  %1400 = vmatpush1.msra.mxu0 %v1027
  %1401 = vmatprep.subr.mxu0 0.0
  %1402 = vmatpush1.msra.mxu0 0.0
  %1403 = vmatprep.subr.mxu0 0.0
  %1404 = vmatpush1.msra.mxu0 0.0
  %1405 = vmatprep.subr.mxu0 0.0
  %1406 = vmatpush1.msra.mxu0 0.0
  %1407 = vmatprep.subr.mxu0 0.0
  %1408 = vmatpush1.msra.mxu0 0.0
  %1409 = vmatprep.subr.mxu0 0.0
  %1410 = vmatpush1.msra.mxu0 0.0
  %1411 = vmatprep.subr.mxu0 0.0
  %1412 = vmatpush1.msra.mxu0 0.0
  %1413 = vmatprep.subr.mxu0 0.0
  %1414 = vmatpush1.msra.mxu0 0.0
  %1415 = vmatprep.subr.mxu0 0.0
  %1416 = vmatpush1.msra.mxu0 0.0
  %1417 = vmatprep.subr.mxu0 0.0
  %1418 = vmatpush1.msra.mxu0 0.0
  %1419 = vmatprep.subr.mxu0 0.0
  %1420 = vmatpush1.msra.mxu0 0.0
  %1421 = vmatprep.subr.mxu0 0.0
  %1422 = vmatpush1.msra.mxu0 0.0
  %1423 = vmatprep.subr.mxu0 0.0
  %1424 = vmatpush1.msra.mxu0 0.0
  %1425 = vmatprep.subr.mxu0 0.0
  %1426 = vmatpush1.msra.mxu0 0.0
  %1427 = vmatprep.subr.mxu0 0.0
  %1428 = vmatpush1.msra.mxu0 0.0
  %1429 = vmatprep.subr.mxu0 0.0
  %1430 = vmatpush1.msra.mxu0 0.0
  %1431 = vmatprep.subr.mxu0 0.0
  %1432 = vmatpush1.msra.mxu0 0.0
  %1433 = vmatprep.subr.mxu0 0.0
  %1434 = vmatpush1.msra.mxu0 0.0
  %1435 = vmatprep.subr.mxu0 0.0
  %1436 = vmatpush1.msra.mxu0 0.0
  %1437 = vmatprep.subr.mxu0 0.0
  %1438 = vmatpush1.msra.mxu0 0.0
  %1439 = vmatprep.subr.mxu0 0.0
  %1440 = vmatpush1.msra.mxu0 0.0
  %1441 = vmatprep.subr.mxu0 0.0
  %1442 = vmatpush1.msra.mxu0 0.0
  %1443 = vmatprep.subr.mxu0 0.0
  %1444 = vmatpush1.msra.mxu0 0.0
  %1445 = vmatprep.subr.mxu0 0.0
  %1446 = vmatpush1.msra.mxu0 0.0
  %1447 = vmatprep.subr.mxu0 0.0
  %1448 = vmatpush1.msra.mxu0 0.0
  %1449 = vmatprep.subr.mxu0 0.0
  %1450 = vmatpush1.msra.mxu0 0.0
  %1451 = vmatprep.subr.mxu0 0.0
  %1452 = vmatpush1.msra.mxu0 0.0
  %1453 = vmatprep.subr.mxu0 0.0
  %1454 = vmatpush1.msra.mxu0 0.0
  %1455 = vmatprep.subr.mxu0 0.0
  %1456 = vmatpush1.msra.mxu0 0.0
  %1457 = vmatprep.subr.mxu0 0.0
  %1458 = vmatpush1.msra.mxu0 0.0
  %1459 = vmatprep.subr.mxu0 0.0
  %1460 = vmatpush1.msra.mxu0 0.0
  %1461 = vmatprep.subr.mxu0 0.0
  %1462 = vmatpush1.msra.mxu0 0.0
  %1463 = vmatprep.mubr.f32.mxu0 0.0
  %1464 = vmatmul.mubr.f32.gmra.mrb[0].mxu0 %v994
  %v1465 = vpop.f32.mrb[0].mxu0
  %v1466 = vadd.f32 %v847, %v1465
  %v1467 = vpop.f32.mrb[0].mxu0
  %v1468 = vadd.f32 %v849, %v1467
  %1469 = vdwg.mxu0
  %1470 = vmatprep.subr.mxu0 %v1036
  %1471 = vmatpush1.msra.mxu0 %v1033
  %1472 = vmatprep.subr.mxu0 0.0
  %1473 = vmatpush1.msra.mxu0 0.0
  %1474 = vmatprep.subr.mxu0 0.0
  %1475 = vmatpush1.msra.mxu0 0.0
  %1476 = vmatprep.subr.mxu0 0.0
  %1477 = vmatpush1.msra.mxu0 0.0
  %1478 = vmatprep.subr.mxu0 0.0
  %1479 = vmatpush1.msra.mxu0 0.0
  %1480 = vmatprep.subr.mxu0 0.0
  %1481 = vmatpush1.msra.mxu0 0.0
  %1482 = vmatprep.subr.mxu0 0.0
  %1483 = vmatpush1.msra.mxu0 0.0
  %1484 = vmatprep.subr.mxu0 0.0
  %1485 = vmatpush1.msra.mxu0 0.0
  %1486 = vmatprep.subr.mxu0 0.0
  %1487 = vmatpush1.msra.mxu0 0.0
  %1488 = vmatprep.subr.mxu0 0.0
  %1489 = vmatpush1.msra.mxu0 0.0
  %1490 = vmatprep.subr.mxu0 0.0
  %1491 = vmatpush1.msra.mxu0 0.0
  %1492 = vmatprep.subr.mxu0 0.0
  %1493 = vmatpush1.msra.mxu0 0.0
  %1494 = vmatprep.subr.mxu0 0.0
  %1495 = vmatpush1.msra.mxu0 0.0
  %1496 = vmatprep.subr.mxu0 0.0
  %1497 = vmatpush1.msra.mxu0 0.0
  %1498 = vmatprep.subr.mxu0 0.0
  %1499 = vmatpush1.msra.mxu0 0.0
  %1500 = vmatprep.subr.mxu0 0.0
  %1501 = vmatpush1.msra.mxu0 0.0
  %1502 = vmatprep.subr.mxu0 0.0
  %1503 = vmatpush1.msra.mxu0 0.0
  %1504 = vmatprep.subr.mxu0 0.0
  %1505 = vmatpush1.msra.mxu0 0.0
  %1506 = vmatprep.subr.mxu0 0.0
  %1507 = vmatpush1.msra.mxu0 0.0
  %1508 = vmatprep.subr.mxu0 0.0
  %1509 = vmatpush1.msra.mxu0 0.0
  %1510 = vmatprep.subr.mxu0 0.0
  %1511 = vmatpush1.msra.mxu0 0.0
  %1512 = vmatprep.subr.mxu0 0.0
  %1513 = vmatpush1.msra.mxu0 0.0
  %1514 = vmatprep.subr.mxu0 0.0
  %1515 = vmatpush1.msra.mxu0 0.0
  %1516 = vmatprep.subr.mxu0 0.0
  %1517 = vmatpush1.msra.mxu0 0.0
  %1518 = vmatprep.subr.mxu0 0.0
  %1519 = vmatpush1.msra.mxu0 0.0
  %1520 = vmatprep.subr.mxu0 0.0
  %1521 = vmatpush1.msra.mxu0 0.0
  %1522 = vmatprep.subr.mxu0 0.0
  %1523 = vmatpush1.msra.mxu0 0.0
  %1524 = vmatprep.subr.mxu0 0.0
  %1525 = vmatpush1.msra.mxu0 0.0
  %1526 = vmatprep.subr.mxu0 0.0
  %1527 = vmatpush1.msra.mxu0 0.0
  %1528 = vmatprep.subr.mxu0 0.0
  %1529 = vmatpush1.msra.mxu0 0.0
  %1530 = vmatprep.subr.mxu0 0.0
  %1531 = vmatpush1.msra.mxu0 0.0
  %1532 = vmatprep.subr.mxu0 0.0
  %1533 = vmatpush1.msra.mxu0 0.0
  %1534 = vmatprep.mubr.f32.mxu0 0.0
  %1535 = vmatmul.mubr.f32.gmra.mrb[0].mxu0 %v994
  %v1536 = vpop.f32.mrb[0].mxu0
  %v1537 = vadd.f32 %v918, %v1536
  %v1538 = vpop.f32.mrb[0].mxu0
  %v1539 = vadd.f32 %v920, %v1538
  %1540 = vdwg.mxu0
  %1541 = vmatprep.subr.mxu0 %v1042
  %1542 = vmatpush1.msra.mxu0 %v1039
  %1543 = vmatprep.subr.mxu0 0.0
  %1544 = vmatpush1.msra.mxu0 0.0
  %1545 = vmatprep.subr.mxu0 0.0
  %1546 = vmatpush1.msra.mxu0 0.0
  %1547 = vmatprep.subr.mxu0 0.0
  %1548 = vmatpush1.msra.mxu0 0.0
  %1549 = vmatprep.subr.mxu0 0.0
  %1550 = vmatpush1.msra.mxu0 0.0
  %1551 = vmatprep.subr.mxu0 0.0
  %1552 = vmatpush1.msra.mxu0 0.0
  %1553 = vmatprep.subr.mxu0 0.0
  %1554 = vmatpush1.msra.mxu0 0.0
  %1555 = vmatprep.subr.mxu0 0.0
  %1556 = vmatpush1.msra.mxu0 0.0
  %1557 = vmatprep.subr.mxu0 0.0
  %1558 = vmatpush1.msra.mxu0 0.0
  %1559 = vmatprep.subr.mxu0 0.0
  %1560 = vmatpush1.msra.mxu0 0.0
  %1561 = vmatprep.subr.mxu0 0.0
  %1562 = vmatpush1.msra.mxu0 0.0
  %1563 = vmatprep.subr.mxu0 0.0
  %1564 = vmatpush1.msra.mxu0 0.0
  %1565 = vmatprep.subr.mxu0 0.0
  %1566 = vmatpush1.msra.mxu0 0.0
  %1567 = vmatprep.subr.mxu0 0.0
  %1568 = vmatpush1.msra.mxu0 0.0
  %1569 = vmatprep.subr.mxu0 0.0
  %1570 = vmatpush1.msra.mxu0 0.0
  %1571 = vmatprep.subr.mxu0 0.0
  %1572 = vmatpush1.msra.mxu0 0.0
  %1573 = vmatprep.subr.mxu0 0.0
  %1574 = vmatpush1.msra.mxu0 0.0
  %1575 = vmatprep.subr.mxu0 0.0
  %1576 = vmatpush1.msra.mxu0 0.0
  %1577 = vmatprep.subr.mxu0 0.0
  %1578 = vmatpush1.msra.mxu0 0.0
  %1579 = vmatprep.subr.mxu0 0.0
  %1580 = vmatpush1.msra.mxu0 0.0
  %1581 = vmatprep.subr.mxu0 0.0
  %1582 = vmatpush1.msra.mxu0 0.0
  %1583 = vmatprep.subr.mxu0 0.0
  %1584 = vmatpush1.msra.mxu0 0.0
  %1585 = vmatprep.subr.mxu0 0.0
  %1586 = vmatpush1.msra.mxu0 0.0
  %1587 = vmatprep.subr.mxu0 0.0
  %1588 = vmatpush1.msra.mxu0 0.0
  %1589 = vmatprep.subr.mxu0 0.0
  %1590 = vmatpush1.msra.mxu0 0.0
  %1591 = vmatprep.subr.mxu0 0.0
  %1592 = vmatpush1.msra.mxu0 0.0
  %1593 = vmatprep.subr.mxu0 0.0
  %1594 = vmatpush1.msra.mxu0 0.0
  %1595 = vmatprep.subr.mxu0 0.0
  %1596 = vmatpush1.msra.mxu0 0.0
  %1597 = vmatprep.subr.mxu0 0.0
  %1598 = vmatpush1.msra.mxu0 0.0
  %1599 = vmatprep.subr.mxu0 0.0
  %1600 = vmatpush1.msra.mxu0 0.0
  %1601 = vmatprep.subr.mxu0 0.0
  %1602 = vmatpush1.msra.mxu0 0.0
  %1603 = vmatprep.subr.mxu0 0.0
  %1604 = vmatpush1.msra.mxu0 0.0
  %1605 = vmatprep.mubr.f32.mxu0 0.0
  %1606 = vmatmul.mubr.f32.gmra.mrb[0].mxu0 %v994
  %v1607 = vpop.f32.mrb[0].mxu0
  %v1608 = vadd.f32 %v989, %v1607
  %v1609 = vpop.f32.mrb[0].mxu0
  %v1610 = vadd.f32 %v991, %v1609
  %1611 = vdwg.mxu0
  %1612 = vrot.lane.b32.xlu0 %v36, 15
  %v1613 = vpop.permute.xlu0 %1612
  %1614 = vrot.lane.b32.xlu0 %v52, 15
  %v1615 = vpop.permute.xlu0 %1614
  %1616 = vrot.lane.b32.xlu0 %v37, 15
  %v1617 = vpop.permute.xlu0 %1616
  %1618 = vrot.lane.b32.xlu0 %v53, 15
  %v1619 = vpop.permute.xlu0 %1618
  %1620 = vrot.lane.b32.xlu0 %v38, 15
  %v1621 = vpop.permute.xlu0 %1620
  %1622 = vrot.lane.b32.xlu0 %v54, 15
  %v1623 = vpop.permute.xlu0 %1622
  %1624 = vrot.lane.b32.xlu0 %v39, 15
  %v1625 = vpop.permute.xlu0 %1624
  %1626 = vrot.lane.b32.xlu0 %v55, 15
  %v1627 = vpop.permute.xlu0 %1626
  %1628 = vrot.lane.b32.xlu0 %v40, 15
  %v1629 = vpop.permute.xlu0 %1628
  %1630 = vrot.lane.b32.xlu0 %v56, 15
  %v1631 = vpop.permute.xlu0 %1630
  %1632 = vrot.lane.b32.xlu0 %v41, 15
  %v1633 = vpop.permute.xlu0 %1632
  %1634 = vrot.lane.b32.xlu0 %v57, 15
  %v1635 = vpop.permute.xlu0 %1634
  %1636 = vrot.lane.b32.xlu0 %v42, 15
  %v1637 = vpop.permute.xlu0 %1636
  %1638 = vrot.lane.b32.xlu0 %v58, 15
  %v1639 = vpop.permute.xlu0 %1638
  %1640 = vrot.lane.b32.xlu0 %v43, 15
  %v1641 = vpop.permute.xlu0 %1640
  %1642 = vrot.lane.b32.xlu0 %v59, 15
  %v1643 = vpop.permute.xlu0 %1642
  %vm1644 = vcmp.lt.s32.totalorder %v101, 15
  %v1645 = vsel %vm1644, %v1641, %v1643
  %v1646 = vsel %vm1644, %v1639, %v1641
  %v1647 = vsel %vm1644, %v1637, %v1639
  %v1648 = vsel %vm1644, %v1635, %v1637
  %v1649 = vsel %vm1644, %v1633, %v1635
  %v1650 = vsel %vm1644, %v1631, %v1633
  %v1651 = vsel %vm1644, %v1629, %v1631
  %v1652 = vsel %vm1644, %v1627, %v1629
  %v1653 = vsel %vm1644, %v1625, %v1627
  %v1654 = vsel %vm1644, %v1623, %v1625
  %v1655 = vsel %vm1644, %v1621, %v1623
  %v1656 = vsel %vm1644, %v1619, %v1621
  %v1657 = vsel %vm1644, %v1617, %v1619
  %v1658 = vsel %vm1644, %v1615, %v1617
  %v1659 = vsel %vm1644, %v1613, %v1615
  %v1660 = vsel %vm1644, %v1643, %v1613
  %s1661 = scalar_lea.vmem %s1, 32
  %v1662 = vld [vmem:[%s1661] sm:$0xff]
  %v1663 = vld [vmem:[%s1661 + $0x8] sm:$0xff]
  %v1666 = vlaneseq
  %v1667 = vshrl.u32 %v1666, 7
  %v1668 = vsub.s32 0, %v1667
  %v1669 = vrot.slane %v1662, %v1668
  %v1670 = vlaneseq
  %v1671 = vshrl.u32 %v1670, 7
  %v1672 = vsub.s32 1, %v1671
  %v1673 = vrot.slane %v1662, %v1672
  %v1674 = vlaneseq
  %v1675 = vshrl.u32 %v1674, 7
  %v1676 = vsub.s32 2, %v1675
  %v1677 = vrot.slane %v1662, %v1676
  %v1678 = vlaneseq
  %v1679 = vshrl.u32 %v1678, 7
  %v1680 = vsub.s32 3, %v1679
  %v1681 = vrot.slane %v1662, %v1680
  %v1682 = vlaneseq
  %v1683 = vshrl.u32 %v1682, 7
  %v1684 = vsub.s32 4, %v1683
  %v1685 = vrot.slane %v1662, %v1684
  %v1686 = vlaneseq
  %v1687 = vshrl.u32 %v1686, 7
  %v1688 = vsub.s32 5, %v1687
  %v1689 = vrot.slane %v1662, %v1688
  %v1690 = vlaneseq
  %v1691 = vshrl.u32 %v1690, 7
  %v1692 = vsub.s32 6, %v1691
  %v1693 = vrot.slane %v1662, %v1692
  %v1694 = vlaneseq
  %v1695 = vshrl.u32 %v1694, 7
  %v1696 = vsub.s32 7, %v1695
  %v1697 = vrot.slane %v1662, %v1696
  %v1698 = vlaneseq
  %v1699 = vshrl.u32 %v1698, 7
  %v1700 = vsub.s32 0, %v1699
  %v1701 = vrot.slane %v1663, %v1700
  %v1702 = vlaneseq
  %v1703 = vshrl.u32 %v1702, 7
  %v1704 = vsub.s32 1, %v1703
  %v1705 = vrot.slane %v1663, %v1704
  %v1706 = vlaneseq
  %v1707 = vshrl.u32 %v1706, 7
  %v1708 = vsub.s32 2, %v1707
  %v1709 = vrot.slane %v1663, %v1708
  %v1710 = vlaneseq
  %v1711 = vshrl.u32 %v1710, 7
  %v1712 = vsub.s32 3, %v1711
  %v1713 = vrot.slane %v1663, %v1712
  %v1714 = vlaneseq
  %v1715 = vshrl.u32 %v1714, 7
  %v1716 = vsub.s32 4, %v1715
  %v1717 = vrot.slane %v1663, %v1716
  %v1718 = vlaneseq
  %v1719 = vshrl.u32 %v1718, 7
  %v1720 = vsub.s32 5, %v1719
  %v1721 = vrot.slane %v1663, %v1720
  %v1722 = vlaneseq
  %v1723 = vshrl.u32 %v1722, 7
  %v1724 = vsub.s32 6, %v1723
  %v1725 = vrot.slane %v1663, %v1724
  %v1726 = vlaneseq
  %v1727 = vshrl.u32 %v1726, 7
  %v1728 = vsub.s32 7, %v1727
  %v1729 = vrot.slane %v1663, %v1728
  %v1746 = vmul.f32 %v1660, %v1669
  %v1747 = vmul.f32 %v1659, %v1673
  %v1748 = vmul.f32 %v1658, %v1677
  %v1749 = vmul.f32 %v1657, %v1681
  %v1750 = vmul.f32 %v1656, %v1685
  %v1751 = vmul.f32 %v1655, %v1689
  %v1752 = vmul.f32 %v1654, %v1693
  %v1753 = vmul.f32 %v1653, %v1697
  %v1754 = vmul.f32 %v1652, %v1701
  %v1755 = vmul.f32 %v1651, %v1705
  %v1756 = vmul.f32 %v1650, %v1709
  %v1757 = vmul.f32 %v1649, %v1713
  %v1758 = vmul.f32 %v1648, %v1717
  %v1759 = vmul.f32 %v1647, %v1721
  %v1760 = vmul.f32 %v1646, %v1725
  %v1761 = vmul.f32 %v1645, %v1729
  %s1762 = scalar_lea.vmem %s2, 16
  %v1763 = vld [vmem:[%s1762] sm:$0xff]
  %v1765 = vsel %vm372, %v1763, 0
  %v1768 = vsel %vm376, %v1746, 0
  %v1771 = vsel %vm376, %v1747, 0
  %v1774 = vsel %vm376, %v1748, 0
  %v1777 = vsel %vm376, %v1749, 0
  %v1780 = vsel %vm376, %v1750, 0
  %v1783 = vsel %vm376, %v1751, 0
  %v1786 = vsel %vm376, %v1752, 0
  %v1789 = vsel %vm376, %v1753, 0
  %v1792 = vsel %vm376, %v1754, 0
  %v1795 = vsel %vm376, %v1755, 0
  %v1798 = vsel %vm376, %v1756, 0
  %v1801 = vsel %vm376, %v1757, 0
  %v1804 = vsel %vm376, %v1758, 0
  %v1807 = vsel %vm376, %v1759, 0
  %v1810 = vsel %vm376, %v1760, 0
  %v1813 = vsel %vm376, %v1761, 0
  %1815 = vmatprep.subr.mxu0 %v1771
  %1816 = vmatpush1.msra.mxu0 %v1768
  %1817 = vmatprep.subr.mxu0 0.0
  %1818 = vmatpush1.msra.mxu0 0.0
  %1819 = vmatprep.subr.mxu0 0.0
  %1820 = vmatpush1.msra.mxu0 0.0
  %1821 = vmatprep.subr.mxu0 0.0
  %1822 = vmatpush1.msra.mxu0 0.0
  %1823 = vmatprep.subr.mxu0 0.0
  %1824 = vmatpush1.msra.mxu0 0.0
  %1825 = vmatprep.subr.mxu0 0.0
  %1826 = vmatpush1.msra.mxu0 0.0
  %1827 = vmatprep.subr.mxu0 0.0
  %1828 = vmatpush1.msra.mxu0 0.0
  %1829 = vmatprep.subr.mxu0 0.0
  %1830 = vmatpush1.msra.mxu0 0.0
  %1831 = vmatprep.subr.mxu0 0.0
  %1832 = vmatpush1.msra.mxu0 0.0
  %1833 = vmatprep.subr.mxu0 0.0
  %1834 = vmatpush1.msra.mxu0 0.0
  %1835 = vmatprep.subr.mxu0 0.0
  %1836 = vmatpush1.msra.mxu0 0.0
  %1837 = vmatprep.subr.mxu0 0.0
  %1838 = vmatpush1.msra.mxu0 0.0
  %1839 = vmatprep.subr.mxu0 0.0
  %1840 = vmatpush1.msra.mxu0 0.0
  %1841 = vmatprep.subr.mxu0 0.0
  %1842 = vmatpush1.msra.mxu0 0.0
  %1843 = vmatprep.subr.mxu0 0.0
  %1844 = vmatpush1.msra.mxu0 0.0
  %1845 = vmatprep.subr.mxu0 0.0
  %1846 = vmatpush1.msra.mxu0 0.0
  %1847 = vmatprep.subr.mxu0 0.0
  %1848 = vmatpush1.msra.mxu0 0.0
  %1849 = vmatprep.subr.mxu0 0.0
  %1850 = vmatpush1.msra.mxu0 0.0
  %1851 = vmatprep.subr.mxu0 0.0
  %1852 = vmatpush1.msra.mxu0 0.0
  %1853 = vmatprep.subr.mxu0 0.0
  %1854 = vmatpush1.msra.mxu0 0.0
  %1855 = vmatprep.subr.mxu0 0.0
  %1856 = vmatpush1.msra.mxu0 0.0
  %1857 = vmatprep.subr.mxu0 0.0
  %1858 = vmatpush1.msra.mxu0 0.0
  %1859 = vmatprep.subr.mxu0 0.0
  %1860 = vmatpush1.msra.mxu0 0.0
  %1861 = vmatprep.subr.mxu0 0.0
  %1862 = vmatpush1.msra.mxu0 0.0
  %1863 = vmatprep.subr.mxu0 0.0
  %1864 = vmatpush1.msra.mxu0 0.0
  %1865 = vmatprep.subr.mxu0 0.0
  %1866 = vmatpush1.msra.mxu0 0.0
  %1867 = vmatprep.subr.mxu0 0.0
  %1868 = vmatpush1.msra.mxu0 0.0
  %1869 = vmatprep.subr.mxu0 0.0
  %1870 = vmatpush1.msra.mxu0 0.0
  %1871 = vmatprep.subr.mxu0 0.0
  %1872 = vmatpush1.msra.mxu0 0.0
  %1873 = vmatprep.subr.mxu0 0.0
  %1874 = vmatpush1.msra.mxu0 0.0
  %1875 = vmatprep.subr.mxu0 0.0
  %1876 = vmatpush1.msra.mxu0 0.0
  %1877 = vmatprep.subr.mxu0 0.0
  %1878 = vmatpush1.msra.mxu0 0.0
  %1879 = vmatprep.mubr.f32.mxu0 0.0
  %1880 = vmatmul.mubr.f32.gmra.mrb[0].mxu0 %v1765
  %v1881 = vpop.f32.mrb[0].mxu0
  %v1882 = vadd.f32 0.0, %v1881
  %v1883 = vpop.f32.mrb[0].mxu0
  %v1884 = vadd.f32 0.0, %v1883
  %1885 = vdwg.mxu0
  %1886 = vmatprep.subr.mxu0 %v1777
  %1887 = vmatpush1.msra.mxu0 %v1774
  %1888 = vmatprep.subr.mxu0 0.0
  %1889 = vmatpush1.msra.mxu0 0.0
  %1890 = vmatprep.subr.mxu0 0.0
  %1891 = vmatpush1.msra.mxu0 0.0
  %1892 = vmatprep.subr.mxu0 0.0
  %1893 = vmatpush1.msra.mxu0 0.0
  %1894 = vmatprep.subr.mxu0 0.0
  %1895 = vmatpush1.msra.mxu0 0.0
  %1896 = vmatprep.subr.mxu0 0.0
  %1897 = vmatpush1.msra.mxu0 0.0
  %1898 = vmatprep.subr.mxu0 0.0
  %1899 = vmatpush1.msra.mxu0 0.0
  %1900 = vmatprep.subr.mxu0 0.0
  %1901 = vmatpush1.msra.mxu0 0.0
  %1902 = vmatprep.subr.mxu0 0.0
  %1903 = vmatpush1.msra.mxu0 0.0
  %1904 = vmatprep.subr.mxu0 0.0
  %1905 = vmatpush1.msra.mxu0 0.0
  %1906 = vmatprep.subr.mxu0 0.0
  %1907 = vmatpush1.msra.mxu0 0.0
  %1908 = vmatprep.subr.mxu0 0.0
  %1909 = vmatpush1.msra.mxu0 0.0
  %1910 = vmatprep.subr.mxu0 0.0
  %1911 = vmatpush1.msra.mxu0 0.0
  %1912 = vmatprep.subr.mxu0 0.0
  %1913 = vmatpush1.msra.mxu0 0.0
  %1914 = vmatprep.subr.mxu0 0.0
  %1915 = vmatpush1.msra.mxu0 0.0
  %1916 = vmatprep.subr.mxu0 0.0
  %1917 = vmatpush1.msra.mxu0 0.0
  %1918 = vmatprep.subr.mxu0 0.0
  %1919 = vmatpush1.msra.mxu0 0.0
  %1920 = vmatprep.subr.mxu0 0.0
  %1921 = vmatpush1.msra.mxu0 0.0
  %1922 = vmatprep.subr.mxu0 0.0
  %1923 = vmatpush1.msra.mxu0 0.0
  %1924 = vmatprep.subr.mxu0 0.0
  %1925 = vmatpush1.msra.mxu0 0.0
  %1926 = vmatprep.subr.mxu0 0.0
  %1927 = vmatpush1.msra.mxu0 0.0
  %1928 = vmatprep.subr.mxu0 0.0
  %1929 = vmatpush1.msra.mxu0 0.0
  %1930 = vmatprep.subr.mxu0 0.0
  %1931 = vmatpush1.msra.mxu0 0.0
  %1932 = vmatprep.subr.mxu0 0.0
  %1933 = vmatpush1.msra.mxu0 0.0
  %1934 = vmatprep.subr.mxu0 0.0
  %1935 = vmatpush1.msra.mxu0 0.0
  %1936 = vmatprep.subr.mxu0 0.0
  %1937 = vmatpush1.msra.mxu0 0.0
  %1938 = vmatprep.subr.mxu0 0.0
  %1939 = vmatpush1.msra.mxu0 0.0
  %1940 = vmatprep.subr.mxu0 0.0
  %1941 = vmatpush1.msra.mxu0 0.0
  %1942 = vmatprep.subr.mxu0 0.0
  %1943 = vmatpush1.msra.mxu0 0.0
  %1944 = vmatprep.subr.mxu0 0.0
  %1945 = vmatpush1.msra.mxu0 0.0
  %1946 = vmatprep.subr.mxu0 0.0
  %1947 = vmatpush1.msra.mxu0 0.0
  %1948 = vmatprep.subr.mxu0 0.0
  %1949 = vmatpush1.msra.mxu0 0.0
  %1950 = vmatprep.mubr.f32.mxu0 0.0
  %1951 = vmatmul.mubr.f32.gmra.mrb[0].mxu0 %v1765
  %v1952 = vpop.f32.mrb[0].mxu0
  %v1953 = vadd.f32 0.0, %v1952
  %v1954 = vpop.f32.mrb[0].mxu0
  %v1955 = vadd.f32 0.0, %v1954
  %1956 = vdwg.mxu0
  %1957 = vmatprep.subr.mxu0 %v1783
  %1958 = vmatpush1.msra.mxu0 %v1780
  %1959 = vmatprep.subr.mxu0 0.0
  %1960 = vmatpush1.msra.mxu0 0.0
  %1961 = vmatprep.subr.mxu0 0.0
  %1962 = vmatpush1.msra.mxu0 0.0
  %1963 = vmatprep.subr.mxu0 0.0
  %1964 = vmatpush1.msra.mxu0 0.0
  %1965 = vmatprep.subr.mxu0 0.0
  %1966 = vmatpush1.msra.mxu0 0.0
  %1967 = vmatprep.subr.mxu0 0.0
  %1968 = vmatpush1.msra.mxu0 0.0
  %1969 = vmatprep.subr.mxu0 0.0
  %1970 = vmatpush1.msra.mxu0 0.0
  %1971 = vmatprep.subr.mxu0 0.0
  %1972 = vmatpush1.msra.mxu0 0.0
  %1973 = vmatprep.subr.mxu0 0.0
  %1974 = vmatpush1.msra.mxu0 0.0
  %1975 = vmatprep.subr.mxu0 0.0
  %1976 = vmatpush1.msra.mxu0 0.0
  %1977 = vmatprep.subr.mxu0 0.0
  %1978 = vmatpush1.msra.mxu0 0.0
  %1979 = vmatprep.subr.mxu0 0.0
  %1980 = vmatpush1.msra.mxu0 0.0
  %1981 = vmatprep.subr.mxu0 0.0
  %1982 = vmatpush1.msra.mxu0 0.0
  %1983 = vmatprep.subr.mxu0 0.0
  %1984 = vmatpush1.msra.mxu0 0.0
  %1985 = vmatprep.subr.mxu0 0.0
  %1986 = vmatpush1.msra.mxu0 0.0
  %1987 = vmatprep.subr.mxu0 0.0
  %1988 = vmatpush1.msra.mxu0 0.0
  %1989 = vmatprep.subr.mxu0 0.0
  %1990 = vmatpush1.msra.mxu0 0.0
  %1991 = vmatprep.subr.mxu0 0.0
  %1992 = vmatpush1.msra.mxu0 0.0
  %1993 = vmatprep.subr.mxu0 0.0
  %1994 = vmatpush1.msra.mxu0 0.0
  %1995 = vmatprep.subr.mxu0 0.0
  %1996 = vmatpush1.msra.mxu0 0.0
  %1997 = vmatprep.subr.mxu0 0.0
  %1998 = vmatpush1.msra.mxu0 0.0
  %1999 = vmatprep.subr.mxu0 0.0
  %2000 = vmatpush1.msra.mxu0 0.0
  %2001 = vmatprep.subr.mxu0 0.0
  %2002 = vmatpush1.msra.mxu0 0.0
  %2003 = vmatprep.subr.mxu0 0.0
  %2004 = vmatpush1.msra.mxu0 0.0
  %2005 = vmatprep.subr.mxu0 0.0
  %2006 = vmatpush1.msra.mxu0 0.0
  %2007 = vmatprep.subr.mxu0 0.0
  %2008 = vmatpush1.msra.mxu0 0.0
  %2009 = vmatprep.subr.mxu0 0.0
  %2010 = vmatpush1.msra.mxu0 0.0
  %2011 = vmatprep.subr.mxu0 0.0
  %2012 = vmatpush1.msra.mxu0 0.0
  %2013 = vmatprep.subr.mxu0 0.0
  %2014 = vmatpush1.msra.mxu0 0.0
  %2015 = vmatprep.subr.mxu0 0.0
  %2016 = vmatpush1.msra.mxu0 0.0
  %2017 = vmatprep.subr.mxu0 0.0
  %2018 = vmatpush1.msra.mxu0 0.0
  %2019 = vmatprep.subr.mxu0 0.0
  %2020 = vmatpush1.msra.mxu0 0.0
  %2021 = vmatprep.mubr.f32.mxu0 0.0
  %2022 = vmatmul.mubr.f32.gmra.mrb[0].mxu0 %v1765
  %v2023 = vpop.f32.mrb[0].mxu0
  %v2024 = vadd.f32 0.0, %v2023
  %v2025 = vpop.f32.mrb[0].mxu0
  %v2026 = vadd.f32 0.0, %v2025
  %2027 = vdwg.mxu0
  %2028 = vmatprep.subr.mxu0 %v1789
  %2029 = vmatpush1.msra.mxu0 %v1786
  %2030 = vmatprep.subr.mxu0 0.0
  %2031 = vmatpush1.msra.mxu0 0.0
  %2032 = vmatprep.subr.mxu0 0.0
  %2033 = vmatpush1.msra.mxu0 0.0
  %2034 = vmatprep.subr.mxu0 0.0
  %2035 = vmatpush1.msra.mxu0 0.0
  %2036 = vmatprep.subr.mxu0 0.0
  %2037 = vmatpush1.msra.mxu0 0.0
  %2038 = vmatprep.subr.mxu0 0.0
  %2039 = vmatpush1.msra.mxu0 0.0
  %2040 = vmatprep.subr.mxu0 0.0
  %2041 = vmatpush1.msra.mxu0 0.0
  %2042 = vmatprep.subr.mxu0 0.0
  %2043 = vmatpush1.msra.mxu0 0.0
  %2044 = vmatprep.subr.mxu0 0.0
  %2045 = vmatpush1.msra.mxu0 0.0
  %2046 = vmatprep.subr.mxu0 0.0
  %2047 = vmatpush1.msra.mxu0 0.0
  %2048 = vmatprep.subr.mxu0 0.0
  %2049 = vmatpush1.msra.mxu0 0.0
  %2050 = vmatprep.subr.mxu0 0.0
  %2051 = vmatpush1.msra.mxu0 0.0
  %2052 = vmatprep.subr.mxu0 0.0
  %2053 = vmatpush1.msra.mxu0 0.0
  %2054 = vmatprep.subr.mxu0 0.0
  %2055 = vmatpush1.msra.mxu0 0.0
  %2056 = vmatprep.subr.mxu0 0.0
  %2057 = vmatpush1.msra.mxu0 0.0
  %2058 = vmatprep.subr.mxu0 0.0
  %2059 = vmatpush1.msra.mxu0 0.0
  %2060 = vmatprep.subr.mxu0 0.0
  %2061 = vmatpush1.msra.mxu0 0.0
  %2062 = vmatprep.subr.mxu0 0.0
  %2063 = vmatpush1.msra.mxu0 0.0
  %2064 = vmatprep.subr.mxu0 0.0
  %2065 = vmatpush1.msra.mxu0 0.0
  %2066 = vmatprep.subr.mxu0 0.0
  %2067 = vmatpush1.msra.mxu0 0.0
  %2068 = vmatprep.subr.mxu0 0.0
  %2069 = vmatpush1.msra.mxu0 0.0
  %2070 = vmatprep.subr.mxu0 0.0
  %2071 = vmatpush1.msra.mxu0 0.0
  %2072 = vmatprep.subr.mxu0 0.0
  %2073 = vmatpush1.msra.mxu0 0.0
  %2074 = vmatprep.subr.mxu0 0.0
  %2075 = vmatpush1.msra.mxu0 0.0
  %2076 = vmatprep.subr.mxu0 0.0
  %2077 = vmatpush1.msra.mxu0 0.0
  %2078 = vmatprep.subr.mxu0 0.0
  %2079 = vmatpush1.msra.mxu0 0.0
  %2080 = vmatprep.subr.mxu0 0.0
  %2081 = vmatpush1.msra.mxu0 0.0
  %2082 = vmatprep.subr.mxu0 0.0
  %2083 = vmatpush1.msra.mxu0 0.0
  %2084 = vmatprep.subr.mxu0 0.0
  %2085 = vmatpush1.msra.mxu0 0.0
  %2086 = vmatprep.subr.mxu0 0.0
  %2087 = vmatpush1.msra.mxu0 0.0
  %2088 = vmatprep.subr.mxu0 0.0
  %2089 = vmatpush1.msra.mxu0 0.0
  %2090 = vmatprep.subr.mxu0 0.0
  %2091 = vmatpush1.msra.mxu0 0.0
  %2092 = vmatprep.mubr.f32.mxu0 0.0
  %2093 = vmatmul.mubr.f32.gmra.mrb[0].mxu0 %v1765
  %v2094 = vpop.f32.mrb[0].mxu0
  %v2095 = vadd.f32 0.0, %v2094
  %v2096 = vpop.f32.mrb[0].mxu0
  %v2097 = vadd.f32 0.0, %v2096
  %2098 = vdwg.mxu0
  %2099 = vmatprep.subr.mxu0 %v1795
  %2100 = vmatpush1.msra.mxu0 %v1792
  %2101 = vmatprep.subr.mxu0 0.0
  %2102 = vmatpush1.msra.mxu0 0.0
  %2103 = vmatprep.subr.mxu0 0.0
  %2104 = vmatpush1.msra.mxu0 0.0
  %2105 = vmatprep.subr.mxu0 0.0
  %2106 = vmatpush1.msra.mxu0 0.0
  %2107 = vmatprep.subr.mxu0 0.0
  %2108 = vmatpush1.msra.mxu0 0.0
  %2109 = vmatprep.subr.mxu0 0.0
  %2110 = vmatpush1.msra.mxu0 0.0
  %2111 = vmatprep.subr.mxu0 0.0
  %2112 = vmatpush1.msra.mxu0 0.0
  %2113 = vmatprep.subr.mxu0 0.0
  %2114 = vmatpush1.msra.mxu0 0.0
  %2115 = vmatprep.subr.mxu0 0.0
  %2116 = vmatpush1.msra.mxu0 0.0
  %2117 = vmatprep.subr.mxu0 0.0
  %2118 = vmatpush1.msra.mxu0 0.0
  %2119 = vmatprep.subr.mxu0 0.0
  %2120 = vmatpush1.msra.mxu0 0.0
  %2121 = vmatprep.subr.mxu0 0.0
  %2122 = vmatpush1.msra.mxu0 0.0
  %2123 = vmatprep.subr.mxu0 0.0
  %2124 = vmatpush1.msra.mxu0 0.0
  %2125 = vmatprep.subr.mxu0 0.0
  %2126 = vmatpush1.msra.mxu0 0.0
  %2127 = vmatprep.subr.mxu0 0.0
  %2128 = vmatpush1.msra.mxu0 0.0
  %2129 = vmatprep.subr.mxu0 0.0
  %2130 = vmatpush1.msra.mxu0 0.0
  %2131 = vmatprep.subr.mxu0 0.0
  %2132 = vmatpush1.msra.mxu0 0.0
  %2133 = vmatprep.subr.mxu0 0.0
  %2134 = vmatpush1.msra.mxu0 0.0
  %2135 = vmatprep.subr.mxu0 0.0
  %2136 = vmatpush1.msra.mxu0 0.0
  %2137 = vmatprep.subr.mxu0 0.0
  %2138 = vmatpush1.msra.mxu0 0.0
  %2139 = vmatprep.subr.mxu0 0.0
  %2140 = vmatpush1.msra.mxu0 0.0
  %2141 = vmatprep.subr.mxu0 0.0
  %2142 = vmatpush1.msra.mxu0 0.0
  %2143 = vmatprep.subr.mxu0 0.0
  %2144 = vmatpush1.msra.mxu0 0.0
  %2145 = vmatprep.subr.mxu0 0.0
  %2146 = vmatpush1.msra.mxu0 0.0
  %2147 = vmatprep.subr.mxu0 0.0
  %2148 = vmatpush1.msra.mxu0 0.0
  %2149 = vmatprep.subr.mxu0 0.0
  %2150 = vmatpush1.msra.mxu0 0.0
  %2151 = vmatprep.subr.mxu0 0.0
  %2152 = vmatpush1.msra.mxu0 0.0
  %2153 = vmatprep.subr.mxu0 0.0
  %2154 = vmatpush1.msra.mxu0 0.0
  %2155 = vmatprep.subr.mxu0 0.0
  %2156 = vmatpush1.msra.mxu0 0.0
  %2157 = vmatprep.subr.mxu0 0.0
  %2158 = vmatpush1.msra.mxu0 0.0
  %2159 = vmatprep.subr.mxu0 0.0
  %2160 = vmatpush1.msra.mxu0 0.0
  %2161 = vmatprep.subr.mxu0 0.0
  %2162 = vmatpush1.msra.mxu0 0.0
  %2163 = vmatprep.mubr.f32.mxu0 0.0
  %2164 = vmatmul.mubr.f32.gmra.mrb[0].mxu0 %v1765
  %v2165 = vpop.f32.mrb[0].mxu0
  %v2166 = vadd.f32 0.0, %v2165
  %v2167 = vpop.f32.mrb[0].mxu0
  %v2168 = vadd.f32 0.0, %v2167
  %2169 = vdwg.mxu0
  %2170 = vmatprep.subr.mxu0 %v1801
  %2171 = vmatpush1.msra.mxu0 %v1798
  %2172 = vmatprep.subr.mxu0 0.0
  %2173 = vmatpush1.msra.mxu0 0.0
  %2174 = vmatprep.subr.mxu0 0.0
  %2175 = vmatpush1.msra.mxu0 0.0
  %2176 = vmatprep.subr.mxu0 0.0
  %2177 = vmatpush1.msra.mxu0 0.0
  %2178 = vmatprep.subr.mxu0 0.0
  %2179 = vmatpush1.msra.mxu0 0.0
  %2180 = vmatprep.subr.mxu0 0.0
  %2181 = vmatpush1.msra.mxu0 0.0
  %2182 = vmatprep.subr.mxu0 0.0
  %2183 = vmatpush1.msra.mxu0 0.0
  %2184 = vmatprep.subr.mxu0 0.0
  %2185 = vmatpush1.msra.mxu0 0.0
  %2186 = vmatprep.subr.mxu0 0.0
  %2187 = vmatpush1.msra.mxu0 0.0
  %2188 = vmatprep.subr.mxu0 0.0
  %2189 = vmatpush1.msra.mxu0 0.0
  %2190 = vmatprep.subr.mxu0 0.0
  %2191 = vmatpush1.msra.mxu0 0.0
  %2192 = vmatprep.subr.mxu0 0.0
  %2193 = vmatpush1.msra.mxu0 0.0
  %2194 = vmatprep.subr.mxu0 0.0
  %2195 = vmatpush1.msra.mxu0 0.0
  %2196 = vmatprep.subr.mxu0 0.0
  %2197 = vmatpush1.msra.mxu0 0.0
  %2198 = vmatprep.subr.mxu0 0.0
  %2199 = vmatpush1.msra.mxu0 0.0
  %2200 = vmatprep.subr.mxu0 0.0
  %2201 = vmatpush1.msra.mxu0 0.0
  %2202 = vmatprep.subr.mxu0 0.0
  %2203 = vmatpush1.msra.mxu0 0.0
  %2204 = vmatprep.subr.mxu0 0.0
  %2205 = vmatpush1.msra.mxu0 0.0
  %2206 = vmatprep.subr.mxu0 0.0
  %2207 = vmatpush1.msra.mxu0 0.0
  %2208 = vmatprep.subr.mxu0 0.0
  %2209 = vmatpush1.msra.mxu0 0.0
  %2210 = vmatprep.subr.mxu0 0.0
  %2211 = vmatpush1.msra.mxu0 0.0
  %2212 = vmatprep.subr.mxu0 0.0
  %2213 = vmatpush1.msra.mxu0 0.0
  %2214 = vmatprep.subr.mxu0 0.0
  %2215 = vmatpush1.msra.mxu0 0.0
  %2216 = vmatprep.subr.mxu0 0.0
  %2217 = vmatpush1.msra.mxu0 0.0
  %2218 = vmatprep.subr.mxu0 0.0
  %2219 = vmatpush1.msra.mxu0 0.0
  %2220 = vmatprep.subr.mxu0 0.0
  %2221 = vmatpush1.msra.mxu0 0.0
  %2222 = vmatprep.subr.mxu0 0.0
  %2223 = vmatpush1.msra.mxu0 0.0
  %2224 = vmatprep.subr.mxu0 0.0
  %2225 = vmatpush1.msra.mxu0 0.0
  %2226 = vmatprep.subr.mxu0 0.0
  %2227 = vmatpush1.msra.mxu0 0.0
  %2228 = vmatprep.subr.mxu0 0.0
  %2229 = vmatpush1.msra.mxu0 0.0
  %2230 = vmatprep.subr.mxu0 0.0
  %2231 = vmatpush1.msra.mxu0 0.0
  %2232 = vmatprep.subr.mxu0 0.0
  %2233 = vmatpush1.msra.mxu0 0.0
  %2234 = vmatprep.mubr.f32.mxu0 0.0
  %2235 = vmatmul.mubr.f32.gmra.mrb[0].mxu0 %v1765
  %v2236 = vpop.f32.mrb[0].mxu0
  %v2237 = vadd.f32 0.0, %v2236
  %v2238 = vpop.f32.mrb[0].mxu0
  %v2239 = vadd.f32 0.0, %v2238
  %2240 = vdwg.mxu0
  %2241 = vmatprep.subr.mxu0 %v1807
  %2242 = vmatpush1.msra.mxu0 %v1804
  %2243 = vmatprep.subr.mxu0 0.0
  %2244 = vmatpush1.msra.mxu0 0.0
  %2245 = vmatprep.subr.mxu0 0.0
  %2246 = vmatpush1.msra.mxu0 0.0
  %2247 = vmatprep.subr.mxu0 0.0
  %2248 = vmatpush1.msra.mxu0 0.0
  %2249 = vmatprep.subr.mxu0 0.0
  %2250 = vmatpush1.msra.mxu0 0.0
  %2251 = vmatprep.subr.mxu0 0.0
  %2252 = vmatpush1.msra.mxu0 0.0
  %2253 = vmatprep.subr.mxu0 0.0
  %2254 = vmatpush1.msra.mxu0 0.0
  %2255 = vmatprep.subr.mxu0 0.0
  %2256 = vmatpush1.msra.mxu0 0.0
  %2257 = vmatprep.subr.mxu0 0.0
  %2258 = vmatpush1.msra.mxu0 0.0
  %2259 = vmatprep.subr.mxu0 0.0
  %2260 = vmatpush1.msra.mxu0 0.0
  %2261 = vmatprep.subr.mxu0 0.0
  %2262 = vmatpush1.msra.mxu0 0.0
  %2263 = vmatprep.subr.mxu0 0.0
  %2264 = vmatpush1.msra.mxu0 0.0
  %2265 = vmatprep.subr.mxu0 0.0
  %2266 = vmatpush1.msra.mxu0 0.0
  %2267 = vmatprep.subr.mxu0 0.0
  %2268 = vmatpush1.msra.mxu0 0.0
  %2269 = vmatprep.subr.mxu0 0.0
  %2270 = vmatpush1.msra.mxu0 0.0
  %2271 = vmatprep.subr.mxu0 0.0
  %2272 = vmatpush1.msra.mxu0 0.0
  %2273 = vmatprep.subr.mxu0 0.0
  %2274 = vmatpush1.msra.mxu0 0.0
  %2275 = vmatprep.subr.mxu0 0.0
  %2276 = vmatpush1.msra.mxu0 0.0
  %2277 = vmatprep.subr.mxu0 0.0
  %2278 = vmatpush1.msra.mxu0 0.0
  %2279 = vmatprep.subr.mxu0 0.0
  %2280 = vmatpush1.msra.mxu0 0.0
  %2281 = vmatprep.subr.mxu0 0.0
  %2282 = vmatpush1.msra.mxu0 0.0
  %2283 = vmatprep.subr.mxu0 0.0
  %2284 = vmatpush1.msra.mxu0 0.0
  %2285 = vmatprep.subr.mxu0 0.0
  %2286 = vmatpush1.msra.mxu0 0.0
  %2287 = vmatprep.subr.mxu0 0.0
  %2288 = vmatpush1.msra.mxu0 0.0
  %2289 = vmatprep.subr.mxu0 0.0
  %2290 = vmatpush1.msra.mxu0 0.0
  %2291 = vmatprep.subr.mxu0 0.0
  %2292 = vmatpush1.msra.mxu0 0.0
  %2293 = vmatprep.subr.mxu0 0.0
  %2294 = vmatpush1.msra.mxu0 0.0
  %2295 = vmatprep.subr.mxu0 0.0
  %2296 = vmatpush1.msra.mxu0 0.0
  %2297 = vmatprep.subr.mxu0 0.0
  %2298 = vmatpush1.msra.mxu0 0.0
  %2299 = vmatprep.subr.mxu0 0.0
  %2300 = vmatpush1.msra.mxu0 0.0
  %2301 = vmatprep.subr.mxu0 0.0
  %2302 = vmatpush1.msra.mxu0 0.0
  %2303 = vmatprep.subr.mxu0 0.0
  %2304 = vmatpush1.msra.mxu0 0.0
  %2305 = vmatprep.mubr.f32.mxu0 0.0
  %2306 = vmatmul.mubr.f32.gmra.mrb[0].mxu0 %v1765
  %v2307 = vpop.f32.mrb[0].mxu0
  %v2308 = vadd.f32 0.0, %v2307
  %v2309 = vpop.f32.mrb[0].mxu0
  %v2310 = vadd.f32 0.0, %v2309
  %2311 = vdwg.mxu0
  %2312 = vmatprep.subr.mxu0 %v1813
  %2313 = vmatpush1.msra.mxu0 %v1810
  %2314 = vmatprep.subr.mxu0 0.0
  %2315 = vmatpush1.msra.mxu0 0.0
  %2316 = vmatprep.subr.mxu0 0.0
  %2317 = vmatpush1.msra.mxu0 0.0
  %2318 = vmatprep.subr.mxu0 0.0
  %2319 = vmatpush1.msra.mxu0 0.0
  %2320 = vmatprep.subr.mxu0 0.0
  %2321 = vmatpush1.msra.mxu0 0.0
  %2322 = vmatprep.subr.mxu0 0.0
  %2323 = vmatpush1.msra.mxu0 0.0
  %2324 = vmatprep.subr.mxu0 0.0
  %2325 = vmatpush1.msra.mxu0 0.0
  %2326 = vmatprep.subr.mxu0 0.0
  %2327 = vmatpush1.msra.mxu0 0.0
  %2328 = vmatprep.subr.mxu0 0.0
  %2329 = vmatpush1.msra.mxu0 0.0
  %2330 = vmatprep.subr.mxu0 0.0
  %2331 = vmatpush1.msra.mxu0 0.0
  %2332 = vmatprep.subr.mxu0 0.0
  %2333 = vmatpush1.msra.mxu0 0.0
  %2334 = vmatprep.subr.mxu0 0.0
  %2335 = vmatpush1.msra.mxu0 0.0
  %2336 = vmatprep.subr.mxu0 0.0
  %2337 = vmatpush1.msra.mxu0 0.0
  %2338 = vmatprep.subr.mxu0 0.0
  %2339 = vmatpush1.msra.mxu0 0.0
  %2340 = vmatprep.subr.mxu0 0.0
  %2341 = vmatpush1.msra.mxu0 0.0
  %2342 = vmatprep.subr.mxu0 0.0
  %2343 = vmatpush1.msra.mxu0 0.0
  %2344 = vmatprep.subr.mxu0 0.0
  %2345 = vmatpush1.msra.mxu0 0.0
  %2346 = vmatprep.subr.mxu0 0.0
  %2347 = vmatpush1.msra.mxu0 0.0
  %2348 = vmatprep.subr.mxu0 0.0
  %2349 = vmatpush1.msra.mxu0 0.0
  %2350 = vmatprep.subr.mxu0 0.0
  %2351 = vmatpush1.msra.mxu0 0.0
  %2352 = vmatprep.subr.mxu0 0.0
  %2353 = vmatpush1.msra.mxu0 0.0
  %2354 = vmatprep.subr.mxu0 0.0
  %2355 = vmatpush1.msra.mxu0 0.0
  %2356 = vmatprep.subr.mxu0 0.0
  %2357 = vmatpush1.msra.mxu0 0.0
  %2358 = vmatprep.subr.mxu0 0.0
  %2359 = vmatpush1.msra.mxu0 0.0
  %2360 = vmatprep.subr.mxu0 0.0
  %2361 = vmatpush1.msra.mxu0 0.0
  %2362 = vmatprep.subr.mxu0 0.0
  %2363 = vmatpush1.msra.mxu0 0.0
  %2364 = vmatprep.subr.mxu0 0.0
  %2365 = vmatpush1.msra.mxu0 0.0
  %2366 = vmatprep.subr.mxu0 0.0
  %2367 = vmatpush1.msra.mxu0 0.0
  %2368 = vmatprep.subr.mxu0 0.0
  %2369 = vmatpush1.msra.mxu0 0.0
  %2370 = vmatprep.subr.mxu0 0.0
  %2371 = vmatpush1.msra.mxu0 0.0
  %2372 = vmatprep.subr.mxu0 0.0
  %2373 = vmatpush1.msra.mxu0 0.0
  %2374 = vmatprep.subr.mxu0 0.0
  %2375 = vmatpush1.msra.mxu0 0.0
  %2376 = vmatprep.mubr.f32.mxu0 0.0
  %2377 = vmatmul.mubr.f32.gmra.mrb[0].mxu0 %v1765
  %v2378 = vpop.f32.mrb[0].mxu0
  %v2379 = vadd.f32 0.0, %v2378
  %v2380 = vpop.f32.mrb[0].mxu0
  %v2381 = vadd.f32 0.0, %v2380
  %2382 = vdwg.mxu0
  %v2383 = vadd.f32 %v1111, %v1882
  %v2384 = vadd.f32 %v1113, %v1884
  %v2385 = vadd.f32 %v1182, %v1953
  %v2386 = vadd.f32 %v1184, %v1955
  %v2387 = vadd.f32 %v1253, %v2024
  %v2388 = vadd.f32 %v1255, %v2026
  %v2389 = vadd.f32 %v1324, %v2095
  %v2390 = vadd.f32 %v1326, %v2097
  %v2391 = vadd.f32 %v1395, %v2166
  %v2392 = vadd.f32 %v1397, %v2168
  %v2393 = vadd.f32 %v1466, %v2237
  %v2394 = vadd.f32 %v1468, %v2239
  %v2395 = vadd.f32 %v1537, %v2308
  %v2396 = vadd.f32 %v1539, %v2310
  %v2397 = vadd.f32 %v1608, %v2379
  %v2398 = vadd.f32 %v1610, %v2381
  %2399 = vrot.lane.b32.xlu0 %v36, 1
  %v2400 = vpop.permute.xlu0 %2399
  %2401 = vrot.lane.b32.xlu0 %v52, 1
  %v2402 = vpop.permute.xlu0 %2401
  %2403 = vrot.lane.b32.xlu0 %v37, 1
  %v2404 = vpop.permute.xlu0 %2403
  %2405 = vrot.lane.b32.xlu0 %v53, 1
  %v2406 = vpop.permute.xlu0 %2405
  %2407 = vrot.lane.b32.xlu0 %v38, 1
  %v2408 = vpop.permute.xlu0 %2407
  %2409 = vrot.lane.b32.xlu0 %v54, 1
  %v2410 = vpop.permute.xlu0 %2409
  %2411 = vrot.lane.b32.xlu0 %v39, 1
  %v2412 = vpop.permute.xlu0 %2411
  %2413 = vrot.lane.b32.xlu0 %v55, 1
  %v2414 = vpop.permute.xlu0 %2413
  %2415 = vrot.lane.b32.xlu0 %v40, 1
  %v2416 = vpop.permute.xlu0 %2415
  %2417 = vrot.lane.b32.xlu0 %v56, 1
  %v2418 = vpop.permute.xlu0 %2417
  %2419 = vrot.lane.b32.xlu0 %v41, 1
  %v2420 = vpop.permute.xlu0 %2419
  %2421 = vrot.lane.b32.xlu0 %v57, 1
  %v2422 = vpop.permute.xlu0 %2421
  %2423 = vrot.lane.b32.xlu0 %v42, 1
  %v2424 = vpop.permute.xlu0 %2423
  %2425 = vrot.lane.b32.xlu0 %v58, 1
  %v2426 = vpop.permute.xlu0 %2425
  %2427 = vrot.lane.b32.xlu0 %v43, 1
  %v2428 = vpop.permute.xlu0 %2427
  %2429 = vrot.lane.b32.xlu0 %v59, 1
  %v2430 = vpop.permute.xlu0 %2429
  %vm2431 = vcmp.lt.s32.totalorder %v101, 1
  %v2432 = vsel %vm2431, %v2428, %v2430
  %v2433 = vsel %vm2431, %v2426, %v2428
  %v2434 = vsel %vm2431, %v2424, %v2426
  %v2435 = vsel %vm2431, %v2422, %v2424
  %v2436 = vsel %vm2431, %v2420, %v2422
  %v2437 = vsel %vm2431, %v2418, %v2420
  %v2438 = vsel %vm2431, %v2416, %v2418
  %v2439 = vsel %vm2431, %v2414, %v2416
  %v2440 = vsel %vm2431, %v2412, %v2414
  %v2441 = vsel %vm2431, %v2410, %v2412
  %v2442 = vsel %vm2431, %v2408, %v2410
  %v2443 = vsel %vm2431, %v2406, %v2408
  %v2444 = vsel %vm2431, %v2404, %v2406
  %v2445 = vsel %vm2431, %v2402, %v2404
  %v2446 = vsel %vm2431, %v2400, %v2402
  %v2447 = vsel %vm2431, %v2430, %v2400
  %s2448 = scalar_lea.vmem %s1, 48
  %v2449 = vld [vmem:[%s2448] sm:$0xff]
  %v2450 = vld [vmem:[%s2448 + $0x8] sm:$0xff]
  %v2453 = vlaneseq
  %v2454 = vshrl.u32 %v2453, 7
  %v2455 = vsub.s32 0, %v2454
  %v2456 = vrot.slane %v2449, %v2455
  %v2457 = vlaneseq
  %v2458 = vshrl.u32 %v2457, 7
  %v2459 = vsub.s32 1, %v2458
  %v2460 = vrot.slane %v2449, %v2459
  %v2461 = vlaneseq
  %v2462 = vshrl.u32 %v2461, 7
  %v2463 = vsub.s32 2, %v2462
  %v2464 = vrot.slane %v2449, %v2463
  %v2465 = vlaneseq
  %v2466 = vshrl.u32 %v2465, 7
  %v2467 = vsub.s32 3, %v2466
  %v2468 = vrot.slane %v2449, %v2467
  %v2469 = vlaneseq
  %v2470 = vshrl.u32 %v2469, 7
  %v2471 = vsub.s32 4, %v2470
  %v2472 = vrot.slane %v2449, %v2471
  %v2473 = vlaneseq
  %v2474 = vshrl.u32 %v2473, 7
  %v2475 = vsub.s32 5, %v2474
  %v2476 = vrot.slane %v2449, %v2475
  %v2477 = vlaneseq
  %v2478 = vshrl.u32 %v2477, 7
  %v2479 = vsub.s32 6, %v2478
  %v2480 = vrot.slane %v2449, %v2479
  %v2481 = vlaneseq
  %v2482 = vshrl.u32 %v2481, 7
  %v2483 = vsub.s32 7, %v2482
  %v2484 = vrot.slane %v2449, %v2483
  %v2485 = vlaneseq
  %v2486 = vshrl.u32 %v2485, 7
  %v2487 = vsub.s32 0, %v2486
  %v2488 = vrot.slane %v2450, %v2487
  %v2489 = vlaneseq
  %v2490 = vshrl.u32 %v2489, 7
  %v2491 = vsub.s32 1, %v2490
  %v2492 = vrot.slane %v2450, %v2491
  %v2493 = vlaneseq
  %v2494 = vshrl.u32 %v2493, 7
  %v2495 = vsub.s32 2, %v2494
  %v2496 = vrot.slane %v2450, %v2495
  %v2497 = vlaneseq
  %v2498 = vshrl.u32 %v2497, 7
  %v2499 = vsub.s32 3, %v2498
  %v2500 = vrot.slane %v2450, %v2499
  %v2501 = vlaneseq
  %v2502 = vshrl.u32 %v2501, 7
  %v2503 = vsub.s32 4, %v2502
  %v2504 = vrot.slane %v2450, %v2503
  %v2505 = vlaneseq
  %v2506 = vshrl.u32 %v2505, 7
  %v2507 = vsub.s32 5, %v2506
  %v2508 = vrot.slane %v2450, %v2507
  %v2509 = vlaneseq
  %v2510 = vshrl.u32 %v2509, 7
  %v2511 = vsub.s32 6, %v2510
  %v2512 = vrot.slane %v2450, %v2511
  %v2513 = vlaneseq
  %v2514 = vshrl.u32 %v2513, 7
  %v2515 = vsub.s32 7, %v2514
  %v2516 = vrot.slane %v2450, %v2515
  %v2533 = vmul.f32 %v2447, %v2456
  %v2534 = vmul.f32 %v2446, %v2460
  %v2535 = vmul.f32 %v2445, %v2464
  %v2536 = vmul.f32 %v2444, %v2468
  %v2537 = vmul.f32 %v2443, %v2472
  %v2538 = vmul.f32 %v2442, %v2476
  %v2539 = vmul.f32 %v2441, %v2480
  %v2540 = vmul.f32 %v2440, %v2484
  %v2541 = vmul.f32 %v2439, %v2488
  %v2542 = vmul.f32 %v2438, %v2492
  %v2543 = vmul.f32 %v2437, %v2496
  %v2544 = vmul.f32 %v2436, %v2500
  %v2545 = vmul.f32 %v2435, %v2504
  %v2546 = vmul.f32 %v2434, %v2508
  %v2547 = vmul.f32 %v2433, %v2512
  %v2548 = vmul.f32 %v2432, %v2516
  %s2549 = scalar_lea.vmem %s2, 24
  %v2550 = vld [vmem:[%s2549] sm:$0xff]
  %v2552 = vsel %vm372, %v2550, 0
  %v2555 = vsel %vm376, %v2533, 0
  %v2558 = vsel %vm376, %v2534, 0
  %v2561 = vsel %vm376, %v2535, 0
  %v2564 = vsel %vm376, %v2536, 0
  %v2567 = vsel %vm376, %v2537, 0
  %v2570 = vsel %vm376, %v2538, 0
  %v2573 = vsel %vm376, %v2539, 0
  %v2576 = vsel %vm376, %v2540, 0
  %v2579 = vsel %vm376, %v2541, 0
  %v2582 = vsel %vm376, %v2542, 0
  %v2585 = vsel %vm376, %v2543, 0
  %v2588 = vsel %vm376, %v2544, 0
  %v2591 = vsel %vm376, %v2545, 0
  %v2594 = vsel %vm376, %v2546, 0
  %v2597 = vsel %vm376, %v2547, 0
  %v2600 = vsel %vm376, %v2548, 0
  %2602 = vmatprep.subr.mxu0 %v2558
  %2603 = vmatpush1.msra.mxu0 %v2555
  %2604 = vmatprep.subr.mxu0 0.0
  %2605 = vmatpush1.msra.mxu0 0.0
  %2606 = vmatprep.subr.mxu0 0.0
  %2607 = vmatpush1.msra.mxu0 0.0
  %2608 = vmatprep.subr.mxu0 0.0
  %2609 = vmatpush1.msra.mxu0 0.0
  %2610 = vmatprep.subr.mxu0 0.0
  %2611 = vmatpush1.msra.mxu0 0.0
  %2612 = vmatprep.subr.mxu0 0.0
  %2613 = vmatpush1.msra.mxu0 0.0
  %2614 = vmatprep.subr.mxu0 0.0
  %2615 = vmatpush1.msra.mxu0 0.0
  %2616 = vmatprep.subr.mxu0 0.0
  %2617 = vmatpush1.msra.mxu0 0.0
  %2618 = vmatprep.subr.mxu0 0.0
  %2619 = vmatpush1.msra.mxu0 0.0
  %2620 = vmatprep.subr.mxu0 0.0
  %2621 = vmatpush1.msra.mxu0 0.0
  %2622 = vmatprep.subr.mxu0 0.0
  %2623 = vmatpush1.msra.mxu0 0.0
  %2624 = vmatprep.subr.mxu0 0.0
  %2625 = vmatpush1.msra.mxu0 0.0
  %2626 = vmatprep.subr.mxu0 0.0
  %2627 = vmatpush1.msra.mxu0 0.0
  %2628 = vmatprep.subr.mxu0 0.0
  %2629 = vmatpush1.msra.mxu0 0.0
  %2630 = vmatprep.subr.mxu0 0.0
  %2631 = vmatpush1.msra.mxu0 0.0
  %2632 = vmatprep.subr.mxu0 0.0
  %2633 = vmatpush1.msra.mxu0 0.0
  %2634 = vmatprep.subr.mxu0 0.0
  %2635 = vmatpush1.msra.mxu0 0.0
  %2636 = vmatprep.subr.mxu0 0.0
  %2637 = vmatpush1.msra.mxu0 0.0
  %2638 = vmatprep.subr.mxu0 0.0
  %2639 = vmatpush1.msra.mxu0 0.0
  %2640 = vmatprep.subr.mxu0 0.0
  %2641 = vmatpush1.msra.mxu0 0.0
  %2642 = vmatprep.subr.mxu0 0.0
  %2643 = vmatpush1.msra.mxu0 0.0
  %2644 = vmatprep.subr.mxu0 0.0
  %2645 = vmatpush1.msra.mxu0 0.0
  %2646 = vmatprep.subr.mxu0 0.0
  %2647 = vmatpush1.msra.mxu0 0.0
  %2648 = vmatprep.subr.mxu0 0.0
  %2649 = vmatpush1.msra.mxu0 0.0
  %2650 = vmatprep.subr.mxu0 0.0
  %2651 = vmatpush1.msra.mxu0 0.0
  %2652 = vmatprep.subr.mxu0 0.0
  %2653 = vmatpush1.msra.mxu0 0.0
  %2654 = vmatprep.subr.mxu0 0.0
  %2655 = vmatpush1.msra.mxu0 0.0
  %2656 = vmatprep.subr.mxu0 0.0
  %2657 = vmatpush1.msra.mxu0 0.0
  %2658 = vmatprep.subr.mxu0 0.0
  %2659 = vmatpush1.msra.mxu0 0.0
  %2660 = vmatprep.subr.mxu0 0.0
  %2661 = vmatpush1.msra.mxu0 0.0
  %2662 = vmatprep.subr.mxu0 0.0
  %2663 = vmatpush1.msra.mxu0 0.0
  %2664 = vmatprep.subr.mxu0 0.0
  %2665 = vmatpush1.msra.mxu0 0.0
  %2666 = vmatprep.mubr.f32.mxu0 0.0
  %2667 = vmatmul.mubr.f32.gmra.mrb[0].mxu0 %v2552
  %v2668 = vpop.f32.mrb[0].mxu0
  %v2669 = vadd.f32 0.0, %v2668
  %v2670 = vpop.f32.mrb[0].mxu0
  %v2671 = vadd.f32 0.0, %v2670
  %2672 = vdwg.mxu0
  %2673 = vmatprep.subr.mxu0 %v2564
  %2674 = vmatpush1.msra.mxu0 %v2561
  %2675 = vmatprep.subr.mxu0 0.0
  %2676 = vmatpush1.msra.mxu0 0.0
  %2677 = vmatprep.subr.mxu0 0.0
  %2678 = vmatpush1.msra.mxu0 0.0
  %2679 = vmatprep.subr.mxu0 0.0
  %2680 = vmatpush1.msra.mxu0 0.0
  %2681 = vmatprep.subr.mxu0 0.0
  %2682 = vmatpush1.msra.mxu0 0.0
  %2683 = vmatprep.subr.mxu0 0.0
  %2684 = vmatpush1.msra.mxu0 0.0
  %2685 = vmatprep.subr.mxu0 0.0
  %2686 = vmatpush1.msra.mxu0 0.0
  %2687 = vmatprep.subr.mxu0 0.0
  %2688 = vmatpush1.msra.mxu0 0.0
  %2689 = vmatprep.subr.mxu0 0.0
  %2690 = vmatpush1.msra.mxu0 0.0
  %2691 = vmatprep.subr.mxu0 0.0
  %2692 = vmatpush1.msra.mxu0 0.0
  %2693 = vmatprep.subr.mxu0 0.0
  %2694 = vmatpush1.msra.mxu0 0.0
  %2695 = vmatprep.subr.mxu0 0.0
  %2696 = vmatpush1.msra.mxu0 0.0
  %2697 = vmatprep.subr.mxu0 0.0
  %2698 = vmatpush1.msra.mxu0 0.0
  %2699 = vmatprep.subr.mxu0 0.0
  %2700 = vmatpush1.msra.mxu0 0.0
  %2701 = vmatprep.subr.mxu0 0.0
  %2702 = vmatpush1.msra.mxu0 0.0
  %2703 = vmatprep.subr.mxu0 0.0
  %2704 = vmatpush1.msra.mxu0 0.0
  %2705 = vmatprep.subr.mxu0 0.0
  %2706 = vmatpush1.msra.mxu0 0.0
  %2707 = vmatprep.subr.mxu0 0.0
  %2708 = vmatpush1.msra.mxu0 0.0
  %2709 = vmatprep.subr.mxu0 0.0
  %2710 = vmatpush1.msra.mxu0 0.0
  %2711 = vmatprep.subr.mxu0 0.0
  %2712 = vmatpush1.msra.mxu0 0.0
  %2713 = vmatprep.subr.mxu0 0.0
  %2714 = vmatpush1.msra.mxu0 0.0
  %2715 = vmatprep.subr.mxu0 0.0
  %2716 = vmatpush1.msra.mxu0 0.0
  %2717 = vmatprep.subr.mxu0 0.0
  %2718 = vmatpush1.msra.mxu0 0.0
  %2719 = vmatprep.subr.mxu0 0.0
  %2720 = vmatpush1.msra.mxu0 0.0
  %2721 = vmatprep.subr.mxu0 0.0
  %2722 = vmatpush1.msra.mxu0 0.0
  %2723 = vmatprep.subr.mxu0 0.0
  %2724 = vmatpush1.msra.mxu0 0.0
  %2725 = vmatprep.subr.mxu0 0.0
  %2726 = vmatpush1.msra.mxu0 0.0
  %2727 = vmatprep.subr.mxu0 0.0
  %2728 = vmatpush1.msra.mxu0 0.0
  %2729 = vmatprep.subr.mxu0 0.0
  %2730 = vmatpush1.msra.mxu0 0.0
  %2731 = vmatprep.subr.mxu0 0.0
  %2732 = vmatpush1.msra.mxu0 0.0
  %2733 = vmatprep.subr.mxu0 0.0
  %2734 = vmatpush1.msra.mxu0 0.0
  %2735 = vmatprep.subr.mxu0 0.0
  %2736 = vmatpush1.msra.mxu0 0.0
  %2737 = vmatprep.mubr.f32.mxu0 0.0
  %2738 = vmatmul.mubr.f32.gmra.mrb[0].mxu0 %v2552
  %v2739 = vpop.f32.mrb[0].mxu0
  %v2740 = vadd.f32 0.0, %v2739
  %v2741 = vpop.f32.mrb[0].mxu0
  %v2742 = vadd.f32 0.0, %v2741
  %2743 = vdwg.mxu0
  %2744 = vmatprep.subr.mxu0 %v2570
  %2745 = vmatpush1.msra.mxu0 %v2567
  %2746 = vmatprep.subr.mxu0 0.0
  %2747 = vmatpush1.msra.mxu0 0.0
  %2748 = vmatprep.subr.mxu0 0.0
  %2749 = vmatpush1.msra.mxu0 0.0
  %2750 = vmatprep.subr.mxu0 0.0
  %2751 = vmatpush1.msra.mxu0 0.0
  %2752 = vmatprep.subr.mxu0 0.0
  %2753 = vmatpush1.msra.mxu0 0.0
  %2754 = vmatprep.subr.mxu0 0.0
  %2755 = vmatpush1.msra.mxu0 0.0
  %2756 = vmatprep.subr.mxu0 0.0
  %2757 = vmatpush1.msra.mxu0 0.0
  %2758 = vmatprep.subr.mxu0 0.0
  %2759 = vmatpush1.msra.mxu0 0.0
  %2760 = vmatprep.subr.mxu0 0.0
  %2761 = vmatpush1.msra.mxu0 0.0
  %2762 = vmatprep.subr.mxu0 0.0
  %2763 = vmatpush1.msra.mxu0 0.0
  %2764 = vmatprep.subr.mxu0 0.0
  %2765 = vmatpush1.msra.mxu0 0.0
  %2766 = vmatprep.subr.mxu0 0.0
  %2767 = vmatpush1.msra.mxu0 0.0
  %2768 = vmatprep.subr.mxu0 0.0
  %2769 = vmatpush1.msra.mxu0 0.0
  %2770 = vmatprep.subr.mxu0 0.0
  %2771 = vmatpush1.msra.mxu0 0.0
  %2772 = vmatprep.subr.mxu0 0.0
  %2773 = vmatpush1.msra.mxu0 0.0
  %2774 = vmatprep.subr.mxu0 0.0
  %2775 = vmatpush1.msra.mxu0 0.0
  %2776 = vmatprep.subr.mxu0 0.0
  %2777 = vmatpush1.msra.mxu0 0.0
  %2778 = vmatprep.subr.mxu0 0.0
  %2779 = vmatpush1.msra.mxu0 0.0
  %2780 = vmatprep.subr.mxu0 0.0
  %2781 = vmatpush1.msra.mxu0 0.0
  %2782 = vmatprep.subr.mxu0 0.0
  %2783 = vmatpush1.msra.mxu0 0.0
  %2784 = vmatprep.subr.mxu0 0.0
  %2785 = vmatpush1.msra.mxu0 0.0
  %2786 = vmatprep.subr.mxu0 0.0
  %2787 = vmatpush1.msra.mxu0 0.0
  %2788 = vmatprep.subr.mxu0 0.0
  %2789 = vmatpush1.msra.mxu0 0.0
  %2790 = vmatprep.subr.mxu0 0.0
  %2791 = vmatpush1.msra.mxu0 0.0
  %2792 = vmatprep.subr.mxu0 0.0
  %2793 = vmatpush1.msra.mxu0 0.0
  %2794 = vmatprep.subr.mxu0 0.0
  %2795 = vmatpush1.msra.mxu0 0.0
  %2796 = vmatprep.subr.mxu0 0.0
  %2797 = vmatpush1.msra.mxu0 0.0
  %2798 = vmatprep.subr.mxu0 0.0
  %2799 = vmatpush1.msra.mxu0 0.0
  %2800 = vmatprep.subr.mxu0 0.0
  %2801 = vmatpush1.msra.mxu0 0.0
  %2802 = vmatprep.subr.mxu0 0.0
  %2803 = vmatpush1.msra.mxu0 0.0
  %2804 = vmatprep.subr.mxu0 0.0
  %2805 = vmatpush1.msra.mxu0 0.0
  %2806 = vmatprep.subr.mxu0 0.0
  %2807 = vmatpush1.msra.mxu0 0.0
  %2808 = vmatprep.mubr.f32.mxu0 0.0
  %2809 = vmatmul.mubr.f32.gmra.mrb[0].mxu0 %v2552
  %v2810 = vpop.f32.mrb[0].mxu0
  %v2811 = vadd.f32 0.0, %v2810
  %v2812 = vpop.f32.mrb[0].mxu0
  %v2813 = vadd.f32 0.0, %v2812
  %2814 = vdwg.mxu0
  %2815 = vmatprep.subr.mxu0 %v2576
  %2816 = vmatpush1.msra.mxu0 %v2573
  %2817 = vmatprep.subr.mxu0 0.0
  %2818 = vmatpush1.msra.mxu0 0.0
  %2819 = vmatprep.subr.mxu0 0.0
  %2820 = vmatpush1.msra.mxu0 0.0
  %2821 = vmatprep.subr.mxu0 0.0
  %2822 = vmatpush1.msra.mxu0 0.0
  %2823 = vmatprep.subr.mxu0 0.0
  %2824 = vmatpush1.msra.mxu0 0.0
  %2825 = vmatprep.subr.mxu0 0.0
  %2826 = vmatpush1.msra.mxu0 0.0
  %2827 = vmatprep.subr.mxu0 0.0
  %2828 = vmatpush1.msra.mxu0 0.0
  %2829 = vmatprep.subr.mxu0 0.0
  %2830 = vmatpush1.msra.mxu0 0.0
  %2831 = vmatprep.subr.mxu0 0.0
  %2832 = vmatpush1.msra.mxu0 0.0
  %2833 = vmatprep.subr.mxu0 0.0
  %2834 = vmatpush1.msra.mxu0 0.0
  %2835 = vmatprep.subr.mxu0 0.0
  %2836 = vmatpush1.msra.mxu0 0.0
  %2837 = vmatprep.subr.mxu0 0.0
  %2838 = vmatpush1.msra.mxu0 0.0
  %2839 = vmatprep.subr.mxu0 0.0
  %2840 = vmatpush1.msra.mxu0 0.0
  %2841 = vmatprep.subr.mxu0 0.0
  %2842 = vmatpush1.msra.mxu0 0.0
  %2843 = vmatprep.subr.mxu0 0.0
  %2844 = vmatpush1.msra.mxu0 0.0
  %2845 = vmatprep.subr.mxu0 0.0
  %2846 = vmatpush1.msra.mxu0 0.0
  %2847 = vmatprep.subr.mxu0 0.0
  %2848 = vmatpush1.msra.mxu0 0.0
  %2849 = vmatprep.subr.mxu0 0.0
  %2850 = vmatpush1.msra.mxu0 0.0
  %2851 = vmatprep.subr.mxu0 0.0
  %2852 = vmatpush1.msra.mxu0 0.0
  %2853 = vmatprep.subr.mxu0 0.0
  %2854 = vmatpush1.msra.mxu0 0.0
  %2855 = vmatprep.subr.mxu0 0.0
  %2856 = vmatpush1.msra.mxu0 0.0
  %2857 = vmatprep.subr.mxu0 0.0
  %2858 = vmatpush1.msra.mxu0 0.0
  %2859 = vmatprep.subr.mxu0 0.0
  %2860 = vmatpush1.msra.mxu0 0.0
  %2861 = vmatprep.subr.mxu0 0.0
  %2862 = vmatpush1.msra.mxu0 0.0
  %2863 = vmatprep.subr.mxu0 0.0
  %2864 = vmatpush1.msra.mxu0 0.0
  %2865 = vmatprep.subr.mxu0 0.0
  %2866 = vmatpush1.msra.mxu0 0.0
  %2867 = vmatprep.subr.mxu0 0.0
  %2868 = vmatpush1.msra.mxu0 0.0
  %2869 = vmatprep.subr.mxu0 0.0
  %2870 = vmatpush1.msra.mxu0 0.0
  %2871 = vmatprep.subr.mxu0 0.0
  %2872 = vmatpush1.msra.mxu0 0.0
  %2873 = vmatprep.subr.mxu0 0.0
  %2874 = vmatpush1.msra.mxu0 0.0
  %2875 = vmatprep.subr.mxu0 0.0
  %2876 = vmatpush1.msra.mxu0 0.0
  %2877 = vmatprep.subr.mxu0 0.0
  %2878 = vmatpush1.msra.mxu0 0.0
  %2879 = vmatprep.mubr.f32.mxu0 0.0
  %2880 = vmatmul.mubr.f32.gmra.mrb[0].mxu0 %v2552
  %v2881 = vpop.f32.mrb[0].mxu0
  %v2882 = vadd.f32 0.0, %v2881
  %v2883 = vpop.f32.mrb[0].mxu0
  %v2884 = vadd.f32 0.0, %v2883
  %2885 = vdwg.mxu0
  %2886 = vmatprep.subr.mxu0 %v2582
  %2887 = vmatpush1.msra.mxu0 %v2579
  %2888 = vmatprep.subr.mxu0 0.0
  %2889 = vmatpush1.msra.mxu0 0.0
  %2890 = vmatprep.subr.mxu0 0.0
  %2891 = vmatpush1.msra.mxu0 0.0
  %2892 = vmatprep.subr.mxu0 0.0
  %2893 = vmatpush1.msra.mxu0 0.0
  %2894 = vmatprep.subr.mxu0 0.0
  %2895 = vmatpush1.msra.mxu0 0.0
  %2896 = vmatprep.subr.mxu0 0.0
  %2897 = vmatpush1.msra.mxu0 0.0
  %2898 = vmatprep.subr.mxu0 0.0
  %2899 = vmatpush1.msra.mxu0 0.0
  %2900 = vmatprep.subr.mxu0 0.0
  %2901 = vmatpush1.msra.mxu0 0.0
  %2902 = vmatprep.subr.mxu0 0.0
  %2903 = vmatpush1.msra.mxu0 0.0
  %2904 = vmatprep.subr.mxu0 0.0
  %2905 = vmatpush1.msra.mxu0 0.0
  %2906 = vmatprep.subr.mxu0 0.0
  %2907 = vmatpush1.msra.mxu0 0.0
  %2908 = vmatprep.subr.mxu0 0.0
  %2909 = vmatpush1.msra.mxu0 0.0
  %2910 = vmatprep.subr.mxu0 0.0
  %2911 = vmatpush1.msra.mxu0 0.0
  %2912 = vmatprep.subr.mxu0 0.0
  %2913 = vmatpush1.msra.mxu0 0.0
  %2914 = vmatprep.subr.mxu0 0.0
  %2915 = vmatpush1.msra.mxu0 0.0
  %2916 = vmatprep.subr.mxu0 0.0
  %2917 = vmatpush1.msra.mxu0 0.0
  %2918 = vmatprep.subr.mxu0 0.0
  %2919 = vmatpush1.msra.mxu0 0.0
  %2920 = vmatprep.subr.mxu0 0.0
  %2921 = vmatpush1.msra.mxu0 0.0
  %2922 = vmatprep.subr.mxu0 0.0
  %2923 = vmatpush1.msra.mxu0 0.0
  %2924 = vmatprep.subr.mxu0 0.0
  %2925 = vmatpush1.msra.mxu0 0.0
  %2926 = vmatprep.subr.mxu0 0.0
  %2927 = vmatpush1.msra.mxu0 0.0
  %2928 = vmatprep.subr.mxu0 0.0
  %2929 = vmatpush1.msra.mxu0 0.0
  %2930 = vmatprep.subr.mxu0 0.0
  %2931 = vmatpush1.msra.mxu0 0.0
  %2932 = vmatprep.subr.mxu0 0.0
  %2933 = vmatpush1.msra.mxu0 0.0
  %2934 = vmatprep.subr.mxu0 0.0
  %2935 = vmatpush1.msra.mxu0 0.0
  %2936 = vmatprep.subr.mxu0 0.0
  %2937 = vmatpush1.msra.mxu0 0.0
  %2938 = vmatprep.subr.mxu0 0.0
  %2939 = vmatpush1.msra.mxu0 0.0
  %2940 = vmatprep.subr.mxu0 0.0
  %2941 = vmatpush1.msra.mxu0 0.0
  %2942 = vmatprep.subr.mxu0 0.0
  %2943 = vmatpush1.msra.mxu0 0.0
  %2944 = vmatprep.subr.mxu0 0.0
  %2945 = vmatpush1.msra.mxu0 0.0
  %2946 = vmatprep.subr.mxu0 0.0
  %2947 = vmatpush1.msra.mxu0 0.0
  %2948 = vmatprep.subr.mxu0 0.0
  %2949 = vmatpush1.msra.mxu0 0.0
  %2950 = vmatprep.mubr.f32.mxu0 0.0
  %2951 = vmatmul.mubr.f32.gmra.mrb[0].mxu0 %v2552
  %v2952 = vpop.f32.mrb[0].mxu0
  %v2953 = vadd.f32 0.0, %v2952
  %v2954 = vpop.f32.mrb[0].mxu0
  %v2955 = vadd.f32 0.0, %v2954
  %2956 = vdwg.mxu0
  %2957 = vmatprep.subr.mxu0 %v2588
  %2958 = vmatpush1.msra.mxu0 %v2585
  %2959 = vmatprep.subr.mxu0 0.0
  %2960 = vmatpush1.msra.mxu0 0.0
  %2961 = vmatprep.subr.mxu0 0.0
  %2962 = vmatpush1.msra.mxu0 0.0
  %2963 = vmatprep.subr.mxu0 0.0
  %2964 = vmatpush1.msra.mxu0 0.0
  %2965 = vmatprep.subr.mxu0 0.0
  %2966 = vmatpush1.msra.mxu0 0.0
  %2967 = vmatprep.subr.mxu0 0.0
  %2968 = vmatpush1.msra.mxu0 0.0
  %2969 = vmatprep.subr.mxu0 0.0
  %2970 = vmatpush1.msra.mxu0 0.0
  %2971 = vmatprep.subr.mxu0 0.0
  %2972 = vmatpush1.msra.mxu0 0.0
  %2973 = vmatprep.subr.mxu0 0.0
  %2974 = vmatpush1.msra.mxu0 0.0
  %2975 = vmatprep.subr.mxu0 0.0
  %2976 = vmatpush1.msra.mxu0 0.0
  %2977 = vmatprep.subr.mxu0 0.0
  %2978 = vmatpush1.msra.mxu0 0.0
  %2979 = vmatprep.subr.mxu0 0.0
  %2980 = vmatpush1.msra.mxu0 0.0
  %2981 = vmatprep.subr.mxu0 0.0
  %2982 = vmatpush1.msra.mxu0 0.0
  %2983 = vmatprep.subr.mxu0 0.0
  %2984 = vmatpush1.msra.mxu0 0.0
  %2985 = vmatprep.subr.mxu0 0.0
  %2986 = vmatpush1.msra.mxu0 0.0
  %2987 = vmatprep.subr.mxu0 0.0
  %2988 = vmatpush1.msra.mxu0 0.0
  %2989 = vmatprep.subr.mxu0 0.0
  %2990 = vmatpush1.msra.mxu0 0.0
  %2991 = vmatprep.subr.mxu0 0.0
  %2992 = vmatpush1.msra.mxu0 0.0
  %2993 = vmatprep.subr.mxu0 0.0
  %2994 = vmatpush1.msra.mxu0 0.0
  %2995 = vmatprep.subr.mxu0 0.0
  %2996 = vmatpush1.msra.mxu0 0.0
  %2997 = vmatprep.subr.mxu0 0.0
  %2998 = vmatpush1.msra.mxu0 0.0
  %2999 = vmatprep.subr.mxu0 0.0
  %3000 = vmatpush1.msra.mxu0 0.0
  %3001 = vmatprep.subr.mxu0 0.0
  %3002 = vmatpush1.msra.mxu0 0.0
  %3003 = vmatprep.subr.mxu0 0.0
  %3004 = vmatpush1.msra.mxu0 0.0
  %3005 = vmatprep.subr.mxu0 0.0
  %3006 = vmatpush1.msra.mxu0 0.0
  %3007 = vmatprep.subr.mxu0 0.0
  %3008 = vmatpush1.msra.mxu0 0.0
  %3009 = vmatprep.subr.mxu0 0.0
  %3010 = vmatpush1.msra.mxu0 0.0
  %3011 = vmatprep.subr.mxu0 0.0
  %3012 = vmatpush1.msra.mxu0 0.0
  %3013 = vmatprep.subr.mxu0 0.0
  %3014 = vmatpush1.msra.mxu0 0.0
  %3015 = vmatprep.subr.mxu0 0.0
  %3016 = vmatpush1.msra.mxu0 0.0
  %3017 = vmatprep.subr.mxu0 0.0
  %3018 = vmatpush1.msra.mxu0 0.0
  %3019 = vmatprep.subr.mxu0 0.0
  %3020 = vmatpush1.msra.mxu0 0.0
  %3021 = vmatprep.mubr.f32.mxu0 0.0
  %3022 = vmatmul.mubr.f32.gmra.mrb[0].mxu0 %v2552
  %v3023 = vpop.f32.mrb[0].mxu0
  %v3024 = vadd.f32 0.0, %v3023
  %v3025 = vpop.f32.mrb[0].mxu0
  %v3026 = vadd.f32 0.0, %v3025
  %3027 = vdwg.mxu0
  %3028 = vmatprep.subr.mxu0 %v2594
  %3029 = vmatpush1.msra.mxu0 %v2591
  %3030 = vmatprep.subr.mxu0 0.0
  %3031 = vmatpush1.msra.mxu0 0.0
  %3032 = vmatprep.subr.mxu0 0.0
  %3033 = vmatpush1.msra.mxu0 0.0
  %3034 = vmatprep.subr.mxu0 0.0
  %3035 = vmatpush1.msra.mxu0 0.0
  %3036 = vmatprep.subr.mxu0 0.0
  %3037 = vmatpush1.msra.mxu0 0.0
  %3038 = vmatprep.subr.mxu0 0.0
  %3039 = vmatpush1.msra.mxu0 0.0
  %3040 = vmatprep.subr.mxu0 0.0
  %3041 = vmatpush1.msra.mxu0 0.0
  %3042 = vmatprep.subr.mxu0 0.0
  %3043 = vmatpush1.msra.mxu0 0.0
  %3044 = vmatprep.subr.mxu0 0.0
  %3045 = vmatpush1.msra.mxu0 0.0
  %3046 = vmatprep.subr.mxu0 0.0
  %3047 = vmatpush1.msra.mxu0 0.0
  %3048 = vmatprep.subr.mxu0 0.0
  %3049 = vmatpush1.msra.mxu0 0.0
  %3050 = vmatprep.subr.mxu0 0.0
  %3051 = vmatpush1.msra.mxu0 0.0
  %3052 = vmatprep.subr.mxu0 0.0
  %3053 = vmatpush1.msra.mxu0 0.0
  %3054 = vmatprep.subr.mxu0 0.0
  %3055 = vmatpush1.msra.mxu0 0.0
  %3056 = vmatprep.subr.mxu0 0.0
  %3057 = vmatpush1.msra.mxu0 0.0
  %3058 = vmatprep.subr.mxu0 0.0
  %3059 = vmatpush1.msra.mxu0 0.0
  %3060 = vmatprep.subr.mxu0 0.0
  %3061 = vmatpush1.msra.mxu0 0.0
  %3062 = vmatprep.subr.mxu0 0.0
  %3063 = vmatpush1.msra.mxu0 0.0
  %3064 = vmatprep.subr.mxu0 0.0
  %3065 = vmatpush1.msra.mxu0 0.0
  %3066 = vmatprep.subr.mxu0 0.0
  %3067 = vmatpush1.msra.mxu0 0.0
  %3068 = vmatprep.subr.mxu0 0.0
  %3069 = vmatpush1.msra.mxu0 0.0
  %3070 = vmatprep.subr.mxu0 0.0
  %3071 = vmatpush1.msra.mxu0 0.0
  %3072 = vmatprep.subr.mxu0 0.0
  %3073 = vmatpush1.msra.mxu0 0.0
  %3074 = vmatprep.subr.mxu0 0.0
  %3075 = vmatpush1.msra.mxu0 0.0
  %3076 = vmatprep.subr.mxu0 0.0
  %3077 = vmatpush1.msra.mxu0 0.0
  %3078 = vmatprep.subr.mxu0 0.0
  %3079 = vmatpush1.msra.mxu0 0.0
  %3080 = vmatprep.subr.mxu0 0.0
  %3081 = vmatpush1.msra.mxu0 0.0
  %3082 = vmatprep.subr.mxu0 0.0
  %3083 = vmatpush1.msra.mxu0 0.0
  %3084 = vmatprep.subr.mxu0 0.0
  %3085 = vmatpush1.msra.mxu0 0.0
  %3086 = vmatprep.subr.mxu0 0.0
  %3087 = vmatpush1.msra.mxu0 0.0
  %3088 = vmatprep.subr.mxu0 0.0
  %3089 = vmatpush1.msra.mxu0 0.0
  %3090 = vmatprep.subr.mxu0 0.0
  %3091 = vmatpush1.msra.mxu0 0.0
  %3092 = vmatprep.mubr.f32.mxu0 0.0
  %3093 = vmatmul.mubr.f32.gmra.mrb[0].mxu0 %v2552
  %v3094 = vpop.f32.mrb[0].mxu0
  %v3095 = vadd.f32 0.0, %v3094
  %v3096 = vpop.f32.mrb[0].mxu0
  %v3097 = vadd.f32 0.0, %v3096
  %3098 = vdwg.mxu0
  %3099 = vmatprep.subr.mxu0 %v2600
  %3100 = vmatpush1.msra.mxu0 %v2597
  %3101 = vmatprep.subr.mxu0 0.0
  %3102 = vmatpush1.msra.mxu0 0.0
  %3103 = vmatprep.subr.mxu0 0.0
  %3104 = vmatpush1.msra.mxu0 0.0
  %3105 = vmatprep.subr.mxu0 0.0
  %3106 = vmatpush1.msra.mxu0 0.0
  %3107 = vmatprep.subr.mxu0 0.0
  %3108 = vmatpush1.msra.mxu0 0.0
  %3109 = vmatprep.subr.mxu0 0.0
  %3110 = vmatpush1.msra.mxu0 0.0
  %3111 = vmatprep.subr.mxu0 0.0
  %3112 = vmatpush1.msra.mxu0 0.0
  %3113 = vmatprep.subr.mxu0 0.0
  %3114 = vmatpush1.msra.mxu0 0.0
  %3115 = vmatprep.subr.mxu0 0.0
  %3116 = vmatpush1.msra.mxu0 0.0
  %3117 = vmatprep.subr.mxu0 0.0
  %3118 = vmatpush1.msra.mxu0 0.0
  %3119 = vmatprep.subr.mxu0 0.0
  %3120 = vmatpush1.msra.mxu0 0.0
  %3121 = vmatprep.subr.mxu0 0.0
  %3122 = vmatpush1.msra.mxu0 0.0
  %3123 = vmatprep.subr.mxu0 0.0
  %3124 = vmatpush1.msra.mxu0 0.0
  %3125 = vmatprep.subr.mxu0 0.0
  %3126 = vmatpush1.msra.mxu0 0.0
  %3127 = vmatprep.subr.mxu0 0.0
  %3128 = vmatpush1.msra.mxu0 0.0
  %3129 = vmatprep.subr.mxu0 0.0
  %3130 = vmatpush1.msra.mxu0 0.0
  %3131 = vmatprep.subr.mxu0 0.0
  %3132 = vmatpush1.msra.mxu0 0.0
  %3133 = vmatprep.subr.mxu0 0.0
  %3134 = vmatpush1.msra.mxu0 0.0
  %3135 = vmatprep.subr.mxu0 0.0
  %3136 = vmatpush1.msra.mxu0 0.0
  %3137 = vmatprep.subr.mxu0 0.0
  %3138 = vmatpush1.msra.mxu0 0.0
  %3139 = vmatprep.subr.mxu0 0.0
  %3140 = vmatpush1.msra.mxu0 0.0
  %3141 = vmatprep.subr.mxu0 0.0
  %3142 = vmatpush1.msra.mxu0 0.0
  %3143 = vmatprep.subr.mxu0 0.0
  %3144 = vmatpush1.msra.mxu0 0.0
  %3145 = vmatprep.subr.mxu0 0.0
  %3146 = vmatpush1.msra.mxu0 0.0
  %3147 = vmatprep.subr.mxu0 0.0
  %3148 = vmatpush1.msra.mxu0 0.0
  %3149 = vmatprep.subr.mxu0 0.0
  %3150 = vmatpush1.msra.mxu0 0.0
  %3151 = vmatprep.subr.mxu0 0.0
  %3152 = vmatpush1.msra.mxu0 0.0
  %3153 = vmatprep.subr.mxu0 0.0
  %3154 = vmatpush1.msra.mxu0 0.0
  %3155 = vmatprep.subr.mxu0 0.0
  %3156 = vmatpush1.msra.mxu0 0.0
  %3157 = vmatprep.subr.mxu0 0.0
  %3158 = vmatpush1.msra.mxu0 0.0
  %3159 = vmatprep.subr.mxu0 0.0
  %3160 = vmatpush1.msra.mxu0 0.0
  %3161 = vmatprep.subr.mxu0 0.0
  %3162 = vmatpush1.msra.mxu0 0.0
  %3163 = vmatprep.mubr.f32.mxu0 0.0
  %3164 = vmatmul.mubr.f32.gmra.mrb[0].mxu0 %v2552
  %v3165 = vpop.f32.mrb[0].mxu0
  %v3166 = vadd.f32 0.0, %v3165
  %v3167 = vpop.f32.mrb[0].mxu0
  %v3168 = vadd.f32 0.0, %v3167
  %3169 = vdwg.mxu0
  %v3170 = vadd.f32 %v2383, %v2669
  %v3171 = vadd.f32 %v2384, %v2671
  %v3172 = vadd.f32 %v2385, %v2740
  %v3173 = vadd.f32 %v2386, %v2742
  %v3174 = vadd.f32 %v2387, %v2811
  %v3175 = vadd.f32 %v2388, %v2813
  %v3176 = vadd.f32 %v2389, %v2882
  %v3177 = vadd.f32 %v2390, %v2884
  %v3178 = vadd.f32 %v2391, %v2953
  %v3179 = vadd.f32 %v2392, %v2955
  %v3180 = vadd.f32 %v2393, %v3024
  %v3181 = vadd.f32 %v2394, %v3026
  %v3182 = vadd.f32 %v2395, %v3095
  %v3183 = vadd.f32 %v2396, %v3097
  %v3184 = vadd.f32 %v2397, %v3166
  %v3185 = vadd.f32 %v2398, %v3168
  %s3186 = scalar_lea.vmem %s1, 64
  %v3187 = vld [vmem:[%s3186] sm:$0xff]
  %v3188 = vld [vmem:[%s3186 + $0x8] sm:$0xff]
  %v3191 = vlaneseq
  %v3192 = vshrl.u32 %v3191, 7
  %v3193 = vsub.s32 0, %v3192
  %v3194 = vrot.slane %v3187, %v3193
  %v3195 = vlaneseq
  %v3196 = vshrl.u32 %v3195, 7
  %v3197 = vsub.s32 1, %v3196
  %v3198 = vrot.slane %v3187, %v3197
  %v3199 = vlaneseq
  %v3200 = vshrl.u32 %v3199, 7
  %v3201 = vsub.s32 2, %v3200
  %v3202 = vrot.slane %v3187, %v3201
  %v3203 = vlaneseq
  %v3204 = vshrl.u32 %v3203, 7
  %v3205 = vsub.s32 3, %v3204
  %v3206 = vrot.slane %v3187, %v3205
  %v3207 = vlaneseq
  %v3208 = vshrl.u32 %v3207, 7
  %v3209 = vsub.s32 4, %v3208
  %v3210 = vrot.slane %v3187, %v3209
  %v3211 = vlaneseq
  %v3212 = vshrl.u32 %v3211, 7
  %v3213 = vsub.s32 5, %v3212
  %v3214 = vrot.slane %v3187, %v3213
  %v3215 = vlaneseq
  %v3216 = vshrl.u32 %v3215, 7
  %v3217 = vsub.s32 6, %v3216
  %v3218 = vrot.slane %v3187, %v3217
  %v3219 = vlaneseq
  %v3220 = vshrl.u32 %v3219, 7
  %v3221 = vsub.s32 7, %v3220
  %v3222 = vrot.slane %v3187, %v3221
  %v3223 = vlaneseq
  %v3224 = vshrl.u32 %v3223, 7
  %v3225 = vsub.s32 0, %v3224
  %v3226 = vrot.slane %v3188, %v3225
  %v3227 = vlaneseq
  %v3228 = vshrl.u32 %v3227, 7
  %v3229 = vsub.s32 1, %v3228
  %v3230 = vrot.slane %v3188, %v3229
  %v3231 = vlaneseq
  %v3232 = vshrl.u32 %v3231, 7
  %v3233 = vsub.s32 2, %v3232
  %v3234 = vrot.slane %v3188, %v3233
  %v3235 = vlaneseq
  %v3236 = vshrl.u32 %v3235, 7
  %v3237 = vsub.s32 3, %v3236
  %v3238 = vrot.slane %v3188, %v3237
  %v3239 = vlaneseq
  %v3240 = vshrl.u32 %v3239, 7
  %v3241 = vsub.s32 4, %v3240
  %v3242 = vrot.slane %v3188, %v3241
  %v3243 = vlaneseq
  %v3244 = vshrl.u32 %v3243, 7
  %v3245 = vsub.s32 5, %v3244
  %v3246 = vrot.slane %v3188, %v3245
  %v3247 = vlaneseq
  %v3248 = vshrl.u32 %v3247, 7
  %v3249 = vsub.s32 6, %v3248
  %v3250 = vrot.slane %v3188, %v3249
  %v3251 = vlaneseq
  %v3252 = vshrl.u32 %v3251, 7
  %v3253 = vsub.s32 7, %v3252
  %v3254 = vrot.slane %v3188, %v3253
  %v3255 = vcombine.low %v3194, %v3198
  %v3256 = vcombine.low %v3202, %v3206
  %v3257 = vcombine.low %v3210, %v3214
  %v3258 = vcombine.low %v3218, %v3222
  %v3259 = vcombine.low %v3226, %v3230
  %v3260 = vcombine.low %v3234, %v3238
  %v3261 = vcombine.low %v3242, %v3246
  %v3262 = vcombine.low %v3250, %v3254
  %v3271 = vmul.f32 %v36, %v3255
  %v3272 = vmul.f32 %v37, %v3256
  %v3273 = vmul.f32 %v38, %v3257
  %v3274 = vmul.f32 %v39, %v3258
  %v3275 = vmul.f32 %v40, %v3259
  %v3276 = vmul.f32 %v41, %v3260
  %v3277 = vmul.f32 %v42, %v3261
  %v3278 = vmul.f32 %v43, %v3262
  %s3279 = scalar_lea.vmem %s2, 32
  %v3280 = vld [vmem:[%s3279] sm:$0xff]
  %v3289 = vcombine.high %v3271, %v3271
  %v3290 = vcombine.high %v3272, %v3272
  %v3291 = vcombine.high %v3273, %v3273
  %v3292 = vcombine.high %v3274, %v3274
  %v3293 = vcombine.high %v3275, %v3275
  %v3294 = vcombine.high %v3276, %v3276
  %v3295 = vcombine.high %v3277, %v3277
  %v3296 = vcombine.high %v3278, %v3278
  %v3298 = vsel %vm372, %v3280, 0
  %v3300 = vsel %vm376, %v3271, 0
  %v3302 = vsel %vm376, %v3289, 0
  %v3304 = vsel %vm376, %v3272, 0
  %v3306 = vsel %vm376, %v3290, 0
  %v3308 = vsel %vm376, %v3273, 0
  %v3310 = vsel %vm376, %v3291, 0
  %v3312 = vsel %vm376, %v3274, 0
  %v3314 = vsel %vm376, %v3292, 0
  %v3316 = vsel %vm376, %v3275, 0
  %v3318 = vsel %vm376, %v3293, 0
  %v3320 = vsel %vm376, %v3276, 0
  %v3322 = vsel %vm376, %v3294, 0
  %v3324 = vsel %vm376, %v3277, 0
  %v3326 = vsel %vm376, %v3295, 0
  %v3328 = vsel %vm376, %v3278, 0
  %v3330 = vsel %vm376, %v3296, 0
  %3332 = vmatprep.subr.mxu0 %v3302
  %3333 = vmatpush1.msra.mxu0 %v3300
  %3334 = vmatprep.subr.mxu0 0.0
  %3335 = vmatpush1.msra.mxu0 0.0
  %3336 = vmatprep.subr.mxu0 0.0
  %3337 = vmatpush1.msra.mxu0 0.0
  %3338 = vmatprep.subr.mxu0 0.0
  %3339 = vmatpush1.msra.mxu0 0.0
  %3340 = vmatprep.subr.mxu0 0.0
  %3341 = vmatpush1.msra.mxu0 0.0
  %3342 = vmatprep.subr.mxu0 0.0
  %3343 = vmatpush1.msra.mxu0 0.0
  %3344 = vmatprep.subr.mxu0 0.0
  %3345 = vmatpush1.msra.mxu0 0.0
  %3346 = vmatprep.subr.mxu0 0.0
  %3347 = vmatpush1.msra.mxu0 0.0
  %3348 = vmatprep.subr.mxu0 0.0
  %3349 = vmatpush1.msra.mxu0 0.0
  %3350 = vmatprep.subr.mxu0 0.0
  %3351 = vmatpush1.msra.mxu0 0.0
  %3352 = vmatprep.subr.mxu0 0.0
  %3353 = vmatpush1.msra.mxu0 0.0
  %3354 = vmatprep.subr.mxu0 0.0
  %3355 = vmatpush1.msra.mxu0 0.0
  %3356 = vmatprep.subr.mxu0 0.0
  %3357 = vmatpush1.msra.mxu0 0.0
  %3358 = vmatprep.subr.mxu0 0.0
  %3359 = vmatpush1.msra.mxu0 0.0
  %3360 = vmatprep.subr.mxu0 0.0
  %3361 = vmatpush1.msra.mxu0 0.0
  %3362 = vmatprep.subr.mxu0 0.0
  %3363 = vmatpush1.msra.mxu0 0.0
  %3364 = vmatprep.subr.mxu0 0.0
  %3365 = vmatpush1.msra.mxu0 0.0
  %3366 = vmatprep.subr.mxu0 0.0
  %3367 = vmatpush1.msra.mxu0 0.0
  %3368 = vmatprep.subr.mxu0 0.0
  %3369 = vmatpush1.msra.mxu0 0.0
  %3370 = vmatprep.subr.mxu0 0.0
  %3371 = vmatpush1.msra.mxu0 0.0
  %3372 = vmatprep.subr.mxu0 0.0
  %3373 = vmatpush1.msra.mxu0 0.0
  %3374 = vmatprep.subr.mxu0 0.0
  %3375 = vmatpush1.msra.mxu0 0.0
  %3376 = vmatprep.subr.mxu0 0.0
  %3377 = vmatpush1.msra.mxu0 0.0
  %3378 = vmatprep.subr.mxu0 0.0
  %3379 = vmatpush1.msra.mxu0 0.0
  %3380 = vmatprep.subr.mxu0 0.0
  %3381 = vmatpush1.msra.mxu0 0.0
  %3382 = vmatprep.subr.mxu0 0.0
  %3383 = vmatpush1.msra.mxu0 0.0
  %3384 = vmatprep.subr.mxu0 0.0
  %3385 = vmatpush1.msra.mxu0 0.0
  %3386 = vmatprep.subr.mxu0 0.0
  %3387 = vmatpush1.msra.mxu0 0.0
  %3388 = vmatprep.subr.mxu0 0.0
  %3389 = vmatpush1.msra.mxu0 0.0
  %3390 = vmatprep.subr.mxu0 0.0
  %3391 = vmatpush1.msra.mxu0 0.0
  %3392 = vmatprep.subr.mxu0 0.0
  %3393 = vmatpush1.msra.mxu0 0.0
  %3394 = vmatprep.subr.mxu0 0.0
  %3395 = vmatpush1.msra.mxu0 0.0
  %3396 = vmatprep.mubr.f32.mxu0 0.0
  %3397 = vmatmul.mubr.f32.gmra.mrb[0].mxu0 %v3298
  %v3398 = vpop.f32.mrb[0].mxu0
  %v3399 = vadd.f32 0.0, %v3398
  %v3400 = vpop.f32.mrb[0].mxu0
  %v3401 = vadd.f32 0.0, %v3400
  %3402 = vdwg.mxu0
  %3403 = vmatprep.subr.mxu0 %v3306
  %3404 = vmatpush1.msra.mxu0 %v3304
  %3405 = vmatprep.subr.mxu0 0.0
  %3406 = vmatpush1.msra.mxu0 0.0
  %3407 = vmatprep.subr.mxu0 0.0
  %3408 = vmatpush1.msra.mxu0 0.0
  %3409 = vmatprep.subr.mxu0 0.0
  %3410 = vmatpush1.msra.mxu0 0.0
  %3411 = vmatprep.subr.mxu0 0.0
  %3412 = vmatpush1.msra.mxu0 0.0
  %3413 = vmatprep.subr.mxu0 0.0
  %3414 = vmatpush1.msra.mxu0 0.0
  %3415 = vmatprep.subr.mxu0 0.0
  %3416 = vmatpush1.msra.mxu0 0.0
  %3417 = vmatprep.subr.mxu0 0.0
  %3418 = vmatpush1.msra.mxu0 0.0
  %3419 = vmatprep.subr.mxu0 0.0
  %3420 = vmatpush1.msra.mxu0 0.0
  %3421 = vmatprep.subr.mxu0 0.0
  %3422 = vmatpush1.msra.mxu0 0.0
  %3423 = vmatprep.subr.mxu0 0.0
  %3424 = vmatpush1.msra.mxu0 0.0
  %3425 = vmatprep.subr.mxu0 0.0
  %3426 = vmatpush1.msra.mxu0 0.0
  %3427 = vmatprep.subr.mxu0 0.0
  %3428 = vmatpush1.msra.mxu0 0.0
  %3429 = vmatprep.subr.mxu0 0.0
  %3430 = vmatpush1.msra.mxu0 0.0
  %3431 = vmatprep.subr.mxu0 0.0
  %3432 = vmatpush1.msra.mxu0 0.0
  %3433 = vmatprep.subr.mxu0 0.0
  %3434 = vmatpush1.msra.mxu0 0.0
  %3435 = vmatprep.subr.mxu0 0.0
  %3436 = vmatpush1.msra.mxu0 0.0
  %3437 = vmatprep.subr.mxu0 0.0
  %3438 = vmatpush1.msra.mxu0 0.0
  %3439 = vmatprep.subr.mxu0 0.0
  %3440 = vmatpush1.msra.mxu0 0.0
  %3441 = vmatprep.subr.mxu0 0.0
  %3442 = vmatpush1.msra.mxu0 0.0
  %3443 = vmatprep.subr.mxu0 0.0
  %3444 = vmatpush1.msra.mxu0 0.0
  %3445 = vmatprep.subr.mxu0 0.0
  %3446 = vmatpush1.msra.mxu0 0.0
  %3447 = vmatprep.subr.mxu0 0.0
  %3448 = vmatpush1.msra.mxu0 0.0
  %3449 = vmatprep.subr.mxu0 0.0
  %3450 = vmatpush1.msra.mxu0 0.0
  %3451 = vmatprep.subr.mxu0 0.0
  %3452 = vmatpush1.msra.mxu0 0.0
  %3453 = vmatprep.subr.mxu0 0.0
  %3454 = vmatpush1.msra.mxu0 0.0
  %3455 = vmatprep.subr.mxu0 0.0
  %3456 = vmatpush1.msra.mxu0 0.0
  %3457 = vmatprep.subr.mxu0 0.0
  %3458 = vmatpush1.msra.mxu0 0.0
  %3459 = vmatprep.subr.mxu0 0.0
  %3460 = vmatpush1.msra.mxu0 0.0
  %3461 = vmatprep.subr.mxu0 0.0
  %3462 = vmatpush1.msra.mxu0 0.0
  %3463 = vmatprep.subr.mxu0 0.0
  %3464 = vmatpush1.msra.mxu0 0.0
  %3465 = vmatprep.subr.mxu0 0.0
  %3466 = vmatpush1.msra.mxu0 0.0
  %3467 = vmatprep.mubr.f32.mxu0 0.0
  %3468 = vmatmul.mubr.f32.gmra.mrb[0].mxu0 %v3298
  %v3469 = vpop.f32.mrb[0].mxu0
  %v3470 = vadd.f32 0.0, %v3469
  %v3471 = vpop.f32.mrb[0].mxu0
  %v3472 = vadd.f32 0.0, %v3471
  %3473 = vdwg.mxu0
  %3474 = vmatprep.subr.mxu0 %v3310
  %3475 = vmatpush1.msra.mxu0 %v3308
  %3476 = vmatprep.subr.mxu0 0.0
  %3477 = vmatpush1.msra.mxu0 0.0
  %3478 = vmatprep.subr.mxu0 0.0
  %3479 = vmatpush1.msra.mxu0 0.0
  %3480 = vmatprep.subr.mxu0 0.0
  %3481 = vmatpush1.msra.mxu0 0.0
  %3482 = vmatprep.subr.mxu0 0.0
  %3483 = vmatpush1.msra.mxu0 0.0
  %3484 = vmatprep.subr.mxu0 0.0
  %3485 = vmatpush1.msra.mxu0 0.0
  %3486 = vmatprep.subr.mxu0 0.0
  %3487 = vmatpush1.msra.mxu0 0.0
  %3488 = vmatprep.subr.mxu0 0.0
  %3489 = vmatpush1.msra.mxu0 0.0
  %3490 = vmatprep.subr.mxu0 0.0
  %3491 = vmatpush1.msra.mxu0 0.0
  %3492 = vmatprep.subr.mxu0 0.0
  %3493 = vmatpush1.msra.mxu0 0.0
  %3494 = vmatprep.subr.mxu0 0.0
  %3495 = vmatpush1.msra.mxu0 0.0
  %3496 = vmatprep.subr.mxu0 0.0
  %3497 = vmatpush1.msra.mxu0 0.0
  %3498 = vmatprep.subr.mxu0 0.0
  %3499 = vmatpush1.msra.mxu0 0.0
  %3500 = vmatprep.subr.mxu0 0.0
  %3501 = vmatpush1.msra.mxu0 0.0
  %3502 = vmatprep.subr.mxu0 0.0
  %3503 = vmatpush1.msra.mxu0 0.0
  %3504 = vmatprep.subr.mxu0 0.0
  %3505 = vmatpush1.msra.mxu0 0.0
  %3506 = vmatprep.subr.mxu0 0.0
  %3507 = vmatpush1.msra.mxu0 0.0
  %3508 = vmatprep.subr.mxu0 0.0
  %3509 = vmatpush1.msra.mxu0 0.0
  %3510 = vmatprep.subr.mxu0 0.0
  %3511 = vmatpush1.msra.mxu0 0.0
  %3512 = vmatprep.subr.mxu0 0.0
  %3513 = vmatpush1.msra.mxu0 0.0
  %3514 = vmatprep.subr.mxu0 0.0
  %3515 = vmatpush1.msra.mxu0 0.0
  %3516 = vmatprep.subr.mxu0 0.0
  %3517 = vmatpush1.msra.mxu0 0.0
  %3518 = vmatprep.subr.mxu0 0.0
  %3519 = vmatpush1.msra.mxu0 0.0
  %3520 = vmatprep.subr.mxu0 0.0
  %3521 = vmatpush1.msra.mxu0 0.0
  %3522 = vmatprep.subr.mxu0 0.0
  %3523 = vmatpush1.msra.mxu0 0.0
  %3524 = vmatprep.subr.mxu0 0.0
  %3525 = vmatpush1.msra.mxu0 0.0
  %3526 = vmatprep.subr.mxu0 0.0
  %3527 = vmatpush1.msra.mxu0 0.0
  %3528 = vmatprep.subr.mxu0 0.0
  %3529 = vmatpush1.msra.mxu0 0.0
  %3530 = vmatprep.subr.mxu0 0.0
  %3531 = vmatpush1.msra.mxu0 0.0
  %3532 = vmatprep.subr.mxu0 0.0
  %3533 = vmatpush1.msra.mxu0 0.0
  %3534 = vmatprep.subr.mxu0 0.0
  %3535 = vmatpush1.msra.mxu0 0.0
  %3536 = vmatprep.subr.mxu0 0.0
  %3537 = vmatpush1.msra.mxu0 0.0
  %3538 = vmatprep.mubr.f32.mxu0 0.0
  %3539 = vmatmul.mubr.f32.gmra.mrb[0].mxu0 %v3298
  %v3540 = vpop.f32.mrb[0].mxu0
  %v3541 = vadd.f32 0.0, %v3540
  %v3542 = vpop.f32.mrb[0].mxu0
  %v3543 = vadd.f32 0.0, %v3542
  %3544 = vdwg.mxu0
  %3545 = vmatprep.subr.mxu0 %v3314
  %3546 = vmatpush1.msra.mxu0 %v3312
  %3547 = vmatprep.subr.mxu0 0.0
  %3548 = vmatpush1.msra.mxu0 0.0
  %3549 = vmatprep.subr.mxu0 0.0
  %3550 = vmatpush1.msra.mxu0 0.0
  %3551 = vmatprep.subr.mxu0 0.0
  %3552 = vmatpush1.msra.mxu0 0.0
  %3553 = vmatprep.subr.mxu0 0.0
  %3554 = vmatpush1.msra.mxu0 0.0
  %3555 = vmatprep.subr.mxu0 0.0
  %3556 = vmatpush1.msra.mxu0 0.0
  %3557 = vmatprep.subr.mxu0 0.0
  %3558 = vmatpush1.msra.mxu0 0.0
  %3559 = vmatprep.subr.mxu0 0.0
  %3560 = vmatpush1.msra.mxu0 0.0
  %3561 = vmatprep.subr.mxu0 0.0
  %3562 = vmatpush1.msra.mxu0 0.0
  %3563 = vmatprep.subr.mxu0 0.0
  %3564 = vmatpush1.msra.mxu0 0.0
  %3565 = vmatprep.subr.mxu0 0.0
  %3566 = vmatpush1.msra.mxu0 0.0
  %3567 = vmatprep.subr.mxu0 0.0
  %3568 = vmatpush1.msra.mxu0 0.0
  %3569 = vmatprep.subr.mxu0 0.0
  %3570 = vmatpush1.msra.mxu0 0.0
  %3571 = vmatprep.subr.mxu0 0.0
  %3572 = vmatpush1.msra.mxu0 0.0
  %3573 = vmatprep.subr.mxu0 0.0
  %3574 = vmatpush1.msra.mxu0 0.0
  %3575 = vmatprep.subr.mxu0 0.0
  %3576 = vmatpush1.msra.mxu0 0.0
  %3577 = vmatprep.subr.mxu0 0.0
  %3578 = vmatpush1.msra.mxu0 0.0
  %3579 = vmatprep.subr.mxu0 0.0
  %3580 = vmatpush1.msra.mxu0 0.0
  %3581 = vmatprep.subr.mxu0 0.0
  %3582 = vmatpush1.msra.mxu0 0.0
  %3583 = vmatprep.subr.mxu0 0.0
  %3584 = vmatpush1.msra.mxu0 0.0
  %3585 = vmatprep.subr.mxu0 0.0
  %3586 = vmatpush1.msra.mxu0 0.0
  %3587 = vmatprep.subr.mxu0 0.0
  %3588 = vmatpush1.msra.mxu0 0.0
  %3589 = vmatprep.subr.mxu0 0.0
  %3590 = vmatpush1.msra.mxu0 0.0
  %3591 = vmatprep.subr.mxu0 0.0
  %3592 = vmatpush1.msra.mxu0 0.0
  %3593 = vmatprep.subr.mxu0 0.0
  %3594 = vmatpush1.msra.mxu0 0.0
  %3595 = vmatprep.subr.mxu0 0.0
  %3596 = vmatpush1.msra.mxu0 0.0
  %3597 = vmatprep.subr.mxu0 0.0
  %3598 = vmatpush1.msra.mxu0 0.0
  %3599 = vmatprep.subr.mxu0 0.0
  %3600 = vmatpush1.msra.mxu0 0.0
  %3601 = vmatprep.subr.mxu0 0.0
  %3602 = vmatpush1.msra.mxu0 0.0
  %3603 = vmatprep.subr.mxu0 0.0
  %3604 = vmatpush1.msra.mxu0 0.0
  %3605 = vmatprep.subr.mxu0 0.0
  %3606 = vmatpush1.msra.mxu0 0.0
  %3607 = vmatprep.subr.mxu0 0.0
  %3608 = vmatpush1.msra.mxu0 0.0
  %3609 = vmatprep.mubr.f32.mxu0 0.0
  %3610 = vmatmul.mubr.f32.gmra.mrb[0].mxu0 %v3298
  %v3611 = vpop.f32.mrb[0].mxu0
  %v3612 = vadd.f32 0.0, %v3611
  %v3613 = vpop.f32.mrb[0].mxu0
  %v3614 = vadd.f32 0.0, %v3613
  %3615 = vdwg.mxu0
  %3616 = vmatprep.subr.mxu0 %v3318
  %3617 = vmatpush1.msra.mxu0 %v3316
  %3618 = vmatprep.subr.mxu0 0.0
  %3619 = vmatpush1.msra.mxu0 0.0
  %3620 = vmatprep.subr.mxu0 0.0
  %3621 = vmatpush1.msra.mxu0 0.0
  %3622 = vmatprep.subr.mxu0 0.0
  %3623 = vmatpush1.msra.mxu0 0.0
  %3624 = vmatprep.subr.mxu0 0.0
  %3625 = vmatpush1.msra.mxu0 0.0
  %3626 = vmatprep.subr.mxu0 0.0
  %3627 = vmatpush1.msra.mxu0 0.0
  %3628 = vmatprep.subr.mxu0 0.0
  %3629 = vmatpush1.msra.mxu0 0.0
  %3630 = vmatprep.subr.mxu0 0.0
  %3631 = vmatpush1.msra.mxu0 0.0
  %3632 = vmatprep.subr.mxu0 0.0
  %3633 = vmatpush1.msra.mxu0 0.0
  %3634 = vmatprep.subr.mxu0 0.0
  %3635 = vmatpush1.msra.mxu0 0.0
  %3636 = vmatprep.subr.mxu0 0.0
  %3637 = vmatpush1.msra.mxu0 0.0
  %3638 = vmatprep.subr.mxu0 0.0
  %3639 = vmatpush1.msra.mxu0 0.0
  %3640 = vmatprep.subr.mxu0 0.0
  %3641 = vmatpush1.msra.mxu0 0.0
  %3642 = vmatprep.subr.mxu0 0.0
  %3643 = vmatpush1.msra.mxu0 0.0
  %3644 = vmatprep.subr.mxu0 0.0
  %3645 = vmatpush1.msra.mxu0 0.0
  %3646 = vmatprep.subr.mxu0 0.0
  %3647 = vmatpush1.msra.mxu0 0.0
  %3648 = vmatprep.subr.mxu0 0.0
  %3649 = vmatpush1.msra.mxu0 0.0
  %3650 = vmatprep.subr.mxu0 0.0
  %3651 = vmatpush1.msra.mxu0 0.0
  %3652 = vmatprep.subr.mxu0 0.0
  %3653 = vmatpush1.msra.mxu0 0.0
  %3654 = vmatprep.subr.mxu0 0.0
  %3655 = vmatpush1.msra.mxu0 0.0
  %3656 = vmatprep.subr.mxu0 0.0
  %3657 = vmatpush1.msra.mxu0 0.0
  %3658 = vmatprep.subr.mxu0 0.0
  %3659 = vmatpush1.msra.mxu0 0.0
  %3660 = vmatprep.subr.mxu0 0.0
  %3661 = vmatpush1.msra.mxu0 0.0
  %3662 = vmatprep.subr.mxu0 0.0
  %3663 = vmatpush1.msra.mxu0 0.0
  %3664 = vmatprep.subr.mxu0 0.0
  %3665 = vmatpush1.msra.mxu0 0.0
  %3666 = vmatprep.subr.mxu0 0.0
  %3667 = vmatpush1.msra.mxu0 0.0
  %3668 = vmatprep.subr.mxu0 0.0
  %3669 = vmatpush1.msra.mxu0 0.0
  %3670 = vmatprep.subr.mxu0 0.0
  %3671 = vmatpush1.msra.mxu0 0.0
  %3672 = vmatprep.subr.mxu0 0.0
  %3673 = vmatpush1.msra.mxu0 0.0
  %3674 = vmatprep.subr.mxu0 0.0
  %3675 = vmatpush1.msra.mxu0 0.0
  %3676 = vmatprep.subr.mxu0 0.0
  %3677 = vmatpush1.msra.mxu0 0.0
  %3678 = vmatprep.subr.mxu0 0.0
  %3679 = vmatpush1.msra.mxu0 0.0
  %3680 = vmatprep.mubr.f32.mxu0 0.0
  %3681 = vmatmul.mubr.f32.gmra.mrb[0].mxu0 %v3298
  %v3682 = vpop.f32.mrb[0].mxu0
  %v3683 = vadd.f32 0.0, %v3682
  %v3684 = vpop.f32.mrb[0].mxu0
  %v3685 = vadd.f32 0.0, %v3684
  %3686 = vdwg.mxu0
  %3687 = vmatprep.subr.mxu0 %v3322
  %3688 = vmatpush1.msra.mxu0 %v3320
  %3689 = vmatprep.subr.mxu0 0.0
  %3690 = vmatpush1.msra.mxu0 0.0
  %3691 = vmatprep.subr.mxu0 0.0
  %3692 = vmatpush1.msra.mxu0 0.0
  %3693 = vmatprep.subr.mxu0 0.0
  %3694 = vmatpush1.msra.mxu0 0.0
  %3695 = vmatprep.subr.mxu0 0.0
  %3696 = vmatpush1.msra.mxu0 0.0
  %3697 = vmatprep.subr.mxu0 0.0
  %3698 = vmatpush1.msra.mxu0 0.0
  %3699 = vmatprep.subr.mxu0 0.0
  %3700 = vmatpush1.msra.mxu0 0.0
  %3701 = vmatprep.subr.mxu0 0.0
  %3702 = vmatpush1.msra.mxu0 0.0
  %3703 = vmatprep.subr.mxu0 0.0
  %3704 = vmatpush1.msra.mxu0 0.0
  %3705 = vmatprep.subr.mxu0 0.0
  %3706 = vmatpush1.msra.mxu0 0.0
  %3707 = vmatprep.subr.mxu0 0.0
  %3708 = vmatpush1.msra.mxu0 0.0
  %3709 = vmatprep.subr.mxu0 0.0
  %3710 = vmatpush1.msra.mxu0 0.0
  %3711 = vmatprep.subr.mxu0 0.0
  %3712 = vmatpush1.msra.mxu0 0.0
  %3713 = vmatprep.subr.mxu0 0.0
  %3714 = vmatpush1.msra.mxu0 0.0
  %3715 = vmatprep.subr.mxu0 0.0
  %3716 = vmatpush1.msra.mxu0 0.0
  %3717 = vmatprep.subr.mxu0 0.0
  %3718 = vmatpush1.msra.mxu0 0.0
  %3719 = vmatprep.subr.mxu0 0.0
  %3720 = vmatpush1.msra.mxu0 0.0
  %3721 = vmatprep.subr.mxu0 0.0
  %3722 = vmatpush1.msra.mxu0 0.0
  %3723 = vmatprep.subr.mxu0 0.0
  %3724 = vmatpush1.msra.mxu0 0.0
  %3725 = vmatprep.subr.mxu0 0.0
  %3726 = vmatpush1.msra.mxu0 0.0
  %3727 = vmatprep.subr.mxu0 0.0
  %3728 = vmatpush1.msra.mxu0 0.0
  %3729 = vmatprep.subr.mxu0 0.0
  %3730 = vmatpush1.msra.mxu0 0.0
  %3731 = vmatprep.subr.mxu0 0.0
  %3732 = vmatpush1.msra.mxu0 0.0
  %3733 = vmatprep.subr.mxu0 0.0
  %3734 = vmatpush1.msra.mxu0 0.0
  %3735 = vmatprep.subr.mxu0 0.0
  %3736 = vmatpush1.msra.mxu0 0.0
  %3737 = vmatprep.subr.mxu0 0.0
  %3738 = vmatpush1.msra.mxu0 0.0
  %3739 = vmatprep.subr.mxu0 0.0
  %3740 = vmatpush1.msra.mxu0 0.0
  %3741 = vmatprep.subr.mxu0 0.0
  %3742 = vmatpush1.msra.mxu0 0.0
  %3743 = vmatprep.subr.mxu0 0.0
  %3744 = vmatpush1.msra.mxu0 0.0
  %3745 = vmatprep.subr.mxu0 0.0
  %3746 = vmatpush1.msra.mxu0 0.0
  %3747 = vmatprep.subr.mxu0 0.0
  %3748 = vmatpush1.msra.mxu0 0.0
  %3749 = vmatprep.subr.mxu0 0.0
  %3750 = vmatpush1.msra.mxu0 0.0
  %3751 = vmatprep.mubr.f32.mxu0 0.0
  %3752 = vmatmul.mubr.f32.gmra.mrb[0].mxu0 %v3298
  %v3753 = vpop.f32.mrb[0].mxu0
  %v3754 = vadd.f32 0.0, %v3753
  %v3755 = vpop.f32.mrb[0].mxu0
  %v3756 = vadd.f32 0.0, %v3755
  %3757 = vdwg.mxu0
  %3758 = vmatprep.subr.mxu0 %v3326
  %3759 = vmatpush1.msra.mxu0 %v3324
  %3760 = vmatprep.subr.mxu0 0.0
  %3761 = vmatpush1.msra.mxu0 0.0
  %3762 = vmatprep.subr.mxu0 0.0
  %3763 = vmatpush1.msra.mxu0 0.0
  %3764 = vmatprep.subr.mxu0 0.0
  %3765 = vmatpush1.msra.mxu0 0.0
  %3766 = vmatprep.subr.mxu0 0.0
  %3767 = vmatpush1.msra.mxu0 0.0
  %3768 = vmatprep.subr.mxu0 0.0
  %3769 = vmatpush1.msra.mxu0 0.0
  %3770 = vmatprep.subr.mxu0 0.0
  %3771 = vmatpush1.msra.mxu0 0.0
  %3772 = vmatprep.subr.mxu0 0.0
  %3773 = vmatpush1.msra.mxu0 0.0
  %3774 = vmatprep.subr.mxu0 0.0
  %3775 = vmatpush1.msra.mxu0 0.0
  %3776 = vmatprep.subr.mxu0 0.0
  %3777 = vmatpush1.msra.mxu0 0.0
  %3778 = vmatprep.subr.mxu0 0.0
  %3779 = vmatpush1.msra.mxu0 0.0
  %3780 = vmatprep.subr.mxu0 0.0
  %3781 = vmatpush1.msra.mxu0 0.0
  %3782 = vmatprep.subr.mxu0 0.0
  %3783 = vmatpush1.msra.mxu0 0.0
  %3784 = vmatprep.subr.mxu0 0.0
  %3785 = vmatpush1.msra.mxu0 0.0
  %3786 = vmatprep.subr.mxu0 0.0
  %3787 = vmatpush1.msra.mxu0 0.0
  %3788 = vmatprep.subr.mxu0 0.0
  %3789 = vmatpush1.msra.mxu0 0.0
  %3790 = vmatprep.subr.mxu0 0.0
  %3791 = vmatpush1.msra.mxu0 0.0
  %3792 = vmatprep.subr.mxu0 0.0
  %3793 = vmatpush1.msra.mxu0 0.0
  %3794 = vmatprep.subr.mxu0 0.0
  %3795 = vmatpush1.msra.mxu0 0.0
  %3796 = vmatprep.subr.mxu0 0.0
  %3797 = vmatpush1.msra.mxu0 0.0
  %3798 = vmatprep.subr.mxu0 0.0
  %3799 = vmatpush1.msra.mxu0 0.0
  %3800 = vmatprep.subr.mxu0 0.0
  %3801 = vmatpush1.msra.mxu0 0.0
  %3802 = vmatprep.subr.mxu0 0.0
  %3803 = vmatpush1.msra.mxu0 0.0
  %3804 = vmatprep.subr.mxu0 0.0
  %3805 = vmatpush1.msra.mxu0 0.0
  %3806 = vmatprep.subr.mxu0 0.0
  %3807 = vmatpush1.msra.mxu0 0.0
  %3808 = vmatprep.subr.mxu0 0.0
  %3809 = vmatpush1.msra.mxu0 0.0
  %3810 = vmatprep.subr.mxu0 0.0
  %3811 = vmatpush1.msra.mxu0 0.0
  %3812 = vmatprep.subr.mxu0 0.0
  %3813 = vmatpush1.msra.mxu0 0.0
  %3814 = vmatprep.subr.mxu0 0.0
  %3815 = vmatpush1.msra.mxu0 0.0
  %3816 = vmatprep.subr.mxu0 0.0
  %3817 = vmatpush1.msra.mxu0 0.0
  %3818 = vmatprep.subr.mxu0 0.0
  %3819 = vmatpush1.msra.mxu0 0.0
  %3820 = vmatprep.subr.mxu0 0.0
  %3821 = vmatpush1.msra.mxu0 0.0
  %3822 = vmatprep.mubr.f32.mxu0 0.0
  %3823 = vmatmul.mubr.f32.gmra.mrb[0].mxu0 %v3298
  %v3824 = vpop.f32.mrb[0].mxu0
  %v3825 = vadd.f32 0.0, %v3824
  %v3826 = vpop.f32.mrb[0].mxu0
  %v3827 = vadd.f32 0.0, %v3826
  %3828 = vdwg.mxu0
  %3829 = vmatprep.subr.mxu0 %v3330
  %3830 = vmatpush1.msra.mxu0 %v3328
  %3831 = vmatprep.subr.mxu0 0.0
  %3832 = vmatpush1.msra.mxu0 0.0
  %3833 = vmatprep.subr.mxu0 0.0
  %3834 = vmatpush1.msra.mxu0 0.0
  %3835 = vmatprep.subr.mxu0 0.0
  %3836 = vmatpush1.msra.mxu0 0.0
  %3837 = vmatprep.subr.mxu0 0.0
  %3838 = vmatpush1.msra.mxu0 0.0
  %3839 = vmatprep.subr.mxu0 0.0
  %3840 = vmatpush1.msra.mxu0 0.0
  %3841 = vmatprep.subr.mxu0 0.0
  %3842 = vmatpush1.msra.mxu0 0.0
  %3843 = vmatprep.subr.mxu0 0.0
  %3844 = vmatpush1.msra.mxu0 0.0
  %3845 = vmatprep.subr.mxu0 0.0
  %3846 = vmatpush1.msra.mxu0 0.0
  %3847 = vmatprep.subr.mxu0 0.0
  %3848 = vmatpush1.msra.mxu0 0.0
  %3849 = vmatprep.subr.mxu0 0.0
  %3850 = vmatpush1.msra.mxu0 0.0
  %3851 = vmatprep.subr.mxu0 0.0
  %3852 = vmatpush1.msra.mxu0 0.0
  %3853 = vmatprep.subr.mxu0 0.0
  %3854 = vmatpush1.msra.mxu0 0.0
  %3855 = vmatprep.subr.mxu0 0.0
  %3856 = vmatpush1.msra.mxu0 0.0
  %3857 = vmatprep.subr.mxu0 0.0
  %3858 = vmatpush1.msra.mxu0 0.0
  %3859 = vmatprep.subr.mxu0 0.0
  %3860 = vmatpush1.msra.mxu0 0.0
  %3861 = vmatprep.subr.mxu0 0.0
  %3862 = vmatpush1.msra.mxu0 0.0
  %3863 = vmatprep.subr.mxu0 0.0
  %3864 = vmatpush1.msra.mxu0 0.0
  %3865 = vmatprep.subr.mxu0 0.0
  %3866 = vmatpush1.msra.mxu0 0.0
  %3867 = vmatprep.subr.mxu0 0.0
  %3868 = vmatpush1.msra.mxu0 0.0
  %3869 = vmatprep.subr.mxu0 0.0
  %3870 = vmatpush1.msra.mxu0 0.0
  %3871 = vmatprep.subr.mxu0 0.0
  %3872 = vmatpush1.msra.mxu0 0.0
  %3873 = vmatprep.subr.mxu0 0.0
  %3874 = vmatpush1.msra.mxu0 0.0
  %3875 = vmatprep.subr.mxu0 0.0
  %3876 = vmatpush1.msra.mxu0 0.0
  %3877 = vmatprep.subr.mxu0 0.0
  %3878 = vmatpush1.msra.mxu0 0.0
  %3879 = vmatprep.subr.mxu0 0.0
  %3880 = vmatpush1.msra.mxu0 0.0
  %3881 = vmatprep.subr.mxu0 0.0
  %3882 = vmatpush1.msra.mxu0 0.0
  %3883 = vmatprep.subr.mxu0 0.0
  %3884 = vmatpush1.msra.mxu0 0.0
  %3885 = vmatprep.subr.mxu0 0.0
  %3886 = vmatpush1.msra.mxu0 0.0
  %3887 = vmatprep.subr.mxu0 0.0
  %3888 = vmatpush1.msra.mxu0 0.0
  %3889 = vmatprep.subr.mxu0 0.0
  %3890 = vmatpush1.msra.mxu0 0.0
  %3891 = vmatprep.subr.mxu0 0.0
  %3892 = vmatpush1.msra.mxu0 0.0
  %3893 = vmatprep.mubr.f32.mxu0 0.0
  %3894 = vmatmul.mubr.f32.gmra.mrb[0].mxu0 %v3298
  %v3895 = vpop.f32.mrb[0].mxu0
  %v3896 = vadd.f32 0.0, %v3895
  %v3897 = vpop.f32.mrb[0].mxu0
  %v3898 = vadd.f32 0.0, %v3897
  %3899 = vdwg.mxu0
  %v3900 = vadd.f32 %v3170, %v3399
  %v3901 = vadd.f32 %v3171, %v3401
  %v3902 = vadd.f32 %v3172, %v3470
  %v3903 = vadd.f32 %v3173, %v3472
  %v3904 = vadd.f32 %v3174, %v3541
  %v3905 = vadd.f32 %v3175, %v3543
  %v3906 = vadd.f32 %v3176, %v3612
  %v3907 = vadd.f32 %v3177, %v3614
  %v3908 = vadd.f32 %v3178, %v3683
  %v3909 = vadd.f32 %v3179, %v3685
  %v3910 = vadd.f32 %v3180, %v3754
  %v3911 = vadd.f32 %v3181, %v3756
  %v3912 = vadd.f32 %v3182, %v3825
  %v3913 = vadd.f32 %v3183, %v3827
  %v3914 = vadd.f32 %v3184, %v3896
  %v3915 = vadd.f32 %v3185, %v3898
  %3916 = vrot.lane.b32.xlu0 %v36, 127
  %v3917 = vpop.permute.xlu0 %3916
  %3918 = vrot.lane.b32.xlu0 %v52, 127
  %v3919 = vpop.permute.xlu0 %3918
  %3920 = vrot.lane.b32.xlu0 %v37, 127
  %v3921 = vpop.permute.xlu0 %3920
  %3922 = vrot.lane.b32.xlu0 %v53, 127
  %v3923 = vpop.permute.xlu0 %3922
  %3924 = vrot.lane.b32.xlu0 %v38, 127
  %v3925 = vpop.permute.xlu0 %3924
  %3926 = vrot.lane.b32.xlu0 %v54, 127
  %v3927 = vpop.permute.xlu0 %3926
  %3928 = vrot.lane.b32.xlu0 %v39, 127
  %v3929 = vpop.permute.xlu0 %3928
  %3930 = vrot.lane.b32.xlu0 %v55, 127
  %v3931 = vpop.permute.xlu0 %3930
  %3932 = vrot.lane.b32.xlu0 %v40, 127
  %v3933 = vpop.permute.xlu0 %3932
  %3934 = vrot.lane.b32.xlu0 %v56, 127
  %v3935 = vpop.permute.xlu0 %3934
  %3936 = vrot.lane.b32.xlu0 %v41, 127
  %v3937 = vpop.permute.xlu0 %3936
  %3938 = vrot.lane.b32.xlu0 %v57, 127
  %v3939 = vpop.permute.xlu0 %3938
  %3940 = vrot.lane.b32.xlu0 %v42, 127
  %v3941 = vpop.permute.xlu0 %3940
  %3942 = vrot.lane.b32.xlu0 %v58, 127
  %v3943 = vpop.permute.xlu0 %3942
  %3944 = vrot.lane.b32.xlu0 %v43, 127
  %v3945 = vpop.permute.xlu0 %3944
  %3946 = vrot.lane.b32.xlu0 %v59, 127
  %v3947 = vpop.permute.xlu0 %3946
  %vm3948 = vcmp.lt.s32.totalorder %v101, 127
  %v3949 = vsel %vm3948, %v3945, %v3947
  %v3950 = vsel %vm3948, %v3943, %v3945
  %v3951 = vsel %vm3948, %v3941, %v3943
  %v3952 = vsel %vm3948, %v3939, %v3941
  %v3953 = vsel %vm3948, %v3937, %v3939
  %v3954 = vsel %vm3948, %v3935, %v3937
  %v3955 = vsel %vm3948, %v3933, %v3935
  %v3956 = vsel %vm3948, %v3931, %v3933
  %v3957 = vsel %vm3948, %v3929, %v3931
  %v3958 = vsel %vm3948, %v3927, %v3929
  %v3959 = vsel %vm3948, %v3925, %v3927
  %v3960 = vsel %vm3948, %v3923, %v3925
  %v3961 = vsel %vm3948, %v3921, %v3923
  %v3962 = vsel %vm3948, %v3919, %v3921
  %v3963 = vsel %vm3948, %v3917, %v3919
  %v3964 = vsel %vm3948, %v3947, %v3917
  %s3965 = scalar_lea.vmem %s1, 80
  %v3966 = vld [vmem:[%s3965] sm:$0xff]
  %v3967 = vld [vmem:[%s3965 + $0x8] sm:$0xff]
  %v3970 = vlaneseq
  %v3971 = vshrl.u32 %v3970, 7
  %v3972 = vsub.s32 0, %v3971
  %v3973 = vrot.slane %v3966, %v3972
  %v3974 = vlaneseq
  %v3975 = vshrl.u32 %v3974, 7
  %v3976 = vsub.s32 1, %v3975
  %v3977 = vrot.slane %v3966, %v3976
  %v3978 = vlaneseq
  %v3979 = vshrl.u32 %v3978, 7
  %v3980 = vsub.s32 2, %v3979
  %v3981 = vrot.slane %v3966, %v3980
  %v3982 = vlaneseq
  %v3983 = vshrl.u32 %v3982, 7
  %v3984 = vsub.s32 3, %v3983
  %v3985 = vrot.slane %v3966, %v3984
  %v3986 = vlaneseq
  %v3987 = vshrl.u32 %v3986, 7
  %v3988 = vsub.s32 4, %v3987
  %v3989 = vrot.slane %v3966, %v3988
  %v3990 = vlaneseq
  %v3991 = vshrl.u32 %v3990, 7
  %v3992 = vsub.s32 5, %v3991
  %v3993 = vrot.slane %v3966, %v3992
  %v3994 = vlaneseq
  %v3995 = vshrl.u32 %v3994, 7
  %v3996 = vsub.s32 6, %v3995
  %v3997 = vrot.slane %v3966, %v3996
  %v3998 = vlaneseq
  %v3999 = vshrl.u32 %v3998, 7
  %v4000 = vsub.s32 7, %v3999
  %v4001 = vrot.slane %v3966, %v4000
  %v4002 = vlaneseq
  %v4003 = vshrl.u32 %v4002, 7
  %v4004 = vsub.s32 0, %v4003
  %v4005 = vrot.slane %v3967, %v4004
  %v4006 = vlaneseq
  %v4007 = vshrl.u32 %v4006, 7
  %v4008 = vsub.s32 1, %v4007
  %v4009 = vrot.slane %v3967, %v4008
  %v4010 = vlaneseq
  %v4011 = vshrl.u32 %v4010, 7
  %v4012 = vsub.s32 2, %v4011
  %v4013 = vrot.slane %v3967, %v4012
  %v4014 = vlaneseq
  %v4015 = vshrl.u32 %v4014, 7
  %v4016 = vsub.s32 3, %v4015
  %v4017 = vrot.slane %v3967, %v4016
  %v4018 = vlaneseq
  %v4019 = vshrl.u32 %v4018, 7
  %v4020 = vsub.s32 4, %v4019
  %v4021 = vrot.slane %v3967, %v4020
  %v4022 = vlaneseq
  %v4023 = vshrl.u32 %v4022, 7
  %v4024 = vsub.s32 5, %v4023
  %v4025 = vrot.slane %v3967, %v4024
  %v4026 = vlaneseq
  %v4027 = vshrl.u32 %v4026, 7
  %v4028 = vsub.s32 6, %v4027
  %v4029 = vrot.slane %v3967, %v4028
  %v4030 = vlaneseq
  %v4031 = vshrl.u32 %v4030, 7
  %v4032 = vsub.s32 7, %v4031
  %v4033 = vrot.slane %v3967, %v4032
  %v4050 = vmul.f32 %v3963, %v3973
  %v4051 = vmul.f32 %v3962, %v3977
  %v4052 = vmul.f32 %v3961, %v3981
  %v4053 = vmul.f32 %v3960, %v3985
  %v4054 = vmul.f32 %v3959, %v3989
  %v4055 = vmul.f32 %v3958, %v3993
  %v4056 = vmul.f32 %v3957, %v3997
  %v4057 = vmul.f32 %v3956, %v4001
  %v4058 = vmul.f32 %v3955, %v4005
  %v4059 = vmul.f32 %v3954, %v4009
  %v4060 = vmul.f32 %v3953, %v4013
  %v4061 = vmul.f32 %v3952, %v4017
  %v4062 = vmul.f32 %v3951, %v4021
  %v4063 = vmul.f32 %v3950, %v4025
  %v4064 = vmul.f32 %v3949, %v4029
  %v4065 = vmul.f32 %v3964, %v4033
  %s4066 = scalar_lea.vmem %s2, 40
  %v4067 = vld [vmem:[%s4066] sm:$0xff]
  %v4069 = vsel %vm372, %v4067, 0
  %v4072 = vsel %vm376, %v4050, 0
  %v4075 = vsel %vm376, %v4051, 0
  %v4078 = vsel %vm376, %v4052, 0
  %v4081 = vsel %vm376, %v4053, 0
  %v4084 = vsel %vm376, %v4054, 0
  %v4087 = vsel %vm376, %v4055, 0
  %v4090 = vsel %vm376, %v4056, 0
  %v4093 = vsel %vm376, %v4057, 0
  %v4096 = vsel %vm376, %v4058, 0
  %v4099 = vsel %vm376, %v4059, 0
  %v4102 = vsel %vm376, %v4060, 0
  %v4105 = vsel %vm376, %v4061, 0
  %v4108 = vsel %vm376, %v4062, 0
  %v4111 = vsel %vm376, %v4063, 0
  %v4114 = vsel %vm376, %v4064, 0
  %v4117 = vsel %vm376, %v4065, 0
  %4119 = vmatprep.subr.mxu0 %v4075
  %4120 = vmatpush1.msra.mxu0 %v4072
  %4121 = vmatprep.subr.mxu0 0.0
  %4122 = vmatpush1.msra.mxu0 0.0
  %4123 = vmatprep.subr.mxu0 0.0
  %4124 = vmatpush1.msra.mxu0 0.0
  %4125 = vmatprep.subr.mxu0 0.0
  %4126 = vmatpush1.msra.mxu0 0.0
  %4127 = vmatprep.subr.mxu0 0.0
  %4128 = vmatpush1.msra.mxu0 0.0
  %4129 = vmatprep.subr.mxu0 0.0
  %4130 = vmatpush1.msra.mxu0 0.0
  %4131 = vmatprep.subr.mxu0 0.0
  %4132 = vmatpush1.msra.mxu0 0.0
  %4133 = vmatprep.subr.mxu0 0.0
  %4134 = vmatpush1.msra.mxu0 0.0
  %4135 = vmatprep.subr.mxu0 0.0
  %4136 = vmatpush1.msra.mxu0 0.0
  %4137 = vmatprep.subr.mxu0 0.0
  %4138 = vmatpush1.msra.mxu0 0.0
  %4139 = vmatprep.subr.mxu0 0.0
  %4140 = vmatpush1.msra.mxu0 0.0
  %4141 = vmatprep.subr.mxu0 0.0
  %4142 = vmatpush1.msra.mxu0 0.0
  %4143 = vmatprep.subr.mxu0 0.0
  %4144 = vmatpush1.msra.mxu0 0.0
  %4145 = vmatprep.subr.mxu0 0.0
  %4146 = vmatpush1.msra.mxu0 0.0
  %4147 = vmatprep.subr.mxu0 0.0
  %4148 = vmatpush1.msra.mxu0 0.0
  %4149 = vmatprep.subr.mxu0 0.0
  %4150 = vmatpush1.msra.mxu0 0.0
  %4151 = vmatprep.subr.mxu0 0.0
  %4152 = vmatpush1.msra.mxu0 0.0
  %4153 = vmatprep.subr.mxu0 0.0
  %4154 = vmatpush1.msra.mxu0 0.0
  %4155 = vmatprep.subr.mxu0 0.0
  %4156 = vmatpush1.msra.mxu0 0.0
  %4157 = vmatprep.subr.mxu0 0.0
  %4158 = vmatpush1.msra.mxu0 0.0
  %4159 = vmatprep.subr.mxu0 0.0
  %4160 = vmatpush1.msra.mxu0 0.0
  %4161 = vmatprep.subr.mxu0 0.0
  %4162 = vmatpush1.msra.mxu0 0.0
  %4163 = vmatprep.subr.mxu0 0.0
  %4164 = vmatpush1.msra.mxu0 0.0
  %4165 = vmatprep.subr.mxu0 0.0
  %4166 = vmatpush1.msra.mxu0 0.0
  %4167 = vmatprep.subr.mxu0 0.0
  %4168 = vmatpush1.msra.mxu0 0.0
  %4169 = vmatprep.subr.mxu0 0.0
  %4170 = vmatpush1.msra.mxu0 0.0
  %4171 = vmatprep.subr.mxu0 0.0
  %4172 = vmatpush1.msra.mxu0 0.0
  %4173 = vmatprep.subr.mxu0 0.0
  %4174 = vmatpush1.msra.mxu0 0.0
  %4175 = vmatprep.subr.mxu0 0.0
  %4176 = vmatpush1.msra.mxu0 0.0
  %4177 = vmatprep.subr.mxu0 0.0
  %4178 = vmatpush1.msra.mxu0 0.0
  %4179 = vmatprep.subr.mxu0 0.0
  %4180 = vmatpush1.msra.mxu0 0.0
  %4181 = vmatprep.subr.mxu0 0.0
  %4182 = vmatpush1.msra.mxu0 0.0
  %4183 = vmatprep.mubr.f32.mxu0 0.0
  %4184 = vmatmul.mubr.f32.gmra.mrb[0].mxu0 %v4069
  %v4185 = vpop.f32.mrb[0].mxu0
  %v4186 = vadd.f32 0.0, %v4185
  %v4187 = vpop.f32.mrb[0].mxu0
  %v4188 = vadd.f32 0.0, %v4187
  %4189 = vdwg.mxu0
  %4190 = vmatprep.subr.mxu0 %v4081
  %4191 = vmatpush1.msra.mxu0 %v4078
  %4192 = vmatprep.subr.mxu0 0.0
  %4193 = vmatpush1.msra.mxu0 0.0
  %4194 = vmatprep.subr.mxu0 0.0
  %4195 = vmatpush1.msra.mxu0 0.0
  %4196 = vmatprep.subr.mxu0 0.0
  %4197 = vmatpush1.msra.mxu0 0.0
  %4198 = vmatprep.subr.mxu0 0.0
  %4199 = vmatpush1.msra.mxu0 0.0
  %4200 = vmatprep.subr.mxu0 0.0
  %4201 = vmatpush1.msra.mxu0 0.0
  %4202 = vmatprep.subr.mxu0 0.0
  %4203 = vmatpush1.msra.mxu0 0.0
  %4204 = vmatprep.subr.mxu0 0.0
  %4205 = vmatpush1.msra.mxu0 0.0
  %4206 = vmatprep.subr.mxu0 0.0
  %4207 = vmatpush1.msra.mxu0 0.0
  %4208 = vmatprep.subr.mxu0 0.0
  %4209 = vmatpush1.msra.mxu0 0.0
  %4210 = vmatprep.subr.mxu0 0.0
  %4211 = vmatpush1.msra.mxu0 0.0
  %4212 = vmatprep.subr.mxu0 0.0
  %4213 = vmatpush1.msra.mxu0 0.0
  %4214 = vmatprep.subr.mxu0 0.0
  %4215 = vmatpush1.msra.mxu0 0.0
  %4216 = vmatprep.subr.mxu0 0.0
  %4217 = vmatpush1.msra.mxu0 0.0
  %4218 = vmatprep.subr.mxu0 0.0
  %4219 = vmatpush1.msra.mxu0 0.0
  %4220 = vmatprep.subr.mxu0 0.0
  %4221 = vmatpush1.msra.mxu0 0.0
  %4222 = vmatprep.subr.mxu0 0.0
  %4223 = vmatpush1.msra.mxu0 0.0
  %4224 = vmatprep.subr.mxu0 0.0
  %4225 = vmatpush1.msra.mxu0 0.0
  %4226 = vmatprep.subr.mxu0 0.0
  %4227 = vmatpush1.msra.mxu0 0.0
  %4228 = vmatprep.subr.mxu0 0.0
  %4229 = vmatpush1.msra.mxu0 0.0
  %4230 = vmatprep.subr.mxu0 0.0
  %4231 = vmatpush1.msra.mxu0 0.0
  %4232 = vmatprep.subr.mxu0 0.0
  %4233 = vmatpush1.msra.mxu0 0.0
  %4234 = vmatprep.subr.mxu0 0.0
  %4235 = vmatpush1.msra.mxu0 0.0
  %4236 = vmatprep.subr.mxu0 0.0
  %4237 = vmatpush1.msra.mxu0 0.0
  %4238 = vmatprep.subr.mxu0 0.0
  %4239 = vmatpush1.msra.mxu0 0.0
  %4240 = vmatprep.subr.mxu0 0.0
  %4241 = vmatpush1.msra.mxu0 0.0
  %4242 = vmatprep.subr.mxu0 0.0
  %4243 = vmatpush1.msra.mxu0 0.0
  %4244 = vmatprep.subr.mxu0 0.0
  %4245 = vmatpush1.msra.mxu0 0.0
  %4246 = vmatprep.subr.mxu0 0.0
  %4247 = vmatpush1.msra.mxu0 0.0
  %4248 = vmatprep.subr.mxu0 0.0
  %4249 = vmatpush1.msra.mxu0 0.0
  %4250 = vmatprep.subr.mxu0 0.0
  %4251 = vmatpush1.msra.mxu0 0.0
  %4252 = vmatprep.subr.mxu0 0.0
  %4253 = vmatpush1.msra.mxu0 0.0
  %4254 = vmatprep.mubr.f32.mxu0 0.0
  %4255 = vmatmul.mubr.f32.gmra.mrb[0].mxu0 %v4069
  %v4256 = vpop.f32.mrb[0].mxu0
  %v4257 = vadd.f32 0.0, %v4256
  %v4258 = vpop.f32.mrb[0].mxu0
  %v4259 = vadd.f32 0.0, %v4258
  %4260 = vdwg.mxu0
  %4261 = vmatprep.subr.mxu0 %v4087
  %4262 = vmatpush1.msra.mxu0 %v4084
  %4263 = vmatprep.subr.mxu0 0.0
  %4264 = vmatpush1.msra.mxu0 0.0
  %4265 = vmatprep.subr.mxu0 0.0
  %4266 = vmatpush1.msra.mxu0 0.0
  %4267 = vmatprep.subr.mxu0 0.0
  %4268 = vmatpush1.msra.mxu0 0.0
  %4269 = vmatprep.subr.mxu0 0.0
  %4270 = vmatpush1.msra.mxu0 0.0
  %4271 = vmatprep.subr.mxu0 0.0
  %4272 = vmatpush1.msra.mxu0 0.0
  %4273 = vmatprep.subr.mxu0 0.0
  %4274 = vmatpush1.msra.mxu0 0.0
  %4275 = vmatprep.subr.mxu0 0.0
  %4276 = vmatpush1.msra.mxu0 0.0
  %4277 = vmatprep.subr.mxu0 0.0
  %4278 = vmatpush1.msra.mxu0 0.0
  %4279 = vmatprep.subr.mxu0 0.0
  %4280 = vmatpush1.msra.mxu0 0.0
  %4281 = vmatprep.subr.mxu0 0.0
  %4282 = vmatpush1.msra.mxu0 0.0
  %4283 = vmatprep.subr.mxu0 0.0
  %4284 = vmatpush1.msra.mxu0 0.0
  %4285 = vmatprep.subr.mxu0 0.0
  %4286 = vmatpush1.msra.mxu0 0.0
  %4287 = vmatprep.subr.mxu0 0.0
  %4288 = vmatpush1.msra.mxu0 0.0
  %4289 = vmatprep.subr.mxu0 0.0
  %4290 = vmatpush1.msra.mxu0 0.0
  %4291 = vmatprep.subr.mxu0 0.0
  %4292 = vmatpush1.msra.mxu0 0.0
  %4293 = vmatprep.subr.mxu0 0.0
  %4294 = vmatpush1.msra.mxu0 0.0
  %4295 = vmatprep.subr.mxu0 0.0
  %4296 = vmatpush1.msra.mxu0 0.0
  %4297 = vmatprep.subr.mxu0 0.0
  %4298 = vmatpush1.msra.mxu0 0.0
  %4299 = vmatprep.subr.mxu0 0.0
  %4300 = vmatpush1.msra.mxu0 0.0
  %4301 = vmatprep.subr.mxu0 0.0
  %4302 = vmatpush1.msra.mxu0 0.0
  %4303 = vmatprep.subr.mxu0 0.0
  %4304 = vmatpush1.msra.mxu0 0.0
  %4305 = vmatprep.subr.mxu0 0.0
  %4306 = vmatpush1.msra.mxu0 0.0
  %4307 = vmatprep.subr.mxu0 0.0
  %4308 = vmatpush1.msra.mxu0 0.0
  %4309 = vmatprep.subr.mxu0 0.0
  %4310 = vmatpush1.msra.mxu0 0.0
  %4311 = vmatprep.subr.mxu0 0.0
  %4312 = vmatpush1.msra.mxu0 0.0
  %4313 = vmatprep.subr.mxu0 0.0
  %4314 = vmatpush1.msra.mxu0 0.0
  %4315 = vmatprep.subr.mxu0 0.0
  %4316 = vmatpush1.msra.mxu0 0.0
  %4317 = vmatprep.subr.mxu0 0.0
  %4318 = vmatpush1.msra.mxu0 0.0
  %4319 = vmatprep.subr.mxu0 0.0
  %4320 = vmatpush1.msra.mxu0 0.0
  %4321 = vmatprep.subr.mxu0 0.0
  %4322 = vmatpush1.msra.mxu0 0.0
  %4323 = vmatprep.subr.mxu0 0.0
  %4324 = vmatpush1.msra.mxu0 0.0
  %4325 = vmatprep.mubr.f32.mxu0 0.0
  %4326 = vmatmul.mubr.f32.gmra.mrb[0].mxu0 %v4069
  %v4327 = vpop.f32.mrb[0].mxu0
  %v4328 = vadd.f32 0.0, %v4327
  %v4329 = vpop.f32.mrb[0].mxu0
  %v4330 = vadd.f32 0.0, %v4329
  %4331 = vdwg.mxu0
  %4332 = vmatprep.subr.mxu0 %v4093
  %4333 = vmatpush1.msra.mxu0 %v4090
  %4334 = vmatprep.subr.mxu0 0.0
  %4335 = vmatpush1.msra.mxu0 0.0
  %4336 = vmatprep.subr.mxu0 0.0
  %4337 = vmatpush1.msra.mxu0 0.0
  %4338 = vmatprep.subr.mxu0 0.0
  %4339 = vmatpush1.msra.mxu0 0.0
  %4340 = vmatprep.subr.mxu0 0.0
  %4341 = vmatpush1.msra.mxu0 0.0
  %4342 = vmatprep.subr.mxu0 0.0
  %4343 = vmatpush1.msra.mxu0 0.0
  %4344 = vmatprep.subr.mxu0 0.0
  %4345 = vmatpush1.msra.mxu0 0.0
  %4346 = vmatprep.subr.mxu0 0.0
  %4347 = vmatpush1.msra.mxu0 0.0
  %4348 = vmatprep.subr.mxu0 0.0
  %4349 = vmatpush1.msra.mxu0 0.0
  %4350 = vmatprep.subr.mxu0 0.0
  %4351 = vmatpush1.msra.mxu0 0.0
  %4352 = vmatprep.subr.mxu0 0.0
  %4353 = vmatpush1.msra.mxu0 0.0
  %4354 = vmatprep.subr.mxu0 0.0
  %4355 = vmatpush1.msra.mxu0 0.0
  %4356 = vmatprep.subr.mxu0 0.0
  %4357 = vmatpush1.msra.mxu0 0.0
  %4358 = vmatprep.subr.mxu0 0.0
  %4359 = vmatpush1.msra.mxu0 0.0
  %4360 = vmatprep.subr.mxu0 0.0
  %4361 = vmatpush1.msra.mxu0 0.0
  %4362 = vmatprep.subr.mxu0 0.0
  %4363 = vmatpush1.msra.mxu0 0.0
  %4364 = vmatprep.subr.mxu0 0.0
  %4365 = vmatpush1.msra.mxu0 0.0
  %4366 = vmatprep.subr.mxu0 0.0
  %4367 = vmatpush1.msra.mxu0 0.0
  %4368 = vmatprep.subr.mxu0 0.0
  %4369 = vmatpush1.msra.mxu0 0.0
  %4370 = vmatprep.subr.mxu0 0.0
  %4371 = vmatpush1.msra.mxu0 0.0
  %4372 = vmatprep.subr.mxu0 0.0
  %4373 = vmatpush1.msra.mxu0 0.0
  %4374 = vmatprep.subr.mxu0 0.0
  %4375 = vmatpush1.msra.mxu0 0.0
  %4376 = vmatprep.subr.mxu0 0.0
  %4377 = vmatpush1.msra.mxu0 0.0
  %4378 = vmatprep.subr.mxu0 0.0
  %4379 = vmatpush1.msra.mxu0 0.0
  %4380 = vmatprep.subr.mxu0 0.0
  %4381 = vmatpush1.msra.mxu0 0.0
  %4382 = vmatprep.subr.mxu0 0.0
  %4383 = vmatpush1.msra.mxu0 0.0
  %4384 = vmatprep.subr.mxu0 0.0
  %4385 = vmatpush1.msra.mxu0 0.0
  %4386 = vmatprep.subr.mxu0 0.0
  %4387 = vmatpush1.msra.mxu0 0.0
  %4388 = vmatprep.subr.mxu0 0.0
  %4389 = vmatpush1.msra.mxu0 0.0
  %4390 = vmatprep.subr.mxu0 0.0
  %4391 = vmatpush1.msra.mxu0 0.0
  %4392 = vmatprep.subr.mxu0 0.0
  %4393 = vmatpush1.msra.mxu0 0.0
  %4394 = vmatprep.subr.mxu0 0.0
  %4395 = vmatpush1.msra.mxu0 0.0
  %4396 = vmatprep.mubr.f32.mxu0 0.0
  %4397 = vmatmul.mubr.f32.gmra.mrb[0].mxu0 %v4069
  %v4398 = vpop.f32.mrb[0].mxu0
  %v4399 = vadd.f32 0.0, %v4398
  %v4400 = vpop.f32.mrb[0].mxu0
  %v4401 = vadd.f32 0.0, %v4400
  %4402 = vdwg.mxu0
  %4403 = vmatprep.subr.mxu0 %v4099
  %4404 = vmatpush1.msra.mxu0 %v4096
  %4405 = vmatprep.subr.mxu0 0.0
  %4406 = vmatpush1.msra.mxu0 0.0
  %4407 = vmatprep.subr.mxu0 0.0
  %4408 = vmatpush1.msra.mxu0 0.0
  %4409 = vmatprep.subr.mxu0 0.0
  %4410 = vmatpush1.msra.mxu0 0.0
  %4411 = vmatprep.subr.mxu0 0.0
  %4412 = vmatpush1.msra.mxu0 0.0
  %4413 = vmatprep.subr.mxu0 0.0
  %4414 = vmatpush1.msra.mxu0 0.0
  %4415 = vmatprep.subr.mxu0 0.0
  %4416 = vmatpush1.msra.mxu0 0.0
  %4417 = vmatprep.subr.mxu0 0.0
  %4418 = vmatpush1.msra.mxu0 0.0
  %4419 = vmatprep.subr.mxu0 0.0
  %4420 = vmatpush1.msra.mxu0 0.0
  %4421 = vmatprep.subr.mxu0 0.0
  %4422 = vmatpush1.msra.mxu0 0.0
  %4423 = vmatprep.subr.mxu0 0.0
  %4424 = vmatpush1.msra.mxu0 0.0
  %4425 = vmatprep.subr.mxu0 0.0
  %4426 = vmatpush1.msra.mxu0 0.0
  %4427 = vmatprep.subr.mxu0 0.0
  %4428 = vmatpush1.msra.mxu0 0.0
  %4429 = vmatprep.subr.mxu0 0.0
  %4430 = vmatpush1.msra.mxu0 0.0
  %4431 = vmatprep.subr.mxu0 0.0
  %4432 = vmatpush1.msra.mxu0 0.0
  %4433 = vmatprep.subr.mxu0 0.0
  %4434 = vmatpush1.msra.mxu0 0.0
  %4435 = vmatprep.subr.mxu0 0.0
  %4436 = vmatpush1.msra.mxu0 0.0
  %4437 = vmatprep.subr.mxu0 0.0
  %4438 = vmatpush1.msra.mxu0 0.0
  %4439 = vmatprep.subr.mxu0 0.0
  %4440 = vmatpush1.msra.mxu0 0.0
  %4441 = vmatprep.subr.mxu0 0.0
  %4442 = vmatpush1.msra.mxu0 0.0
  %4443 = vmatprep.subr.mxu0 0.0
  %4444 = vmatpush1.msra.mxu0 0.0
  %4445 = vmatprep.subr.mxu0 0.0
  %4446 = vmatpush1.msra.mxu0 0.0
  %4447 = vmatprep.subr.mxu0 0.0
  %4448 = vmatpush1.msra.mxu0 0.0
  %4449 = vmatprep.subr.mxu0 0.0
  %4450 = vmatpush1.msra.mxu0 0.0
  %4451 = vmatprep.subr.mxu0 0.0
  %4452 = vmatpush1.msra.mxu0 0.0
  %4453 = vmatprep.subr.mxu0 0.0
  %4454 = vmatpush1.msra.mxu0 0.0
  %4455 = vmatprep.subr.mxu0 0.0
  %4456 = vmatpush1.msra.mxu0 0.0
  %4457 = vmatprep.subr.mxu0 0.0
  %4458 = vmatpush1.msra.mxu0 0.0
  %4459 = vmatprep.subr.mxu0 0.0
  %4460 = vmatpush1.msra.mxu0 0.0
  %4461 = vmatprep.subr.mxu0 0.0
  %4462 = vmatpush1.msra.mxu0 0.0
  %4463 = vmatprep.subr.mxu0 0.0
  %4464 = vmatpush1.msra.mxu0 0.0
  %4465 = vmatprep.subr.mxu0 0.0
  %4466 = vmatpush1.msra.mxu0 0.0
  %4467 = vmatprep.mubr.f32.mxu0 0.0
  %4468 = vmatmul.mubr.f32.gmra.mrb[0].mxu0 %v4069
  %v4469 = vpop.f32.mrb[0].mxu0
  %v4470 = vadd.f32 0.0, %v4469
  %v4471 = vpop.f32.mrb[0].mxu0
  %v4472 = vadd.f32 0.0, %v4471
  %4473 = vdwg.mxu0
  %4474 = vmatprep.subr.mxu0 %v4105
  %4475 = vmatpush1.msra.mxu0 %v4102
  %4476 = vmatprep.subr.mxu0 0.0
  %4477 = vmatpush1.msra.mxu0 0.0
  %4478 = vmatprep.subr.mxu0 0.0
  %4479 = vmatpush1.msra.mxu0 0.0
  %4480 = vmatprep.subr.mxu0 0.0
  %4481 = vmatpush1.msra.mxu0 0.0
  %4482 = vmatprep.subr.mxu0 0.0
  %4483 = vmatpush1.msra.mxu0 0.0
  %4484 = vmatprep.subr.mxu0 0.0
  %4485 = vmatpush1.msra.mxu0 0.0
  %4486 = vmatprep.subr.mxu0 0.0
  %4487 = vmatpush1.msra.mxu0 0.0
  %4488 = vmatprep.subr.mxu0 0.0
  %4489 = vmatpush1.msra.mxu0 0.0
  %4490 = vmatprep.subr.mxu0 0.0
  %4491 = vmatpush1.msra.mxu0 0.0
  %4492 = vmatprep.subr.mxu0 0.0
  %4493 = vmatpush1.msra.mxu0 0.0
  %4494 = vmatprep.subr.mxu0 0.0
  %4495 = vmatpush1.msra.mxu0 0.0
  %4496 = vmatprep.subr.mxu0 0.0
  %4497 = vmatpush1.msra.mxu0 0.0
  %4498 = vmatprep.subr.mxu0 0.0
  %4499 = vmatpush1.msra.mxu0 0.0
  %4500 = vmatprep.subr.mxu0 0.0
  %4501 = vmatpush1.msra.mxu0 0.0
  %4502 = vmatprep.subr.mxu0 0.0
  %4503 = vmatpush1.msra.mxu0 0.0
  %4504 = vmatprep.subr.mxu0 0.0
  %4505 = vmatpush1.msra.mxu0 0.0
  %4506 = vmatprep.subr.mxu0 0.0
  %4507 = vmatpush1.msra.mxu0 0.0
  %4508 = vmatprep.subr.mxu0 0.0
  %4509 = vmatpush1.msra.mxu0 0.0
  %4510 = vmatprep.subr.mxu0 0.0
  %4511 = vmatpush1.msra.mxu0 0.0
  %4512 = vmatprep.subr.mxu0 0.0
  %4513 = vmatpush1.msra.mxu0 0.0
  %4514 = vmatprep.subr.mxu0 0.0
  %4515 = vmatpush1.msra.mxu0 0.0
  %4516 = vmatprep.subr.mxu0 0.0
  %4517 = vmatpush1.msra.mxu0 0.0
  %4518 = vmatprep.subr.mxu0 0.0
  %4519 = vmatpush1.msra.mxu0 0.0
  %4520 = vmatprep.subr.mxu0 0.0
  %4521 = vmatpush1.msra.mxu0 0.0
  %4522 = vmatprep.subr.mxu0 0.0
  %4523 = vmatpush1.msra.mxu0 0.0
  %4524 = vmatprep.subr.mxu0 0.0
  %4525 = vmatpush1.msra.mxu0 0.0
  %4526 = vmatprep.subr.mxu0 0.0
  %4527 = vmatpush1.msra.mxu0 0.0
  %4528 = vmatprep.subr.mxu0 0.0
  %4529 = vmatpush1.msra.mxu0 0.0
  %4530 = vmatprep.subr.mxu0 0.0
  %4531 = vmatpush1.msra.mxu0 0.0
  %4532 = vmatprep.subr.mxu0 0.0
  %4533 = vmatpush1.msra.mxu0 0.0
  %4534 = vmatprep.subr.mxu0 0.0
  %4535 = vmatpush1.msra.mxu0 0.0
  %4536 = vmatprep.subr.mxu0 0.0
  %4537 = vmatpush1.msra.mxu0 0.0
  %4538 = vmatprep.mubr.f32.mxu0 0.0
  %4539 = vmatmul.mubr.f32.gmra.mrb[0].mxu0 %v4069
  %v4540 = vpop.f32.mrb[0].mxu0
  %v4541 = vadd.f32 0.0, %v4540
  %v4542 = vpop.f32.mrb[0].mxu0
  %v4543 = vadd.f32 0.0, %v4542
  %4544 = vdwg.mxu0
  %4545 = vmatprep.subr.mxu0 %v4111
  %4546 = vmatpush1.msra.mxu0 %v4108
  %4547 = vmatprep.subr.mxu0 0.0
  %4548 = vmatpush1.msra.mxu0 0.0
  %4549 = vmatprep.subr.mxu0 0.0
  %4550 = vmatpush1.msra.mxu0 0.0
  %4551 = vmatprep.subr.mxu0 0.0
  %4552 = vmatpush1.msra.mxu0 0.0
  %4553 = vmatprep.subr.mxu0 0.0
  %4554 = vmatpush1.msra.mxu0 0.0
  %4555 = vmatprep.subr.mxu0 0.0
  %4556 = vmatpush1.msra.mxu0 0.0
  %4557 = vmatprep.subr.mxu0 0.0
  %4558 = vmatpush1.msra.mxu0 0.0
  %4559 = vmatprep.subr.mxu0 0.0
  %4560 = vmatpush1.msra.mxu0 0.0
  %4561 = vmatprep.subr.mxu0 0.0
  %4562 = vmatpush1.msra.mxu0 0.0
  %4563 = vmatprep.subr.mxu0 0.0
  %4564 = vmatpush1.msra.mxu0 0.0
  %4565 = vmatprep.subr.mxu0 0.0
  %4566 = vmatpush1.msra.mxu0 0.0
  %4567 = vmatprep.subr.mxu0 0.0
  %4568 = vmatpush1.msra.mxu0 0.0
  %4569 = vmatprep.subr.mxu0 0.0
  %4570 = vmatpush1.msra.mxu0 0.0
  %4571 = vmatprep.subr.mxu0 0.0
  %4572 = vmatpush1.msra.mxu0 0.0
  %4573 = vmatprep.subr.mxu0 0.0
  %4574 = vmatpush1.msra.mxu0 0.0
  %4575 = vmatprep.subr.mxu0 0.0
  %4576 = vmatpush1.msra.mxu0 0.0
  %4577 = vmatprep.subr.mxu0 0.0
  %4578 = vmatpush1.msra.mxu0 0.0
  %4579 = vmatprep.subr.mxu0 0.0
  %4580 = vmatpush1.msra.mxu0 0.0
  %4581 = vmatprep.subr.mxu0 0.0
  %4582 = vmatpush1.msra.mxu0 0.0
  %4583 = vmatprep.subr.mxu0 0.0
  %4584 = vmatpush1.msra.mxu0 0.0
  %4585 = vmatprep.subr.mxu0 0.0
  %4586 = vmatpush1.msra.mxu0 0.0
  %4587 = vmatprep.subr.mxu0 0.0
  %4588 = vmatpush1.msra.mxu0 0.0
  %4589 = vmatprep.subr.mxu0 0.0
  %4590 = vmatpush1.msra.mxu0 0.0
  %4591 = vmatprep.subr.mxu0 0.0
  %4592 = vmatpush1.msra.mxu0 0.0
  %4593 = vmatprep.subr.mxu0 0.0
  %4594 = vmatpush1.msra.mxu0 0.0
  %4595 = vmatprep.subr.mxu0 0.0
  %4596 = vmatpush1.msra.mxu0 0.0
  %4597 = vmatprep.subr.mxu0 0.0
  %4598 = vmatpush1.msra.mxu0 0.0
  %4599 = vmatprep.subr.mxu0 0.0
  %4600 = vmatpush1.msra.mxu0 0.0
  %4601 = vmatprep.subr.mxu0 0.0
  %4602 = vmatpush1.msra.mxu0 0.0
  %4603 = vmatprep.subr.mxu0 0.0
  %4604 = vmatpush1.msra.mxu0 0.0
  %4605 = vmatprep.subr.mxu0 0.0
  %4606 = vmatpush1.msra.mxu0 0.0
  %4607 = vmatprep.subr.mxu0 0.0
  %4608 = vmatpush1.msra.mxu0 0.0
  %4609 = vmatprep.mubr.f32.mxu0 0.0
  %4610 = vmatmul.mubr.f32.gmra.mrb[0].mxu0 %v4069
  %v4611 = vpop.f32.mrb[0].mxu0
  %v4612 = vadd.f32 0.0, %v4611
  %v4613 = vpop.f32.mrb[0].mxu0
  %v4614 = vadd.f32 0.0, %v4613
  %4615 = vdwg.mxu0
  %4616 = vmatprep.subr.mxu0 %v4117
  %4617 = vmatpush1.msra.mxu0 %v4114
  %4618 = vmatprep.subr.mxu0 0.0
  %4619 = vmatpush1.msra.mxu0 0.0
  %4620 = vmatprep.subr.mxu0 0.0
  %4621 = vmatpush1.msra.mxu0 0.0
  %4622 = vmatprep.subr.mxu0 0.0
  %4623 = vmatpush1.msra.mxu0 0.0
  %4624 = vmatprep.subr.mxu0 0.0
  %4625 = vmatpush1.msra.mxu0 0.0
  %4626 = vmatprep.subr.mxu0 0.0
  %4627 = vmatpush1.msra.mxu0 0.0
  %4628 = vmatprep.subr.mxu0 0.0
  %4629 = vmatpush1.msra.mxu0 0.0
  %4630 = vmatprep.subr.mxu0 0.0
  %4631 = vmatpush1.msra.mxu0 0.0
  %4632 = vmatprep.subr.mxu0 0.0
  %4633 = vmatpush1.msra.mxu0 0.0
  %4634 = vmatprep.subr.mxu0 0.0
  %4635 = vmatpush1.msra.mxu0 0.0
  %4636 = vmatprep.subr.mxu0 0.0
  %4637 = vmatpush1.msra.mxu0 0.0
  %4638 = vmatprep.subr.mxu0 0.0
  %4639 = vmatpush1.msra.mxu0 0.0
  %4640 = vmatprep.subr.mxu0 0.0
  %4641 = vmatpush1.msra.mxu0 0.0
  %4642 = vmatprep.subr.mxu0 0.0
  %4643 = vmatpush1.msra.mxu0 0.0
  %4644 = vmatprep.subr.mxu0 0.0
  %4645 = vmatpush1.msra.mxu0 0.0
  %4646 = vmatprep.subr.mxu0 0.0
  %4647 = vmatpush1.msra.mxu0 0.0
  %4648 = vmatprep.subr.mxu0 0.0
  %4649 = vmatpush1.msra.mxu0 0.0
  %4650 = vmatprep.subr.mxu0 0.0
  %4651 = vmatpush1.msra.mxu0 0.0
  %4652 = vmatprep.subr.mxu0 0.0
  %4653 = vmatpush1.msra.mxu0 0.0
  %4654 = vmatprep.subr.mxu0 0.0
  %4655 = vmatpush1.msra.mxu0 0.0
  %4656 = vmatprep.subr.mxu0 0.0
  %4657 = vmatpush1.msra.mxu0 0.0
  %4658 = vmatprep.subr.mxu0 0.0
  %4659 = vmatpush1.msra.mxu0 0.0
  %4660 = vmatprep.subr.mxu0 0.0
  %4661 = vmatpush1.msra.mxu0 0.0
  %4662 = vmatprep.subr.mxu0 0.0
  %4663 = vmatpush1.msra.mxu0 0.0
  %4664 = vmatprep.subr.mxu0 0.0
  %4665 = vmatpush1.msra.mxu0 0.0
  %4666 = vmatprep.subr.mxu0 0.0
  %4667 = vmatpush1.msra.mxu0 0.0
  %4668 = vmatprep.subr.mxu0 0.0
  %4669 = vmatpush1.msra.mxu0 0.0
  %4670 = vmatprep.subr.mxu0 0.0
  %4671 = vmatpush1.msra.mxu0 0.0
  %4672 = vmatprep.subr.mxu0 0.0
  %4673 = vmatpush1.msra.mxu0 0.0
  %4674 = vmatprep.subr.mxu0 0.0
  %4675 = vmatpush1.msra.mxu0 0.0
  %4676 = vmatprep.subr.mxu0 0.0
  %4677 = vmatpush1.msra.mxu0 0.0
  %4678 = vmatprep.subr.mxu0 0.0
  %4679 = vmatpush1.msra.mxu0 0.0
  %4680 = vmatprep.mubr.f32.mxu0 0.0
  %4681 = vmatmul.mubr.f32.gmra.mrb[0].mxu0 %v4069
  %v4682 = vpop.f32.mrb[0].mxu0
  %v4683 = vadd.f32 0.0, %v4682
  %v4684 = vpop.f32.mrb[0].mxu0
  %v4685 = vadd.f32 0.0, %v4684
  %4686 = vdwg.mxu0
  %v4687 = vadd.f32 %v3900, %v4186
  %v4688 = vadd.f32 %v3901, %v4188
  %v4689 = vadd.f32 %v3902, %v4257
  %v4690 = vadd.f32 %v3903, %v4259
  %v4691 = vadd.f32 %v3904, %v4328
  %v4692 = vadd.f32 %v3905, %v4330
  %v4693 = vadd.f32 %v3906, %v4399
  %v4694 = vadd.f32 %v3907, %v4401
  %v4695 = vadd.f32 %v3908, %v4470
  %v4696 = vadd.f32 %v3909, %v4472
  %v4697 = vadd.f32 %v3910, %v4541
  %v4698 = vadd.f32 %v3911, %v4543
  %v4699 = vadd.f32 %v3912, %v4612
  %v4700 = vadd.f32 %v3913, %v4614
  %v4701 = vadd.f32 %v3914, %v4683
  %v4702 = vadd.f32 %v3915, %v4685
  %4703 = vrot.lane.b32.xlu0 %v36, 113
  %v4704 = vpop.permute.xlu0 %4703
  %4705 = vrot.lane.b32.xlu0 %v52, 113
  %v4706 = vpop.permute.xlu0 %4705
  %4707 = vrot.lane.b32.xlu0 %v37, 113
  %v4708 = vpop.permute.xlu0 %4707
  %4709 = vrot.lane.b32.xlu0 %v53, 113
  %v4710 = vpop.permute.xlu0 %4709
  %4711 = vrot.lane.b32.xlu0 %v38, 113
  %v4712 = vpop.permute.xlu0 %4711
  %4713 = vrot.lane.b32.xlu0 %v54, 113
  %v4714 = vpop.permute.xlu0 %4713
  %4715 = vrot.lane.b32.xlu0 %v39, 113
  %v4716 = vpop.permute.xlu0 %4715
  %4717 = vrot.lane.b32.xlu0 %v55, 113
  %v4718 = vpop.permute.xlu0 %4717
  %4719 = vrot.lane.b32.xlu0 %v40, 113
  %v4720 = vpop.permute.xlu0 %4719
  %4721 = vrot.lane.b32.xlu0 %v56, 113
  %v4722 = vpop.permute.xlu0 %4721
  %4723 = vrot.lane.b32.xlu0 %v41, 113
  %v4724 = vpop.permute.xlu0 %4723
  %4725 = vrot.lane.b32.xlu0 %v57, 113
  %v4726 = vpop.permute.xlu0 %4725
  %4727 = vrot.lane.b32.xlu0 %v42, 113
  %v4728 = vpop.permute.xlu0 %4727
  %4729 = vrot.lane.b32.xlu0 %v58, 113
  %v4730 = vpop.permute.xlu0 %4729
  %4731 = vrot.lane.b32.xlu0 %v43, 113
  %v4732 = vpop.permute.xlu0 %4731
  %4733 = vrot.lane.b32.xlu0 %v59, 113
  %v4734 = vpop.permute.xlu0 %4733
  %vm4735 = vcmp.lt.s32.totalorder %v101, 113
  %v4736 = vsel %vm4735, %v4732, %v4734
  %v4737 = vsel %vm4735, %v4730, %v4732
  %v4738 = vsel %vm4735, %v4728, %v4730
  %v4739 = vsel %vm4735, %v4726, %v4728
  %v4740 = vsel %vm4735, %v4724, %v4726
  %v4741 = vsel %vm4735, %v4722, %v4724
  %v4742 = vsel %vm4735, %v4720, %v4722
  %v4743 = vsel %vm4735, %v4718, %v4720
  %v4744 = vsel %vm4735, %v4716, %v4718
  %v4745 = vsel %vm4735, %v4714, %v4716
  %v4746 = vsel %vm4735, %v4712, %v4714
  %v4747 = vsel %vm4735, %v4710, %v4712
  %v4748 = vsel %vm4735, %v4708, %v4710
  %v4749 = vsel %vm4735, %v4706, %v4708
  %v4750 = vsel %vm4735, %v4704, %v4706
  %v4751 = vsel %vm4735, %v4734, %v4704
  %s4752 = scalar_lea.vmem %s1, 96
  %v4753 = vld [vmem:[%s4752] sm:$0xff]
  %v4754 = vld [vmem:[%s4752 + $0x8] sm:$0xff]
  %v4757 = vlaneseq
  %v4758 = vshrl.u32 %v4757, 7
  %v4759 = vsub.s32 0, %v4758
  %v4760 = vrot.slane %v4753, %v4759
  %v4761 = vlaneseq
  %v4762 = vshrl.u32 %v4761, 7
  %v4763 = vsub.s32 1, %v4762
  %v4764 = vrot.slane %v4753, %v4763
  %v4765 = vlaneseq
  %v4766 = vshrl.u32 %v4765, 7
  %v4767 = vsub.s32 2, %v4766
  %v4768 = vrot.slane %v4753, %v4767
  %v4769 = vlaneseq
  %v4770 = vshrl.u32 %v4769, 7
  %v4771 = vsub.s32 3, %v4770
  %v4772 = vrot.slane %v4753, %v4771
  %v4773 = vlaneseq
  %v4774 = vshrl.u32 %v4773, 7
  %v4775 = vsub.s32 4, %v4774
  %v4776 = vrot.slane %v4753, %v4775
  %v4777 = vlaneseq
  %v4778 = vshrl.u32 %v4777, 7
  %v4779 = vsub.s32 5, %v4778
  %v4780 = vrot.slane %v4753, %v4779
  %v4781 = vlaneseq
  %v4782 = vshrl.u32 %v4781, 7
  %v4783 = vsub.s32 6, %v4782
  %v4784 = vrot.slane %v4753, %v4783
  %v4785 = vlaneseq
  %v4786 = vshrl.u32 %v4785, 7
  %v4787 = vsub.s32 7, %v4786
  %v4788 = vrot.slane %v4753, %v4787
  %v4789 = vlaneseq
  %v4790 = vshrl.u32 %v4789, 7
  %v4791 = vsub.s32 0, %v4790
  %v4792 = vrot.slane %v4754, %v4791
  %v4793 = vlaneseq
  %v4794 = vshrl.u32 %v4793, 7
  %v4795 = vsub.s32 1, %v4794
  %v4796 = vrot.slane %v4754, %v4795
  %v4797 = vlaneseq
  %v4798 = vshrl.u32 %v4797, 7
  %v4799 = vsub.s32 2, %v4798
  %v4800 = vrot.slane %v4754, %v4799
  %v4801 = vlaneseq
  %v4802 = vshrl.u32 %v4801, 7
  %v4803 = vsub.s32 3, %v4802
  %v4804 = vrot.slane %v4754, %v4803
  %v4805 = vlaneseq
  %v4806 = vshrl.u32 %v4805, 7
  %v4807 = vsub.s32 4, %v4806
  %v4808 = vrot.slane %v4754, %v4807
  %v4809 = vlaneseq
  %v4810 = vshrl.u32 %v4809, 7
  %v4811 = vsub.s32 5, %v4810
  %v4812 = vrot.slane %v4754, %v4811
  %v4813 = vlaneseq
  %v4814 = vshrl.u32 %v4813, 7
  %v4815 = vsub.s32 6, %v4814
  %v4816 = vrot.slane %v4754, %v4815
  %v4817 = vlaneseq
  %v4818 = vshrl.u32 %v4817, 7
  %v4819 = vsub.s32 7, %v4818
  %v4820 = vrot.slane %v4754, %v4819
  %v4837 = vmul.f32 %v4750, %v4760
  %v4838 = vmul.f32 %v4749, %v4764
  %v4839 = vmul.f32 %v4748, %v4768
  %v4840 = vmul.f32 %v4747, %v4772
  %v4841 = vmul.f32 %v4746, %v4776
  %v4842 = vmul.f32 %v4745, %v4780
  %v4843 = vmul.f32 %v4744, %v4784
  %v4844 = vmul.f32 %v4743, %v4788
  %v4845 = vmul.f32 %v4742, %v4792
  %v4846 = vmul.f32 %v4741, %v4796
  %v4847 = vmul.f32 %v4740, %v4800
  %v4848 = vmul.f32 %v4739, %v4804
  %v4849 = vmul.f32 %v4738, %v4808
  %v4850 = vmul.f32 %v4737, %v4812
  %v4851 = vmul.f32 %v4736, %v4816
  %v4852 = vmul.f32 %v4751, %v4820
  %s4853 = scalar_lea.vmem %s2, 48
  %v4854 = vld [vmem:[%s4853] sm:$0xff]
  %v4856 = vsel %vm372, %v4854, 0
  %v4859 = vsel %vm376, %v4837, 0
  %v4862 = vsel %vm376, %v4838, 0
  %v4865 = vsel %vm376, %v4839, 0
  %v4868 = vsel %vm376, %v4840, 0
  %v4871 = vsel %vm376, %v4841, 0
  %v4874 = vsel %vm376, %v4842, 0
  %v4877 = vsel %vm376, %v4843, 0
  %v4880 = vsel %vm376, %v4844, 0
  %v4883 = vsel %vm376, %v4845, 0
  %v4886 = vsel %vm376, %v4846, 0
  %v4889 = vsel %vm376, %v4847, 0
  %v4892 = vsel %vm376, %v4848, 0
  %v4895 = vsel %vm376, %v4849, 0
  %v4898 = vsel %vm376, %v4850, 0
  %v4901 = vsel %vm376, %v4851, 0
  %v4904 = vsel %vm376, %v4852, 0
  %4906 = vmatprep.subr.mxu0 %v4862
  %4907 = vmatpush1.msra.mxu0 %v4859
  %4908 = vmatprep.subr.mxu0 0.0
  %4909 = vmatpush1.msra.mxu0 0.0
  %4910 = vmatprep.subr.mxu0 0.0
  %4911 = vmatpush1.msra.mxu0 0.0
  %4912 = vmatprep.subr.mxu0 0.0
  %4913 = vmatpush1.msra.mxu0 0.0
  %4914 = vmatprep.subr.mxu0 0.0
  %4915 = vmatpush1.msra.mxu0 0.0
  %4916 = vmatprep.subr.mxu0 0.0
  %4917 = vmatpush1.msra.mxu0 0.0
  %4918 = vmatprep.subr.mxu0 0.0
  %4919 = vmatpush1.msra.mxu0 0.0
  %4920 = vmatprep.subr.mxu0 0.0
  %4921 = vmatpush1.msra.mxu0 0.0
  %4922 = vmatprep.subr.mxu0 0.0
  %4923 = vmatpush1.msra.mxu0 0.0
  %4924 = vmatprep.subr.mxu0 0.0
  %4925 = vmatpush1.msra.mxu0 0.0
  %4926 = vmatprep.subr.mxu0 0.0
  %4927 = vmatpush1.msra.mxu0 0.0
  %4928 = vmatprep.subr.mxu0 0.0
  %4929 = vmatpush1.msra.mxu0 0.0
  %4930 = vmatprep.subr.mxu0 0.0
  %4931 = vmatpush1.msra.mxu0 0.0
  %4932 = vmatprep.subr.mxu0 0.0
  %4933 = vmatpush1.msra.mxu0 0.0
  %4934 = vmatprep.subr.mxu0 0.0
  %4935 = vmatpush1.msra.mxu0 0.0
  %4936 = vmatprep.subr.mxu0 0.0
  %4937 = vmatpush1.msra.mxu0 0.0
  %4938 = vmatprep.subr.mxu0 0.0
  %4939 = vmatpush1.msra.mxu0 0.0
  %4940 = vmatprep.subr.mxu0 0.0
  %4941 = vmatpush1.msra.mxu0 0.0
  %4942 = vmatprep.subr.mxu0 0.0
  %4943 = vmatpush1.msra.mxu0 0.0
  %4944 = vmatprep.subr.mxu0 0.0
  %4945 = vmatpush1.msra.mxu0 0.0
  %4946 = vmatprep.subr.mxu0 0.0
  %4947 = vmatpush1.msra.mxu0 0.0
  %4948 = vmatprep.subr.mxu0 0.0
  %4949 = vmatpush1.msra.mxu0 0.0
  %4950 = vmatprep.subr.mxu0 0.0
  %4951 = vmatpush1.msra.mxu0 0.0
  %4952 = vmatprep.subr.mxu0 0.0
  %4953 = vmatpush1.msra.mxu0 0.0
  %4954 = vmatprep.subr.mxu0 0.0
  %4955 = vmatpush1.msra.mxu0 0.0
  %4956 = vmatprep.subr.mxu0 0.0
  %4957 = vmatpush1.msra.mxu0 0.0
  %4958 = vmatprep.subr.mxu0 0.0
  %4959 = vmatpush1.msra.mxu0 0.0
  %4960 = vmatprep.subr.mxu0 0.0
  %4961 = vmatpush1.msra.mxu0 0.0
  %4962 = vmatprep.subr.mxu0 0.0
  %4963 = vmatpush1.msra.mxu0 0.0
  %4964 = vmatprep.subr.mxu0 0.0
  %4965 = vmatpush1.msra.mxu0 0.0
  %4966 = vmatprep.subr.mxu0 0.0
  %4967 = vmatpush1.msra.mxu0 0.0
  %4968 = vmatprep.subr.mxu0 0.0
  %4969 = vmatpush1.msra.mxu0 0.0
  %4970 = vmatprep.mubr.f32.mxu0 0.0
  %4971 = vmatmul.mubr.f32.gmra.mrb[0].mxu0 %v4856
  %v4972 = vpop.f32.mrb[0].mxu0
  %v4973 = vadd.f32 0.0, %v4972
  %v4974 = vpop.f32.mrb[0].mxu0
  %v4975 = vadd.f32 0.0, %v4974
  %4976 = vdwg.mxu0
  %4977 = vmatprep.subr.mxu0 %v4868
  %4978 = vmatpush1.msra.mxu0 %v4865
  %4979 = vmatprep.subr.mxu0 0.0
  %4980 = vmatpush1.msra.mxu0 0.0
  %4981 = vmatprep.subr.mxu0 0.0
  %4982 = vmatpush1.msra.mxu0 0.0
  %4983 = vmatprep.subr.mxu0 0.0
  %4984 = vmatpush1.msra.mxu0 0.0
  %4985 = vmatprep.subr.mxu0 0.0
  %4986 = vmatpush1.msra.mxu0 0.0
  %4987 = vmatprep.subr.mxu0 0.0
  %4988 = vmatpush1.msra.mxu0 0.0
  %4989 = vmatprep.subr.mxu0 0.0
  %4990 = vmatpush1.msra.mxu0 0.0
  %4991 = vmatprep.subr.mxu0 0.0
  %4992 = vmatpush1.msra.mxu0 0.0
  %4993 = vmatprep.subr.mxu0 0.0
  %4994 = vmatpush1.msra.mxu0 0.0
  %4995 = vmatprep.subr.mxu0 0.0
  %4996 = vmatpush1.msra.mxu0 0.0
  %4997 = vmatprep.subr.mxu0 0.0
  %4998 = vmatpush1.msra.mxu0 0.0
  %4999 = vmatprep.subr.mxu0 0.0
  %5000 = vmatpush1.msra.mxu0 0.0
  %5001 = vmatprep.subr.mxu0 0.0
  %5002 = vmatpush1.msra.mxu0 0.0
  %5003 = vmatprep.subr.mxu0 0.0
  %5004 = vmatpush1.msra.mxu0 0.0
  %5005 = vmatprep.subr.mxu0 0.0
  %5006 = vmatpush1.msra.mxu0 0.0
  %5007 = vmatprep.subr.mxu0 0.0
  %5008 = vmatpush1.msra.mxu0 0.0
  %5009 = vmatprep.subr.mxu0 0.0
  %5010 = vmatpush1.msra.mxu0 0.0
  %5011 = vmatprep.subr.mxu0 0.0
  %5012 = vmatpush1.msra.mxu0 0.0
  %5013 = vmatprep.subr.mxu0 0.0
  %5014 = vmatpush1.msra.mxu0 0.0
  %5015 = vmatprep.subr.mxu0 0.0
  %5016 = vmatpush1.msra.mxu0 0.0
  %5017 = vmatprep.subr.mxu0 0.0
  %5018 = vmatpush1.msra.mxu0 0.0
  %5019 = vmatprep.subr.mxu0 0.0
  %5020 = vmatpush1.msra.mxu0 0.0
  %5021 = vmatprep.subr.mxu0 0.0
  %5022 = vmatpush1.msra.mxu0 0.0
  %5023 = vmatprep.subr.mxu0 0.0
  %5024 = vmatpush1.msra.mxu0 0.0
  %5025 = vmatprep.subr.mxu0 0.0
  %5026 = vmatpush1.msra.mxu0 0.0
  %5027 = vmatprep.subr.mxu0 0.0
  %5028 = vmatpush1.msra.mxu0 0.0
  %5029 = vmatprep.subr.mxu0 0.0
  %5030 = vmatpush1.msra.mxu0 0.0
  %5031 = vmatprep.subr.mxu0 0.0
  %5032 = vmatpush1.msra.mxu0 0.0
  %5033 = vmatprep.subr.mxu0 0.0
  %5034 = vmatpush1.msra.mxu0 0.0
  %5035 = vmatprep.subr.mxu0 0.0
  %5036 = vmatpush1.msra.mxu0 0.0
  %5037 = vmatprep.subr.mxu0 0.0
  %5038 = vmatpush1.msra.mxu0 0.0
  %5039 = vmatprep.subr.mxu0 0.0
  %5040 = vmatpush1.msra.mxu0 0.0
  %5041 = vmatprep.mubr.f32.mxu0 0.0
  %5042 = vmatmul.mubr.f32.gmra.mrb[0].mxu0 %v4856
  %v5043 = vpop.f32.mrb[0].mxu0
  %v5044 = vadd.f32 0.0, %v5043
  %v5045 = vpop.f32.mrb[0].mxu0
  %v5046 = vadd.f32 0.0, %v5045
  %5047 = vdwg.mxu0
  %5048 = vmatprep.subr.mxu0 %v4874
  %5049 = vmatpush1.msra.mxu0 %v4871
  %5050 = vmatprep.subr.mxu0 0.0
  %5051 = vmatpush1.msra.mxu0 0.0
  %5052 = vmatprep.subr.mxu0 0.0
  %5053 = vmatpush1.msra.mxu0 0.0
  %5054 = vmatprep.subr.mxu0 0.0
  %5055 = vmatpush1.msra.mxu0 0.0
  %5056 = vmatprep.subr.mxu0 0.0
  %5057 = vmatpush1.msra.mxu0 0.0
  %5058 = vmatprep.subr.mxu0 0.0
  %5059 = vmatpush1.msra.mxu0 0.0
  %5060 = vmatprep.subr.mxu0 0.0
  %5061 = vmatpush1.msra.mxu0 0.0
  %5062 = vmatprep.subr.mxu0 0.0
  %5063 = vmatpush1.msra.mxu0 0.0
  %5064 = vmatprep.subr.mxu0 0.0
  %5065 = vmatpush1.msra.mxu0 0.0
  %5066 = vmatprep.subr.mxu0 0.0
  %5067 = vmatpush1.msra.mxu0 0.0
  %5068 = vmatprep.subr.mxu0 0.0
  %5069 = vmatpush1.msra.mxu0 0.0
  %5070 = vmatprep.subr.mxu0 0.0
  %5071 = vmatpush1.msra.mxu0 0.0
  %5072 = vmatprep.subr.mxu0 0.0
  %5073 = vmatpush1.msra.mxu0 0.0
  %5074 = vmatprep.subr.mxu0 0.0
  %5075 = vmatpush1.msra.mxu0 0.0
  %5076 = vmatprep.subr.mxu0 0.0
  %5077 = vmatpush1.msra.mxu0 0.0
  %5078 = vmatprep.subr.mxu0 0.0
  %5079 = vmatpush1.msra.mxu0 0.0
  %5080 = vmatprep.subr.mxu0 0.0
  %5081 = vmatpush1.msra.mxu0 0.0
  %5082 = vmatprep.subr.mxu0 0.0
  %5083 = vmatpush1.msra.mxu0 0.0
  %5084 = vmatprep.subr.mxu0 0.0
  %5085 = vmatpush1.msra.mxu0 0.0
  %5086 = vmatprep.subr.mxu0 0.0
  %5087 = vmatpush1.msra.mxu0 0.0
  %5088 = vmatprep.subr.mxu0 0.0
  %5089 = vmatpush1.msra.mxu0 0.0
  %5090 = vmatprep.subr.mxu0 0.0
  %5091 = vmatpush1.msra.mxu0 0.0
  %5092 = vmatprep.subr.mxu0 0.0
  %5093 = vmatpush1.msra.mxu0 0.0
  %5094 = vmatprep.subr.mxu0 0.0
  %5095 = vmatpush1.msra.mxu0 0.0
  %5096 = vmatprep.subr.mxu0 0.0
  %5097 = vmatpush1.msra.mxu0 0.0
  %5098 = vmatprep.subr.mxu0 0.0
  %5099 = vmatpush1.msra.mxu0 0.0
  %5100 = vmatprep.subr.mxu0 0.0
  %5101 = vmatpush1.msra.mxu0 0.0
  %5102 = vmatprep.subr.mxu0 0.0
  %5103 = vmatpush1.msra.mxu0 0.0
  %5104 = vmatprep.subr.mxu0 0.0
  %5105 = vmatpush1.msra.mxu0 0.0
  %5106 = vmatprep.subr.mxu0 0.0
  %5107 = vmatpush1.msra.mxu0 0.0
  %5108 = vmatprep.subr.mxu0 0.0
  %5109 = vmatpush1.msra.mxu0 0.0
  %5110 = vmatprep.subr.mxu0 0.0
  %5111 = vmatpush1.msra.mxu0 0.0
  %5112 = vmatprep.mubr.f32.mxu0 0.0
  %5113 = vmatmul.mubr.f32.gmra.mrb[0].mxu0 %v4856
  %v5114 = vpop.f32.mrb[0].mxu0
  %v5115 = vadd.f32 0.0, %v5114
  %v5116 = vpop.f32.mrb[0].mxu0
  %v5117 = vadd.f32 0.0, %v5116
  %5118 = vdwg.mxu0
  %5119 = vmatprep.subr.mxu0 %v4880
  %5120 = vmatpush1.msra.mxu0 %v4877
  %5121 = vmatprep.subr.mxu0 0.0
  %5122 = vmatpush1.msra.mxu0 0.0
  %5123 = vmatprep.subr.mxu0 0.0
  %5124 = vmatpush1.msra.mxu0 0.0
  %5125 = vmatprep.subr.mxu0 0.0
  %5126 = vmatpush1.msra.mxu0 0.0
  %5127 = vmatprep.subr.mxu0 0.0
  %5128 = vmatpush1.msra.mxu0 0.0
  %5129 = vmatprep.subr.mxu0 0.0
  %5130 = vmatpush1.msra.mxu0 0.0
  %5131 = vmatprep.subr.mxu0 0.0
  %5132 = vmatpush1.msra.mxu0 0.0
  %5133 = vmatprep.subr.mxu0 0.0
  %5134 = vmatpush1.msra.mxu0 0.0
  %5135 = vmatprep.subr.mxu0 0.0
  %5136 = vmatpush1.msra.mxu0 0.0
  %5137 = vmatprep.subr.mxu0 0.0
  %5138 = vmatpush1.msra.mxu0 0.0
  %5139 = vmatprep.subr.mxu0 0.0
  %5140 = vmatpush1.msra.mxu0 0.0
  %5141 = vmatprep.subr.mxu0 0.0
  %5142 = vmatpush1.msra.mxu0 0.0
  %5143 = vmatprep.subr.mxu0 0.0
  %5144 = vmatpush1.msra.mxu0 0.0
  %5145 = vmatprep.subr.mxu0 0.0
  %5146 = vmatpush1.msra.mxu0 0.0
  %5147 = vmatprep.subr.mxu0 0.0
  %5148 = vmatpush1.msra.mxu0 0.0
  %5149 = vmatprep.subr.mxu0 0.0
  %5150 = vmatpush1.msra.mxu0 0.0
  %5151 = vmatprep.subr.mxu0 0.0
  %5152 = vmatpush1.msra.mxu0 0.0
  %5153 = vmatprep.subr.mxu0 0.0
  %5154 = vmatpush1.msra.mxu0 0.0
  %5155 = vmatprep.subr.mxu0 0.0
  %5156 = vmatpush1.msra.mxu0 0.0
  %5157 = vmatprep.subr.mxu0 0.0
  %5158 = vmatpush1.msra.mxu0 0.0
  %5159 = vmatprep.subr.mxu0 0.0
  %5160 = vmatpush1.msra.mxu0 0.0
  %5161 = vmatprep.subr.mxu0 0.0
  %5162 = vmatpush1.msra.mxu0 0.0
  %5163 = vmatprep.subr.mxu0 0.0
  %5164 = vmatpush1.msra.mxu0 0.0
  %5165 = vmatprep.subr.mxu0 0.0
  %5166 = vmatpush1.msra.mxu0 0.0
  %5167 = vmatprep.subr.mxu0 0.0
  %5168 = vmatpush1.msra.mxu0 0.0
  %5169 = vmatprep.subr.mxu0 0.0
  %5170 = vmatpush1.msra.mxu0 0.0
  %5171 = vmatprep.subr.mxu0 0.0
  %5172 = vmatpush1.msra.mxu0 0.0
  %5173 = vmatprep.subr.mxu0 0.0
  %5174 = vmatpush1.msra.mxu0 0.0
  %5175 = vmatprep.subr.mxu0 0.0
  %5176 = vmatpush1.msra.mxu0 0.0
  %5177 = vmatprep.subr.mxu0 0.0
  %5178 = vmatpush1.msra.mxu0 0.0
  %5179 = vmatprep.subr.mxu0 0.0
  %5180 = vmatpush1.msra.mxu0 0.0
  %5181 = vmatprep.subr.mxu0 0.0
  %5182 = vmatpush1.msra.mxu0 0.0
  %5183 = vmatprep.mubr.f32.mxu0 0.0
  %5184 = vmatmul.mubr.f32.gmra.mrb[0].mxu0 %v4856
  %v5185 = vpop.f32.mrb[0].mxu0
  %v5186 = vadd.f32 0.0, %v5185
  %v5187 = vpop.f32.mrb[0].mxu0
  %v5188 = vadd.f32 0.0, %v5187
  %5189 = vdwg.mxu0
  %5190 = vmatprep.subr.mxu0 %v4886
  %5191 = vmatpush1.msra.mxu0 %v4883
  %5192 = vmatprep.subr.mxu0 0.0
  %5193 = vmatpush1.msra.mxu0 0.0
  %5194 = vmatprep.subr.mxu0 0.0
  %5195 = vmatpush1.msra.mxu0 0.0
  %5196 = vmatprep.subr.mxu0 0.0
  %5197 = vmatpush1.msra.mxu0 0.0
  %5198 = vmatprep.subr.mxu0 0.0
  %5199 = vmatpush1.msra.mxu0 0.0
  %5200 = vmatprep.subr.mxu0 0.0
  %5201 = vmatpush1.msra.mxu0 0.0
  %5202 = vmatprep.subr.mxu0 0.0
  %5203 = vmatpush1.msra.mxu0 0.0
  %5204 = vmatprep.subr.mxu0 0.0
  %5205 = vmatpush1.msra.mxu0 0.0
  %5206 = vmatprep.subr.mxu0 0.0
  %5207 = vmatpush1.msra.mxu0 0.0
  %5208 = vmatprep.subr.mxu0 0.0
  %5209 = vmatpush1.msra.mxu0 0.0
  %5210 = vmatprep.subr.mxu0 0.0
  %5211 = vmatpush1.msra.mxu0 0.0
  %5212 = vmatprep.subr.mxu0 0.0
  %5213 = vmatpush1.msra.mxu0 0.0
  %5214 = vmatprep.subr.mxu0 0.0
  %5215 = vmatpush1.msra.mxu0 0.0
  %5216 = vmatprep.subr.mxu0 0.0
  %5217 = vmatpush1.msra.mxu0 0.0
  %5218 = vmatprep.subr.mxu0 0.0
  %5219 = vmatpush1.msra.mxu0 0.0
  %5220 = vmatprep.subr.mxu0 0.0
  %5221 = vmatpush1.msra.mxu0 0.0
  %5222 = vmatprep.subr.mxu0 0.0
  %5223 = vmatpush1.msra.mxu0 0.0
  %5224 = vmatprep.subr.mxu0 0.0
  %5225 = vmatpush1.msra.mxu0 0.0
  %5226 = vmatprep.subr.mxu0 0.0
  %5227 = vmatpush1.msra.mxu0 0.0
  %5228 = vmatprep.subr.mxu0 0.0
  %5229 = vmatpush1.msra.mxu0 0.0
  %5230 = vmatprep.subr.mxu0 0.0
  %5231 = vmatpush1.msra.mxu0 0.0
  %5232 = vmatprep.subr.mxu0 0.0
  %5233 = vmatpush1.msra.mxu0 0.0
  %5234 = vmatprep.subr.mxu0 0.0
  %5235 = vmatpush1.msra.mxu0 0.0
  %5236 = vmatprep.subr.mxu0 0.0
  %5237 = vmatpush1.msra.mxu0 0.0
  %5238 = vmatprep.subr.mxu0 0.0
  %5239 = vmatpush1.msra.mxu0 0.0
  %5240 = vmatprep.subr.mxu0 0.0
  %5241 = vmatpush1.msra.mxu0 0.0
  %5242 = vmatprep.subr.mxu0 0.0
  %5243 = vmatpush1.msra.mxu0 0.0
  %5244 = vmatprep.subr.mxu0 0.0
  %5245 = vmatpush1.msra.mxu0 0.0
  %5246 = vmatprep.subr.mxu0 0.0
  %5247 = vmatpush1.msra.mxu0 0.0
  %5248 = vmatprep.subr.mxu0 0.0
  %5249 = vmatpush1.msra.mxu0 0.0
  %5250 = vmatprep.subr.mxu0 0.0
  %5251 = vmatpush1.msra.mxu0 0.0
  %5252 = vmatprep.subr.mxu0 0.0
  %5253 = vmatpush1.msra.mxu0 0.0
  %5254 = vmatprep.mubr.f32.mxu0 0.0
  %5255 = vmatmul.mubr.f32.gmra.mrb[0].mxu0 %v4856
  %v5256 = vpop.f32.mrb[0].mxu0
  %v5257 = vadd.f32 0.0, %v5256
  %v5258 = vpop.f32.mrb[0].mxu0
  %v5259 = vadd.f32 0.0, %v5258
  %5260 = vdwg.mxu0
  %5261 = vmatprep.subr.mxu0 %v4892
  %5262 = vmatpush1.msra.mxu0 %v4889
  %5263 = vmatprep.subr.mxu0 0.0
  %5264 = vmatpush1.msra.mxu0 0.0
  %5265 = vmatprep.subr.mxu0 0.0
  %5266 = vmatpush1.msra.mxu0 0.0
  %5267 = vmatprep.subr.mxu0 0.0
  %5268 = vmatpush1.msra.mxu0 0.0
  %5269 = vmatprep.subr.mxu0 0.0
  %5270 = vmatpush1.msra.mxu0 0.0
  %5271 = vmatprep.subr.mxu0 0.0
  %5272 = vmatpush1.msra.mxu0 0.0
  %5273 = vmatprep.subr.mxu0 0.0
  %5274 = vmatpush1.msra.mxu0 0.0
  %5275 = vmatprep.subr.mxu0 0.0
  %5276 = vmatpush1.msra.mxu0 0.0
  %5277 = vmatprep.subr.mxu0 0.0
  %5278 = vmatpush1.msra.mxu0 0.0
  %5279 = vmatprep.subr.mxu0 0.0
  %5280 = vmatpush1.msra.mxu0 0.0
  %5281 = vmatprep.subr.mxu0 0.0
  %5282 = vmatpush1.msra.mxu0 0.0
  %5283 = vmatprep.subr.mxu0 0.0
  %5284 = vmatpush1.msra.mxu0 0.0
  %5285 = vmatprep.subr.mxu0 0.0
  %5286 = vmatpush1.msra.mxu0 0.0
  %5287 = vmatprep.subr.mxu0 0.0
  %5288 = vmatpush1.msra.mxu0 0.0
  %5289 = vmatprep.subr.mxu0 0.0
  %5290 = vmatpush1.msra.mxu0 0.0
  %5291 = vmatprep.subr.mxu0 0.0
  %5292 = vmatpush1.msra.mxu0 0.0
  %5293 = vmatprep.subr.mxu0 0.0
  %5294 = vmatpush1.msra.mxu0 0.0
  %5295 = vmatprep.subr.mxu0 0.0
  %5296 = vmatpush1.msra.mxu0 0.0
  %5297 = vmatprep.subr.mxu0 0.0
  %5298 = vmatpush1.msra.mxu0 0.0
  %5299 = vmatprep.subr.mxu0 0.0
  %5300 = vmatpush1.msra.mxu0 0.0
  %5301 = vmatprep.subr.mxu0 0.0
  %5302 = vmatpush1.msra.mxu0 0.0
  %5303 = vmatprep.subr.mxu0 0.0
  %5304 = vmatpush1.msra.mxu0 0.0
  %5305 = vmatprep.subr.mxu0 0.0
  %5306 = vmatpush1.msra.mxu0 0.0
  %5307 = vmatprep.subr.mxu0 0.0
  %5308 = vmatpush1.msra.mxu0 0.0
  %5309 = vmatprep.subr.mxu0 0.0
  %5310 = vmatpush1.msra.mxu0 0.0
  %5311 = vmatprep.subr.mxu0 0.0
  %5312 = vmatpush1.msra.mxu0 0.0
  %5313 = vmatprep.subr.mxu0 0.0
  %5314 = vmatpush1.msra.mxu0 0.0
  %5315 = vmatprep.subr.mxu0 0.0
  %5316 = vmatpush1.msra.mxu0 0.0
  %5317 = vmatprep.subr.mxu0 0.0
  %5318 = vmatpush1.msra.mxu0 0.0
  %5319 = vmatprep.subr.mxu0 0.0
  %5320 = vmatpush1.msra.mxu0 0.0
  %5321 = vmatprep.subr.mxu0 0.0
  %5322 = vmatpush1.msra.mxu0 0.0
  %5323 = vmatprep.subr.mxu0 0.0
  %5324 = vmatpush1.msra.mxu0 0.0
  %5325 = vmatprep.mubr.f32.mxu0 0.0
  %5326 = vmatmul.mubr.f32.gmra.mrb[0].mxu0 %v4856
  %v5327 = vpop.f32.mrb[0].mxu0
  %v5328 = vadd.f32 0.0, %v5327
  %v5329 = vpop.f32.mrb[0].mxu0
  %v5330 = vadd.f32 0.0, %v5329
  %5331 = vdwg.mxu0
  %5332 = vmatprep.subr.mxu0 %v4898
  %5333 = vmatpush1.msra.mxu0 %v4895
  %5334 = vmatprep.subr.mxu0 0.0
  %5335 = vmatpush1.msra.mxu0 0.0
  %5336 = vmatprep.subr.mxu0 0.0
  %5337 = vmatpush1.msra.mxu0 0.0
  %5338 = vmatprep.subr.mxu0 0.0
  %5339 = vmatpush1.msra.mxu0 0.0
  %5340 = vmatprep.subr.mxu0 0.0
  %5341 = vmatpush1.msra.mxu0 0.0
  %5342 = vmatprep.subr.mxu0 0.0
  %5343 = vmatpush1.msra.mxu0 0.0
  %5344 = vmatprep.subr.mxu0 0.0
  %5345 = vmatpush1.msra.mxu0 0.0
  %5346 = vmatprep.subr.mxu0 0.0
  %5347 = vmatpush1.msra.mxu0 0.0
  %5348 = vmatprep.subr.mxu0 0.0
  %5349 = vmatpush1.msra.mxu0 0.0
  %5350 = vmatprep.subr.mxu0 0.0
  %5351 = vmatpush1.msra.mxu0 0.0
  %5352 = vmatprep.subr.mxu0 0.0
  %5353 = vmatpush1.msra.mxu0 0.0
  %5354 = vmatprep.subr.mxu0 0.0
  %5355 = vmatpush1.msra.mxu0 0.0
  %5356 = vmatprep.subr.mxu0 0.0
  %5357 = vmatpush1.msra.mxu0 0.0
  %5358 = vmatprep.subr.mxu0 0.0
  %5359 = vmatpush1.msra.mxu0 0.0
  %5360 = vmatprep.subr.mxu0 0.0
  %5361 = vmatpush1.msra.mxu0 0.0
  %5362 = vmatprep.subr.mxu0 0.0
  %5363 = vmatpush1.msra.mxu0 0.0
  %5364 = vmatprep.subr.mxu0 0.0
  %5365 = vmatpush1.msra.mxu0 0.0
  %5366 = vmatprep.subr.mxu0 0.0
  %5367 = vmatpush1.msra.mxu0 0.0
  %5368 = vmatprep.subr.mxu0 0.0
  %5369 = vmatpush1.msra.mxu0 0.0
  %5370 = vmatprep.subr.mxu0 0.0
  %5371 = vmatpush1.msra.mxu0 0.0
  %5372 = vmatprep.subr.mxu0 0.0
  %5373 = vmatpush1.msra.mxu0 0.0
  %5374 = vmatprep.subr.mxu0 0.0
  %5375 = vmatpush1.msra.mxu0 0.0
  %5376 = vmatprep.subr.mxu0 0.0
  %5377 = vmatpush1.msra.mxu0 0.0
  %5378 = vmatprep.subr.mxu0 0.0
  %5379 = vmatpush1.msra.mxu0 0.0
  %5380 = vmatprep.subr.mxu0 0.0
  %5381 = vmatpush1.msra.mxu0 0.0
  %5382 = vmatprep.subr.mxu0 0.0
  %5383 = vmatpush1.msra.mxu0 0.0
  %5384 = vmatprep.subr.mxu0 0.0
  %5385 = vmatpush1.msra.mxu0 0.0
  %5386 = vmatprep.subr.mxu0 0.0
  %5387 = vmatpush1.msra.mxu0 0.0
  %5388 = vmatprep.subr.mxu0 0.0
  %5389 = vmatpush1.msra.mxu0 0.0
  %5390 = vmatprep.subr.mxu0 0.0
  %5391 = vmatpush1.msra.mxu0 0.0
  %5392 = vmatprep.subr.mxu0 0.0
  %5393 = vmatpush1.msra.mxu0 0.0
  %5394 = vmatprep.subr.mxu0 0.0
  %5395 = vmatpush1.msra.mxu0 0.0
  %5396 = vmatprep.mubr.f32.mxu0 0.0
  %5397 = vmatmul.mubr.f32.gmra.mrb[0].mxu0 %v4856
  %v5398 = vpop.f32.mrb[0].mxu0
  %v5399 = vadd.f32 0.0, %v5398
  %v5400 = vpop.f32.mrb[0].mxu0
  %v5401 = vadd.f32 0.0, %v5400
  %5402 = vdwg.mxu0
  %5403 = vmatprep.subr.mxu0 %v4904
  %5404 = vmatpush1.msra.mxu0 %v4901
  %5405 = vmatprep.subr.mxu0 0.0
  %5406 = vmatpush1.msra.mxu0 0.0
  %5407 = vmatprep.subr.mxu0 0.0
  %5408 = vmatpush1.msra.mxu0 0.0
  %5409 = vmatprep.subr.mxu0 0.0
  %5410 = vmatpush1.msra.mxu0 0.0
  %5411 = vmatprep.subr.mxu0 0.0
  %5412 = vmatpush1.msra.mxu0 0.0
  %5413 = vmatprep.subr.mxu0 0.0
  %5414 = vmatpush1.msra.mxu0 0.0
  %5415 = vmatprep.subr.mxu0 0.0
  %5416 = vmatpush1.msra.mxu0 0.0
  %5417 = vmatprep.subr.mxu0 0.0
  %5418 = vmatpush1.msra.mxu0 0.0
  %5419 = vmatprep.subr.mxu0 0.0
  %5420 = vmatpush1.msra.mxu0 0.0
  %5421 = vmatprep.subr.mxu0 0.0
  %5422 = vmatpush1.msra.mxu0 0.0
  %5423 = vmatprep.subr.mxu0 0.0
  %5424 = vmatpush1.msra.mxu0 0.0
  %5425 = vmatprep.subr.mxu0 0.0
  %5426 = vmatpush1.msra.mxu0 0.0
  %5427 = vmatprep.subr.mxu0 0.0
  %5428 = vmatpush1.msra.mxu0 0.0
  %5429 = vmatprep.subr.mxu0 0.0
  %5430 = vmatpush1.msra.mxu0 0.0
  %5431 = vmatprep.subr.mxu0 0.0
  %5432 = vmatpush1.msra.mxu0 0.0
  %5433 = vmatprep.subr.mxu0 0.0
  %5434 = vmatpush1.msra.mxu0 0.0
  %5435 = vmatprep.subr.mxu0 0.0
  %5436 = vmatpush1.msra.mxu0 0.0
  %5437 = vmatprep.subr.mxu0 0.0
  %5438 = vmatpush1.msra.mxu0 0.0
  %5439 = vmatprep.subr.mxu0 0.0
  %5440 = vmatpush1.msra.mxu0 0.0
  %5441 = vmatprep.subr.mxu0 0.0
  %5442 = vmatpush1.msra.mxu0 0.0
  %5443 = vmatprep.subr.mxu0 0.0
  %5444 = vmatpush1.msra.mxu0 0.0
  %5445 = vmatprep.subr.mxu0 0.0
  %5446 = vmatpush1.msra.mxu0 0.0
  %5447 = vmatprep.subr.mxu0 0.0
  %5448 = vmatpush1.msra.mxu0 0.0
  %5449 = vmatprep.subr.mxu0 0.0
  %5450 = vmatpush1.msra.mxu0 0.0
  %5451 = vmatprep.subr.mxu0 0.0
  %5452 = vmatpush1.msra.mxu0 0.0
  %5453 = vmatprep.subr.mxu0 0.0
  %5454 = vmatpush1.msra.mxu0 0.0
  %5455 = vmatprep.subr.mxu0 0.0
  %5456 = vmatpush1.msra.mxu0 0.0
  %5457 = vmatprep.subr.mxu0 0.0
  %5458 = vmatpush1.msra.mxu0 0.0
  %5459 = vmatprep.subr.mxu0 0.0
  %5460 = vmatpush1.msra.mxu0 0.0
  %5461 = vmatprep.subr.mxu0 0.0
  %5462 = vmatpush1.msra.mxu0 0.0
  %5463 = vmatprep.subr.mxu0 0.0
  %5464 = vmatpush1.msra.mxu0 0.0
  %5465 = vmatprep.subr.mxu0 0.0
  %5466 = vmatpush1.msra.mxu0 0.0
  %5467 = vmatprep.mubr.f32.mxu0 0.0
  %5468 = vmatmul.mubr.f32.gmra.mrb[0].mxu0 %v4856
  %v5469 = vpop.f32.mrb[0].mxu0
  %v5470 = vadd.f32 0.0, %v5469
  %v5471 = vpop.f32.mrb[0].mxu0
  %v5472 = vadd.f32 0.0, %v5471
  %5473 = vdwg.mxu0
  %v5474 = vadd.f32 %v4687, %v4973
  %v5475 = vadd.f32 %v4688, %v4975
  %v5476 = vadd.f32 %v4689, %v5044
  %v5477 = vadd.f32 %v4690, %v5046
  %v5478 = vadd.f32 %v4691, %v5115
  %v5479 = vadd.f32 %v4692, %v5117
  %v5480 = vadd.f32 %v4693, %v5186
  %v5481 = vadd.f32 %v4694, %v5188
  %v5482 = vadd.f32 %v4695, %v5257
  %v5483 = vadd.f32 %v4696, %v5259
  %v5484 = vadd.f32 %v4697, %v5328
  %v5485 = vadd.f32 %v4698, %v5330
  %v5486 = vadd.f32 %v4699, %v5399
  %v5487 = vadd.f32 %v4700, %v5401
  %v5488 = vadd.f32 %v4701, %v5470
  %v5489 = vadd.f32 %v4702, %v5472
  %5490 = vrot.lane.b32.xlu0 %v36, 112
  %v5491 = vpop.permute.xlu0 %5490
  %5492 = vrot.lane.b32.xlu0 %v52, 112
  %v5493 = vpop.permute.xlu0 %5492
  %5494 = vrot.lane.b32.xlu0 %v37, 112
  %v5495 = vpop.permute.xlu0 %5494
  %5496 = vrot.lane.b32.xlu0 %v53, 112
  %v5497 = vpop.permute.xlu0 %5496
  %5498 = vrot.lane.b32.xlu0 %v38, 112
  %v5499 = vpop.permute.xlu0 %5498
  %5500 = vrot.lane.b32.xlu0 %v54, 112
  %v5501 = vpop.permute.xlu0 %5500
  %5502 = vrot.lane.b32.xlu0 %v39, 112
  %v5503 = vpop.permute.xlu0 %5502
  %5504 = vrot.lane.b32.xlu0 %v55, 112
  %v5505 = vpop.permute.xlu0 %5504
  %5506 = vrot.lane.b32.xlu0 %v40, 112
  %v5507 = vpop.permute.xlu0 %5506
  %5508 = vrot.lane.b32.xlu0 %v56, 112
  %v5509 = vpop.permute.xlu0 %5508
  %5510 = vrot.lane.b32.xlu0 %v41, 112
  %v5511 = vpop.permute.xlu0 %5510
  %5512 = vrot.lane.b32.xlu0 %v57, 112
  %v5513 = vpop.permute.xlu0 %5512
  %5514 = vrot.lane.b32.xlu0 %v42, 112
  %v5515 = vpop.permute.xlu0 %5514
  %5516 = vrot.lane.b32.xlu0 %v58, 112
  %v5517 = vpop.permute.xlu0 %5516
  %5518 = vrot.lane.b32.xlu0 %v43, 112
  %v5519 = vpop.permute.xlu0 %5518
  %5520 = vrot.lane.b32.xlu0 %v59, 112
  %v5521 = vpop.permute.xlu0 %5520
  %vm5522 = vcmp.lt.s32.totalorder %v101, 112
  %v5523 = vsel %vm5522, %v5519, %v5521
  %v5524 = vsel %vm5522, %v5517, %v5519
  %v5525 = vsel %vm5522, %v5515, %v5517
  %v5526 = vsel %vm5522, %v5513, %v5515
  %v5527 = vsel %vm5522, %v5511, %v5513
  %v5528 = vsel %vm5522, %v5509, %v5511
  %v5529 = vsel %vm5522, %v5507, %v5509
  %v5530 = vsel %vm5522, %v5505, %v5507
  %v5531 = vsel %vm5522, %v5503, %v5505
  %v5532 = vsel %vm5522, %v5501, %v5503
  %v5533 = vsel %vm5522, %v5499, %v5501
  %v5534 = vsel %vm5522, %v5497, %v5499
  %v5535 = vsel %vm5522, %v5495, %v5497
  %v5536 = vsel %vm5522, %v5493, %v5495
  %v5537 = vsel %vm5522, %v5491, %v5493
  %v5538 = vsel %vm5522, %v5521, %v5491
  %s5539 = scalar_lea.vmem %s1, 112
  %v5540 = vld [vmem:[%s5539] sm:$0xff]
  %v5541 = vld [vmem:[%s5539 + $0x8] sm:$0xff]
  %v5544 = vlaneseq
  %v5545 = vshrl.u32 %v5544, 7
  %v5546 = vsub.s32 0, %v5545
  %v5547 = vrot.slane %v5540, %v5546
  %v5548 = vlaneseq
  %v5549 = vshrl.u32 %v5548, 7
  %v5550 = vsub.s32 1, %v5549
  %v5551 = vrot.slane %v5540, %v5550
  %v5552 = vlaneseq
  %v5553 = vshrl.u32 %v5552, 7
  %v5554 = vsub.s32 2, %v5553
  %v5555 = vrot.slane %v5540, %v5554
  %v5556 = vlaneseq
  %v5557 = vshrl.u32 %v5556, 7
  %v5558 = vsub.s32 3, %v5557
  %v5559 = vrot.slane %v5540, %v5558
  %v5560 = vlaneseq
  %v5561 = vshrl.u32 %v5560, 7
  %v5562 = vsub.s32 4, %v5561
  %v5563 = vrot.slane %v5540, %v5562
  %v5564 = vlaneseq
  %v5565 = vshrl.u32 %v5564, 7
  %v5566 = vsub.s32 5, %v5565
  %v5567 = vrot.slane %v5540, %v5566
  %v5568 = vlaneseq
  %v5569 = vshrl.u32 %v5568, 7
  %v5570 = vsub.s32 6, %v5569
  %v5571 = vrot.slane %v5540, %v5570
  %v5572 = vlaneseq
  %v5573 = vshrl.u32 %v5572, 7
  %v5574 = vsub.s32 7, %v5573
  %v5575 = vrot.slane %v5540, %v5574
  %v5576 = vlaneseq
  %v5577 = vshrl.u32 %v5576, 7
  %v5578 = vsub.s32 0, %v5577
  %v5579 = vrot.slane %v5541, %v5578
  %v5580 = vlaneseq
  %v5581 = vshrl.u32 %v5580, 7
  %v5582 = vsub.s32 1, %v5581
  %v5583 = vrot.slane %v5541, %v5582
  %v5584 = vlaneseq
  %v5585 = vshrl.u32 %v5584, 7
  %v5586 = vsub.s32 2, %v5585
  %v5587 = vrot.slane %v5541, %v5586
  %v5588 = vlaneseq
  %v5589 = vshrl.u32 %v5588, 7
  %v5590 = vsub.s32 3, %v5589
  %v5591 = vrot.slane %v5541, %v5590
  %v5592 = vlaneseq
  %v5593 = vshrl.u32 %v5592, 7
  %v5594 = vsub.s32 4, %v5593
  %v5595 = vrot.slane %v5541, %v5594
  %v5596 = vlaneseq
  %v5597 = vshrl.u32 %v5596, 7
  %v5598 = vsub.s32 5, %v5597
  %v5599 = vrot.slane %v5541, %v5598
  %v5600 = vlaneseq
  %v5601 = vshrl.u32 %v5600, 7
  %v5602 = vsub.s32 6, %v5601
  %v5603 = vrot.slane %v5541, %v5602
  %v5604 = vlaneseq
  %v5605 = vshrl.u32 %v5604, 7
  %v5606 = vsub.s32 7, %v5605
  %v5607 = vrot.slane %v5541, %v5606
  %v5624 = vmul.f32 %v5537, %v5547
  %v5625 = vmul.f32 %v5536, %v5551
  %v5626 = vmul.f32 %v5535, %v5555
  %v5627 = vmul.f32 %v5534, %v5559
  %v5628 = vmul.f32 %v5533, %v5563
  %v5629 = vmul.f32 %v5532, %v5567
  %v5630 = vmul.f32 %v5531, %v5571
  %v5631 = vmul.f32 %v5530, %v5575
  %v5632 = vmul.f32 %v5529, %v5579
  %v5633 = vmul.f32 %v5528, %v5583
  %v5634 = vmul.f32 %v5527, %v5587
  %v5635 = vmul.f32 %v5526, %v5591
  %v5636 = vmul.f32 %v5525, %v5595
  %v5637 = vmul.f32 %v5524, %v5599
  %v5638 = vmul.f32 %v5523, %v5603
  %v5639 = vmul.f32 %v5538, %v5607
  %s5640 = scalar_lea.vmem %s2, 56
  %v5641 = vld [vmem:[%s5640] sm:$0xff]
  %v5643 = vsel %vm372, %v5641, 0
  %v5646 = vsel %vm376, %v5624, 0
  %v5649 = vsel %vm376, %v5625, 0
  %v5652 = vsel %vm376, %v5626, 0
  %v5655 = vsel %vm376, %v5627, 0
  %v5658 = vsel %vm376, %v5628, 0
  %v5661 = vsel %vm376, %v5629, 0
  %v5664 = vsel %vm376, %v5630, 0
  %v5667 = vsel %vm376, %v5631, 0
  %v5670 = vsel %vm376, %v5632, 0
  %v5673 = vsel %vm376, %v5633, 0
  %v5676 = vsel %vm376, %v5634, 0
  %v5679 = vsel %vm376, %v5635, 0
  %v5682 = vsel %vm376, %v5636, 0
  %v5685 = vsel %vm376, %v5637, 0
  %v5688 = vsel %vm376, %v5638, 0
  %v5691 = vsel %vm376, %v5639, 0
  %5693 = vmatprep.subr.mxu0 %v5649
  %5694 = vmatpush1.msra.mxu0 %v5646
  %5695 = vmatprep.subr.mxu0 0.0
  %5696 = vmatpush1.msra.mxu0 0.0
  %5697 = vmatprep.subr.mxu0 0.0
  %5698 = vmatpush1.msra.mxu0 0.0
  %5699 = vmatprep.subr.mxu0 0.0
  %5700 = vmatpush1.msra.mxu0 0.0
  %5701 = vmatprep.subr.mxu0 0.0
  %5702 = vmatpush1.msra.mxu0 0.0
  %5703 = vmatprep.subr.mxu0 0.0
  %5704 = vmatpush1.msra.mxu0 0.0
  %5705 = vmatprep.subr.mxu0 0.0
  %5706 = vmatpush1.msra.mxu0 0.0
  %5707 = vmatprep.subr.mxu0 0.0
  %5708 = vmatpush1.msra.mxu0 0.0
  %5709 = vmatprep.subr.mxu0 0.0
  %5710 = vmatpush1.msra.mxu0 0.0
  %5711 = vmatprep.subr.mxu0 0.0
  %5712 = vmatpush1.msra.mxu0 0.0
  %5713 = vmatprep.subr.mxu0 0.0
  %5714 = vmatpush1.msra.mxu0 0.0
  %5715 = vmatprep.subr.mxu0 0.0
  %5716 = vmatpush1.msra.mxu0 0.0
  %5717 = vmatprep.subr.mxu0 0.0
  %5718 = vmatpush1.msra.mxu0 0.0
  %5719 = vmatprep.subr.mxu0 0.0
  %5720 = vmatpush1.msra.mxu0 0.0
  %5721 = vmatprep.subr.mxu0 0.0
  %5722 = vmatpush1.msra.mxu0 0.0
  %5723 = vmatprep.subr.mxu0 0.0
  %5724 = vmatpush1.msra.mxu0 0.0
  %5725 = vmatprep.subr.mxu0 0.0
  %5726 = vmatpush1.msra.mxu0 0.0
  %5727 = vmatprep.subr.mxu0 0.0
  %5728 = vmatpush1.msra.mxu0 0.0
  %5729 = vmatprep.subr.mxu0 0.0
  %5730 = vmatpush1.msra.mxu0 0.0
  %5731 = vmatprep.subr.mxu0 0.0
  %5732 = vmatpush1.msra.mxu0 0.0
  %5733 = vmatprep.subr.mxu0 0.0
  %5734 = vmatpush1.msra.mxu0 0.0
  %5735 = vmatprep.subr.mxu0 0.0
  %5736 = vmatpush1.msra.mxu0 0.0
  %5737 = vmatprep.subr.mxu0 0.0
  %5738 = vmatpush1.msra.mxu0 0.0
  %5739 = vmatprep.subr.mxu0 0.0
  %5740 = vmatpush1.msra.mxu0 0.0
  %5741 = vmatprep.subr.mxu0 0.0
  %5742 = vmatpush1.msra.mxu0 0.0
  %5743 = vmatprep.subr.mxu0 0.0
  %5744 = vmatpush1.msra.mxu0 0.0
  %5745 = vmatprep.subr.mxu0 0.0
  %5746 = vmatpush1.msra.mxu0 0.0
  %5747 = vmatprep.subr.mxu0 0.0
  %5748 = vmatpush1.msra.mxu0 0.0
  %5749 = vmatprep.subr.mxu0 0.0
  %5750 = vmatpush1.msra.mxu0 0.0
  %5751 = vmatprep.subr.mxu0 0.0
  %5752 = vmatpush1.msra.mxu0 0.0
  %5753 = vmatprep.subr.mxu0 0.0
  %5754 = vmatpush1.msra.mxu0 0.0
  %5755 = vmatprep.subr.mxu0 0.0
  %5756 = vmatpush1.msra.mxu0 0.0
  %5757 = vmatprep.mubr.f32.mxu0 0.0
  %5758 = vmatmul.mubr.f32.gmra.mrb[0].mxu0 %v5643
  %v5759 = vpop.f32.mrb[0].mxu0
  %v5760 = vadd.f32 0.0, %v5759
  %v5761 = vpop.f32.mrb[0].mxu0
  %v5762 = vadd.f32 0.0, %v5761
  %5763 = vdwg.mxu0
  %5764 = vmatprep.subr.mxu0 %v5655
  %5765 = vmatpush1.msra.mxu0 %v5652
  %5766 = vmatprep.subr.mxu0 0.0
  %5767 = vmatpush1.msra.mxu0 0.0
  %5768 = vmatprep.subr.mxu0 0.0
  %5769 = vmatpush1.msra.mxu0 0.0
  %5770 = vmatprep.subr.mxu0 0.0
  %5771 = vmatpush1.msra.mxu0 0.0
  %5772 = vmatprep.subr.mxu0 0.0
  %5773 = vmatpush1.msra.mxu0 0.0
  %5774 = vmatprep.subr.mxu0 0.0
  %5775 = vmatpush1.msra.mxu0 0.0
  %5776 = vmatprep.subr.mxu0 0.0
  %5777 = vmatpush1.msra.mxu0 0.0
  %5778 = vmatprep.subr.mxu0 0.0
  %5779 = vmatpush1.msra.mxu0 0.0
  %5780 = vmatprep.subr.mxu0 0.0
  %5781 = vmatpush1.msra.mxu0 0.0
  %5782 = vmatprep.subr.mxu0 0.0
  %5783 = vmatpush1.msra.mxu0 0.0
  %5784 = vmatprep.subr.mxu0 0.0
  %5785 = vmatpush1.msra.mxu0 0.0
  %5786 = vmatprep.subr.mxu0 0.0
  %5787 = vmatpush1.msra.mxu0 0.0
  %5788 = vmatprep.subr.mxu0 0.0
  %5789 = vmatpush1.msra.mxu0 0.0
  %5790 = vmatprep.subr.mxu0 0.0
  %5791 = vmatpush1.msra.mxu0 0.0
  %5792 = vmatprep.subr.mxu0 0.0
  %5793 = vmatpush1.msra.mxu0 0.0
  %5794 = vmatprep.subr.mxu0 0.0
  %5795 = vmatpush1.msra.mxu0 0.0
  %5796 = vmatprep.subr.mxu0 0.0
  %5797 = vmatpush1.msra.mxu0 0.0
  %5798 = vmatprep.subr.mxu0 0.0
  %5799 = vmatpush1.msra.mxu0 0.0
  %5800 = vmatprep.subr.mxu0 0.0
  %5801 = vmatpush1.msra.mxu0 0.0
  %5802 = vmatprep.subr.mxu0 0.0
  %5803 = vmatpush1.msra.mxu0 0.0
  %5804 = vmatprep.subr.mxu0 0.0
  %5805 = vmatpush1.msra.mxu0 0.0
  %5806 = vmatprep.subr.mxu0 0.0
  %5807 = vmatpush1.msra.mxu0 0.0
  %5808 = vmatprep.subr.mxu0 0.0
  %5809 = vmatpush1.msra.mxu0 0.0
  %5810 = vmatprep.subr.mxu0 0.0
  %5811 = vmatpush1.msra.mxu0 0.0
  %5812 = vmatprep.subr.mxu0 0.0
  %5813 = vmatpush1.msra.mxu0 0.0
  %5814 = vmatprep.subr.mxu0 0.0
  %5815 = vmatpush1.msra.mxu0 0.0
  %5816 = vmatprep.subr.mxu0 0.0
  %5817 = vmatpush1.msra.mxu0 0.0
  %5818 = vmatprep.subr.mxu0 0.0
  %5819 = vmatpush1.msra.mxu0 0.0
  %5820 = vmatprep.subr.mxu0 0.0
  %5821 = vmatpush1.msra.mxu0 0.0
  %5822 = vmatprep.subr.mxu0 0.0
  %5823 = vmatpush1.msra.mxu0 0.0
  %5824 = vmatprep.subr.mxu0 0.0
  %5825 = vmatpush1.msra.mxu0 0.0
  %5826 = vmatprep.subr.mxu0 0.0
  %5827 = vmatpush1.msra.mxu0 0.0
  %5828 = vmatprep.mubr.f32.mxu0 0.0
  %5829 = vmatmul.mubr.f32.gmra.mrb[0].mxu0 %v5643
  %v5830 = vpop.f32.mrb[0].mxu0
  %v5831 = vadd.f32 0.0, %v5830
  %v5832 = vpop.f32.mrb[0].mxu0
  %v5833 = vadd.f32 0.0, %v5832
  %5834 = vdwg.mxu0
  %5835 = vmatprep.subr.mxu0 %v5661
  %5836 = vmatpush1.msra.mxu0 %v5658
  %5837 = vmatprep.subr.mxu0 0.0
  %5838 = vmatpush1.msra.mxu0 0.0
  %5839 = vmatprep.subr.mxu0 0.0
  %5840 = vmatpush1.msra.mxu0 0.0
  %5841 = vmatprep.subr.mxu0 0.0
  %5842 = vmatpush1.msra.mxu0 0.0
  %5843 = vmatprep.subr.mxu0 0.0
  %5844 = vmatpush1.msra.mxu0 0.0
  %5845 = vmatprep.subr.mxu0 0.0
  %5846 = vmatpush1.msra.mxu0 0.0
  %5847 = vmatprep.subr.mxu0 0.0
  %5848 = vmatpush1.msra.mxu0 0.0
  %5849 = vmatprep.subr.mxu0 0.0
  %5850 = vmatpush1.msra.mxu0 0.0
  %5851 = vmatprep.subr.mxu0 0.0
  %5852 = vmatpush1.msra.mxu0 0.0
  %5853 = vmatprep.subr.mxu0 0.0
  %5854 = vmatpush1.msra.mxu0 0.0
  %5855 = vmatprep.subr.mxu0 0.0
  %5856 = vmatpush1.msra.mxu0 0.0
  %5857 = vmatprep.subr.mxu0 0.0
  %5858 = vmatpush1.msra.mxu0 0.0
  %5859 = vmatprep.subr.mxu0 0.0
  %5860 = vmatpush1.msra.mxu0 0.0
  %5861 = vmatprep.subr.mxu0 0.0
  %5862 = vmatpush1.msra.mxu0 0.0
  %5863 = vmatprep.subr.mxu0 0.0
  %5864 = vmatpush1.msra.mxu0 0.0
  %5865 = vmatprep.subr.mxu0 0.0
  %5866 = vmatpush1.msra.mxu0 0.0
  %5867 = vmatprep.subr.mxu0 0.0
  %5868 = vmatpush1.msra.mxu0 0.0
  %5869 = vmatprep.subr.mxu0 0.0
  %5870 = vmatpush1.msra.mxu0 0.0
  %5871 = vmatprep.subr.mxu0 0.0
  %5872 = vmatpush1.msra.mxu0 0.0
  %5873 = vmatprep.subr.mxu0 0.0
  %5874 = vmatpush1.msra.mxu0 0.0
  %5875 = vmatprep.subr.mxu0 0.0
  %5876 = vmatpush1.msra.mxu0 0.0
  %5877 = vmatprep.subr.mxu0 0.0
  %5878 = vmatpush1.msra.mxu0 0.0
  %5879 = vmatprep.subr.mxu0 0.0
  %5880 = vmatpush1.msra.mxu0 0.0
  %5881 = vmatprep.subr.mxu0 0.0
  %5882 = vmatpush1.msra.mxu0 0.0
  %5883 = vmatprep.subr.mxu0 0.0
  %5884 = vmatpush1.msra.mxu0 0.0
  %5885 = vmatprep.subr.mxu0 0.0
  %5886 = vmatpush1.msra.mxu0 0.0
  %5887 = vmatprep.subr.mxu0 0.0
  %5888 = vmatpush1.msra.mxu0 0.0
  %5889 = vmatprep.subr.mxu0 0.0
  %5890 = vmatpush1.msra.mxu0 0.0
  %5891 = vmatprep.subr.mxu0 0.0
  %5892 = vmatpush1.msra.mxu0 0.0
  %5893 = vmatprep.subr.mxu0 0.0
  %5894 = vmatpush1.msra.mxu0 0.0
  %5895 = vmatprep.subr.mxu0 0.0
  %5896 = vmatpush1.msra.mxu0 0.0
  %5897 = vmatprep.subr.mxu0 0.0
  %5898 = vmatpush1.msra.mxu0 0.0
  %5899 = vmatprep.mubr.f32.mxu0 0.0
  %5900 = vmatmul.mubr.f32.gmra.mrb[0].mxu0 %v5643
  %v5901 = vpop.f32.mrb[0].mxu0
  %v5902 = vadd.f32 0.0, %v5901
  %v5903 = vpop.f32.mrb[0].mxu0
  %v5904 = vadd.f32 0.0, %v5903
  %5905 = vdwg.mxu0
  %5906 = vmatprep.subr.mxu0 %v5667
  %5907 = vmatpush1.msra.mxu0 %v5664
  %5908 = vmatprep.subr.mxu0 0.0
  %5909 = vmatpush1.msra.mxu0 0.0
  %5910 = vmatprep.subr.mxu0 0.0
  %5911 = vmatpush1.msra.mxu0 0.0
  %5912 = vmatprep.subr.mxu0 0.0
  %5913 = vmatpush1.msra.mxu0 0.0
  %5914 = vmatprep.subr.mxu0 0.0
  %5915 = vmatpush1.msra.mxu0 0.0
  %5916 = vmatprep.subr.mxu0 0.0
  %5917 = vmatpush1.msra.mxu0 0.0
  %5918 = vmatprep.subr.mxu0 0.0
  %5919 = vmatpush1.msra.mxu0 0.0
  %5920 = vmatprep.subr.mxu0 0.0
  %5921 = vmatpush1.msra.mxu0 0.0
  %5922 = vmatprep.subr.mxu0 0.0
  %5923 = vmatpush1.msra.mxu0 0.0
  %5924 = vmatprep.subr.mxu0 0.0
  %5925 = vmatpush1.msra.mxu0 0.0
  %5926 = vmatprep.subr.mxu0 0.0
  %5927 = vmatpush1.msra.mxu0 0.0
  %5928 = vmatprep.subr.mxu0 0.0
  %5929 = vmatpush1.msra.mxu0 0.0
  %5930 = vmatprep.subr.mxu0 0.0
  %5931 = vmatpush1.msra.mxu0 0.0
  %5932 = vmatprep.subr.mxu0 0.0
  %5933 = vmatpush1.msra.mxu0 0.0
  %5934 = vmatprep.subr.mxu0 0.0
  %5935 = vmatpush1.msra.mxu0 0.0
  %5936 = vmatprep.subr.mxu0 0.0
  %5937 = vmatpush1.msra.mxu0 0.0
  %5938 = vmatprep.subr.mxu0 0.0
  %5939 = vmatpush1.msra.mxu0 0.0
  %5940 = vmatprep.subr.mxu0 0.0
  %5941 = vmatpush1.msra.mxu0 0.0
  %5942 = vmatprep.subr.mxu0 0.0
  %5943 = vmatpush1.msra.mxu0 0.0
  %5944 = vmatprep.subr.mxu0 0.0
  %5945 = vmatpush1.msra.mxu0 0.0
  %5946 = vmatprep.subr.mxu0 0.0
  %5947 = vmatpush1.msra.mxu0 0.0
  %5948 = vmatprep.subr.mxu0 0.0
  %5949 = vmatpush1.msra.mxu0 0.0
  %5950 = vmatprep.subr.mxu0 0.0
  %5951 = vmatpush1.msra.mxu0 0.0
  %5952 = vmatprep.subr.mxu0 0.0
  %5953 = vmatpush1.msra.mxu0 0.0
  %5954 = vmatprep.subr.mxu0 0.0
  %5955 = vmatpush1.msra.mxu0 0.0
  %5956 = vmatprep.subr.mxu0 0.0
  %5957 = vmatpush1.msra.mxu0 0.0
  %5958 = vmatprep.subr.mxu0 0.0
  %5959 = vmatpush1.msra.mxu0 0.0
  %5960 = vmatprep.subr.mxu0 0.0
  %5961 = vmatpush1.msra.mxu0 0.0
  %5962 = vmatprep.subr.mxu0 0.0
  %5963 = vmatpush1.msra.mxu0 0.0
  %5964 = vmatprep.subr.mxu0 0.0
  %5965 = vmatpush1.msra.mxu0 0.0
  %5966 = vmatprep.subr.mxu0 0.0
  %5967 = vmatpush1.msra.mxu0 0.0
  %5968 = vmatprep.subr.mxu0 0.0
  %5969 = vmatpush1.msra.mxu0 0.0
  %5970 = vmatprep.mubr.f32.mxu0 0.0
  %5971 = vmatmul.mubr.f32.gmra.mrb[0].mxu0 %v5643
  %v5972 = vpop.f32.mrb[0].mxu0
  %v5973 = vadd.f32 0.0, %v5972
  %v5974 = vpop.f32.mrb[0].mxu0
  %v5975 = vadd.f32 0.0, %v5974
  %5976 = vdwg.mxu0
  %5977 = vmatprep.subr.mxu0 %v5673
  %5978 = vmatpush1.msra.mxu0 %v5670
  %5979 = vmatprep.subr.mxu0 0.0
  %5980 = vmatpush1.msra.mxu0 0.0
  %5981 = vmatprep.subr.mxu0 0.0
  %5982 = vmatpush1.msra.mxu0 0.0
  %5983 = vmatprep.subr.mxu0 0.0
  %5984 = vmatpush1.msra.mxu0 0.0
  %5985 = vmatprep.subr.mxu0 0.0
  %5986 = vmatpush1.msra.mxu0 0.0
  %5987 = vmatprep.subr.mxu0 0.0
  %5988 = vmatpush1.msra.mxu0 0.0
  %5989 = vmatprep.subr.mxu0 0.0
  %5990 = vmatpush1.msra.mxu0 0.0
  %5991 = vmatprep.subr.mxu0 0.0
  %5992 = vmatpush1.msra.mxu0 0.0
  %5993 = vmatprep.subr.mxu0 0.0
  %5994 = vmatpush1.msra.mxu0 0.0
  %5995 = vmatprep.subr.mxu0 0.0
  %5996 = vmatpush1.msra.mxu0 0.0
  %5997 = vmatprep.subr.mxu0 0.0
  %5998 = vmatpush1.msra.mxu0 0.0
  %5999 = vmatprep.subr.mxu0 0.0
  %6000 = vmatpush1.msra.mxu0 0.0
  %6001 = vmatprep.subr.mxu0 0.0
  %6002 = vmatpush1.msra.mxu0 0.0
  %6003 = vmatprep.subr.mxu0 0.0
  %6004 = vmatpush1.msra.mxu0 0.0
  %6005 = vmatprep.subr.mxu0 0.0
  %6006 = vmatpush1.msra.mxu0 0.0
  %6007 = vmatprep.subr.mxu0 0.0
  %6008 = vmatpush1.msra.mxu0 0.0
  %6009 = vmatprep.subr.mxu0 0.0
  %6010 = vmatpush1.msra.mxu0 0.0
  %6011 = vmatprep.subr.mxu0 0.0
  %6012 = vmatpush1.msra.mxu0 0.0
  %6013 = vmatprep.subr.mxu0 0.0
  %6014 = vmatpush1.msra.mxu0 0.0
  %6015 = vmatprep.subr.mxu0 0.0
  %6016 = vmatpush1.msra.mxu0 0.0
  %6017 = vmatprep.subr.mxu0 0.0
  %6018 = vmatpush1.msra.mxu0 0.0
  %6019 = vmatprep.subr.mxu0 0.0
  %6020 = vmatpush1.msra.mxu0 0.0
  %6021 = vmatprep.subr.mxu0 0.0
  %6022 = vmatpush1.msra.mxu0 0.0
  %6023 = vmatprep.subr.mxu0 0.0
  %6024 = vmatpush1.msra.mxu0 0.0
  %6025 = vmatprep.subr.mxu0 0.0
  %6026 = vmatpush1.msra.mxu0 0.0
  %6027 = vmatprep.subr.mxu0 0.0
  %6028 = vmatpush1.msra.mxu0 0.0
  %6029 = vmatprep.subr.mxu0 0.0
  %6030 = vmatpush1.msra.mxu0 0.0
  %6031 = vmatprep.subr.mxu0 0.0
  %6032 = vmatpush1.msra.mxu0 0.0
  %6033 = vmatprep.subr.mxu0 0.0
  %6034 = vmatpush1.msra.mxu0 0.0
  %6035 = vmatprep.subr.mxu0 0.0
  %6036 = vmatpush1.msra.mxu0 0.0
  %6037 = vmatprep.subr.mxu0 0.0
  %6038 = vmatpush1.msra.mxu0 0.0
  %6039 = vmatprep.subr.mxu0 0.0
  %6040 = vmatpush1.msra.mxu0 0.0
  %6041 = vmatprep.mubr.f32.mxu0 0.0
  %6042 = vmatmul.mubr.f32.gmra.mrb[0].mxu0 %v5643
  %v6043 = vpop.f32.mrb[0].mxu0
  %v6044 = vadd.f32 0.0, %v6043
  %v6045 = vpop.f32.mrb[0].mxu0
  %v6046 = vadd.f32 0.0, %v6045
  %6047 = vdwg.mxu0
  %6048 = vmatprep.subr.mxu0 %v5679
  %6049 = vmatpush1.msra.mxu0 %v5676
  %6050 = vmatprep.subr.mxu0 0.0
  %6051 = vmatpush1.msra.mxu0 0.0
  %6052 = vmatprep.subr.mxu0 0.0
  %6053 = vmatpush1.msra.mxu0 0.0
  %6054 = vmatprep.subr.mxu0 0.0
  %6055 = vmatpush1.msra.mxu0 0.0
  %6056 = vmatprep.subr.mxu0 0.0
  %6057 = vmatpush1.msra.mxu0 0.0
  %6058 = vmatprep.subr.mxu0 0.0
  %6059 = vmatpush1.msra.mxu0 0.0
  %6060 = vmatprep.subr.mxu0 0.0
  %6061 = vmatpush1.msra.mxu0 0.0
  %6062 = vmatprep.subr.mxu0 0.0
  %6063 = vmatpush1.msra.mxu0 0.0
  %6064 = vmatprep.subr.mxu0 0.0
  %6065 = vmatpush1.msra.mxu0 0.0
  %6066 = vmatprep.subr.mxu0 0.0
  %6067 = vmatpush1.msra.mxu0 0.0
  %6068 = vmatprep.subr.mxu0 0.0
  %6069 = vmatpush1.msra.mxu0 0.0
  %6070 = vmatprep.subr.mxu0 0.0
  %6071 = vmatpush1.msra.mxu0 0.0
  %6072 = vmatprep.subr.mxu0 0.0
  %6073 = vmatpush1.msra.mxu0 0.0
  %6074 = vmatprep.subr.mxu0 0.0
  %6075 = vmatpush1.msra.mxu0 0.0
  %6076 = vmatprep.subr.mxu0 0.0
  %6077 = vmatpush1.msra.mxu0 0.0
  %6078 = vmatprep.subr.mxu0 0.0
  %6079 = vmatpush1.msra.mxu0 0.0
  %6080 = vmatprep.subr.mxu0 0.0
  %6081 = vmatpush1.msra.mxu0 0.0
  %6082 = vmatprep.subr.mxu0 0.0
  %6083 = vmatpush1.msra.mxu0 0.0
  %6084 = vmatprep.subr.mxu0 0.0
  %6085 = vmatpush1.msra.mxu0 0.0
  %6086 = vmatprep.subr.mxu0 0.0
  %6087 = vmatpush1.msra.mxu0 0.0
  %6088 = vmatprep.subr.mxu0 0.0
  %6089 = vmatpush1.msra.mxu0 0.0
  %6090 = vmatprep.subr.mxu0 0.0
  %6091 = vmatpush1.msra.mxu0 0.0
  %6092 = vmatprep.subr.mxu0 0.0
  %6093 = vmatpush1.msra.mxu0 0.0
  %6094 = vmatprep.subr.mxu0 0.0
  %6095 = vmatpush1.msra.mxu0 0.0
  %6096 = vmatprep.subr.mxu0 0.0
  %6097 = vmatpush1.msra.mxu0 0.0
  %6098 = vmatprep.subr.mxu0 0.0
  %6099 = vmatpush1.msra.mxu0 0.0
  %6100 = vmatprep.subr.mxu0 0.0
  %6101 = vmatpush1.msra.mxu0 0.0
  %6102 = vmatprep.subr.mxu0 0.0
  %6103 = vmatpush1.msra.mxu0 0.0
  %6104 = vmatprep.subr.mxu0 0.0
  %6105 = vmatpush1.msra.mxu0 0.0
  %6106 = vmatprep.subr.mxu0 0.0
  %6107 = vmatpush1.msra.mxu0 0.0
  %6108 = vmatprep.subr.mxu0 0.0
  %6109 = vmatpush1.msra.mxu0 0.0
  %6110 = vmatprep.subr.mxu0 0.0
  %6111 = vmatpush1.msra.mxu0 0.0
  %6112 = vmatprep.mubr.f32.mxu0 0.0
  %6113 = vmatmul.mubr.f32.gmra.mrb[0].mxu0 %v5643
  %v6114 = vpop.f32.mrb[0].mxu0
  %v6115 = vadd.f32 0.0, %v6114
  %v6116 = vpop.f32.mrb[0].mxu0
  %v6117 = vadd.f32 0.0, %v6116
  %6118 = vdwg.mxu0
  %6119 = vmatprep.subr.mxu0 %v5685
  %6120 = vmatpush1.msra.mxu0 %v5682
  %6121 = vmatprep.subr.mxu0 0.0
  %6122 = vmatpush1.msra.mxu0 0.0
  %6123 = vmatprep.subr.mxu0 0.0
  %6124 = vmatpush1.msra.mxu0 0.0
  %6125 = vmatprep.subr.mxu0 0.0
  %6126 = vmatpush1.msra.mxu0 0.0
  %6127 = vmatprep.subr.mxu0 0.0
  %6128 = vmatpush1.msra.mxu0 0.0
  %6129 = vmatprep.subr.mxu0 0.0
  %6130 = vmatpush1.msra.mxu0 0.0
  %6131 = vmatprep.subr.mxu0 0.0
  %6132 = vmatpush1.msra.mxu0 0.0
  %6133 = vmatprep.subr.mxu0 0.0
  %6134 = vmatpush1.msra.mxu0 0.0
  %6135 = vmatprep.subr.mxu0 0.0
  %6136 = vmatpush1.msra.mxu0 0.0
  %6137 = vmatprep.subr.mxu0 0.0
  %6138 = vmatpush1.msra.mxu0 0.0
  %6139 = vmatprep.subr.mxu0 0.0
  %6140 = vmatpush1.msra.mxu0 0.0
  %6141 = vmatprep.subr.mxu0 0.0
  %6142 = vmatpush1.msra.mxu0 0.0
  %6143 = vmatprep.subr.mxu0 0.0
  %6144 = vmatpush1.msra.mxu0 0.0
  %6145 = vmatprep.subr.mxu0 0.0
  %6146 = vmatpush1.msra.mxu0 0.0
  %6147 = vmatprep.subr.mxu0 0.0
  %6148 = vmatpush1.msra.mxu0 0.0
  %6149 = vmatprep.subr.mxu0 0.0
  %6150 = vmatpush1.msra.mxu0 0.0
  %6151 = vmatprep.subr.mxu0 0.0
  %6152 = vmatpush1.msra.mxu0 0.0
  %6153 = vmatprep.subr.mxu0 0.0
  %6154 = vmatpush1.msra.mxu0 0.0
  %6155 = vmatprep.subr.mxu0 0.0
  %6156 = vmatpush1.msra.mxu0 0.0
  %6157 = vmatprep.subr.mxu0 0.0
  %6158 = vmatpush1.msra.mxu0 0.0
  %6159 = vmatprep.subr.mxu0 0.0
  %6160 = vmatpush1.msra.mxu0 0.0
  %6161 = vmatprep.subr.mxu0 0.0
  %6162 = vmatpush1.msra.mxu0 0.0
  %6163 = vmatprep.subr.mxu0 0.0
  %6164 = vmatpush1.msra.mxu0 0.0
  %6165 = vmatprep.subr.mxu0 0.0
  %6166 = vmatpush1.msra.mxu0 0.0
  %6167 = vmatprep.subr.mxu0 0.0
  %6168 = vmatpush1.msra.mxu0 0.0
  %6169 = vmatprep.subr.mxu0 0.0
  %6170 = vmatpush1.msra.mxu0 0.0
  %6171 = vmatprep.subr.mxu0 0.0
  %6172 = vmatpush1.msra.mxu0 0.0
  %6173 = vmatprep.subr.mxu0 0.0
  %6174 = vmatpush1.msra.mxu0 0.0
  %6175 = vmatprep.subr.mxu0 0.0
  %6176 = vmatpush1.msra.mxu0 0.0
  %6177 = vmatprep.subr.mxu0 0.0
  %6178 = vmatpush1.msra.mxu0 0.0
  %6179 = vmatprep.subr.mxu0 0.0
  %6180 = vmatpush1.msra.mxu0 0.0
  %6181 = vmatprep.subr.mxu0 0.0
  %6182 = vmatpush1.msra.mxu0 0.0
  %6183 = vmatprep.mubr.f32.mxu0 0.0
  %6184 = vmatmul.mubr.f32.gmra.mrb[0].mxu0 %v5643
  %v6185 = vpop.f32.mrb[0].mxu0
  %v6186 = vadd.f32 0.0, %v6185
  %v6187 = vpop.f32.mrb[0].mxu0
  %v6188 = vadd.f32 0.0, %v6187
  %6189 = vdwg.mxu0
  %6190 = vmatprep.subr.mxu0 %v5691
  %6191 = vmatpush1.msra.mxu0 %v5688
  %6192 = vmatprep.subr.mxu0 0.0
  %6193 = vmatpush1.msra.mxu0 0.0
  %6194 = vmatprep.subr.mxu0 0.0
  %6195 = vmatpush1.msra.mxu0 0.0
  %6196 = vmatprep.subr.mxu0 0.0
  %6197 = vmatpush1.msra.mxu0 0.0
  %6198 = vmatprep.subr.mxu0 0.0
  %6199 = vmatpush1.msra.mxu0 0.0
  %6200 = vmatprep.subr.mxu0 0.0
  %6201 = vmatpush1.msra.mxu0 0.0
  %6202 = vmatprep.subr.mxu0 0.0
  %6203 = vmatpush1.msra.mxu0 0.0
  %6204 = vmatprep.subr.mxu0 0.0
  %6205 = vmatpush1.msra.mxu0 0.0
  %6206 = vmatprep.subr.mxu0 0.0
  %6207 = vmatpush1.msra.mxu0 0.0
  %6208 = vmatprep.subr.mxu0 0.0
  %6209 = vmatpush1.msra.mxu0 0.0
  %6210 = vmatprep.subr.mxu0 0.0
  %6211 = vmatpush1.msra.mxu0 0.0
  %6212 = vmatprep.subr.mxu0 0.0
  %6213 = vmatpush1.msra.mxu0 0.0
  %6214 = vmatprep.subr.mxu0 0.0
  %6215 = vmatpush1.msra.mxu0 0.0
  %6216 = vmatprep.subr.mxu0 0.0
  %6217 = vmatpush1.msra.mxu0 0.0
  %6218 = vmatprep.subr.mxu0 0.0
  %6219 = vmatpush1.msra.mxu0 0.0
  %6220 = vmatprep.subr.mxu0 0.0
  %6221 = vmatpush1.msra.mxu0 0.0
  %6222 = vmatprep.subr.mxu0 0.0
  %6223 = vmatpush1.msra.mxu0 0.0
  %6224 = vmatprep.subr.mxu0 0.0
  %6225 = vmatpush1.msra.mxu0 0.0
  %6226 = vmatprep.subr.mxu0 0.0
  %6227 = vmatpush1.msra.mxu0 0.0
  %6228 = vmatprep.subr.mxu0 0.0
  %6229 = vmatpush1.msra.mxu0 0.0
  %6230 = vmatprep.subr.mxu0 0.0
  %6231 = vmatpush1.msra.mxu0 0.0
  %6232 = vmatprep.subr.mxu0 0.0
  %6233 = vmatpush1.msra.mxu0 0.0
  %6234 = vmatprep.subr.mxu0 0.0
  %6235 = vmatpush1.msra.mxu0 0.0
  %6236 = vmatprep.subr.mxu0 0.0
  %6237 = vmatpush1.msra.mxu0 0.0
  %6238 = vmatprep.subr.mxu0 0.0
  %6239 = vmatpush1.msra.mxu0 0.0
  %6240 = vmatprep.subr.mxu0 0.0
  %6241 = vmatpush1.msra.mxu0 0.0
  %6242 = vmatprep.subr.mxu0 0.0
  %6243 = vmatpush1.msra.mxu0 0.0
  %6244 = vmatprep.subr.mxu0 0.0
  %6245 = vmatpush1.msra.mxu0 0.0
  %6246 = vmatprep.subr.mxu0 0.0
  %6247 = vmatpush1.msra.mxu0 0.0
  %6248 = vmatprep.subr.mxu0 0.0
  %6249 = vmatpush1.msra.mxu0 0.0
  %6250 = vmatprep.subr.mxu0 0.0
  %6251 = vmatpush1.msra.mxu0 0.0
  %6252 = vmatprep.subr.mxu0 0.0
  %6253 = vmatpush1.msra.mxu0 0.0
  %6254 = vmatprep.mubr.f32.mxu0 0.0
  %6255 = vmatmul.mubr.f32.gmra.mrb[0].mxu0 %v5643
  %v6256 = vpop.f32.mrb[0].mxu0
  %v6257 = vadd.f32 0.0, %v6256
  %v6258 = vpop.f32.mrb[0].mxu0
  %v6259 = vadd.f32 0.0, %v6258
  %6260 = vdwg.mxu0
  %v6261 = vadd.f32 %v5474, %v5760
  %v6262 = vadd.f32 %v5475, %v5762
  %v6263 = vadd.f32 %v5476, %v5831
  %v6264 = vadd.f32 %v5477, %v5833
  %v6265 = vadd.f32 %v5478, %v5902
  %v6266 = vadd.f32 %v5479, %v5904
  %v6267 = vadd.f32 %v5480, %v5973
  %v6268 = vadd.f32 %v5481, %v5975
  %v6269 = vadd.f32 %v5482, %v6044
  %v6270 = vadd.f32 %v5483, %v6046
  %v6271 = vadd.f32 %v5484, %v6115
  %v6272 = vadd.f32 %v5485, %v6117
  %v6273 = vadd.f32 %v5486, %v6186
  %v6274 = vadd.f32 %v5487, %v6188
  %v6275 = vadd.f32 %v5488, %v6257
  %v6276 = vadd.f32 %v5489, %v6259
  %6277 = vrot.lane.b32.xlu0 %v36, 111
  %v6278 = vpop.permute.xlu0 %6277
  %6279 = vrot.lane.b32.xlu0 %v52, 111
  %v6280 = vpop.permute.xlu0 %6279
  %6281 = vrot.lane.b32.xlu0 %v37, 111
  %v6282 = vpop.permute.xlu0 %6281
  %6283 = vrot.lane.b32.xlu0 %v53, 111
  %v6284 = vpop.permute.xlu0 %6283
  %6285 = vrot.lane.b32.xlu0 %v38, 111
  %v6286 = vpop.permute.xlu0 %6285
  %6287 = vrot.lane.b32.xlu0 %v54, 111
  %v6288 = vpop.permute.xlu0 %6287
  %6289 = vrot.lane.b32.xlu0 %v39, 111
  %v6290 = vpop.permute.xlu0 %6289
  %6291 = vrot.lane.b32.xlu0 %v55, 111
  %v6292 = vpop.permute.xlu0 %6291
  %6293 = vrot.lane.b32.xlu0 %v40, 111
  %v6294 = vpop.permute.xlu0 %6293
  %6295 = vrot.lane.b32.xlu0 %v56, 111
  %v6296 = vpop.permute.xlu0 %6295
  %6297 = vrot.lane.b32.xlu0 %v41, 111
  %v6298 = vpop.permute.xlu0 %6297
  %6299 = vrot.lane.b32.xlu0 %v57, 111
  %v6300 = vpop.permute.xlu0 %6299
  %6301 = vrot.lane.b32.xlu0 %v42, 111
  %v6302 = vpop.permute.xlu0 %6301
  %6303 = vrot.lane.b32.xlu0 %v58, 111
  %v6304 = vpop.permute.xlu0 %6303
  %6305 = vrot.lane.b32.xlu0 %v43, 111
  %v6306 = vpop.permute.xlu0 %6305
  %6307 = vrot.lane.b32.xlu0 %v59, 111
  %v6308 = vpop.permute.xlu0 %6307
  %vm6309 = vcmp.lt.s32.totalorder %v101, 111
  %v6310 = vsel %vm6309, %v6306, %v6308
  %v6311 = vsel %vm6309, %v6304, %v6306
  %v6312 = vsel %vm6309, %v6302, %v6304
  %v6313 = vsel %vm6309, %v6300, %v6302
  %v6314 = vsel %vm6309, %v6298, %v6300
  %v6315 = vsel %vm6309, %v6296, %v6298
  %v6316 = vsel %vm6309, %v6294, %v6296
  %v6317 = vsel %vm6309, %v6292, %v6294
  %v6318 = vsel %vm6309, %v6290, %v6292
  %v6319 = vsel %vm6309, %v6288, %v6290
  %v6320 = vsel %vm6309, %v6286, %v6288
  %v6321 = vsel %vm6309, %v6284, %v6286
  %v6322 = vsel %vm6309, %v6282, %v6284
  %v6323 = vsel %vm6309, %v6280, %v6282
  %v6324 = vsel %vm6309, %v6278, %v6280
  %v6325 = vsel %vm6309, %v6308, %v6278
  %s6326 = scalar_lea.vmem %s1, 128
  %v6327 = vld [vmem:[%s6326] sm:$0xff]
  %v6328 = vld [vmem:[%s6326 + $0x8] sm:$0xff]
  %v6331 = vlaneseq
  %v6332 = vshrl.u32 %v6331, 7
  %v6333 = vsub.s32 0, %v6332
  %v6334 = vrot.slane %v6327, %v6333
  %v6335 = vlaneseq
  %v6336 = vshrl.u32 %v6335, 7
  %v6337 = vsub.s32 1, %v6336
  %v6338 = vrot.slane %v6327, %v6337
  %v6339 = vlaneseq
  %v6340 = vshrl.u32 %v6339, 7
  %v6341 = vsub.s32 2, %v6340
  %v6342 = vrot.slane %v6327, %v6341
  %v6343 = vlaneseq
  %v6344 = vshrl.u32 %v6343, 7
  %v6345 = vsub.s32 3, %v6344
  %v6346 = vrot.slane %v6327, %v6345
  %v6347 = vlaneseq
  %v6348 = vshrl.u32 %v6347, 7
  %v6349 = vsub.s32 4, %v6348
  %v6350 = vrot.slane %v6327, %v6349
  %v6351 = vlaneseq
  %v6352 = vshrl.u32 %v6351, 7
  %v6353 = vsub.s32 5, %v6352
  %v6354 = vrot.slane %v6327, %v6353
  %v6355 = vlaneseq
  %v6356 = vshrl.u32 %v6355, 7
  %v6357 = vsub.s32 6, %v6356
  %v6358 = vrot.slane %v6327, %v6357
  %v6359 = vlaneseq
  %v6360 = vshrl.u32 %v6359, 7
  %v6361 = vsub.s32 7, %v6360
  %v6362 = vrot.slane %v6327, %v6361
  %v6363 = vlaneseq
  %v6364 = vshrl.u32 %v6363, 7
  %v6365 = vsub.s32 0, %v6364
  %v6366 = vrot.slane %v6328, %v6365
  %v6367 = vlaneseq
  %v6368 = vshrl.u32 %v6367, 7
  %v6369 = vsub.s32 1, %v6368
  %v6370 = vrot.slane %v6328, %v6369
  %v6371 = vlaneseq
  %v6372 = vshrl.u32 %v6371, 7
  %v6373 = vsub.s32 2, %v6372
  %v6374 = vrot.slane %v6328, %v6373
  %v6375 = vlaneseq
  %v6376 = vshrl.u32 %v6375, 7
  %v6377 = vsub.s32 3, %v6376
  %v6378 = vrot.slane %v6328, %v6377
  %v6379 = vlaneseq
  %v6380 = vshrl.u32 %v6379, 7
  %v6381 = vsub.s32 4, %v6380
  %v6382 = vrot.slane %v6328, %v6381
  %v6383 = vlaneseq
  %v6384 = vshrl.u32 %v6383, 7
  %v6385 = vsub.s32 5, %v6384
  %v6386 = vrot.slane %v6328, %v6385
  %v6387 = vlaneseq
  %v6388 = vshrl.u32 %v6387, 7
  %v6389 = vsub.s32 6, %v6388
  %v6390 = vrot.slane %v6328, %v6389
  %v6391 = vlaneseq
  %v6392 = vshrl.u32 %v6391, 7
  %v6393 = vsub.s32 7, %v6392
  %v6394 = vrot.slane %v6328, %v6393
  %v6411 = vmul.f32 %v6324, %v6334
  %v6412 = vmul.f32 %v6323, %v6338
  %v6413 = vmul.f32 %v6322, %v6342
  %v6414 = vmul.f32 %v6321, %v6346
  %v6415 = vmul.f32 %v6320, %v6350
  %v6416 = vmul.f32 %v6319, %v6354
  %v6417 = vmul.f32 %v6318, %v6358
  %v6418 = vmul.f32 %v6317, %v6362
  %v6419 = vmul.f32 %v6316, %v6366
  %v6420 = vmul.f32 %v6315, %v6370
  %v6421 = vmul.f32 %v6314, %v6374
  %v6422 = vmul.f32 %v6313, %v6378
  %v6423 = vmul.f32 %v6312, %v6382
  %v6424 = vmul.f32 %v6311, %v6386
  %v6425 = vmul.f32 %v6310, %v6390
  %v6426 = vmul.f32 %v6325, %v6394
  %s6427 = scalar_lea.vmem %s2, 64
  %v6428 = vld [vmem:[%s6427] sm:$0xff]
  %v6430 = vsel %vm372, %v6428, 0
  %v6433 = vsel %vm376, %v6411, 0
  %v6436 = vsel %vm376, %v6412, 0
  %v6439 = vsel %vm376, %v6413, 0
  %v6442 = vsel %vm376, %v6414, 0
  %v6445 = vsel %vm376, %v6415, 0
  %v6448 = vsel %vm376, %v6416, 0
  %v6451 = vsel %vm376, %v6417, 0
  %v6454 = vsel %vm376, %v6418, 0
  %v6457 = vsel %vm376, %v6419, 0
  %v6460 = vsel %vm376, %v6420, 0
  %v6463 = vsel %vm376, %v6421, 0
  %v6466 = vsel %vm376, %v6422, 0
  %v6469 = vsel %vm376, %v6423, 0
  %v6472 = vsel %vm376, %v6424, 0
  %v6475 = vsel %vm376, %v6425, 0
  %v6478 = vsel %vm376, %v6426, 0
  %6480 = vmatprep.subr.mxu0 %v6436
  %6481 = vmatpush1.msra.mxu0 %v6433
  %6482 = vmatprep.subr.mxu0 0.0
  %6483 = vmatpush1.msra.mxu0 0.0
  %6484 = vmatprep.subr.mxu0 0.0
  %6485 = vmatpush1.msra.mxu0 0.0
  %6486 = vmatprep.subr.mxu0 0.0
  %6487 = vmatpush1.msra.mxu0 0.0
  %6488 = vmatprep.subr.mxu0 0.0
  %6489 = vmatpush1.msra.mxu0 0.0
  %6490 = vmatprep.subr.mxu0 0.0
  %6491 = vmatpush1.msra.mxu0 0.0
  %6492 = vmatprep.subr.mxu0 0.0
  %6493 = vmatpush1.msra.mxu0 0.0
  %6494 = vmatprep.subr.mxu0 0.0
  %6495 = vmatpush1.msra.mxu0 0.0
  %6496 = vmatprep.subr.mxu0 0.0
  %6497 = vmatpush1.msra.mxu0 0.0
  %6498 = vmatprep.subr.mxu0 0.0
  %6499 = vmatpush1.msra.mxu0 0.0
  %6500 = vmatprep.subr.mxu0 0.0
  %6501 = vmatpush1.msra.mxu0 0.0
  %6502 = vmatprep.subr.mxu0 0.0
  %6503 = vmatpush1.msra.mxu0 0.0
  %6504 = vmatprep.subr.mxu0 0.0
  %6505 = vmatpush1.msra.mxu0 0.0
  %6506 = vmatprep.subr.mxu0 0.0
  %6507 = vmatpush1.msra.mxu0 0.0
  %6508 = vmatprep.subr.mxu0 0.0
  %6509 = vmatpush1.msra.mxu0 0.0
  %6510 = vmatprep.subr.mxu0 0.0
  %6511 = vmatpush1.msra.mxu0 0.0
  %6512 = vmatprep.subr.mxu0 0.0
  %6513 = vmatpush1.msra.mxu0 0.0
  %6514 = vmatprep.subr.mxu0 0.0
  %6515 = vmatpush1.msra.mxu0 0.0
  %6516 = vmatprep.subr.mxu0 0.0
  %6517 = vmatpush1.msra.mxu0 0.0
  %6518 = vmatprep.subr.mxu0 0.0
  %6519 = vmatpush1.msra.mxu0 0.0
  %6520 = vmatprep.subr.mxu0 0.0
  %6521 = vmatpush1.msra.mxu0 0.0
  %6522 = vmatprep.subr.mxu0 0.0
  %6523 = vmatpush1.msra.mxu0 0.0
  %6524 = vmatprep.subr.mxu0 0.0
  %6525 = vmatpush1.msra.mxu0 0.0
  %6526 = vmatprep.subr.mxu0 0.0
  %6527 = vmatpush1.msra.mxu0 0.0
  %6528 = vmatprep.subr.mxu0 0.0
  %6529 = vmatpush1.msra.mxu0 0.0
  %6530 = vmatprep.subr.mxu0 0.0
  %6531 = vmatpush1.msra.mxu0 0.0
  %6532 = vmatprep.subr.mxu0 0.0
  %6533 = vmatpush1.msra.mxu0 0.0
  %6534 = vmatprep.subr.mxu0 0.0
  %6535 = vmatpush1.msra.mxu0 0.0
  %6536 = vmatprep.subr.mxu0 0.0
  %6537 = vmatpush1.msra.mxu0 0.0
  %6538 = vmatprep.subr.mxu0 0.0
  %6539 = vmatpush1.msra.mxu0 0.0
  %6540 = vmatprep.subr.mxu0 0.0
  %6541 = vmatpush1.msra.mxu0 0.0
  %6542 = vmatprep.subr.mxu0 0.0
  %6543 = vmatpush1.msra.mxu0 0.0
  %6544 = vmatprep.mubr.f32.mxu0 0.0
  %6545 = vmatmul.mubr.f32.gmra.mrb[0].mxu0 %v6430
  %v6546 = vpop.f32.mrb[0].mxu0
  %v6547 = vadd.f32 0.0, %v6546
  %v6548 = vpop.f32.mrb[0].mxu0
  %v6549 = vadd.f32 0.0, %v6548
  %6550 = vdwg.mxu0
  %6551 = vmatprep.subr.mxu0 %v6442
  %6552 = vmatpush1.msra.mxu0 %v6439
  %6553 = vmatprep.subr.mxu0 0.0
  %6554 = vmatpush1.msra.mxu0 0.0
  %6555 = vmatprep.subr.mxu0 0.0
  %6556 = vmatpush1.msra.mxu0 0.0
  %6557 = vmatprep.subr.mxu0 0.0
  %6558 = vmatpush1.msra.mxu0 0.0
  %6559 = vmatprep.subr.mxu0 0.0
  %6560 = vmatpush1.msra.mxu0 0.0
  %6561 = vmatprep.subr.mxu0 0.0
  %6562 = vmatpush1.msra.mxu0 0.0
  %6563 = vmatprep.subr.mxu0 0.0
  %6564 = vmatpush1.msra.mxu0 0.0
  %6565 = vmatprep.subr.mxu0 0.0
  %6566 = vmatpush1.msra.mxu0 0.0
  %6567 = vmatprep.subr.mxu0 0.0
  %6568 = vmatpush1.msra.mxu0 0.0
  %6569 = vmatprep.subr.mxu0 0.0
  %6570 = vmatpush1.msra.mxu0 0.0
  %6571 = vmatprep.subr.mxu0 0.0
  %6572 = vmatpush1.msra.mxu0 0.0
  %6573 = vmatprep.subr.mxu0 0.0
  %6574 = vmatpush1.msra.mxu0 0.0
  %6575 = vmatprep.subr.mxu0 0.0
  %6576 = vmatpush1.msra.mxu0 0.0
  %6577 = vmatprep.subr.mxu0 0.0
  %6578 = vmatpush1.msra.mxu0 0.0
  %6579 = vmatprep.subr.mxu0 0.0
  %6580 = vmatpush1.msra.mxu0 0.0
  %6581 = vmatprep.subr.mxu0 0.0
  %6582 = vmatpush1.msra.mxu0 0.0
  %6583 = vmatprep.subr.mxu0 0.0
  %6584 = vmatpush1.msra.mxu0 0.0
  %6585 = vmatprep.subr.mxu0 0.0
  %6586 = vmatpush1.msra.mxu0 0.0
  %6587 = vmatprep.subr.mxu0 0.0
  %6588 = vmatpush1.msra.mxu0 0.0
  %6589 = vmatprep.subr.mxu0 0.0
  %6590 = vmatpush1.msra.mxu0 0.0
  %6591 = vmatprep.subr.mxu0 0.0
  %6592 = vmatpush1.msra.mxu0 0.0
  %6593 = vmatprep.subr.mxu0 0.0
  %6594 = vmatpush1.msra.mxu0 0.0
  %6595 = vmatprep.subr.mxu0 0.0
  %6596 = vmatpush1.msra.mxu0 0.0
  %6597 = vmatprep.subr.mxu0 0.0
  %6598 = vmatpush1.msra.mxu0 0.0
  %6599 = vmatprep.subr.mxu0 0.0
  %6600 = vmatpush1.msra.mxu0 0.0
  %6601 = vmatprep.subr.mxu0 0.0
  %6602 = vmatpush1.msra.mxu0 0.0
  %6603 = vmatprep.subr.mxu0 0.0
  %6604 = vmatpush1.msra.mxu0 0.0
  %6605 = vmatprep.subr.mxu0 0.0
  %6606 = vmatpush1.msra.mxu0 0.0
  %6607 = vmatprep.subr.mxu0 0.0
  %6608 = vmatpush1.msra.mxu0 0.0
  %6609 = vmatprep.subr.mxu0 0.0
  %6610 = vmatpush1.msra.mxu0 0.0
  %6611 = vmatprep.subr.mxu0 0.0
  %6612 = vmatpush1.msra.mxu0 0.0
  %6613 = vmatprep.subr.mxu0 0.0
  %6614 = vmatpush1.msra.mxu0 0.0
  %6615 = vmatprep.mubr.f32.mxu0 0.0
  %6616 = vmatmul.mubr.f32.gmra.mrb[0].mxu0 %v6430
  %v6617 = vpop.f32.mrb[0].mxu0
  %v6618 = vadd.f32 0.0, %v6617
  %v6619 = vpop.f32.mrb[0].mxu0
  %v6620 = vadd.f32 0.0, %v6619
  %6621 = vdwg.mxu0
  %6622 = vmatprep.subr.mxu0 %v6448
  %6623 = vmatpush1.msra.mxu0 %v6445
  %6624 = vmatprep.subr.mxu0 0.0
  %6625 = vmatpush1.msra.mxu0 0.0
  %6626 = vmatprep.subr.mxu0 0.0
  %6627 = vmatpush1.msra.mxu0 0.0
  %6628 = vmatprep.subr.mxu0 0.0
  %6629 = vmatpush1.msra.mxu0 0.0
  %6630 = vmatprep.subr.mxu0 0.0
  %6631 = vmatpush1.msra.mxu0 0.0
  %6632 = vmatprep.subr.mxu0 0.0
  %6633 = vmatpush1.msra.mxu0 0.0
  %6634 = vmatprep.subr.mxu0 0.0
  %6635 = vmatpush1.msra.mxu0 0.0
  %6636 = vmatprep.subr.mxu0 0.0
  %6637 = vmatpush1.msra.mxu0 0.0
  %6638 = vmatprep.subr.mxu0 0.0
  %6639 = vmatpush1.msra.mxu0 0.0
  %6640 = vmatprep.subr.mxu0 0.0
  %6641 = vmatpush1.msra.mxu0 0.0
  %6642 = vmatprep.subr.mxu0 0.0
  %6643 = vmatpush1.msra.mxu0 0.0
  %6644 = vmatprep.subr.mxu0 0.0
  %6645 = vmatpush1.msra.mxu0 0.0
  %6646 = vmatprep.subr.mxu0 0.0
  %6647 = vmatpush1.msra.mxu0 0.0
  %6648 = vmatprep.subr.mxu0 0.0
  %6649 = vmatpush1.msra.mxu0 0.0
  %6650 = vmatprep.subr.mxu0 0.0
  %6651 = vmatpush1.msra.mxu0 0.0
  %6652 = vmatprep.subr.mxu0 0.0
  %6653 = vmatpush1.msra.mxu0 0.0
  %6654 = vmatprep.subr.mxu0 0.0
  %6655 = vmatpush1.msra.mxu0 0.0
  %6656 = vmatprep.subr.mxu0 0.0
  %6657 = vmatpush1.msra.mxu0 0.0
  %6658 = vmatprep.subr.mxu0 0.0
  %6659 = vmatpush1.msra.mxu0 0.0
  %6660 = vmatprep.subr.mxu0 0.0
  %6661 = vmatpush1.msra.mxu0 0.0
  %6662 = vmatprep.subr.mxu0 0.0
  %6663 = vmatpush1.msra.mxu0 0.0
  %6664 = vmatprep.subr.mxu0 0.0
  %6665 = vmatpush1.msra.mxu0 0.0
  %6666 = vmatprep.subr.mxu0 0.0
  %6667 = vmatpush1.msra.mxu0 0.0
  %6668 = vmatprep.subr.mxu0 0.0
  %6669 = vmatpush1.msra.mxu0 0.0
  %6670 = vmatprep.subr.mxu0 0.0
  %6671 = vmatpush1.msra.mxu0 0.0
  %6672 = vmatprep.subr.mxu0 0.0
  %6673 = vmatpush1.msra.mxu0 0.0
  %6674 = vmatprep.subr.mxu0 0.0
  %6675 = vmatpush1.msra.mxu0 0.0
  %6676 = vmatprep.subr.mxu0 0.0
  %6677 = vmatpush1.msra.mxu0 0.0
  %6678 = vmatprep.subr.mxu0 0.0
  %6679 = vmatpush1.msra.mxu0 0.0
  %6680 = vmatprep.subr.mxu0 0.0
  %6681 = vmatpush1.msra.mxu0 0.0
  %6682 = vmatprep.subr.mxu0 0.0
  %6683 = vmatpush1.msra.mxu0 0.0
  %6684 = vmatprep.subr.mxu0 0.0
  %6685 = vmatpush1.msra.mxu0 0.0
  %6686 = vmatprep.mubr.f32.mxu0 0.0
  %6687 = vmatmul.mubr.f32.gmra.mrb[0].mxu0 %v6430
  %v6688 = vpop.f32.mrb[0].mxu0
  %v6689 = vadd.f32 0.0, %v6688
  %v6690 = vpop.f32.mrb[0].mxu0
  %v6691 = vadd.f32 0.0, %v6690
  %6692 = vdwg.mxu0
  %6693 = vmatprep.subr.mxu0 %v6454
  %6694 = vmatpush1.msra.mxu0 %v6451
  %6695 = vmatprep.subr.mxu0 0.0
  %6696 = vmatpush1.msra.mxu0 0.0
  %6697 = vmatprep.subr.mxu0 0.0
  %6698 = vmatpush1.msra.mxu0 0.0
  %6699 = vmatprep.subr.mxu0 0.0
  %6700 = vmatpush1.msra.mxu0 0.0
  %6701 = vmatprep.subr.mxu0 0.0
  %6702 = vmatpush1.msra.mxu0 0.0
  %6703 = vmatprep.subr.mxu0 0.0
  %6704 = vmatpush1.msra.mxu0 0.0
  %6705 = vmatprep.subr.mxu0 0.0
  %6706 = vmatpush1.msra.mxu0 0.0
  %6707 = vmatprep.subr.mxu0 0.0
  %6708 = vmatpush1.msra.mxu0 0.0
  %6709 = vmatprep.subr.mxu0 0.0
  %6710 = vmatpush1.msra.mxu0 0.0
  %6711 = vmatprep.subr.mxu0 0.0
  %6712 = vmatpush1.msra.mxu0 0.0
  %6713 = vmatprep.subr.mxu0 0.0
  %6714 = vmatpush1.msra.mxu0 0.0
  %6715 = vmatprep.subr.mxu0 0.0
  %6716 = vmatpush1.msra.mxu0 0.0
  %6717 = vmatprep.subr.mxu0 0.0
  %6718 = vmatpush1.msra.mxu0 0.0
  %6719 = vmatprep.subr.mxu0 0.0
  %6720 = vmatpush1.msra.mxu0 0.0
  %6721 = vmatprep.subr.mxu0 0.0
  %6722 = vmatpush1.msra.mxu0 0.0
  %6723 = vmatprep.subr.mxu0 0.0
  %6724 = vmatpush1.msra.mxu0 0.0
  %6725 = vmatprep.subr.mxu0 0.0
  %6726 = vmatpush1.msra.mxu0 0.0
  %6727 = vmatprep.subr.mxu0 0.0
  %6728 = vmatpush1.msra.mxu0 0.0
  %6729 = vmatprep.subr.mxu0 0.0
  %6730 = vmatpush1.msra.mxu0 0.0
  %6731 = vmatprep.subr.mxu0 0.0
  %6732 = vmatpush1.msra.mxu0 0.0
  %6733 = vmatprep.subr.mxu0 0.0
  %6734 = vmatpush1.msra.mxu0 0.0
  %6735 = vmatprep.subr.mxu0 0.0
  %6736 = vmatpush1.msra.mxu0 0.0
  %6737 = vmatprep.subr.mxu0 0.0
  %6738 = vmatpush1.msra.mxu0 0.0
  %6739 = vmatprep.subr.mxu0 0.0
  %6740 = vmatpush1.msra.mxu0 0.0
  %6741 = vmatprep.subr.mxu0 0.0
  %6742 = vmatpush1.msra.mxu0 0.0
  %6743 = vmatprep.subr.mxu0 0.0
  %6744 = vmatpush1.msra.mxu0 0.0
  %6745 = vmatprep.subr.mxu0 0.0
  %6746 = vmatpush1.msra.mxu0 0.0
  %6747 = vmatprep.subr.mxu0 0.0
  %6748 = vmatpush1.msra.mxu0 0.0
  %6749 = vmatprep.subr.mxu0 0.0
  %6750 = vmatpush1.msra.mxu0 0.0
  %6751 = vmatprep.subr.mxu0 0.0
  %6752 = vmatpush1.msra.mxu0 0.0
  %6753 = vmatprep.subr.mxu0 0.0
  %6754 = vmatpush1.msra.mxu0 0.0
  %6755 = vmatprep.subr.mxu0 0.0
  %6756 = vmatpush1.msra.mxu0 0.0
  %6757 = vmatprep.mubr.f32.mxu0 0.0
  %6758 = vmatmul.mubr.f32.gmra.mrb[0].mxu0 %v6430
  %v6759 = vpop.f32.mrb[0].mxu0
  %v6760 = vadd.f32 0.0, %v6759
  %v6761 = vpop.f32.mrb[0].mxu0
  %v6762 = vadd.f32 0.0, %v6761
  %6763 = vdwg.mxu0
  %6764 = vmatprep.subr.mxu0 %v6460
  %6765 = vmatpush1.msra.mxu0 %v6457
  %6766 = vmatprep.subr.mxu0 0.0
  %6767 = vmatpush1.msra.mxu0 0.0
  %6768 = vmatprep.subr.mxu0 0.0
  %6769 = vmatpush1.msra.mxu0 0.0
  %6770 = vmatprep.subr.mxu0 0.0
  %6771 = vmatpush1.msra.mxu0 0.0
  %6772 = vmatprep.subr.mxu0 0.0
  %6773 = vmatpush1.msra.mxu0 0.0
  %6774 = vmatprep.subr.mxu0 0.0
  %6775 = vmatpush1.msra.mxu0 0.0
  %6776 = vmatprep.subr.mxu0 0.0
  %6777 = vmatpush1.msra.mxu0 0.0
  %6778 = vmatprep.subr.mxu0 0.0
  %6779 = vmatpush1.msra.mxu0 0.0
  %6780 = vmatprep.subr.mxu0 0.0
  %6781 = vmatpush1.msra.mxu0 0.0
  %6782 = vmatprep.subr.mxu0 0.0
  %6783 = vmatpush1.msra.mxu0 0.0
  %6784 = vmatprep.subr.mxu0 0.0
  %6785 = vmatpush1.msra.mxu0 0.0
  %6786 = vmatprep.subr.mxu0 0.0
  %6787 = vmatpush1.msra.mxu0 0.0
  %6788 = vmatprep.subr.mxu0 0.0
  %6789 = vmatpush1.msra.mxu0 0.0
  %6790 = vmatprep.subr.mxu0 0.0
  %6791 = vmatpush1.msra.mxu0 0.0
  %6792 = vmatprep.subr.mxu0 0.0
  %6793 = vmatpush1.msra.mxu0 0.0
  %6794 = vmatprep.subr.mxu0 0.0
  %6795 = vmatpush1.msra.mxu0 0.0
  %6796 = vmatprep.subr.mxu0 0.0
  %6797 = vmatpush1.msra.mxu0 0.0
  %6798 = vmatprep.subr.mxu0 0.0
  %6799 = vmatpush1.msra.mxu0 0.0
  %6800 = vmatprep.subr.mxu0 0.0
  %6801 = vmatpush1.msra.mxu0 0.0
  %6802 = vmatprep.subr.mxu0 0.0
  %6803 = vmatpush1.msra.mxu0 0.0
  %6804 = vmatprep.subr.mxu0 0.0
  %6805 = vmatpush1.msra.mxu0 0.0
  %6806 = vmatprep.subr.mxu0 0.0
  %6807 = vmatpush1.msra.mxu0 0.0
  %6808 = vmatprep.subr.mxu0 0.0
  %6809 = vmatpush1.msra.mxu0 0.0
  %6810 = vmatprep.subr.mxu0 0.0
  %6811 = vmatpush1.msra.mxu0 0.0
  %6812 = vmatprep.subr.mxu0 0.0
  %6813 = vmatpush1.msra.mxu0 0.0
  %6814 = vmatprep.subr.mxu0 0.0
  %6815 = vmatpush1.msra.mxu0 0.0
  %6816 = vmatprep.subr.mxu0 0.0
  %6817 = vmatpush1.msra.mxu0 0.0
  %6818 = vmatprep.subr.mxu0 0.0
  %6819 = vmatpush1.msra.mxu0 0.0
  %6820 = vmatprep.subr.mxu0 0.0
  %6821 = vmatpush1.msra.mxu0 0.0
  %6822 = vmatprep.subr.mxu0 0.0
  %6823 = vmatpush1.msra.mxu0 0.0
  %6824 = vmatprep.subr.mxu0 0.0
  %6825 = vmatpush1.msra.mxu0 0.0
  %6826 = vmatprep.subr.mxu0 0.0
  %6827 = vmatpush1.msra.mxu0 0.0
  %6828 = vmatprep.mubr.f32.mxu0 0.0
  %6829 = vmatmul.mubr.f32.gmra.mrb[0].mxu0 %v6430
  %v6830 = vpop.f32.mrb[0].mxu0
  %v6831 = vadd.f32 0.0, %v6830
  %v6832 = vpop.f32.mrb[0].mxu0
  %v6833 = vadd.f32 0.0, %v6832
  %6834 = vdwg.mxu0
  %6835 = vmatprep.subr.mxu0 %v6466
  %6836 = vmatpush1.msra.mxu0 %v6463
  %6837 = vmatprep.subr.mxu0 0.0
  %6838 = vmatpush1.msra.mxu0 0.0
  %6839 = vmatprep.subr.mxu0 0.0
  %6840 = vmatpush1.msra.mxu0 0.0
  %6841 = vmatprep.subr.mxu0 0.0
  %6842 = vmatpush1.msra.mxu0 0.0
  %6843 = vmatprep.subr.mxu0 0.0
  %6844 = vmatpush1.msra.mxu0 0.0
  %6845 = vmatprep.subr.mxu0 0.0
  %6846 = vmatpush1.msra.mxu0 0.0
  %6847 = vmatprep.subr.mxu0 0.0
  %6848 = vmatpush1.msra.mxu0 0.0
  %6849 = vmatprep.subr.mxu0 0.0
  %6850 = vmatpush1.msra.mxu0 0.0
  %6851 = vmatprep.subr.mxu0 0.0
  %6852 = vmatpush1.msra.mxu0 0.0
  %6853 = vmatprep.subr.mxu0 0.0
  %6854 = vmatpush1.msra.mxu0 0.0
  %6855 = vmatprep.subr.mxu0 0.0
  %6856 = vmatpush1.msra.mxu0 0.0
  %6857 = vmatprep.subr.mxu0 0.0
  %6858 = vmatpush1.msra.mxu0 0.0
  %6859 = vmatprep.subr.mxu0 0.0
  %6860 = vmatpush1.msra.mxu0 0.0
  %6861 = vmatprep.subr.mxu0 0.0
  %6862 = vmatpush1.msra.mxu0 0.0
  %6863 = vmatprep.subr.mxu0 0.0
  %6864 = vmatpush1.msra.mxu0 0.0
  %6865 = vmatprep.subr.mxu0 0.0
  %6866 = vmatpush1.msra.mxu0 0.0
  %6867 = vmatprep.subr.mxu0 0.0
  %6868 = vmatpush1.msra.mxu0 0.0
  %6869 = vmatprep.subr.mxu0 0.0
  %6870 = vmatpush1.msra.mxu0 0.0
  %6871 = vmatprep.subr.mxu0 0.0
  %6872 = vmatpush1.msra.mxu0 0.0
  %6873 = vmatprep.subr.mxu0 0.0
  %6874 = vmatpush1.msra.mxu0 0.0
  %6875 = vmatprep.subr.mxu0 0.0
  %6876 = vmatpush1.msra.mxu0 0.0
  %6877 = vmatprep.subr.mxu0 0.0
  %6878 = vmatpush1.msra.mxu0 0.0
  %6879 = vmatprep.subr.mxu0 0.0
  %6880 = vmatpush1.msra.mxu0 0.0
  %6881 = vmatprep.subr.mxu0 0.0
  %6882 = vmatpush1.msra.mxu0 0.0
  %6883 = vmatprep.subr.mxu0 0.0
  %6884 = vmatpush1.msra.mxu0 0.0
  %6885 = vmatprep.subr.mxu0 0.0
  %6886 = vmatpush1.msra.mxu0 0.0
  %6887 = vmatprep.subr.mxu0 0.0
  %6888 = vmatpush1.msra.mxu0 0.0
  %6889 = vmatprep.subr.mxu0 0.0
  %6890 = vmatpush1.msra.mxu0 0.0
  %6891 = vmatprep.subr.mxu0 0.0
  %6892 = vmatpush1.msra.mxu0 0.0
  %6893 = vmatprep.subr.mxu0 0.0
  %6894 = vmatpush1.msra.mxu0 0.0
  %6895 = vmatprep.subr.mxu0 0.0
  %6896 = vmatpush1.msra.mxu0 0.0
  %6897 = vmatprep.subr.mxu0 0.0
  %6898 = vmatpush1.msra.mxu0 0.0
  %6899 = vmatprep.mubr.f32.mxu0 0.0
  %6900 = vmatmul.mubr.f32.gmra.mrb[0].mxu0 %v6430
  %v6901 = vpop.f32.mrb[0].mxu0
  %v6902 = vadd.f32 0.0, %v6901
  %v6903 = vpop.f32.mrb[0].mxu0
  %v6904 = vadd.f32 0.0, %v6903
  %6905 = vdwg.mxu0
  %6906 = vmatprep.subr.mxu0 %v6472
  %6907 = vmatpush1.msra.mxu0 %v6469
  %6908 = vmatprep.subr.mxu0 0.0
  %6909 = vmatpush1.msra.mxu0 0.0
  %6910 = vmatprep.subr.mxu0 0.0
  %6911 = vmatpush1.msra.mxu0 0.0
  %6912 = vmatprep.subr.mxu0 0.0
  %6913 = vmatpush1.msra.mxu0 0.0
  %6914 = vmatprep.subr.mxu0 0.0
  %6915 = vmatpush1.msra.mxu0 0.0
  %6916 = vmatprep.subr.mxu0 0.0
  %6917 = vmatpush1.msra.mxu0 0.0
  %6918 = vmatprep.subr.mxu0 0.0
  %6919 = vmatpush1.msra.mxu0 0.0
  %6920 = vmatprep.subr.mxu0 0.0
  %6921 = vmatpush1.msra.mxu0 0.0
  %6922 = vmatprep.subr.mxu0 0.0
  %6923 = vmatpush1.msra.mxu0 0.0
  %6924 = vmatprep.subr.mxu0 0.0
  %6925 = vmatpush1.msra.mxu0 0.0
  %6926 = vmatprep.subr.mxu0 0.0
  %6927 = vmatpush1.msra.mxu0 0.0
  %6928 = vmatprep.subr.mxu0 0.0
  %6929 = vmatpush1.msra.mxu0 0.0
  %6930 = vmatprep.subr.mxu0 0.0
  %6931 = vmatpush1.msra.mxu0 0.0
  %6932 = vmatprep.subr.mxu0 0.0
  %6933 = vmatpush1.msra.mxu0 0.0
  %6934 = vmatprep.subr.mxu0 0.0
  %6935 = vmatpush1.msra.mxu0 0.0
  %6936 = vmatprep.subr.mxu0 0.0
  %6937 = vmatpush1.msra.mxu0 0.0
  %6938 = vmatprep.subr.mxu0 0.0
  %6939 = vmatpush1.msra.mxu0 0.0
  %6940 = vmatprep.subr.mxu0 0.0
  %6941 = vmatpush1.msra.mxu0 0.0
  %6942 = vmatprep.subr.mxu0 0.0
  %6943 = vmatpush1.msra.mxu0 0.0
  %6944 = vmatprep.subr.mxu0 0.0
  %6945 = vmatpush1.msra.mxu0 0.0
  %6946 = vmatprep.subr.mxu0 0.0
  %6947 = vmatpush1.msra.mxu0 0.0
  %6948 = vmatprep.subr.mxu0 0.0
  %6949 = vmatpush1.msra.mxu0 0.0
  %6950 = vmatprep.subr.mxu0 0.0
  %6951 = vmatpush1.msra.mxu0 0.0
  %6952 = vmatprep.subr.mxu0 0.0
  %6953 = vmatpush1.msra.mxu0 0.0
  %6954 = vmatprep.subr.mxu0 0.0
  %6955 = vmatpush1.msra.mxu0 0.0
  %6956 = vmatprep.subr.mxu0 0.0
  %6957 = vmatpush1.msra.mxu0 0.0
  %6958 = vmatprep.subr.mxu0 0.0
  %6959 = vmatpush1.msra.mxu0 0.0
  %6960 = vmatprep.subr.mxu0 0.0
  %6961 = vmatpush1.msra.mxu0 0.0
  %6962 = vmatprep.subr.mxu0 0.0
  %6963 = vmatpush1.msra.mxu0 0.0
  %6964 = vmatprep.subr.mxu0 0.0
  %6965 = vmatpush1.msra.mxu0 0.0
  %6966 = vmatprep.subr.mxu0 0.0
  %6967 = vmatpush1.msra.mxu0 0.0
  %6968 = vmatprep.subr.mxu0 0.0
  %6969 = vmatpush1.msra.mxu0 0.0
  %6970 = vmatprep.mubr.f32.mxu0 0.0
  %6971 = vmatmul.mubr.f32.gmra.mrb[0].mxu0 %v6430
  %v6972 = vpop.f32.mrb[0].mxu0
  %v6973 = vadd.f32 0.0, %v6972
  %v6974 = vpop.f32.mrb[0].mxu0
  %v6975 = vadd.f32 0.0, %v6974
  %6976 = vdwg.mxu0
  %6977 = vmatprep.subr.mxu0 %v6478
  %6978 = vmatpush1.msra.mxu0 %v6475
  %6979 = vmatprep.subr.mxu0 0.0
  %6980 = vmatpush1.msra.mxu0 0.0
  %6981 = vmatprep.subr.mxu0 0.0
  %6982 = vmatpush1.msra.mxu0 0.0
  %6983 = vmatprep.subr.mxu0 0.0
  %6984 = vmatpush1.msra.mxu0 0.0
  %6985 = vmatprep.subr.mxu0 0.0
  %6986 = vmatpush1.msra.mxu0 0.0
  %6987 = vmatprep.subr.mxu0 0.0
  %6988 = vmatpush1.msra.mxu0 0.0
  %6989 = vmatprep.subr.mxu0 0.0
  %6990 = vmatpush1.msra.mxu0 0.0
  %6991 = vmatprep.subr.mxu0 0.0
  %6992 = vmatpush1.msra.mxu0 0.0
  %6993 = vmatprep.subr.mxu0 0.0
  %6994 = vmatpush1.msra.mxu0 0.0
  %6995 = vmatprep.subr.mxu0 0.0
  %6996 = vmatpush1.msra.mxu0 0.0
  %6997 = vmatprep.subr.mxu0 0.0
  %6998 = vmatpush1.msra.mxu0 0.0
  %6999 = vmatprep.subr.mxu0 0.0
  %7000 = vmatpush1.msra.mxu0 0.0
  %7001 = vmatprep.subr.mxu0 0.0
  %7002 = vmatpush1.msra.mxu0 0.0
  %7003 = vmatprep.subr.mxu0 0.0
  %7004 = vmatpush1.msra.mxu0 0.0
  %7005 = vmatprep.subr.mxu0 0.0
  %7006 = vmatpush1.msra.mxu0 0.0
  %7007 = vmatprep.subr.mxu0 0.0
  %7008 = vmatpush1.msra.mxu0 0.0
  %7009 = vmatprep.subr.mxu0 0.0
  %7010 = vmatpush1.msra.mxu0 0.0
  %7011 = vmatprep.subr.mxu0 0.0
  %7012 = vmatpush1.msra.mxu0 0.0
  %7013 = vmatprep.subr.mxu0 0.0
  %7014 = vmatpush1.msra.mxu0 0.0
  %7015 = vmatprep.subr.mxu0 0.0
  %7016 = vmatpush1.msra.mxu0 0.0
  %7017 = vmatprep.subr.mxu0 0.0
  %7018 = vmatpush1.msra.mxu0 0.0
  %7019 = vmatprep.subr.mxu0 0.0
  %7020 = vmatpush1.msra.mxu0 0.0
  %7021 = vmatprep.subr.mxu0 0.0
  %7022 = vmatpush1.msra.mxu0 0.0
  %7023 = vmatprep.subr.mxu0 0.0
  %7024 = vmatpush1.msra.mxu0 0.0
  %7025 = vmatprep.subr.mxu0 0.0
  %7026 = vmatpush1.msra.mxu0 0.0
  %7027 = vmatprep.subr.mxu0 0.0
  %7028 = vmatpush1.msra.mxu0 0.0
  %7029 = vmatprep.subr.mxu0 0.0
  %7030 = vmatpush1.msra.mxu0 0.0
  %7031 = vmatprep.subr.mxu0 0.0
  %7032 = vmatpush1.msra.mxu0 0.0
  %7033 = vmatprep.subr.mxu0 0.0
  %7034 = vmatpush1.msra.mxu0 0.0
  %7035 = vmatprep.subr.mxu0 0.0
  %7036 = vmatpush1.msra.mxu0 0.0
  %7037 = vmatprep.subr.mxu0 0.0
  %7038 = vmatpush1.msra.mxu0 0.0
  %7039 = vmatprep.subr.mxu0 0.0
  %7040 = vmatpush1.msra.mxu0 0.0
  %7041 = vmatprep.mubr.f32.mxu0 0.0
  %7042 = vmatmul.mubr.f32.gmra.mrb[0].mxu0 %v6430
  %v7043 = vpop.f32.mrb[0].mxu0
  %v7044 = vadd.f32 0.0, %v7043
  %v7045 = vpop.f32.mrb[0].mxu0
  %v7046 = vadd.f32 0.0, %v7045
  %7047 = vdwg.mxu0
  %v7048 = vadd.f32 %v6261, %v6547
  %v7049 = vadd.f32 %v6262, %v6549
  %v7050 = vadd.f32 %v6263, %v6618
  %v7051 = vadd.f32 %v6264, %v6620
  %v7052 = vadd.f32 %v6265, %v6689
  %v7053 = vadd.f32 %v6266, %v6691
  %v7054 = vadd.f32 %v6267, %v6760
  %v7055 = vadd.f32 %v6268, %v6762
  %v7056 = vadd.f32 %v6269, %v6831
  %v7057 = vadd.f32 %v6270, %v6833
  %v7058 = vadd.f32 %v6271, %v6902
  %v7059 = vadd.f32 %v6272, %v6904
  %v7060 = vadd.f32 %v6273, %v6973
  %v7061 = vadd.f32 %v6274, %v6975
  %v7062 = vadd.f32 %v6275, %v7044
  %v7063 = vadd.f32 %v6276, %v7046
  %v7064 = vld [vmem:[%s3] sm:$0xff]
  %7066 = vset.pattern.permute.xlu0 0
  %7067 = vperm.xlu0 %7066, %v7064
  %v7068 = vpop.permute.xlu0 %7067
  %v7070 = vadd.f32 %v7048, %v7068
  %v7071 = vadd.f32 %v7049, %v7068
  %v7072 = vadd.f32 %v7050, %v7068
  %v7073 = vadd.f32 %v7051, %v7068
  %v7074 = vadd.f32 %v7052, %v7068
  %v7075 = vadd.f32 %v7053, %v7068
  %v7076 = vadd.f32 %v7054, %v7068
  %v7077 = vadd.f32 %v7055, %v7068
  %v7078 = vadd.f32 %v7056, %v7068
  %v7079 = vadd.f32 %v7057, %v7068
  %v7080 = vadd.f32 %v7058, %v7068
  %v7081 = vadd.f32 %v7059, %v7068
  %v7082 = vadd.f32 %v7060, %v7068
  %v7083 = vadd.f32 %v7061, %v7068
  %v7084 = vadd.f32 %v7062, %v7068
  %v7085 = vadd.f32 %v7063, %v7068
  %v7086 = vmax.f32 %v7070, 0.0
  %v7087 = vmax.f32 %v7071, 0.0
  %v7088 = vmax.f32 %v7072, 0.0
  %v7089 = vmax.f32 %v7073, 0.0
  %v7090 = vmax.f32 %v7074, 0.0
  %v7091 = vmax.f32 %v7075, 0.0
  %v7092 = vmax.f32 %v7076, 0.0
  %v7093 = vmax.f32 %v7077, 0.0
  %v7094 = vmax.f32 %v7078, 0.0
  %v7095 = vmax.f32 %v7079, 0.0
  %v7096 = vmax.f32 %v7080, 0.0
  %v7097 = vmax.f32 %v7081, 0.0
  %v7098 = vmax.f32 %v7082, 0.0
  %v7099 = vmax.f32 %v7083, 0.0
  %v7100 = vmax.f32 %v7084, 0.0
  %v7101 = vmax.f32 %v7085, 0.0
  %v7102 = vpack.c.bf16 %v7086, %v7086
  %v7103 = vpack.c.bf16 %v7087, %v7087
  %v7104 = vpack.c.bf16 %v7088, %v7088
  %v7105 = vpack.c.bf16 %v7089, %v7089
  %v7106 = vpack.c.bf16 %v7090, %v7090
  %v7107 = vpack.c.bf16 %v7091, %v7091
  %v7108 = vpack.c.bf16 %v7092, %v7092
  %v7109 = vpack.c.bf16 %v7093, %v7093
  %v7110 = vpack.c.bf16 %v7094, %v7094
  %v7111 = vpack.c.bf16 %v7095, %v7095
  %v7112 = vpack.c.bf16 %v7096, %v7096
  %v7113 = vpack.c.bf16 %v7097, %v7097
  %v7114 = vpack.c.bf16 %v7098, %v7098
  %v7115 = vpack.c.bf16 %v7099, %v7099
  %v7116 = vpack.c.bf16 %v7100, %v7100
  %v7117 = vpack.c.bf16 %v7101, %v7101
  %v7134 = vunpack.c.l.b16 %v7102
  %v7135 = vunpack.c.l.b16 %v7103
  %v7136 = vunpack.c.l.b16 %v7104
  %v7137 = vunpack.c.l.b16 %v7105
  %v7138 = vunpack.c.l.b16 %v7106
  %v7139 = vunpack.c.l.b16 %v7107
  %v7140 = vunpack.c.l.b16 %v7108
  %v7141 = vunpack.c.l.b16 %v7109
  %v7142 = vunpack.c.l.b16 %v7110
  %v7143 = vunpack.c.l.b16 %v7111
  %v7144 = vunpack.c.l.b16 %v7112
  %v7145 = vunpack.c.l.b16 %v7113
  %v7146 = vunpack.c.l.b16 %v7114
  %v7147 = vunpack.c.l.b16 %v7115
  %v7148 = vunpack.c.l.b16 %v7116
  %v7149 = vunpack.c.l.b16 %v7117
  %v7150 = vpack.c.b16 %v7135, %v7134
  %v7151 = vpack.c.b16 %v7137, %v7136
  %v7152 = vpack.c.b16 %v7139, %v7138
  %v7153 = vpack.c.b16 %v7141, %v7140
  %v7154 = vpack.c.b16 %v7143, %v7142
  %v7155 = vpack.c.b16 %v7145, %v7144
  %v7156 = vpack.c.b16 %v7147, %v7146
  %v7157 = vpack.c.b16 %v7149, %v7148
  %v7166 = vcombine.low %v7150, %v7154
  %v7167 = vcombine.high %v7150, %v7154
  %v7169 = vunpack.c.l.s4 1983009808
  %v7170 = vunpack.c.0.s8 %v7169
  %v7171 = vlaneseq
  %v7172 = vshrl.u32 %v7171, 7
  %v7173 = vsub.s32 %v7170, %v7172
  %v7174 = vrot.slane %v7166, %v7173
  %v7176 = vunpack.c.l.s4 1983009808
  %v7177 = vunpack.c.0.s8 %v7176
  %v7178 = vlaneseq
  %v7179 = vshrl.u32 %v7178, 7
  %v7180 = vsub.s32 %v7177, %v7179
  %v7181 = vrot.slane %v7167, %v7180
  %v7182 = vcombine.low %v7152, %v7156
  %v7183 = vcombine.high %v7152, %v7156
  %v7185 = vunpack.c.l.s4 1983009808
  %v7186 = vunpack.c.0.s8 %v7185
  %v7187 = vlaneseq
  %v7188 = vshrl.u32 %v7187, 7
  %v7189 = vsub.s32 %v7186, %v7188
  %v7190 = vrot.slane %v7182, %v7189
  %v7192 = vunpack.c.l.s4 1983009808
  %v7193 = vunpack.c.0.s8 %v7192
  %v7194 = vlaneseq
  %v7195 = vshrl.u32 %v7194, 7
  %v7196 = vsub.s32 %v7193, %v7195
  %v7197 = vrot.slane %v7183, %v7196
  %v7198 = vcombine.low %v7174, %v7190
  %v7199 = vcombine.high %v7174, %v7190
  %v7201 = vunpack.c.l.s4 1934713408
  %v7202 = vunpack.c.0.s8 %v7201
  %v7203 = vlaneseq
  %v7204 = vshrl.u32 %v7203, 7
  %v7205 = vsub.s32 %v7202, %v7204
  %v7206 = vrot.slane %v7198, %v7205
  %v7208 = vunpack.c.l.s4 1934713408
  %v7209 = vunpack.c.0.s8 %v7208
  %v7210 = vlaneseq
  %v7211 = vshrl.u32 %v7210, 7
  %v7212 = vsub.s32 %v7209, %v7211
  %v7213 = vrot.slane %v7199, %v7212
  %v7214 = vcombine.low %v7181, %v7197
  %v7215 = vcombine.high %v7181, %v7197
  %v7217 = vunpack.c.l.s4 1934713408
  %v7218 = vunpack.c.0.s8 %v7217
  %v7219 = vlaneseq
  %v7220 = vshrl.u32 %v7219, 7
  %v7221 = vsub.s32 %v7218, %v7220
  %v7222 = vrot.slane %v7214, %v7221
  %v7224 = vunpack.c.l.s4 1934713408
  %v7225 = vunpack.c.0.s8 %v7224
  %v7226 = vlaneseq
  %v7227 = vshrl.u32 %v7226, 7
  %v7228 = vsub.s32 %v7225, %v7227
  %v7229 = vrot.slane %v7215, %v7228
  %v7230 = vcombine.low %v7206, %v7222
  %v7231 = vcombine.high %v7206, %v7222
  %v7232 = vcombine.low %v7213, %v7229
  %v7233 = vcombine.high %v7213, %v7229
  %v7234 = vcombine.low %v7151, %v7155
  %v7235 = vcombine.high %v7151, %v7155
  %v7237 = vunpack.c.l.s4 1983009808
  %v7238 = vunpack.c.0.s8 %v7237
  %v7239 = vlaneseq
  %v7240 = vshrl.u32 %v7239, 7
  %v7241 = vsub.s32 %v7238, %v7240
  %v7242 = vrot.slane %v7234, %v7241
  %v7244 = vunpack.c.l.s4 1983009808
  %v7245 = vunpack.c.0.s8 %v7244
  %v7246 = vlaneseq
  %v7247 = vshrl.u32 %v7246, 7
  %v7248 = vsub.s32 %v7245, %v7247
  %v7249 = vrot.slane %v7235, %v7248
  %v7250 = vcombine.low %v7153, %v7157
  %v7251 = vcombine.high %v7153, %v7157
  %v7253 = vunpack.c.l.s4 1983009808
  %v7254 = vunpack.c.0.s8 %v7253
  %v7255 = vlaneseq
  %v7256 = vshrl.u32 %v7255, 7
  %v7257 = vsub.s32 %v7254, %v7256
  %v7258 = vrot.slane %v7250, %v7257
  %v7260 = vunpack.c.l.s4 1983009808
  %v7261 = vunpack.c.0.s8 %v7260
  %v7262 = vlaneseq
  %v7263 = vshrl.u32 %v7262, 7
  %v7264 = vsub.s32 %v7261, %v7263
  %v7265 = vrot.slane %v7251, %v7264
  %v7266 = vcombine.low %v7242, %v7258
  %v7267 = vcombine.high %v7242, %v7258
  %v7269 = vunpack.c.l.s4 1934713408
  %v7270 = vunpack.c.0.s8 %v7269
  %v7271 = vlaneseq
  %v7272 = vshrl.u32 %v7271, 7
  %v7273 = vsub.s32 %v7270, %v7272
  %v7274 = vrot.slane %v7266, %v7273
  %v7276 = vunpack.c.l.s4 1934713408
  %v7277 = vunpack.c.0.s8 %v7276
  %v7278 = vlaneseq
  %v7279 = vshrl.u32 %v7278, 7
  %v7280 = vsub.s32 %v7277, %v7279
  %v7281 = vrot.slane %v7267, %v7280
  %v7282 = vcombine.low %v7249, %v7265
  %v7283 = vcombine.high %v7249, %v7265
  %v7285 = vunpack.c.l.s4 1934713408
  %v7286 = vunpack.c.0.s8 %v7285
  %v7287 = vlaneseq
  %v7288 = vshrl.u32 %v7287, 7
  %v7289 = vsub.s32 %v7286, %v7288
  %v7290 = vrot.slane %v7282, %v7289
  %v7292 = vunpack.c.l.s4 1934713408
  %v7293 = vunpack.c.0.s8 %v7292
  %v7294 = vlaneseq
  %v7295 = vshrl.u32 %v7294, 7
  %v7296 = vsub.s32 %v7293, %v7295
  %v7297 = vrot.slane %v7283, %v7296
  %v7298 = vcombine.low %v7274, %v7290
  %v7299 = vcombine.high %v7274, %v7290
  %v7300 = vcombine.low %v7281, %v7297
  %v7301 = vcombine.high %v7281, %v7297
  %v7304 = vpack.i.b16 %v7298, %v7230
  %v7305 = vshrl.u32 %v7230, 16
  %v7306 = vshrl.u32 %v7298, 16
  %v7307 = vpack.i.b16 %v7306, %v7305
  %v7310 = vpack.i.b16 %v7299, %v7231
  %v7311 = vshrl.u32 %v7231, 16
  %v7312 = vshrl.u32 %v7299, 16
  %v7313 = vpack.i.b16 %v7312, %v7311
  %v7316 = vpack.i.b16 %v7300, %v7232
  %v7317 = vshrl.u32 %v7232, 16
  %v7318 = vshrl.u32 %v7300, 16
  %v7319 = vpack.i.b16 %v7318, %v7317
  %v7322 = vpack.i.b16 %v7301, %v7233
  %v7323 = vshrl.u32 %v7233, 16
  %v7324 = vshrl.u32 %v7301, 16
  %v7325 = vpack.i.b16 %v7324, %v7323
  %v7326 = vld [vmem:[%s4] sm:$0xf]
  %v7327 = vld [vmem:[%s4 + $0x4] sm:$0xf]
  %v7328 = vld [vmem:[%s4 + $0x8] sm:$0xf]
  %v7329 = vld [vmem:[%s4 + $0xc] sm:$0xf]
  %v7330 = vld [vmem:[%s4 + $0x10] sm:$0xf]
  %v7331 = vld [vmem:[%s4 + $0x14] sm:$0xf]
  %v7332 = vld [vmem:[%s4 + $0x18] sm:$0xf]
  %v7333 = vld [vmem:[%s4 + $0x1c] sm:$0xf]
  %v7334 = vld [vmem:[%s4 + $0x20] sm:$0xf]
  %v7335 = vld [vmem:[%s4 + $0x24] sm:$0xf]
  %v7336 = vld [vmem:[%s4 + $0x28] sm:$0xf]
  %v7337 = vld [vmem:[%s4 + $0x2c] sm:$0xf]
  %v7338 = vld [vmem:[%s4 + $0x30] sm:$0xf]
  %v7339 = vld [vmem:[%s4 + $0x34] sm:$0xf]
  %v7340 = vld [vmem:[%s4 + $0x38] sm:$0xf]
  %v7341 = vld [vmem:[%s4 + $0x3c] sm:$0xf]
  %v7342 = vld [vmem:[%s4 + $0x40] sm:$0xf]
  %v7343 = vld [vmem:[%s4 + $0x44] sm:$0xf]
  %v7344 = vld [vmem:[%s4 + $0x48] sm:$0xf]
  %v7345 = vld [vmem:[%s4 + $0x4c] sm:$0xf]
  %v7346 = vld [vmem:[%s4 + $0x50] sm:$0xf]
  %v7347 = vld [vmem:[%s4 + $0x54] sm:$0xf]
  %v7348 = vld [vmem:[%s4 + $0x58] sm:$0xf]
  %v7349 = vld [vmem:[%s4 + $0x5c] sm:$0xf]
  %v7350 = vld [vmem:[%s4 + $0x60] sm:$0xf]
  %v7351 = vld [vmem:[%s4 + $0x64] sm:$0xf]
  %v7352 = vld [vmem:[%s4 + $0x68] sm:$0xf]
  %v7353 = vld [vmem:[%s4 + $0x6c] sm:$0xf]
  %v7354 = vld [vmem:[%s4 + $0x70] sm:$0xf]
  %v7355 = vld [vmem:[%s4 + $0x74] sm:$0xf]
  %v7356 = vld [vmem:[%s4 + $0x78] sm:$0xf]
  %v7357 = vld [vmem:[%s4 + $0x7c] sm:$0xf]
  %v7358 = vld [vmem:[%s4 + $0x80] sm:$0xf]
  %v7359 = vld [vmem:[%s4 + $0x84] sm:$0xf]
  %v7360 = vld [vmem:[%s4 + $0x88] sm:$0xf]
  %v7361 = vld [vmem:[%s4 + $0x8c] sm:$0xf]
  %v7362 = vld [vmem:[%s4 + $0x90] sm:$0xf]
  %v7363 = vld [vmem:[%s4 + $0x94] sm:$0xf]
  %v7364 = vld [vmem:[%s4 + $0x98] sm:$0xf]
  %v7365 = vld [vmem:[%s4 + $0x9c] sm:$0xf]
  %v7366 = vld [vmem:[%s4 + $0xa0] sm:$0xf]
  %v7367 = vld [vmem:[%s4 + $0xa4] sm:$0xf]
  %v7368 = vld [vmem:[%s4 + $0xa8] sm:$0xf]
  %v7369 = vld [vmem:[%s4 + $0xac] sm:$0xf]
  %v7370 = vld [vmem:[%s4 + $0xb0] sm:$0xf]
  %v7371 = vld [vmem:[%s4 + $0xb4] sm:$0xf]
  %v7372 = vld [vmem:[%s4 + $0xb8] sm:$0xf]
  %v7373 = vld [vmem:[%s4 + $0xbc] sm:$0xf]
  %v7374 = vld [vmem:[%s4 + $0xc0] sm:$0xf]
  %v7375 = vld [vmem:[%s4 + $0xc4] sm:$0xf]
  %v7376 = vld [vmem:[%s4 + $0xc8] sm:$0xf]
  %v7377 = vld [vmem:[%s4 + $0xcc] sm:$0xf]
  %v7378 = vld [vmem:[%s4 + $0xd0] sm:$0xf]
  %v7379 = vld [vmem:[%s4 + $0xd4] sm:$0xf]
  %v7380 = vld [vmem:[%s4 + $0xd8] sm:$0xf]
  %v7381 = vld [vmem:[%s4 + $0xdc] sm:$0xf]
  %v7382 = vld [vmem:[%s4 + $0xe0] sm:$0xf]
  %v7383 = vld [vmem:[%s4 + $0xe4] sm:$0xf]
  %v7384 = vld [vmem:[%s4 + $0xe8] sm:$0xf]
  %v7385 = vld [vmem:[%s4 + $0xec] sm:$0xf]
  %v7386 = vld [vmem:[%s4 + $0xf0] sm:$0xf]
  %v7387 = vld [vmem:[%s4 + $0xf4] sm:$0xf]
  %v7388 = vld [vmem:[%s4 + $0xf8] sm:$0xf]
  %v7389 = vld [vmem:[%s4 + $0xfc] sm:$0xf]
  %v7390 = vld [vmem:[%s4 + $0x100] sm:$0xf]
  %v7391 = vld [vmem:[%s4 + $0x104] sm:$0xf]
  %v7392 = vld [vmem:[%s4 + $0x108] sm:$0xf]
  %v7393 = vld [vmem:[%s4 + $0x10c] sm:$0xf]
  %v7394 = vld [vmem:[%s4 + $0x110] sm:$0xf]
  %v7395 = vld [vmem:[%s4 + $0x114] sm:$0xf]
  %v7396 = vld [vmem:[%s4 + $0x118] sm:$0xf]
  %v7397 = vld [vmem:[%s4 + $0x11c] sm:$0xf]
  %v7398 = vld [vmem:[%s4 + $0x120] sm:$0xf]
  %v7399 = vld [vmem:[%s4 + $0x124] sm:$0xf]
  %v7400 = vld [vmem:[%s4 + $0x128] sm:$0xf]
  %v7401 = vld [vmem:[%s4 + $0x12c] sm:$0xf]
  %v7402 = vld [vmem:[%s4 + $0x130] sm:$0xf]
  %v7403 = vld [vmem:[%s4 + $0x134] sm:$0xf]
  %v7404 = vld [vmem:[%s4 + $0x138] sm:$0xf]
  %v7405 = vld [vmem:[%s4 + $0x13c] sm:$0xf]
  %v7406 = vld [vmem:[%s4 + $0x140] sm:$0xf]
  %v7407 = vld [vmem:[%s4 + $0x144] sm:$0xf]
  %v7408 = vld [vmem:[%s4 + $0x148] sm:$0xf]
  %v7409 = vld [vmem:[%s4 + $0x14c] sm:$0xf]
  %v7410 = vld [vmem:[%s4 + $0x150] sm:$0xf]
  %v7411 = vld [vmem:[%s4 + $0x154] sm:$0xf]
  %v7412 = vld [vmem:[%s4 + $0x158] sm:$0xf]
  %v7413 = vld [vmem:[%s4 + $0x15c] sm:$0xf]
  %v7414 = vld [vmem:[%s4 + $0x160] sm:$0xf]
  %v7415 = vld [vmem:[%s4 + $0x164] sm:$0xf]
  %v7416 = vld [vmem:[%s4 + $0x168] sm:$0xf]
  %v7417 = vld [vmem:[%s4 + $0x16c] sm:$0xf]
  %v7418 = vld [vmem:[%s4 + $0x170] sm:$0xf]
  %v7419 = vld [vmem:[%s4 + $0x174] sm:$0xf]
  %v7420 = vld [vmem:[%s4 + $0x178] sm:$0xf]
  %v7421 = vld [vmem:[%s4 + $0x17c] sm:$0xf]
  %v7422 = vld [vmem:[%s4 + $0x180] sm:$0xf]
  %v7423 = vld [vmem:[%s4 + $0x184] sm:$0xf]
  %v7424 = vld [vmem:[%s4 + $0x188] sm:$0xf]
  %v7425 = vld [vmem:[%s4 + $0x18c] sm:$0xf]
  %v7426 = vld [vmem:[%s4 + $0x190] sm:$0xf]
  %v7427 = vld [vmem:[%s4 + $0x194] sm:$0xf]
  %v7428 = vld [vmem:[%s4 + $0x198] sm:$0xf]
  %v7429 = vld [vmem:[%s4 + $0x19c] sm:$0xf]
  %v7430 = vld [vmem:[%s4 + $0x1a0] sm:$0xf]
  %v7431 = vld [vmem:[%s4 + $0x1a4] sm:$0xf]
  %v7432 = vld [vmem:[%s4 + $0x1a8] sm:$0xf]
  %v7433 = vld [vmem:[%s4 + $0x1ac] sm:$0xf]
  %v7434 = vld [vmem:[%s4 + $0x1b0] sm:$0xf]
  %v7435 = vld [vmem:[%s4 + $0x1b4] sm:$0xf]
  %v7436 = vld [vmem:[%s4 + $0x1b8] sm:$0xf]
  %v7437 = vld [vmem:[%s4 + $0x1bc] sm:$0xf]
  %v7438 = vld [vmem:[%s4 + $0x1c0] sm:$0xf]
  %v7439 = vld [vmem:[%s4 + $0x1c4] sm:$0xf]
  %v7440 = vld [vmem:[%s4 + $0x1c8] sm:$0xf]
  %v7441 = vld [vmem:[%s4 + $0x1cc] sm:$0xf]
  %v7442 = vld [vmem:[%s4 + $0x1d0] sm:$0xf]
  %v7443 = vld [vmem:[%s4 + $0x1d4] sm:$0xf]
  %v7444 = vld [vmem:[%s4 + $0x1d8] sm:$0xf]
  %v7445 = vld [vmem:[%s4 + $0x1dc] sm:$0xf]
  %v7446 = vld [vmem:[%s4 + $0x1e0] sm:$0xf]
  %v7447 = vld [vmem:[%s4 + $0x1e4] sm:$0xf]
  %v7448 = vld [vmem:[%s4 + $0x1e8] sm:$0xf]
  %v7449 = vld [vmem:[%s4 + $0x1ec] sm:$0xf]
  %v7450 = vld [vmem:[%s4 + $0x1f0] sm:$0xf]
  %v7451 = vld [vmem:[%s4 + $0x1f4] sm:$0xf]
  %v7452 = vld [vmem:[%s4 + $0x1f8] sm:$0xf]
  %v7453 = vld [vmem:[%s4 + $0x1fc] sm:$0xf]
  %v7454 = vld [vmem:[%s4 + $0x200] sm:$0xf]
  %v7455 = vld [vmem:[%s4 + $0x204] sm:$0xf]
  %v7456 = vld [vmem:[%s4 + $0x208] sm:$0xf]
  %v7457 = vld [vmem:[%s4 + $0x20c] sm:$0xf]
  %v7458 = vld [vmem:[%s4 + $0x210] sm:$0xf]
  %v7459 = vld [vmem:[%s4 + $0x214] sm:$0xf]
  %v7460 = vld [vmem:[%s4 + $0x218] sm:$0xf]
  %v7461 = vld [vmem:[%s4 + $0x21c] sm:$0xf]
  %v7462 = vld [vmem:[%s4 + $0x220] sm:$0xf]
  %v7463 = vld [vmem:[%s4 + $0x224] sm:$0xf]
  %v7464 = vld [vmem:[%s4 + $0x228] sm:$0xf]
  %v7465 = vld [vmem:[%s4 + $0x22c] sm:$0xf]
  %v7466 = vld [vmem:[%s4 + $0x230] sm:$0xf]
  %v7467 = vld [vmem:[%s4 + $0x234] sm:$0xf]
  %v7468 = vld [vmem:[%s4 + $0x238] sm:$0xf]
  %v7469 = vld [vmem:[%s4 + $0x23c] sm:$0xf]
  %v7470 = vld [vmem:[%s4 + $0x240] sm:$0xf]
  %v7471 = vld [vmem:[%s4 + $0x244] sm:$0xf]
  %v7472 = vld [vmem:[%s4 + $0x248] sm:$0xf]
  %v7473 = vld [vmem:[%s4 + $0x24c] sm:$0xf]
  %v7474 = vld [vmem:[%s4 + $0x250] sm:$0xf]
  %v7475 = vld [vmem:[%s4 + $0x254] sm:$0xf]
  %v7476 = vld [vmem:[%s4 + $0x258] sm:$0xf]
  %v7477 = vld [vmem:[%s4 + $0x25c] sm:$0xf]
  %v7478 = vld [vmem:[%s4 + $0x260] sm:$0xf]
  %v7479 = vld [vmem:[%s4 + $0x264] sm:$0xf]
  %v7480 = vld [vmem:[%s4 + $0x268] sm:$0xf]
  %v7481 = vld [vmem:[%s4 + $0x26c] sm:$0xf]
  %v7482 = vld [vmem:[%s4 + $0x270] sm:$0xf]
  %v7483 = vld [vmem:[%s4 + $0x274] sm:$0xf]
  %v7484 = vld [vmem:[%s4 + $0x278] sm:$0xf]
  %v7485 = vld [vmem:[%s4 + $0x27c] sm:$0xf]
  %v7486 = vld [vmem:[%s4 + $0x280] sm:$0xf]
  %v7487 = vld [vmem:[%s4 + $0x284] sm:$0xf]
  %v7488 = vld [vmem:[%s4 + $0x288] sm:$0xf]
  %v7489 = vld [vmem:[%s4 + $0x28c] sm:$0xf]
  %v7490 = vld [vmem:[%s4 + $0x290] sm:$0xf]
  %v7491 = vld [vmem:[%s4 + $0x294] sm:$0xf]
  %v7492 = vld [vmem:[%s4 + $0x298] sm:$0xf]
  %v7493 = vld [vmem:[%s4 + $0x29c] sm:$0xf]
  %v7494 = vld [vmem:[%s4 + $0x2a0] sm:$0xf]
  %v7495 = vld [vmem:[%s4 + $0x2a4] sm:$0xf]
  %v7496 = vld [vmem:[%s4 + $0x2a8] sm:$0xf]
  %v7497 = vld [vmem:[%s4 + $0x2ac] sm:$0xf]
  %v7498 = vld [vmem:[%s4 + $0x2b0] sm:$0xf]
  %v7499 = vld [vmem:[%s4 + $0x2b4] sm:$0xf]
  %v7500 = vld [vmem:[%s4 + $0x2b8] sm:$0xf]
  %v7501 = vld [vmem:[%s4 + $0x2bc] sm:$0xf]
  %v7502 = vld [vmem:[%s4 + $0x2c0] sm:$0xf]
  %v7503 = vld [vmem:[%s4 + $0x2c4] sm:$0xf]
  %v7504 = vld [vmem:[%s4 + $0x2c8] sm:$0xf]
  %v7505 = vld [vmem:[%s4 + $0x2cc] sm:$0xf]
  %v7506 = vld [vmem:[%s4 + $0x2d0] sm:$0xf]
  %v7507 = vld [vmem:[%s4 + $0x2d4] sm:$0xf]
  %v7508 = vld [vmem:[%s4 + $0x2d8] sm:$0xf]
  %v7509 = vld [vmem:[%s4 + $0x2dc] sm:$0xf]
  %v7510 = vld [vmem:[%s4 + $0x2e0] sm:$0xf]
  %v7511 = vld [vmem:[%s4 + $0x2e4] sm:$0xf]
  %v7512 = vld [vmem:[%s4 + $0x2e8] sm:$0xf]
  %v7513 = vld [vmem:[%s4 + $0x2ec] sm:$0xf]
  %v7514 = vld [vmem:[%s4 + $0x2f0] sm:$0xf]
  %v7515 = vld [vmem:[%s4 + $0x2f4] sm:$0xf]
  %v7516 = vld [vmem:[%s4 + $0x2f8] sm:$0xf]
  %v7517 = vld [vmem:[%s4 + $0x2fc] sm:$0xf]
  %v7518 = vld [vmem:[%s4 + $0x300] sm:$0xf]
  %v7519 = vld [vmem:[%s4 + $0x304] sm:$0xf]
  %v7520 = vld [vmem:[%s4 + $0x308] sm:$0xf]
  %v7521 = vld [vmem:[%s4 + $0x30c] sm:$0xf]
  %v7522 = vld [vmem:[%s4 + $0x310] sm:$0xf]
  %v7523 = vld [vmem:[%s4 + $0x314] sm:$0xf]
  %v7524 = vld [vmem:[%s4 + $0x318] sm:$0xf]
  %v7525 = vld [vmem:[%s4 + $0x31c] sm:$0xf]
  %v7526 = vld [vmem:[%s4 + $0x320] sm:$0xf]
  %v7527 = vld [vmem:[%s4 + $0x324] sm:$0xf]
  %v7528 = vld [vmem:[%s4 + $0x328] sm:$0xf]
  %v7529 = vld [vmem:[%s4 + $0x32c] sm:$0xf]
  %v7530 = vld [vmem:[%s4 + $0x330] sm:$0xf]
  %v7531 = vld [vmem:[%s4 + $0x334] sm:$0xf]
  %v7532 = vld [vmem:[%s4 + $0x338] sm:$0xf]
  %v7533 = vld [vmem:[%s4 + $0x33c] sm:$0xf]
  %v7534 = vld [vmem:[%s4 + $0x340] sm:$0xf]
  %v7535 = vld [vmem:[%s4 + $0x344] sm:$0xf]
  %v7536 = vld [vmem:[%s4 + $0x348] sm:$0xf]
  %v7537 = vld [vmem:[%s4 + $0x34c] sm:$0xf]
  %v7538 = vld [vmem:[%s4 + $0x350] sm:$0xf]
  %v7539 = vld [vmem:[%s4 + $0x354] sm:$0xf]
  %v7540 = vld [vmem:[%s4 + $0x358] sm:$0xf]
  %v7541 = vld [vmem:[%s4 + $0x35c] sm:$0xf]
  %v7542 = vld [vmem:[%s4 + $0x360] sm:$0xf]
  %v7543 = vld [vmem:[%s4 + $0x364] sm:$0xf]
  %v7544 = vld [vmem:[%s4 + $0x368] sm:$0xf]
  %v7545 = vld [vmem:[%s4 + $0x36c] sm:$0xf]
  %v7546 = vld [vmem:[%s4 + $0x370] sm:$0xf]
  %v7547 = vld [vmem:[%s4 + $0x374] sm:$0xf]
  %v7548 = vld [vmem:[%s4 + $0x378] sm:$0xf]
  %v7549 = vld [vmem:[%s4 + $0x37c] sm:$0xf]
  %v7550 = vld [vmem:[%s4 + $0x380] sm:$0xf]
  %v7551 = vld [vmem:[%s4 + $0x384] sm:$0xf]
  %v7552 = vld [vmem:[%s4 + $0x388] sm:$0xf]
  %v7553 = vld [vmem:[%s4 + $0x38c] sm:$0xf]
  %v7554 = vld [vmem:[%s4 + $0x390] sm:$0xf]
  %v7555 = vld [vmem:[%s4 + $0x394] sm:$0xf]
  %v7556 = vld [vmem:[%s4 + $0x398] sm:$0xf]
  %v7557 = vld [vmem:[%s4 + $0x39c] sm:$0xf]
  %v7558 = vld [vmem:[%s4 + $0x3a0] sm:$0xf]
  %v7559 = vld [vmem:[%s4 + $0x3a4] sm:$0xf]
  %v7560 = vld [vmem:[%s4 + $0x3a8] sm:$0xf]
  %v7561 = vld [vmem:[%s4 + $0x3ac] sm:$0xf]
  %v7562 = vld [vmem:[%s4 + $0x3b0] sm:$0xf]
  %v7563 = vld [vmem:[%s4 + $0x3b4] sm:$0xf]
  %v7564 = vld [vmem:[%s4 + $0x3b8] sm:$0xf]
  %v7565 = vld [vmem:[%s4 + $0x3bc] sm:$0xf]
  %v7566 = vld [vmem:[%s4 + $0x3c0] sm:$0xf]
  %v7567 = vld [vmem:[%s4 + $0x3c4] sm:$0xf]
  %v7568 = vld [vmem:[%s4 + $0x3c8] sm:$0xf]
  %v7569 = vld [vmem:[%s4 + $0x3cc] sm:$0xf]
  %v7570 = vld [vmem:[%s4 + $0x3d0] sm:$0xf]
  %v7571 = vld [vmem:[%s4 + $0x3d4] sm:$0xf]
  %v7572 = vld [vmem:[%s4 + $0x3d8] sm:$0xf]
  %v7573 = vld [vmem:[%s4 + $0x3dc] sm:$0xf]
  %v7574 = vld [vmem:[%s4 + $0x3e0] sm:$0xf]
  %v7575 = vld [vmem:[%s4 + $0x3e4] sm:$0xf]
  %v7576 = vld [vmem:[%s4 + $0x3e8] sm:$0xf]
  %v7577 = vld [vmem:[%s4 + $0x3ec] sm:$0xf]
  %v7578 = vld [vmem:[%s4 + $0x3f0] sm:$0xf]
  %v7579 = vld [vmem:[%s4 + $0x3f4] sm:$0xf]
  %v7580 = vld [vmem:[%s4 + $0x3f8] sm:$0xf]
  %v7581 = vld [vmem:[%s4 + $0x3fc] sm:$0xf]
  %v7582 = vunpack.c.l.b16 %v7304
  %v7583 = vunpack.c.h.b16 %v7304
  %v7584 = vpack.c.b16 %v7582, %v7582
  %v7585 = vpack.c.b16 %v7583, %v7583
  %v7620 = vunpack.c.l.b16 %v7326
  %v7621 = vunpack.c.l.b16 %v7327
  %v7622 = vunpack.c.l.b16 %v7328
  %v7623 = vunpack.c.l.b16 %v7329
  %v7624 = vunpack.c.l.b16 %v7330
  %v7625 = vunpack.c.l.b16 %v7331
  %v7626 = vunpack.c.l.b16 %v7332
  %v7627 = vunpack.c.l.b16 %v7333
  %v7628 = vunpack.c.l.b16 %v7334
  %v7629 = vunpack.c.l.b16 %v7335
  %v7630 = vunpack.c.l.b16 %v7336
  %v7631 = vunpack.c.l.b16 %v7337
  %v7632 = vunpack.c.l.b16 %v7338
  %v7633 = vunpack.c.l.b16 %v7339
  %v7634 = vunpack.c.l.b16 %v7340
  %v7635 = vunpack.c.l.b16 %v7341
  %v7636 = vunpack.c.l.b16 %v7342
  %v7637 = vunpack.c.l.b16 %v7343
  %v7638 = vunpack.c.l.b16 %v7344
  %v7639 = vunpack.c.l.b16 %v7345
  %v7640 = vunpack.c.l.b16 %v7346
  %v7641 = vunpack.c.l.b16 %v7347
  %v7642 = vunpack.c.l.b16 %v7348
  %v7643 = vunpack.c.l.b16 %v7349
  %v7644 = vunpack.c.l.b16 %v7350
  %v7645 = vunpack.c.l.b16 %v7351
  %v7646 = vunpack.c.l.b16 %v7352
  %v7647 = vunpack.c.l.b16 %v7353
  %v7648 = vunpack.c.l.b16 %v7354
  %v7649 = vunpack.c.l.b16 %v7355
  %v7650 = vunpack.c.l.b16 %v7356
  %v7651 = vunpack.c.l.b16 %v7357
  %v7652 = vpack.c.b16 %v7621, %v7620
  %v7653 = vpack.c.b16 %v7623, %v7622
  %v7654 = vpack.c.b16 %v7625, %v7624
  %v7655 = vpack.c.b16 %v7627, %v7626
  %v7656 = vpack.c.b16 %v7629, %v7628
  %v7657 = vpack.c.b16 %v7631, %v7630
  %v7658 = vpack.c.b16 %v7633, %v7632
  %v7659 = vpack.c.b16 %v7635, %v7634
  %v7660 = vpack.c.b16 %v7637, %v7636
  %v7661 = vpack.c.b16 %v7639, %v7638
  %v7662 = vpack.c.b16 %v7641, %v7640
  %v7663 = vpack.c.b16 %v7643, %v7642
  %v7664 = vpack.c.b16 %v7645, %v7644
  %v7665 = vpack.c.b16 %v7647, %v7646
  %v7666 = vpack.c.b16 %v7649, %v7648
  %v7667 = vpack.c.b16 %v7651, %v7650
  %7684 = vmatprep.subr.bf16.mxu0 0
  %7685 = vmatpush1.bf16.msra.mxu0 %v7652
  %7686 = vmatprep.subr.bf16.mxu0 0
  %7687 = vmatpush1.bf16.msra.mxu0 %v7653
  %7688 = vmatprep.subr.bf16.mxu0 0
  %7689 = vmatpush1.bf16.msra.mxu0 %v7654
  %7690 = vmatprep.subr.bf16.mxu0 0
  %7691 = vmatpush1.bf16.msra.mxu0 %v7655
  %7692 = vmatprep.subr.bf16.mxu0 0
  %7693 = vmatpush1.bf16.msra.mxu0 %v7656
  %7694 = vmatprep.subr.bf16.mxu0 0
  %7695 = vmatpush1.bf16.msra.mxu0 %v7657
  %7696 = vmatprep.subr.bf16.mxu0 0
  %7697 = vmatpush1.bf16.msra.mxu0 %v7658
  %7698 = vmatprep.subr.bf16.mxu0 0
  %7699 = vmatpush1.bf16.msra.mxu0 %v7659
  %7700 = vmatprep.subr.bf16.mxu0 0
  %7701 = vmatpush1.bf16.msra.mxu0 %v7660
  %7702 = vmatprep.subr.bf16.mxu0 0
  %7703 = vmatpush1.bf16.msra.mxu0 %v7661
  %7704 = vmatprep.subr.bf16.mxu0 0
  %7705 = vmatpush1.bf16.msra.mxu0 %v7662
  %7706 = vmatprep.subr.bf16.mxu0 0
  %7707 = vmatpush1.bf16.msra.mxu0 %v7663
  %7708 = vmatprep.subr.bf16.mxu0 0
  %7709 = vmatpush1.bf16.msra.mxu0 %v7664
  %7710 = vmatprep.subr.bf16.mxu0 0
  %7711 = vmatpush1.bf16.msra.mxu0 %v7665
  %7712 = vmatprep.subr.bf16.mxu0 0
  %7713 = vmatpush1.bf16.msra.mxu0 %v7666
  %7714 = vmatprep.subr.bf16.mxu0 0
  %7715 = vmatpush1.bf16.msra.mxu0 %v7667
  %7716 = vmatprep.mubr.bf16.mxu0 %v7585
  %7717 = vmatmul.mubr.bf16.gmra.mrb[0].mxu0 %v7584
  %v7718 = vpop.f32.mrb[0].mxu0
  %v7719 = vadd.f32 0.0, %v7718
  %v7720 = vpop.f32.mrb[0].mxu0
  %v7721 = vpop.f32.mrb[0].mxu0
  %v7722 = vpop.f32.mrb[0].mxu0
  %7723 = vdwg.mxu0
  %v7724 = vunpack.c.l.b16 %v7307
  %v7725 = vunpack.c.h.b16 %v7307
  %v7726 = vpack.c.b16 %v7724, %v7724
  %v7727 = vpack.c.b16 %v7725, %v7725
  %v7762 = vunpack.c.l.b16 %v7358
  %v7763 = vunpack.c.l.b16 %v7359
  %v7764 = vunpack.c.l.b16 %v7360
  %v7765 = vunpack.c.l.b16 %v7361
  %v7766 = vunpack.c.l.b16 %v7362
  %v7767 = vunpack.c.l.b16 %v7363
  %v7768 = vunpack.c.l.b16 %v7364
  %v7769 = vunpack.c.l.b16 %v7365
  %v7770 = vunpack.c.l.b16 %v7366
  %v7771 = vunpack.c.l.b16 %v7367
  %v7772 = vunpack.c.l.b16 %v7368
  %v7773 = vunpack.c.l.b16 %v7369
  %v7774 = vunpack.c.l.b16 %v7370
  %v7775 = vunpack.c.l.b16 %v7371
  %v7776 = vunpack.c.l.b16 %v7372
  %v7777 = vunpack.c.l.b16 %v7373
  %v7778 = vunpack.c.l.b16 %v7374
  %v7779 = vunpack.c.l.b16 %v7375
  %v7780 = vunpack.c.l.b16 %v7376
  %v7781 = vunpack.c.l.b16 %v7377
  %v7782 = vunpack.c.l.b16 %v7378
  %v7783 = vunpack.c.l.b16 %v7379
  %v7784 = vunpack.c.l.b16 %v7380
  %v7785 = vunpack.c.l.b16 %v7381
  %v7786 = vunpack.c.l.b16 %v7382
  %v7787 = vunpack.c.l.b16 %v7383
  %v7788 = vunpack.c.l.b16 %v7384
  %v7789 = vunpack.c.l.b16 %v7385
  %v7790 = vunpack.c.l.b16 %v7386
  %v7791 = vunpack.c.l.b16 %v7387
  %v7792 = vunpack.c.l.b16 %v7388
  %v7793 = vunpack.c.l.b16 %v7389
  %v7794 = vpack.c.b16 %v7763, %v7762
  %v7795 = vpack.c.b16 %v7765, %v7764
  %v7796 = vpack.c.b16 %v7767, %v7766
  %v7797 = vpack.c.b16 %v7769, %v7768
  %v7798 = vpack.c.b16 %v7771, %v7770
  %v7799 = vpack.c.b16 %v7773, %v7772
  %v7800 = vpack.c.b16 %v7775, %v7774
  %v7801 = vpack.c.b16 %v7777, %v7776
  %v7802 = vpack.c.b16 %v7779, %v7778
  %v7803 = vpack.c.b16 %v7781, %v7780
  %v7804 = vpack.c.b16 %v7783, %v7782
  %v7805 = vpack.c.b16 %v7785, %v7784
  %v7806 = vpack.c.b16 %v7787, %v7786
  %v7807 = vpack.c.b16 %v7789, %v7788
  %v7808 = vpack.c.b16 %v7791, %v7790
  %v7809 = vpack.c.b16 %v7793, %v7792
  %7826 = vmatprep.subr.bf16.mxu0 0
  %7827 = vmatpush1.bf16.msra.mxu0 %v7794
  %7828 = vmatprep.subr.bf16.mxu0 0
  %7829 = vmatpush1.bf16.msra.mxu0 %v7795
  %7830 = vmatprep.subr.bf16.mxu0 0
  %7831 = vmatpush1.bf16.msra.mxu0 %v7796
  %7832 = vmatprep.subr.bf16.mxu0 0
  %7833 = vmatpush1.bf16.msra.mxu0 %v7797
  %7834 = vmatprep.subr.bf16.mxu0 0
  %7835 = vmatpush1.bf16.msra.mxu0 %v7798
  %7836 = vmatprep.subr.bf16.mxu0 0
  %7837 = vmatpush1.bf16.msra.mxu0 %v7799
  %7838 = vmatprep.subr.bf16.mxu0 0
  %7839 = vmatpush1.bf16.msra.mxu0 %v7800
  %7840 = vmatprep.subr.bf16.mxu0 0
  %7841 = vmatpush1.bf16.msra.mxu0 %v7801
  %7842 = vmatprep.subr.bf16.mxu0 0
  %7843 = vmatpush1.bf16.msra.mxu0 %v7802
  %7844 = vmatprep.subr.bf16.mxu0 0
  %7845 = vmatpush1.bf16.msra.mxu0 %v7803
  %7846 = vmatprep.subr.bf16.mxu0 0
  %7847 = vmatpush1.bf16.msra.mxu0 %v7804
  %7848 = vmatprep.subr.bf16.mxu0 0
  %7849 = vmatpush1.bf16.msra.mxu0 %v7805
  %7850 = vmatprep.subr.bf16.mxu0 0
  %7851 = vmatpush1.bf16.msra.mxu0 %v7806
  %7852 = vmatprep.subr.bf16.mxu0 0
  %7853 = vmatpush1.bf16.msra.mxu0 %v7807
  %7854 = vmatprep.subr.bf16.mxu0 0
  %7855 = vmatpush1.bf16.msra.mxu0 %v7808
  %7856 = vmatprep.subr.bf16.mxu0 0
  %7857 = vmatpush1.bf16.msra.mxu0 %v7809
  %7858 = vmatprep.mubr.bf16.mxu0 %v7727
  %7859 = vmatmul.mubr.bf16.gmra.mrb[0].mxu0 %v7726
  %v7860 = vpop.f32.mrb[0].mxu0
  %v7861 = vadd.f32 0.0, %v7860
  %v7862 = vpop.f32.mrb[0].mxu0
  %v7863 = vpop.f32.mrb[0].mxu0
  %v7864 = vpop.f32.mrb[0].mxu0
  %7865 = vdwg.mxu0
  %v7866 = vunpack.c.l.b16 %v7310
  %v7867 = vunpack.c.h.b16 %v7310
  %v7868 = vpack.c.b16 %v7866, %v7866
  %v7869 = vpack.c.b16 %v7867, %v7867
  %v7904 = vunpack.c.l.b16 %v7390
  %v7905 = vunpack.c.l.b16 %v7391
  %v7906 = vunpack.c.l.b16 %v7392
  %v7907 = vunpack.c.l.b16 %v7393
  %v7908 = vunpack.c.l.b16 %v7394
  %v7909 = vunpack.c.l.b16 %v7395
  %v7910 = vunpack.c.l.b16 %v7396
  %v7911 = vunpack.c.l.b16 %v7397
  %v7912 = vunpack.c.l.b16 %v7398
  %v7913 = vunpack.c.l.b16 %v7399
  %v7914 = vunpack.c.l.b16 %v7400
  %v7915 = vunpack.c.l.b16 %v7401
  %v7916 = vunpack.c.l.b16 %v7402
  %v7917 = vunpack.c.l.b16 %v7403
  %v7918 = vunpack.c.l.b16 %v7404
  %v7919 = vunpack.c.l.b16 %v7405
  %v7920 = vunpack.c.l.b16 %v7406
  %v7921 = vunpack.c.l.b16 %v7407
  %v7922 = vunpack.c.l.b16 %v7408
  %v7923 = vunpack.c.l.b16 %v7409
  %v7924 = vunpack.c.l.b16 %v7410
  %v7925 = vunpack.c.l.b16 %v7411
  %v7926 = vunpack.c.l.b16 %v7412
  %v7927 = vunpack.c.l.b16 %v7413
  %v7928 = vunpack.c.l.b16 %v7414
  %v7929 = vunpack.c.l.b16 %v7415
  %v7930 = vunpack.c.l.b16 %v7416
  %v7931 = vunpack.c.l.b16 %v7417
  %v7932 = vunpack.c.l.b16 %v7418
  %v7933 = vunpack.c.l.b16 %v7419
  %v7934 = vunpack.c.l.b16 %v7420
  %v7935 = vunpack.c.l.b16 %v7421
  %v7936 = vpack.c.b16 %v7905, %v7904
  %v7937 = vpack.c.b16 %v7907, %v7906
  %v7938 = vpack.c.b16 %v7909, %v7908
  %v7939 = vpack.c.b16 %v7911, %v7910
  %v7940 = vpack.c.b16 %v7913, %v7912
  %v7941 = vpack.c.b16 %v7915, %v7914
  %v7942 = vpack.c.b16 %v7917, %v7916
  %v7943 = vpack.c.b16 %v7919, %v7918
  %v7944 = vpack.c.b16 %v7921, %v7920
  %v7945 = vpack.c.b16 %v7923, %v7922
  %v7946 = vpack.c.b16 %v7925, %v7924
  %v7947 = vpack.c.b16 %v7927, %v7926
  %v7948 = vpack.c.b16 %v7929, %v7928
  %v7949 = vpack.c.b16 %v7931, %v7930
  %v7950 = vpack.c.b16 %v7933, %v7932
  %v7951 = vpack.c.b16 %v7935, %v7934
  %7968 = vmatprep.subr.bf16.mxu0 0
  %7969 = vmatpush1.bf16.msra.mxu0 %v7936
  %7970 = vmatprep.subr.bf16.mxu0 0
  %7971 = vmatpush1.bf16.msra.mxu0 %v7937
  %7972 = vmatprep.subr.bf16.mxu0 0
  %7973 = vmatpush1.bf16.msra.mxu0 %v7938
  %7974 = vmatprep.subr.bf16.mxu0 0
  %7975 = vmatpush1.bf16.msra.mxu0 %v7939
  %7976 = vmatprep.subr.bf16.mxu0 0
  %7977 = vmatpush1.bf16.msra.mxu0 %v7940
  %7978 = vmatprep.subr.bf16.mxu0 0
  %7979 = vmatpush1.bf16.msra.mxu0 %v7941
  %7980 = vmatprep.subr.bf16.mxu0 0
  %7981 = vmatpush1.bf16.msra.mxu0 %v7942
  %7982 = vmatprep.subr.bf16.mxu0 0
  %7983 = vmatpush1.bf16.msra.mxu0 %v7943
  %7984 = vmatprep.subr.bf16.mxu0 0
  %7985 = vmatpush1.bf16.msra.mxu0 %v7944
  %7986 = vmatprep.subr.bf16.mxu0 0
  %7987 = vmatpush1.bf16.msra.mxu0 %v7945
  %7988 = vmatprep.subr.bf16.mxu0 0
  %7989 = vmatpush1.bf16.msra.mxu0 %v7946
  %7990 = vmatprep.subr.bf16.mxu0 0
  %7991 = vmatpush1.bf16.msra.mxu0 %v7947
  %7992 = vmatprep.subr.bf16.mxu0 0
  %7993 = vmatpush1.bf16.msra.mxu0 %v7948
  %7994 = vmatprep.subr.bf16.mxu0 0
  %7995 = vmatpush1.bf16.msra.mxu0 %v7949
  %7996 = vmatprep.subr.bf16.mxu0 0
  %7997 = vmatpush1.bf16.msra.mxu0 %v7950
  %7998 = vmatprep.subr.bf16.mxu0 0
  %7999 = vmatpush1.bf16.msra.mxu0 %v7951
  %8000 = vmatprep.mubr.bf16.mxu0 %v7869
  %8001 = vmatmul.mubr.bf16.gmra.mrb[0].mxu0 %v7868
  %v8002 = vpop.f32.mrb[0].mxu0
  %v8003 = vadd.f32 0.0, %v8002
  %v8004 = vpop.f32.mrb[0].mxu0
  %v8005 = vpop.f32.mrb[0].mxu0
  %v8006 = vpop.f32.mrb[0].mxu0
  %8007 = vdwg.mxu0
  %v8008 = vunpack.c.l.b16 %v7313
  %v8009 = vunpack.c.h.b16 %v7313
  %v8010 = vpack.c.b16 %v8008, %v8008
  %v8011 = vpack.c.b16 %v8009, %v8009
  %v8046 = vunpack.c.l.b16 %v7422
  %v8047 = vunpack.c.l.b16 %v7423
  %v8048 = vunpack.c.l.b16 %v7424
  %v8049 = vunpack.c.l.b16 %v7425
  %v8050 = vunpack.c.l.b16 %v7426
  %v8051 = vunpack.c.l.b16 %v7427
  %v8052 = vunpack.c.l.b16 %v7428
  %v8053 = vunpack.c.l.b16 %v7429
  %v8054 = vunpack.c.l.b16 %v7430
  %v8055 = vunpack.c.l.b16 %v7431
  %v8056 = vunpack.c.l.b16 %v7432
  %v8057 = vunpack.c.l.b16 %v7433
  %v8058 = vunpack.c.l.b16 %v7434
  %v8059 = vunpack.c.l.b16 %v7435
  %v8060 = vunpack.c.l.b16 %v7436
  %v8061 = vunpack.c.l.b16 %v7437
  %v8062 = vunpack.c.l.b16 %v7438
  %v8063 = vunpack.c.l.b16 %v7439
  %v8064 = vunpack.c.l.b16 %v7440
  %v8065 = vunpack.c.l.b16 %v7441
  %v8066 = vunpack.c.l.b16 %v7442
  %v8067 = vunpack.c.l.b16 %v7443
  %v8068 = vunpack.c.l.b16 %v7444
  %v8069 = vunpack.c.l.b16 %v7445
  %v8070 = vunpack.c.l.b16 %v7446
  %v8071 = vunpack.c.l.b16 %v7447
  %v8072 = vunpack.c.l.b16 %v7448
  %v8073 = vunpack.c.l.b16 %v7449
  %v8074 = vunpack.c.l.b16 %v7450
  %v8075 = vunpack.c.l.b16 %v7451
  %v8076 = vunpack.c.l.b16 %v7452
  %v8077 = vunpack.c.l.b16 %v7453
  %v8078 = vpack.c.b16 %v8047, %v8046
  %v8079 = vpack.c.b16 %v8049, %v8048
  %v8080 = vpack.c.b16 %v8051, %v8050
  %v8081 = vpack.c.b16 %v8053, %v8052
  %v8082 = vpack.c.b16 %v8055, %v8054
  %v8083 = vpack.c.b16 %v8057, %v8056
  %v8084 = vpack.c.b16 %v8059, %v8058
  %v8085 = vpack.c.b16 %v8061, %v8060
  %v8086 = vpack.c.b16 %v8063, %v8062
  %v8087 = vpack.c.b16 %v8065, %v8064
  %v8088 = vpack.c.b16 %v8067, %v8066
  %v8089 = vpack.c.b16 %v8069, %v8068
  %v8090 = vpack.c.b16 %v8071, %v8070
  %v8091 = vpack.c.b16 %v8073, %v8072
  %v8092 = vpack.c.b16 %v8075, %v8074
  %v8093 = vpack.c.b16 %v8077, %v8076
  %8110 = vmatprep.subr.bf16.mxu0 0
  %8111 = vmatpush1.bf16.msra.mxu0 %v8078
  %8112 = vmatprep.subr.bf16.mxu0 0
  %8113 = vmatpush1.bf16.msra.mxu0 %v8079
  %8114 = vmatprep.subr.bf16.mxu0 0
  %8115 = vmatpush1.bf16.msra.mxu0 %v8080
  %8116 = vmatprep.subr.bf16.mxu0 0
  %8117 = vmatpush1.bf16.msra.mxu0 %v8081
  %8118 = vmatprep.subr.bf16.mxu0 0
  %8119 = vmatpush1.bf16.msra.mxu0 %v8082
  %8120 = vmatprep.subr.bf16.mxu0 0
  %8121 = vmatpush1.bf16.msra.mxu0 %v8083
  %8122 = vmatprep.subr.bf16.mxu0 0
  %8123 = vmatpush1.bf16.msra.mxu0 %v8084
  %8124 = vmatprep.subr.bf16.mxu0 0
  %8125 = vmatpush1.bf16.msra.mxu0 %v8085
  %8126 = vmatprep.subr.bf16.mxu0 0
  %8127 = vmatpush1.bf16.msra.mxu0 %v8086
  %8128 = vmatprep.subr.bf16.mxu0 0
  %8129 = vmatpush1.bf16.msra.mxu0 %v8087
  %8130 = vmatprep.subr.bf16.mxu0 0
  %8131 = vmatpush1.bf16.msra.mxu0 %v8088
  %8132 = vmatprep.subr.bf16.mxu0 0
  %8133 = vmatpush1.bf16.msra.mxu0 %v8089
  %8134 = vmatprep.subr.bf16.mxu0 0
  %8135 = vmatpush1.bf16.msra.mxu0 %v8090
  %8136 = vmatprep.subr.bf16.mxu0 0
  %8137 = vmatpush1.bf16.msra.mxu0 %v8091
  %8138 = vmatprep.subr.bf16.mxu0 0
  %8139 = vmatpush1.bf16.msra.mxu0 %v8092
  %8140 = vmatprep.subr.bf16.mxu0 0
  %8141 = vmatpush1.bf16.msra.mxu0 %v8093
  %8142 = vmatprep.mubr.bf16.mxu0 %v8011
  %8143 = vmatmul.mubr.bf16.gmra.mrb[0].mxu0 %v8010
  %v8144 = vpop.f32.mrb[0].mxu0
  %v8145 = vadd.f32 0.0, %v8144
  %v8146 = vpop.f32.mrb[0].mxu0
  %v8147 = vpop.f32.mrb[0].mxu0
  %v8148 = vpop.f32.mrb[0].mxu0
  %8149 = vdwg.mxu0
  %v8150 = vunpack.c.l.b16 %v7316
  %v8151 = vunpack.c.h.b16 %v7316
  %v8152 = vpack.c.b16 %v8150, %v8150
  %v8153 = vpack.c.b16 %v8151, %v8151
  %v8188 = vunpack.c.l.b16 %v7454
  %v8189 = vunpack.c.l.b16 %v7455
  %v8190 = vunpack.c.l.b16 %v7456
  %v8191 = vunpack.c.l.b16 %v7457
  %v8192 = vunpack.c.l.b16 %v7458
  %v8193 = vunpack.c.l.b16 %v7459
  %v8194 = vunpack.c.l.b16 %v7460
  %v8195 = vunpack.c.l.b16 %v7461
  %v8196 = vunpack.c.l.b16 %v7462
  %v8197 = vunpack.c.l.b16 %v7463
  %v8198 = vunpack.c.l.b16 %v7464
  %v8199 = vunpack.c.l.b16 %v7465
  %v8200 = vunpack.c.l.b16 %v7466
  %v8201 = vunpack.c.l.b16 %v7467
  %v8202 = vunpack.c.l.b16 %v7468
  %v8203 = vunpack.c.l.b16 %v7469
  %v8204 = vunpack.c.l.b16 %v7470
  %v8205 = vunpack.c.l.b16 %v7471
  %v8206 = vunpack.c.l.b16 %v7472
  %v8207 = vunpack.c.l.b16 %v7473
  %v8208 = vunpack.c.l.b16 %v7474
  %v8209 = vunpack.c.l.b16 %v7475
  %v8210 = vunpack.c.l.b16 %v7476
  %v8211 = vunpack.c.l.b16 %v7477
  %v8212 = vunpack.c.l.b16 %v7478
  %v8213 = vunpack.c.l.b16 %v7479
  %v8214 = vunpack.c.l.b16 %v7480
  %v8215 = vunpack.c.l.b16 %v7481
  %v8216 = vunpack.c.l.b16 %v7482
  %v8217 = vunpack.c.l.b16 %v7483
  %v8218 = vunpack.c.l.b16 %v7484
  %v8219 = vunpack.c.l.b16 %v7485
  %v8220 = vpack.c.b16 %v8189, %v8188
  %v8221 = vpack.c.b16 %v8191, %v8190
  %v8222 = vpack.c.b16 %v8193, %v8192
  %v8223 = vpack.c.b16 %v8195, %v8194
  %v8224 = vpack.c.b16 %v8197, %v8196
  %v8225 = vpack.c.b16 %v8199, %v8198
  %v8226 = vpack.c.b16 %v8201, %v8200
  %v8227 = vpack.c.b16 %v8203, %v8202
  %v8228 = vpack.c.b16 %v8205, %v8204
  %v8229 = vpack.c.b16 %v8207, %v8206
  %v8230 = vpack.c.b16 %v8209, %v8208
  %v8231 = vpack.c.b16 %v8211, %v8210
  %v8232 = vpack.c.b16 %v8213, %v8212
  %v8233 = vpack.c.b16 %v8215, %v8214
  %v8234 = vpack.c.b16 %v8217, %v8216
  %v8235 = vpack.c.b16 %v8219, %v8218
  %8252 = vmatprep.subr.bf16.mxu0 0
  %8253 = vmatpush1.bf16.msra.mxu0 %v8220
  %8254 = vmatprep.subr.bf16.mxu0 0
  %8255 = vmatpush1.bf16.msra.mxu0 %v8221
  %8256 = vmatprep.subr.bf16.mxu0 0
  %8257 = vmatpush1.bf16.msra.mxu0 %v8222
  %8258 = vmatprep.subr.bf16.mxu0 0
  %8259 = vmatpush1.bf16.msra.mxu0 %v8223
  %8260 = vmatprep.subr.bf16.mxu0 0
  %8261 = vmatpush1.bf16.msra.mxu0 %v8224
  %8262 = vmatprep.subr.bf16.mxu0 0
  %8263 = vmatpush1.bf16.msra.mxu0 %v8225
  %8264 = vmatprep.subr.bf16.mxu0 0
  %8265 = vmatpush1.bf16.msra.mxu0 %v8226
  %8266 = vmatprep.subr.bf16.mxu0 0
  %8267 = vmatpush1.bf16.msra.mxu0 %v8227
  %8268 = vmatprep.subr.bf16.mxu0 0
  %8269 = vmatpush1.bf16.msra.mxu0 %v8228
  %8270 = vmatprep.subr.bf16.mxu0 0
  %8271 = vmatpush1.bf16.msra.mxu0 %v8229
  %8272 = vmatprep.subr.bf16.mxu0 0
  %8273 = vmatpush1.bf16.msra.mxu0 %v8230
  %8274 = vmatprep.subr.bf16.mxu0 0
  %8275 = vmatpush1.bf16.msra.mxu0 %v8231
  %8276 = vmatprep.subr.bf16.mxu0 0
  %8277 = vmatpush1.bf16.msra.mxu0 %v8232
  %8278 = vmatprep.subr.bf16.mxu0 0
  %8279 = vmatpush1.bf16.msra.mxu0 %v8233
  %8280 = vmatprep.subr.bf16.mxu0 0
  %8281 = vmatpush1.bf16.msra.mxu0 %v8234
  %8282 = vmatprep.subr.bf16.mxu0 0
  %8283 = vmatpush1.bf16.msra.mxu0 %v8235
  %8284 = vmatprep.mubr.bf16.mxu0 %v8153
  %8285 = vmatmul.mubr.bf16.gmra.mrb[0].mxu0 %v8152
  %v8286 = vpop.f32.mrb[0].mxu0
  %v8287 = vadd.f32 0.0, %v8286
  %v8288 = vpop.f32.mrb[0].mxu0
  %v8289 = vpop.f32.mrb[0].mxu0
  %v8290 = vpop.f32.mrb[0].mxu0
  %8291 = vdwg.mxu0
  %v8292 = vunpack.c.l.b16 %v7319
  %v8293 = vunpack.c.h.b16 %v7319
  %v8294 = vpack.c.b16 %v8292, %v8292
  %v8295 = vpack.c.b16 %v8293, %v8293
  %v8330 = vunpack.c.l.b16 %v7486
  %v8331 = vunpack.c.l.b16 %v7487
  %v8332 = vunpack.c.l.b16 %v7488
  %v8333 = vunpack.c.l.b16 %v7489
  %v8334 = vunpack.c.l.b16 %v7490
  %v8335 = vunpack.c.l.b16 %v7491
  %v8336 = vunpack.c.l.b16 %v7492
  %v8337 = vunpack.c.l.b16 %v7493
  %v8338 = vunpack.c.l.b16 %v7494
  %v8339 = vunpack.c.l.b16 %v7495
  %v8340 = vunpack.c.l.b16 %v7496
  %v8341 = vunpack.c.l.b16 %v7497
  %v8342 = vunpack.c.l.b16 %v7498
  %v8343 = vunpack.c.l.b16 %v7499
  %v8344 = vunpack.c.l.b16 %v7500
  %v8345 = vunpack.c.l.b16 %v7501
  %v8346 = vunpack.c.l.b16 %v7502
  %v8347 = vunpack.c.l.b16 %v7503
  %v8348 = vunpack.c.l.b16 %v7504
  %v8349 = vunpack.c.l.b16 %v7505
  %v8350 = vunpack.c.l.b16 %v7506
  %v8351 = vunpack.c.l.b16 %v7507
  %v8352 = vunpack.c.l.b16 %v7508
  %v8353 = vunpack.c.l.b16 %v7509
  %v8354 = vunpack.c.l.b16 %v7510
  %v8355 = vunpack.c.l.b16 %v7511
  %v8356 = vunpack.c.l.b16 %v7512
  %v8357 = vunpack.c.l.b16 %v7513
  %v8358 = vunpack.c.l.b16 %v7514
  %v8359 = vunpack.c.l.b16 %v7515
  %v8360 = vunpack.c.l.b16 %v7516
  %v8361 = vunpack.c.l.b16 %v7517
  %v8362 = vpack.c.b16 %v8331, %v8330
  %v8363 = vpack.c.b16 %v8333, %v8332
  %v8364 = vpack.c.b16 %v8335, %v8334
  %v8365 = vpack.c.b16 %v8337, %v8336
  %v8366 = vpack.c.b16 %v8339, %v8338
  %v8367 = vpack.c.b16 %v8341, %v8340
  %v8368 = vpack.c.b16 %v8343, %v8342
  %v8369 = vpack.c.b16 %v8345, %v8344
  %v8370 = vpack.c.b16 %v8347, %v8346
  %v8371 = vpack.c.b16 %v8349, %v8348
  %v8372 = vpack.c.b16 %v8351, %v8350
  %v8373 = vpack.c.b16 %v8353, %v8352
  %v8374 = vpack.c.b16 %v8355, %v8354
  %v8375 = vpack.c.b16 %v8357, %v8356
  %v8376 = vpack.c.b16 %v8359, %v8358
  %v8377 = vpack.c.b16 %v8361, %v8360
  %8394 = vmatprep.subr.bf16.mxu0 0
  %8395 = vmatpush1.bf16.msra.mxu0 %v8362
  %8396 = vmatprep.subr.bf16.mxu0 0
  %8397 = vmatpush1.bf16.msra.mxu0 %v8363
  %8398 = vmatprep.subr.bf16.mxu0 0
  %8399 = vmatpush1.bf16.msra.mxu0 %v8364
  %8400 = vmatprep.subr.bf16.mxu0 0
  %8401 = vmatpush1.bf16.msra.mxu0 %v8365
  %8402 = vmatprep.subr.bf16.mxu0 0
  %8403 = vmatpush1.bf16.msra.mxu0 %v8366
  %8404 = vmatprep.subr.bf16.mxu0 0
  %8405 = vmatpush1.bf16.msra.mxu0 %v8367
  %8406 = vmatprep.subr.bf16.mxu0 0
  %8407 = vmatpush1.bf16.msra.mxu0 %v8368
  %8408 = vmatprep.subr.bf16.mxu0 0
  %8409 = vmatpush1.bf16.msra.mxu0 %v8369
  %8410 = vmatprep.subr.bf16.mxu0 0
  %8411 = vmatpush1.bf16.msra.mxu0 %v8370
  %8412 = vmatprep.subr.bf16.mxu0 0
  %8413 = vmatpush1.bf16.msra.mxu0 %v8371
  %8414 = vmatprep.subr.bf16.mxu0 0
  %8415 = vmatpush1.bf16.msra.mxu0 %v8372
  %8416 = vmatprep.subr.bf16.mxu0 0
  %8417 = vmatpush1.bf16.msra.mxu0 %v8373
  %8418 = vmatprep.subr.bf16.mxu0 0
  %8419 = vmatpush1.bf16.msra.mxu0 %v8374
  %8420 = vmatprep.subr.bf16.mxu0 0
  %8421 = vmatpush1.bf16.msra.mxu0 %v8375
  %8422 = vmatprep.subr.bf16.mxu0 0
  %8423 = vmatpush1.bf16.msra.mxu0 %v8376
  %8424 = vmatprep.subr.bf16.mxu0 0
  %8425 = vmatpush1.bf16.msra.mxu0 %v8377
  %8426 = vmatprep.mubr.bf16.mxu0 %v8295
  %8427 = vmatmul.mubr.bf16.gmra.mrb[0].mxu0 %v8294
  %v8428 = vpop.f32.mrb[0].mxu0
  %v8429 = vadd.f32 0.0, %v8428
  %v8430 = vpop.f32.mrb[0].mxu0
  %v8431 = vpop.f32.mrb[0].mxu0
  %v8432 = vpop.f32.mrb[0].mxu0
  %8433 = vdwg.mxu0
  %v8434 = vunpack.c.l.b16 %v7322
  %v8435 = vunpack.c.h.b16 %v7322
  %v8436 = vpack.c.b16 %v8434, %v8434
  %v8437 = vpack.c.b16 %v8435, %v8435
  %v8472 = vunpack.c.l.b16 %v7518
  %v8473 = vunpack.c.l.b16 %v7519
  %v8474 = vunpack.c.l.b16 %v7520
  %v8475 = vunpack.c.l.b16 %v7521
  %v8476 = vunpack.c.l.b16 %v7522
  %v8477 = vunpack.c.l.b16 %v7523
  %v8478 = vunpack.c.l.b16 %v7524
  %v8479 = vunpack.c.l.b16 %v7525
  %v8480 = vunpack.c.l.b16 %v7526
  %v8481 = vunpack.c.l.b16 %v7527
  %v8482 = vunpack.c.l.b16 %v7528
  %v8483 = vunpack.c.l.b16 %v7529
  %v8484 = vunpack.c.l.b16 %v7530
  %v8485 = vunpack.c.l.b16 %v7531
  %v8486 = vunpack.c.l.b16 %v7532
  %v8487 = vunpack.c.l.b16 %v7533
  %v8488 = vunpack.c.l.b16 %v7534
  %v8489 = vunpack.c.l.b16 %v7535
  %v8490 = vunpack.c.l.b16 %v7536
  %v8491 = vunpack.c.l.b16 %v7537
  %v8492 = vunpack.c.l.b16 %v7538
  %v8493 = vunpack.c.l.b16 %v7539
  %v8494 = vunpack.c.l.b16 %v7540
  %v8495 = vunpack.c.l.b16 %v7541
  %v8496 = vunpack.c.l.b16 %v7542
  %v8497 = vunpack.c.l.b16 %v7543
  %v8498 = vunpack.c.l.b16 %v7544
  %v8499 = vunpack.c.l.b16 %v7545
  %v8500 = vunpack.c.l.b16 %v7546
  %v8501 = vunpack.c.l.b16 %v7547
  %v8502 = vunpack.c.l.b16 %v7548
  %v8503 = vunpack.c.l.b16 %v7549
  %v8504 = vpack.c.b16 %v8473, %v8472
  %v8505 = vpack.c.b16 %v8475, %v8474
  %v8506 = vpack.c.b16 %v8477, %v8476
  %v8507 = vpack.c.b16 %v8479, %v8478
  %v8508 = vpack.c.b16 %v8481, %v8480
  %v8509 = vpack.c.b16 %v8483, %v8482
  %v8510 = vpack.c.b16 %v8485, %v8484
  %v8511 = vpack.c.b16 %v8487, %v8486
  %v8512 = vpack.c.b16 %v8489, %v8488
  %v8513 = vpack.c.b16 %v8491, %v8490
  %v8514 = vpack.c.b16 %v8493, %v8492
  %v8515 = vpack.c.b16 %v8495, %v8494
  %v8516 = vpack.c.b16 %v8497, %v8496
  %v8517 = vpack.c.b16 %v8499, %v8498
  %v8518 = vpack.c.b16 %v8501, %v8500
  %v8519 = vpack.c.b16 %v8503, %v8502
  %8536 = vmatprep.subr.bf16.mxu0 0
  %8537 = vmatpush1.bf16.msra.mxu0 %v8504
  %8538 = vmatprep.subr.bf16.mxu0 0
  %8539 = vmatpush1.bf16.msra.mxu0 %v8505
  %8540 = vmatprep.subr.bf16.mxu0 0
  %8541 = vmatpush1.bf16.msra.mxu0 %v8506
  %8542 = vmatprep.subr.bf16.mxu0 0
  %8543 = vmatpush1.bf16.msra.mxu0 %v8507
  %8544 = vmatprep.subr.bf16.mxu0 0
  %8545 = vmatpush1.bf16.msra.mxu0 %v8508
  %8546 = vmatprep.subr.bf16.mxu0 0
  %8547 = vmatpush1.bf16.msra.mxu0 %v8509
  %8548 = vmatprep.subr.bf16.mxu0 0
  %8549 = vmatpush1.bf16.msra.mxu0 %v8510
  %8550 = vmatprep.subr.bf16.mxu0 0
  %8551 = vmatpush1.bf16.msra.mxu0 %v8511
  %8552 = vmatprep.subr.bf16.mxu0 0
  %8553 = vmatpush1.bf16.msra.mxu0 %v8512
  %8554 = vmatprep.subr.bf16.mxu0 0
  %8555 = vmatpush1.bf16.msra.mxu0 %v8513
  %8556 = vmatprep.subr.bf16.mxu0 0
  %8557 = vmatpush1.bf16.msra.mxu0 %v8514
  %8558 = vmatprep.subr.bf16.mxu0 0
  %8559 = vmatpush1.bf16.msra.mxu0 %v8515
  %8560 = vmatprep.subr.bf16.mxu0 0
  %8561 = vmatpush1.bf16.msra.mxu0 %v8516
  %8562 = vmatprep.subr.bf16.mxu0 0
  %8563 = vmatpush1.bf16.msra.mxu0 %v8517
  %8564 = vmatprep.subr.bf16.mxu0 0
  %8565 = vmatpush1.bf16.msra.mxu0 %v8518
  %8566 = vmatprep.subr.bf16.mxu0 0
  %8567 = vmatpush1.bf16.msra.mxu0 %v8519
  %8568 = vmatprep.mubr.bf16.mxu0 %v8437
  %8569 = vmatmul.mubr.bf16.gmra.mrb[0].mxu0 %v8436
  %v8570 = vpop.f32.mrb[0].mxu0
  %v8571 = vadd.f32 0.0, %v8570
  %v8572 = vpop.f32.mrb[0].mxu0
  %v8573 = vpop.f32.mrb[0].mxu0
  %v8574 = vpop.f32.mrb[0].mxu0
  %8575 = vdwg.mxu0
  %v8576 = vunpack.c.l.b16 %v7325
  %v8577 = vunpack.c.h.b16 %v7325
  %v8578 = vpack.c.b16 %v8576, %v8576
  %v8579 = vpack.c.b16 %v8577, %v8577
  %v8614 = vunpack.c.l.b16 %v7550
  %v8615 = vunpack.c.l.b16 %v7551
  %v8616 = vunpack.c.l.b16 %v7552
  %v8617 = vunpack.c.l.b16 %v7553
  %v8618 = vunpack.c.l.b16 %v7554
  %v8619 = vunpack.c.l.b16 %v7555
  %v8620 = vunpack.c.l.b16 %v7556
  %v8621 = vunpack.c.l.b16 %v7557
  %v8622 = vunpack.c.l.b16 %v7558
  %v8623 = vunpack.c.l.b16 %v7559
  %v8624 = vunpack.c.l.b16 %v7560
  %v8625 = vunpack.c.l.b16 %v7561
  %v8626 = vunpack.c.l.b16 %v7562
  %v8627 = vunpack.c.l.b16 %v7563
  %v8628 = vunpack.c.l.b16 %v7564
  %v8629 = vunpack.c.l.b16 %v7565
  %v8630 = vunpack.c.l.b16 %v7566
  %v8631 = vunpack.c.l.b16 %v7567
  %v8632 = vunpack.c.l.b16 %v7568
  %v8633 = vunpack.c.l.b16 %v7569
  %v8634 = vunpack.c.l.b16 %v7570
  %v8635 = vunpack.c.l.b16 %v7571
  %v8636 = vunpack.c.l.b16 %v7572
  %v8637 = vunpack.c.l.b16 %v7573
  %v8638 = vunpack.c.l.b16 %v7574
  %v8639 = vunpack.c.l.b16 %v7575
  %v8640 = vunpack.c.l.b16 %v7576
  %v8641 = vunpack.c.l.b16 %v7577
  %v8642 = vunpack.c.l.b16 %v7578
  %v8643 = vunpack.c.l.b16 %v7579
  %v8644 = vunpack.c.l.b16 %v7580
  %v8645 = vunpack.c.l.b16 %v7581
  %v8646 = vpack.c.b16 %v8615, %v8614
  %v8647 = vpack.c.b16 %v8617, %v8616
  %v8648 = vpack.c.b16 %v8619, %v8618
  %v8649 = vpack.c.b16 %v8621, %v8620
  %v8650 = vpack.c.b16 %v8623, %v8622
  %v8651 = vpack.c.b16 %v8625, %v8624
  %v8652 = vpack.c.b16 %v8627, %v8626
  %v8653 = vpack.c.b16 %v8629, %v8628
  %v8654 = vpack.c.b16 %v8631, %v8630
  %v8655 = vpack.c.b16 %v8633, %v8632
  %v8656 = vpack.c.b16 %v8635, %v8634
  %v8657 = vpack.c.b16 %v8637, %v8636
  %v8658 = vpack.c.b16 %v8639, %v8638
  %v8659 = vpack.c.b16 %v8641, %v8640
  %v8660 = vpack.c.b16 %v8643, %v8642
  %v8661 = vpack.c.b16 %v8645, %v8644
  %8678 = vmatprep.subr.bf16.mxu0 0
  %8679 = vmatpush1.bf16.msra.mxu0 %v8646
  %8680 = vmatprep.subr.bf16.mxu0 0
  %8681 = vmatpush1.bf16.msra.mxu0 %v8647
  %8682 = vmatprep.subr.bf16.mxu0 0
  %8683 = vmatpush1.bf16.msra.mxu0 %v8648
  %8684 = vmatprep.subr.bf16.mxu0 0
  %8685 = vmatpush1.bf16.msra.mxu0 %v8649
  %8686 = vmatprep.subr.bf16.mxu0 0
  %8687 = vmatpush1.bf16.msra.mxu0 %v8650
  %8688 = vmatprep.subr.bf16.mxu0 0
  %8689 = vmatpush1.bf16.msra.mxu0 %v8651
  %8690 = vmatprep.subr.bf16.mxu0 0
  %8691 = vmatpush1.bf16.msra.mxu0 %v8652
  %8692 = vmatprep.subr.bf16.mxu0 0
  %8693 = vmatpush1.bf16.msra.mxu0 %v8653
  %8694 = vmatprep.subr.bf16.mxu0 0
  %8695 = vmatpush1.bf16.msra.mxu0 %v8654
  %8696 = vmatprep.subr.bf16.mxu0 0
  %8697 = vmatpush1.bf16.msra.mxu0 %v8655
  %8698 = vmatprep.subr.bf16.mxu0 0
  %8699 = vmatpush1.bf16.msra.mxu0 %v8656
  %8700 = vmatprep.subr.bf16.mxu0 0
  %8701 = vmatpush1.bf16.msra.mxu0 %v8657
  %8702 = vmatprep.subr.bf16.mxu0 0
  %8703 = vmatpush1.bf16.msra.mxu0 %v8658
  %8704 = vmatprep.subr.bf16.mxu0 0
  %8705 = vmatpush1.bf16.msra.mxu0 %v8659
  %8706 = vmatprep.subr.bf16.mxu0 0
  %8707 = vmatpush1.bf16.msra.mxu0 %v8660
  %8708 = vmatprep.subr.bf16.mxu0 0
  %8709 = vmatpush1.bf16.msra.mxu0 %v8661
  %8710 = vmatprep.mubr.bf16.mxu0 %v8579
  %8711 = vmatmul.mubr.bf16.gmra.mrb[0].mxu0 %v8578
  %v8712 = vpop.f32.mrb[0].mxu0
  %v8713 = vadd.f32 0.0, %v8712
  %v8714 = vpop.f32.mrb[0].mxu0
  %v8715 = vpop.f32.mrb[0].mxu0
  %v8716 = vpop.f32.mrb[0].mxu0
  %8717 = vdwg.mxu0
  %vm8718 = vcmask 261120
  %v8719 = vsel %vm8718, %v7719, 0.0
  %v8720 = vsel %vm8718, %v7861, 0.0
  %v8721 = vadd.f32 %v8719, %v8720
  %v8722 = vsel %vm8718, %v8003, 0.0
  %v8723 = vadd.f32 %v8721, %v8722
  %v8724 = vsel %vm8718, %v8145, 0.0
  %v8725 = vadd.f32 %v8723, %v8724
  %v8726 = vsel %vm8718, %v8287, 0.0
  %v8727 = vadd.f32 %v8725, %v8726
  %v8728 = vsel %vm8718, %v8429, 0.0
  %v8729 = vadd.f32 %v8727, %v8728
  %v8730 = vsel %vm8718, %v8571, 0.0
  %v8731 = vadd.f32 %v8729, %v8730
  %v8732 = vsel %vm8718, %v8713, 0.0
  %v8733 = vadd.f32 %v8731, %v8732
  %v8734 = vld [vmem:[%s5] sm:$0x1]
  %v8736 = vlaneseq
  %v8737 = vshrl.u32 %v8736, 7
  %v8738 = vsub.s32 0, %v8737
  %v8739 = vrot.slane %v8734, %v8738
  %v8741 = vadd.f32 %v8733, %v8739
  %v8742 = vmax.f32 %v8741, 0.0
  %v8743 = vpack.c.bf16 %v8742, %v8742
  %v8744 = vld [vmem:[%s6] sm:$0xf]
  %v8745 = vld [vmem:[%s6 + $0x4] sm:$0xf]
  %v8746 = vld [vmem:[%s6 + $0x8] sm:$0xf]
  %v8747 = vld [vmem:[%s6 + $0xc] sm:$0xf]
  %v8748 = vld [vmem:[%s7] sm:$0x1]
  %v8750 = vlaneseq
  %v8751 = vshrl.u32 %v8750, 7
  %v8752 = vsub.s32 0, %v8751
  %v8753 = vrot.slane %v8748, %v8752
  %v8759 = vunpack.c.l.b16 %v8744
  %v8760 = vunpack.c.l.b16 %v8745
  %v8761 = vunpack.c.l.b16 %v8746
  %v8762 = vunpack.c.l.b16 %v8747
  %v8763 = vpack.c.b16 %v8760, %v8759
  %v8764 = vpack.c.b16 %v8762, %v8761
  %v8768 = vsel %vm8718, %v8743, 0
  %8770 = vmatprep.subr.bf16.mxu0 0
  %8771 = vmatpush1.bf16.msra.mxu0 %v8763
  %8772 = vmatprep.subr.bf16.mxu0 0
  %8773 = vmatpush1.bf16.msra.mxu0 %v8764
  %8774 = vmatprep.subr.bf16.mxu0 0
  %8775 = vmatpush1.bf16.msra.mxu0 0
  %8776 = vmatprep.subr.bf16.mxu0 0
  %8777 = vmatpush1.bf16.msra.mxu0 0
  %8778 = vmatprep.subr.bf16.mxu0 0
  %8779 = vmatpush1.bf16.msra.mxu0 0
  %8780 = vmatprep.subr.bf16.mxu0 0
  %8781 = vmatpush1.bf16.msra.mxu0 0
  %8782 = vmatprep.subr.bf16.mxu0 0
  %8783 = vmatpush1.bf16.msra.mxu0 0
  %8784 = vmatprep.subr.bf16.mxu0 0
  %8785 = vmatpush1.bf16.msra.mxu0 0
  %8786 = vmatprep.subr.bf16.mxu0 0
  %8787 = vmatpush1.bf16.msra.mxu0 0
  %8788 = vmatprep.subr.bf16.mxu0 0
  %8789 = vmatpush1.bf16.msra.mxu0 0
  %8790 = vmatprep.subr.bf16.mxu0 0
  %8791 = vmatpush1.bf16.msra.mxu0 0
  %8792 = vmatprep.subr.bf16.mxu0 0
  %8793 = vmatpush1.bf16.msra.mxu0 0
  %8794 = vmatprep.subr.bf16.mxu0 0
  %8795 = vmatpush1.bf16.msra.mxu0 0
  %8796 = vmatprep.subr.bf16.mxu0 0
  %8797 = vmatpush1.bf16.msra.mxu0 0
  %8798 = vmatprep.subr.bf16.mxu0 0
  %8799 = vmatpush1.bf16.msra.mxu0 0
  %8800 = vmatprep.subr.bf16.mxu0 0
  %8801 = vmatpush1.bf16.msra.mxu0 0
  %8802 = vmatprep.mubr.bf16.mxu0 0
  %8803 = vmatmul.mubr.bf16.gmra.mrb[0].mxu0 %v8768
  %v8804 = vpop.f32.mrb[0].mxu0
  %v8805 = vadd.f32 %v8753, %v8804
  %v8806 = vpop.f32.mrb[0].mxu0
  %v8807 = vpop.f32.mrb[0].mxu0
  %v8808 = vpop.f32.mrb[0].mxu0
  %8809 = vdwg.mxu0
  %v8810 = vmax.f32 %v8805, 0.0
  %v8811 = vpack.c.bf16 %v8810, %v8810
  %v8812 = vld [vmem:[%s8] sm:$0xf]
  %v8813 = vld [vmem:[%s8 + $0x4] sm:$0xf]
  %v8814 = vld [vmem:[%s8 + $0x8] sm:$0xf]
  %v8815 = vld [vmem:[%s8 + $0xc] sm:$0xf]
  %v8816 = vld [vmem:[%s9] sm:$0x1]
  %v8818 = vlaneseq
  %v8819 = vshrl.u32 %v8818, 7
  %v8820 = vsub.s32 0, %v8819
  %v8821 = vrot.slane %v8816, %v8820
  %v8827 = vunpack.c.l.b16 %v8812
  %v8828 = vunpack.c.l.b16 %v8813
  %v8829 = vunpack.c.l.b16 %v8814
  %v8830 = vunpack.c.l.b16 %v8815
  %v8831 = vpack.c.b16 %v8828, %v8827
  %v8832 = vpack.c.b16 %v8830, %v8829
  %v8836 = vsel %vm8718, %v8811, 0
  %8838 = vmatprep.subr.bf16.mxu0 0
  %8839 = vmatpush1.bf16.msra.mxu0 %v8831
  %8840 = vmatprep.subr.bf16.mxu0 0
  %8841 = vmatpush1.bf16.msra.mxu0 %v8832
  %8842 = vmatprep.subr.bf16.mxu0 0
  %8843 = vmatpush1.bf16.msra.mxu0 0
  %8844 = vmatprep.subr.bf16.mxu0 0
  %8845 = vmatpush1.bf16.msra.mxu0 0
  %8846 = vmatprep.subr.bf16.mxu0 0
  %8847 = vmatpush1.bf16.msra.mxu0 0
  %8848 = vmatprep.subr.bf16.mxu0 0
  %8849 = vmatpush1.bf16.msra.mxu0 0
  %8850 = vmatprep.subr.bf16.mxu0 0
  %8851 = vmatpush1.bf16.msra.mxu0 0
  %8852 = vmatprep.subr.bf16.mxu0 0
  %8853 = vmatpush1.bf16.msra.mxu0 0
  %8854 = vmatprep.subr.bf16.mxu0 0
  %8855 = vmatpush1.bf16.msra.mxu0 0
  %8856 = vmatprep.subr.bf16.mxu0 0
  %8857 = vmatpush1.bf16.msra.mxu0 0
  %8858 = vmatprep.subr.bf16.mxu0 0
  %8859 = vmatpush1.bf16.msra.mxu0 0
  %8860 = vmatprep.subr.bf16.mxu0 0
  %8861 = vmatpush1.bf16.msra.mxu0 0
  %8862 = vmatprep.subr.bf16.mxu0 0
  %8863 = vmatpush1.bf16.msra.mxu0 0
  %8864 = vmatprep.subr.bf16.mxu0 0
  %8865 = vmatpush1.bf16.msra.mxu0 0
  %8866 = vmatprep.subr.bf16.mxu0 0
  %8867 = vmatpush1.bf16.msra.mxu0 0
  %8868 = vmatprep.subr.bf16.mxu0 0
  %8869 = vmatpush1.bf16.msra.mxu0 0
  %8870 = vmatprep.mubr.bf16.mxu0 0
  %8871 = vmatmul.mubr.bf16.gmra.mrb[0].mxu0 %v8836
  %v8872 = vpop.f32.mrb[0].mxu0
  %v8873 = vadd.f32 %v8821, %v8872
  %v8874 = vpop.f32.mrb[0].mxu0
  %v8875 = vpop.f32.mrb[0].mxu0
  %v8876 = vpop.f32.mrb[0].mxu0
  %8877 = vdwg.mxu0
  %8878 = vst [vmem:[%s10] sm:$0xff] %v8873
  // Predicated region
  $region42: #{critic_stack_forward.1} parent=0 // pred_check
    _
  $region43: #{critic_stack_forward.1} parent=0 // pred_check_branch
    %8880 = sbr.rel (0) target = $region45
  $region44: #{critic_stack_forward.1} parent=0 // pred_region
    _
  $region45: #{critic_stack_forward.1} parent=0 // pred_fallthru
    _
  // Predicated region
  $region46: #{critic_stack_forward.1} parent=0 // pred_check
    _
  $region47: #{critic_stack_forward.1} parent=0 // pred_check_branch
    %8882 = sbr.rel (0) target = $region49
  $region48: #{critic_stack_forward.1} parent=0 // pred_region
    _
  $region49: #{critic_stack_forward.1} parent=0 // pred_fallthru
    _

</llo_original>
